<compile_context>
chip_gen: v6e
topology: v6e:2x2x1
jax: 0.10.0
libtpu: 0.0.40
codegen_flags: <defaults>
</compile_context>

<pallas_src>
import jax
import jax.numpy as jnp
from jax.experimental import pallas as pl
from jax.experimental.pallas import tpu as pltpu


# ---------------------------------------------------------------------------
# Fused DownSample2 kernel
# ---------------------------------------------------------------------------
def _mish(y):
    # mish(y) = y * tanh(softplus(y)) = y - 2*y / ((1 + e^y)^2 + 1)
    # Single EUP transcendental (exp); exact f32 division keeps numerics tight.
    e = jnp.exp(y)
    d = (1.0 + e) * (1.0 + e) + 1.0
    return y - (2.0 * y) / d


def downsample2_kernel(
    p1_ref,                      # (M, 9*64) bf16 : im2col patches for conv1 (3x3 stride 2)
    w1_ref, b1_ref,              # (576,128) bf16 , (1,128) f32
    w2_ref, b2_ref,              # (128,64)  bf16 , (1,64)  f32
    w3_ref, b3_ref,              # (128,64)  bf16 , (1,64)  f32
    wr1a_ref, br1a_ref,          # resblock1 1x1 : (64,64) bf16 , (1,64) f32
    wr1b_ref, br1b_ref,          # resblock1 3x3 : (9,64,64) bf16 , (1,64) f32
    wr2a_ref, br2a_ref,          # resblock2 1x1
    wr2b_ref, br2b_ref,          # resblock2 3x3
    w4_ref, b4_ref,              # conv4 1x1 : (64,64) bf16 , (1,64) f32
    w5a_ref, w5b_ref, b5_ref,    # conv5 split: (64,128) for x4, (64,128) for x2, (1,128)
    o_ref,                       # (M, 128) f32 output (lane-dense)
    pad_ref,                     # VMEM scratch (N, Ho+2, Wo+2, 64) f32 (zero-padded spatial)
):
    N, Hp, Wp, C = pad_ref.shape
    Ho, Wo = Hp - 2, Wp - 2
    M = N * Ho * Wo

    def mm(x_bf16, w):
        return jnp.dot(x_bf16, w, preferred_element_type=jnp.float32)

    def cba_1x1(x_f32, w_r, b_r):
        return _mish(mm(x_f32.astype(jnp.bfloat16), w_r[...]) + b_r[...])

    def cba_3x3(x_f32, wt_r, b_r):
        # In-kernel "im2col": write x into the interior of the zero-padded VMEM scratch,
        # then accumulate 9 shifted-tap matmuls (stride 1, pad 1) in f32.
        pad_ref[:, 1:Ho + 1, 1:Wo + 1, :] = x_f32.reshape(N, Ho, Wo, C)
        acc = jnp.zeros((M, C), jnp.float32)
        for kh in range(3):
            for kw in range(3):
                tap = pad_ref[:, kh:kh + Ho, kw:kw + Wo, :]
                tap = tap.reshape(M, C).astype(jnp.bfloat16)
                acc = acc + mm(tap, wt_r[kh * 3 + kw])
        return _mish(acc + b_r[...])

    # Zero the padded scratch once; each cba_3x3 overwrites only the interior,
    # so the border ring stays zero (the conv's implicit padding).
    pad_ref[...] = jnp.zeros_like(pad_ref)

    # conv1 (3x3, stride 2, 64->128): patches arrive pre-im2col'ed from the wrapper.
    x1 = _mish(mm(p1_ref[...], w1_ref[...]) + b1_ref[...])       # (M, 128) f32
    x1b = x1.astype(jnp.bfloat16)

    x2 = _mish(mm(x1b, w2_ref[...]) + b2_ref[...])               # (M, 64) f32
    x3 = _mish(mm(x1b, w3_ref[...]) + b3_ref[...])               # (M, 64) f32

    # ResBlock(ch=64, nblocks=2): r = r + conv3x3(conv1x1(r))  (mish after each conv)
    r = x3
    h = cba_1x1(r, wr1a_ref, br1a_ref)
    r = r + cba_3x3(h, wr1b_ref, br1b_ref)
    h = cba_1x1(r, wr2a_ref, br2a_ref)
    r = r + cba_3x3(h, wr2b_ref, br2b_ref)

    x4 = cba_1x1(r, w4_ref, b4_ref)                              # (M, 64) f32

    # conv5 on concat([x4, x2], channel) without materializing the concat.
    y5 = (mm(x4.astype(jnp.bfloat16), w5a_ref[...])
          + mm(x2.astype(jnp.bfloat16), w5b_ref[...])
          + b5_ref[...])
    o_ref[...] = _mish(y5).astype(o_ref.dtype)


# ---------------------------------------------------------------------------
# Wrapper: one-time layout glue (NCHW->NHWC + conv1 im2col) + single pallas_call
# ---------------------------------------------------------------------------
def _full_spec(shape):
    n = len(shape)
    return pl.BlockSpec(shape, lambda i, n=n: (0,) * n)


def _im2col_3x3_stride2(x_nhwc):
    """im2col for the single stride-2 3x3 conv on the raw network input."""
    N, H, W, C = x_nhwc.shape
    Ho = (H + 2 - 3) // 2 + 1
    Wo = (W + 2 - 3) // 2 + 1
    xp = jnp.pad(x_nhwc, ((0, 0), (1, 1), (1, 1), (0, 0)))
    cols = []
    for kh in range(3):
        for kw in range(3):
            cols.append(xp[:, kh:kh + 2 * (Ho - 1) + 1:2,
                            kw:kw + 2 * (Wo - 1) + 1:2, :])
    patches = jnp.concatenate(cols, axis=-1)   # (N, Ho, Wo, 9*C), feature order (kh, kw, cin)
    return patches, Ho, Wo


@jax.jit
def downsample2_forward(x_nchw, kargs):
    """x_nchw: (N, 64, H, W) f32 -> (N, 128, H//2, W//2) f32 (same as the PyTorch module)."""
    N, Cin, H, W = x_nchw.shape
    x = jnp.transpose(x_nchw, (0, 2, 3, 1))                      # NHWC
    # TODO(synk): conv1's strided im2col (and the NCHW<->NHWC transposes) stay as one-time
    # XLA layout glue on the raw input; everything downstream is fused in one Pallas kernel.
    patches, Ho, Wo = _im2col_3x3_stride2(x)
    M = N * Ho * Wo
    p1 = patches.reshape(M, 9 * Cin).astype(jnp.bfloat16)

    args = (p1,) + tuple(kargs)
    cmid = kargs[2].shape[1]     # 64  (resblock branch width)
    cout = kargs[-1].shape[1]    # 128 (final channels)

    out = pl.pallas_call(
        downsample2_kernel,
        out_shape=jax.ShapeDtypeStruct((M, cout), jnp.float32),
        grid=(1,),               # whole working set (<2 MiB) resident in VMEM
        in_specs=[_full_spec(a.shape) for a in args],
        out_specs=_full_spec((M, cout)),
        scratch_shapes=[pltpu.VMEM((N, Ho + 2, Wo + 2, cmid), jnp.float32)],
        compiler_params=pltpu.CompilerParams(
            dimension_semantics=("arbitrary",)),
        # TODO(synk): at real (non-toy) batch/spatial sizes, split the M axis into >=2
        # "parallel" grid blocks so v7x's two TensorCores both get work.
    )(*args)

    y = out.reshape(N, Ho, Wo, cout)
    return jnp.transpose(y, (0, 3, 1, 2))                        # NCHW


# ---------------------------------------------------------------------------
# Deterministic parameter construction (eval-mode BN folded into scale/bias)
# ---------------------------------------------------------------------------
def make_cba_params(key, cin, cout, k):
    kw_, kg, kb, km, kv = jax.random.split(key, 5)
    w = jax.random.normal(kw_, (cout, cin, k, k), jnp.float32)
    w = w * (1.0 / (cin * k * k)) ** 0.5
    gamma = 1.0 + 0.1 * jax.random.normal(kg, (cout,), jnp.float32)
    beta = 0.1 * jax.random.normal(kb, (cout,), jnp.float32)
    mean = 0.1 * jax.random.normal(km, (cout,), jnp.float32)
    var = jnp.abs(jax.random.normal(kv, (cout,), jnp.float32)) + 0.5
    eps = 1e-5
    scale = gamma / jnp.sqrt(var + eps)
    bias = beta - mean * scale
    return {"w": w, "scale": scale, "bias": bias}


def make_downsample2_params(key):
    keys = jax.random.split(key, 9)
    return {
        "conv1": make_cba_params(keys[0], 64, 128, 3),
        "conv2": make_cba_params(keys[1], 128, 64, 1),
        "conv3": make_cba_params(keys[2], 128, 64, 1),
        "resblock": [
            (make_cba_params(keys[3], 64, 64, 1),
             make_cba_params(keys[4], 64, 64, 3)),
            (make_cba_params(keys[5], 64, 64, 1),
             make_cba_params(keys[6], 64, 64, 3)),
        ],
        "conv4": make_cba_params(keys[7], 64, 64, 1),
        "conv5": make_cba_params(keys[8], 128, 128, 1),
    }


# --- pack raw params into kernel-ready operands (BN scale folded, bf16 weights) ---
def _pack_1x1(p):
    cout, cin = p["w"].shape[:2]
    w2d = p["w"].reshape(cout, cin).T * p["scale"][None, :]
    return w2d.astype(jnp.bfloat16), p["bias"].reshape(1, cout).astype(jnp.float32)


def _pack_3x3_im2col(p):     # feature order (kh, kw, cin) — matches _im2col_3x3_stride2
    cout, cin = p["w"].shape[:2]
    w2d = (jnp.transpose(p["w"], (2, 3, 1, 0)).reshape(9 * cin, cout)
           * p["scale"][None, :])
    return w2d.astype(jnp.bfloat16), p["bias"].reshape(1, cout).astype(jnp.float32)


def _pack_3x3_taps(p):       # (9, cin, cout): one (cin, cout) matrix per spatial tap
    cout, cin = p["w"].shape[:2]
    w = (jnp.transpose(p["w"], (2, 3, 1, 0)).reshape(9, cin, cout)
         * p["scale"][None, None, :])
    return w.astype(jnp.bfloat16), p["bias"].reshape(1, cout).astype(jnp.float32)


def pack_kernel_params(params):
    w1, b1 = _pack_3x3_im2col(params["conv1"])
    w2, b2 = _pack_1x1(params["conv2"])
    w3, b3 = _pack_1x1(params["conv3"])
    (r1a, r1b), (r2a, r2b) = params["resblock"]
    wr1a, br1a = _pack_1x1(r1a)
    wr1b, br1b = _pack_3x3_taps(r1b)
    wr2a, br2a = _pack_1x1(r2a)
    wr2b, br2b = _pack_3x3_taps(r2b)
    w4, b4 = _pack_1x1(params["conv4"])
    p5 = params["conv5"]
    cout5, cin5 = p5["w"].shape[:2]
    w5 = p5["w"].reshape(cout5, cin5).T * p5["scale"][None, :]   # (cin=128, cout=128)
    cmid = cin5 // 2
    w5a = w5[:cmid].astype(jnp.bfloat16)     # rows for x4 (conv4 output) channels
    w5b = w5[cmid:].astype(jnp.bfloat16)     # rows for x2 (conv2 output) channels
    b5 = p5["bias"].reshape(1, cout5).astype(jnp.float32)
    return (w1, b1, w2, b2, w3, b3,
            wr1a, br1a, wr1b, br1b, wr2a, br2a, wr2b, br2b,
            w4, b4, w5a, w5b, b5)


# ---------------------------------------------------------------------------
# Pure-JAX reference (module semantics).  quantize=True mirrors the kernel's
# bf16-operand / f32-accumulate numerics for a tight correctness check.
# ---------------------------------------------------------------------------
def _ref_cba(x_nhwc, p, stride=1, quantize=False):
    w = jnp.transpose(p["w"], (2, 3, 1, 0))      # OIHW -> HWIO
    k = p["w"].shape[2]
    pad = (k - 1) // 2
    dn = ("NHWC", "HWIO", "NHWC")
    if quantize:
        wq = (w * p["scale"]).astype(jnp.bfloat16)
        y = jax.lax.conv_general_dilated(
            x_nhwc.astype(jnp.bfloat16), wq, (stride, stride),
            ((pad, pad), (pad, pad)), dimension_numbers=dn,
            preferred_element_type=jnp.float32)
        y = y + p["bias"]
    else:
        y = jax.lax.conv_general_dilated(
            x_nhwc, w, (stride, stride), ((pad, pad), (pad, pad)),
            dimension_numbers=dn)
        y = y * p["scale"] + p["bias"]
    return y * jnp.tanh(jax.nn.softplus(y))


def downsample2_reference(x_nchw, params, quantize=False):
    x = jnp.transpose(x_nchw, (0, 2, 3, 1))
    x1 = _ref_cba(x, params["conv1"], stride=2, quantize=quantize)
    x2 = _ref_cba(x1, params["conv2"], quantize=quantize)
    x3 = _ref_cba(x1, params["conv3"], quantize=quantize)
    r = x3
    for blk in params["resblock"]:
        h = _ref_cba(r, blk[0], quantize=quantize)
        h = _ref_cba(h, blk[1], quantize=quantize)
        r = r + h
    x4 = _ref_cba(r, params["conv4"], quantize=quantize)
    x4c = jnp.concatenate([x4, x2], axis=-1)
    x5 = _ref_cba(x4c, params["conv5"], quantize=quantize)
    return jnp.transpose(x5, (0, 3, 1, 2))


if __name__ == "__main__":
    key = jax.random.PRNGKey(0)
    k_params, k_x = jax.random.split(key)
    params = make_downsample2_params(k_params)
    kargs = pack_kernel_params(params)

    # DownSample2 requires 64 input channels; small spatial size = 16.
    x = jax.random.normal(k_x, (2, 64, 16, 16), jnp.float32)     # NCHW

    out = jax.block_until_ready(downsample2_forward(x, kargs))
    assert out.shape == (2, 128, 8, 8), out.shape

    # Tight check vs. a reference that uses the same bf16 matmul quantization.
    ref_q = jax.block_until_ready(downsample2_reference(x, params, quantize=True))
    assert jnp.allclose(out, ref_q, atol=2e-3, rtol=2e-3), (
        float(jnp.max(jnp.abs(out - ref_q))))

    # Looser check vs. pure-f32 module semantics (difference = bf16 MXU operand rounding).
    ref_f = jax.block_until_ready(downsample2_reference(x, params, quantize=False))
    assert jnp.allclose(out, ref_f, atol=5e-2, rtol=5e-2), (
        float(jnp.max(jnp.abs(out - ref_f))))

    print("KERNEL_OK")
</pallas_src>

<mosaic_0001>
module attributes {stable_mosaic.version = 11 : i64} {
  func.func @downsample2_kernel(%arg0: i32, %arg1: memref<128x576xbf16, #tpu.memory_space<vmem>>, %arg2: memref<576x128xbf16, #tpu.memory_space<vmem>>, %arg3: memref<1x128xf32, #tpu.memory_space<vmem>>, %arg4: memref<128x64xbf16, #tpu.memory_space<vmem>>, %arg5: memref<1x64xf32, #tpu.memory_space<vmem>>, %arg6: memref<128x64xbf16, #tpu.memory_space<vmem>>, %arg7: memref<1x64xf32, #tpu.memory_space<vmem>>, %arg8: memref<64x64xbf16, #tpu.memory_space<vmem>>, %arg9: memref<1x64xf32, #tpu.memory_space<vmem>>, %arg10: memref<9x64x64xbf16, #tpu.memory_space<vmem>>, %arg11: memref<1x64xf32, #tpu.memory_space<vmem>>, %arg12: memref<64x64xbf16, #tpu.memory_space<vmem>>, %arg13: memref<1x64xf32, #tpu.memory_space<vmem>>, %arg14: memref<9x64x64xbf16, #tpu.memory_space<vmem>>, %arg15: memref<1x64xf32, #tpu.memory_space<vmem>>, %arg16: memref<64x64xbf16, #tpu.memory_space<vmem>>, %arg17: memref<1x64xf32, #tpu.memory_space<vmem>>, %arg18: memref<64x128xbf16, #tpu.memory_space<vmem>>, %arg19: memref<64x128xbf16, #tpu.memory_space<vmem>>, %arg20: memref<1x128xf32, #tpu.memory_space<vmem>>, %arg21: memref<128x128xf32, #tpu.memory_space<vmem>>, %arg22: memref<2x10x10x64xf32, #tpu.memory_space<vmem>>) attributes {dimension_semantics = [#tpu.dimension_semantics<arbitrary>], iteration_bounds = array<i64: 1>, scalar_prefetch = 0 : i64, scratch_operands = 1 : i64, tpu.core_type = #tpu.core_type<tc>, window_params = [{pipeline_mode = #tpu.pipeline_mode<synchronous>, transform_indices = @transform_0, window_bounds = array<i64: 128, 576>}, {pipeline_mode = #tpu.pipeline_mode<synchronous>, transform_indices = @transform_1, window_bounds = array<i64: 576, 128>}, {pipeline_mode = #tpu.pipeline_mode<synchronous>, transform_indices = @transform_2, window_bounds = array<i64: 1, 128>}, {pipeline_mode = #tpu.pipeline_mode<synchronous>, transform_indices = @transform_3, window_bounds = array<i64: 128, 64>}, {pipeline_mode = #tpu.pipeline_mode<synchronous>, transform_indices = @transform_4, window_bounds = array<i64: 1, 64>}, {pipeline_mode = #tpu.pipeline_mode<synchronous>, transform_indices = @transform_5, window_bounds = array<i64: 128, 64>}, {pipeline_mode = #tpu.pipeline_mode<synchronous>, transform_indices = @transform_6, window_bounds = array<i64: 1, 64>}, {pipeline_mode = #tpu.pipeline_mode<synchronous>, transform_indices = @transform_7, window_bounds = array<i64: 64, 64>}, {pipeline_mode = #tpu.pipeline_mode<synchronous>, transform_indices = @transform_8, window_bounds = array<i64: 1, 64>}, {pipeline_mode = #tpu.pipeline_mode<synchronous>, transform_indices = @transform_9, window_bounds = array<i64: 9, 64, 64>}, {pipeline_mode = #tpu.pipeline_mode<synchronous>, transform_indices = @transform_10, window_bounds = array<i64: 1, 64>}, {pipeline_mode = #tpu.pipeline_mode<synchronous>, transform_indices = @transform_11, window_bounds = array<i64: 64, 64>}, {pipeline_mode = #tpu.pipeline_mode<synchronous>, transform_indices = @transform_12, window_bounds = array<i64: 1, 64>}, {pipeline_mode = #tpu.pipeline_mode<synchronous>, transform_indices = @transform_13, window_bounds = array<i64: 9, 64, 64>}, {pipeline_mode = #tpu.pipeline_mode<synchronous>, transform_indices = @transform_14, window_bounds = array<i64: 1, 64>}, {pipeline_mode = #tpu.pipeline_mode<synchronous>, transform_indices = @transform_15, window_bounds = array<i64: 64, 64>}, {pipeline_mode = #tpu.pipeline_mode<synchronous>, transform_indices = @transform_16, window_bounds = array<i64: 1, 64>}, {pipeline_mode = #tpu.pipeline_mode<synchronous>, transform_indices = @transform_17, window_bounds = array<i64: 64, 128>}, {pipeline_mode = #tpu.pipeline_mode<synchronous>, transform_indices = @transform_18, window_bounds = array<i64: 64, 128>}, {pipeline_mode = #tpu.pipeline_mode<synchronous>, transform_indices = @transform_19, window_bounds = array<i64: 1, 128>}, {pipeline_mode = #tpu.pipeline_mode<synchronous>, transform_indices = @transform_20, window_bounds = array<i64: 128, 128>}]} {
    %cst = arith.constant 0.000000e+00 : f32
    %0 = vector.broadcast %cst : f32 to vector<2x10x10x64xf32>
    %c0 = arith.constant 0 : index
    %c0_0 = arith.constant 0 : index
    %c0_1 = arith.constant 0 : index
    %c0_2 = arith.constant 0 : index
    %1 = vector.load %arg22[%c0, %c0_0, %c0_1, %c0_2] : memref<2x10x10x64xf32, #tpu.memory_space<vmem>>, vector<2x10x10x64xf32>
    tpu.vector_store %arg22[%c0, %c0_0, %c0_1, %c0_2], %0 {strides = array<i32>} : memref<2x10x10x64xf32, #tpu.memory_space<vmem>>, vector<2x10x10x64xf32>,
    %c0_3 = arith.constant 0 : index
    %c0_4 = arith.constant 0 : index
    %2 = vector.load %arg1[%c0_3, %c0_4] : memref<128x576xbf16, #tpu.memory_space<vmem>>, vector<128x576xbf16>
    %c0_5 = arith.constant 0 : index
    %c0_6 = arith.constant 0 : index
    %3 = vector.load %arg2[%c0_5, %c0_6] : memref<576x128xbf16, #tpu.memory_space<vmem>>, vector<576x128xbf16>
    %cst_7 = arith.constant dense<0.000000e+00> : vector<128x128xf32>
    %4 = tpu.matmul %2, %3, %cst_7 {dimension_numbers = #tpu.dot_dimension_numbers<[1], [0], [0], [1], [0, 0, 1, 1], [], []>} : vector<128x576xbf16>, vector<576x128xbf16>, vector<128x128xf32> -> vector<128x128xf32>
    %c0_8 = arith.constant 0 : index
    %c0_9 = arith.constant 0 : index
    %5 = vector.load %arg3[%c0_8, %c0_9] : memref<1x128xf32, #tpu.memory_space<vmem>>, vector<1x128xf32>
    %6 = vector.broadcast %5 : vector<1x128xf32> to vector<128x128xf32>
    %7 = arith.addf %4, %6 : vector<128x128xf32>
    %8 = math.exp %7 : vector<128x128xf32>
    %cst_10 = arith.constant 1.000000e+00 : f32
    %9 = vector.broadcast %cst_10 : f32 to vector<128x128xf32>
    %10 = arith.addf %9, %8 : vector<128x128xf32>
    %cst_11 = arith.constant 1.000000e+00 : f32
    %11 = vector.broadcast %cst_11 : f32 to vector<128x128xf32>
    %12 = arith.addf %11, %8 : vector<128x128xf32>
    %13 = arith.mulf %10, %12 : vector<128x128xf32>
    %cst_12 = arith.constant 1.000000e+00 : f32
    %14 = vector.broadcast %cst_12 : f32 to vector<128x128xf32>
    %15 = arith.addf %13, %14 : vector<128x128xf32>
    %cst_13 = arith.constant 2.000000e+00 : f32
    %16 = vector.broadcast %cst_13 : f32 to vector<128x128xf32>
    %17 = arith.mulf %16, %7 : vector<128x128xf32>
    %18 = arith.divf %17, %15 : vector<128x128xf32>
    %19 = arith.subf %7, %18 : vector<128x128xf32>
    %20 = arith.truncf %19 : vector<128x128xf32> to vector<128x128xbf16>
    %c0_14 = arith.constant 0 : index
    %c0_15 = arith.constant 0 : index
    %21 = vector.load %arg4[%c0_14, %c0_15] : memref<128x64xbf16, #tpu.memory_space<vmem>>, vector<128x64xbf16>
    %cst_16 = arith.constant dense<0.000000e+00> : vector<128x64xf32>
    %22 = tpu.matmul %20, %21, %cst_16 {dimension_numbers = #tpu.dot_dimension_numbers<[1], [0], [0], [1], [0, 0, 1, 1], [], []>} : vector<128x128xbf16>, vector<128x64xbf16>, vector<128x64xf32> -> vector<128x64xf32>
    %c0_17 = arith.constant 0 : index
    %c0_18 = arith.constant 0 : index
    %23 = vector.load %arg5[%c0_17, %c0_18] : memref<1x64xf32, #tpu.memory_space<vmem>>, vector<1x64xf32>
    %24 = vector.broadcast %23 : vector<1x64xf32> to vector<128x64xf32>
    %25 = arith.addf %22, %24 : vector<128x64xf32>
    %26 = math.exp %25 : vector<128x64xf32>
    %cst_19 = arith.constant 1.000000e+00 : f32
    %27 = vector.broadcast %cst_19 : f32 to vector<128x64xf32>
    %28 = arith.addf %27, %26 : vector<128x64xf32>
    %cst_20 = arith.constant 1.000000e+00 : f32
    %29 = vector.broadcast %cst_20 : f32 to vector<128x64xf32>
    %30 = arith.addf %29, %26 : vector<128x64xf32>
    %31 = arith.mulf %28, %30 : vector<128x64xf32>
    %cst_21 = arith.constant 1.000000e+00 : f32
    %32 = vector.broadcast %cst_21 : f32 to vector<128x64xf32>
    %33 = arith.addf %31, %32 : vector<128x64xf32>
    %cst_22 = arith.constant 2.000000e+00 : f32
    %34 = vector.broadcast %cst_22 : f32 to vector<128x64xf32>
    %35 = arith.mulf %34, %25 : vector<128x64xf32>
    %36 = arith.divf %35, %33 : vector<128x64xf32>
    %37 = arith.subf %25, %36 : vector<128x64xf32>
    %c0_23 = arith.constant 0 : index
    %c0_24 = arith.constant 0 : index
    %38 = vector.load %arg6[%c0_23, %c0_24] : memref<128x64xbf16, #tpu.memory_space<vmem>>, vector<128x64xbf16>
    %cst_25 = arith.constant dense<0.000000e+00> : vector<128x64xf32>
    %39 = tpu.matmul %20, %38, %cst_25 {dimension_numbers = #tpu.dot_dimension_numbers<[1], [0], [0], [1], [0, 0, 1, 1], [], []>} : vector<128x128xbf16>, vector<128x64xbf16>, vector<128x64xf32> -> vector<128x64xf32>
    %c0_26 = arith.constant 0 : index
    %c0_27 = arith.constant 0 : index
    %40 = vector.load %arg7[%c0_26, %c0_27] : memref<1x64xf32, #tpu.memory_space<vmem>>, vector<1x64xf32>
    %41 = vector.broadcast %40 : vector<1x64xf32> to vector<128x64xf32>
    %42 = arith.addf %39, %41 : vector<128x64xf32>
    %43 = math.exp %42 : vector<128x64xf32>
    %cst_28 = arith.constant 1.000000e+00 : f32
    %44 = vector.broadcast %cst_28 : f32 to vector<128x64xf32>
    %45 = arith.addf %44, %43 : vector<128x64xf32>
    %cst_29 = arith.constant 1.000000e+00 : f32
    %46 = vector.broadcast %cst_29 : f32 to vector<128x64xf32>
    %47 = arith.addf %46, %43 : vector<128x64xf32>
    %48 = arith.mulf %45, %47 : vector<128x64xf32>
    %cst_30 = arith.constant 1.000000e+00 : f32
    %49 = vector.broadcast %cst_30 : f32 to vector<128x64xf32>
    %50 = arith.addf %48, %49 : vector<128x64xf32>
    %cst_31 = arith.constant 2.000000e+00 : f32
    %51 = vector.broadcast %cst_31 : f32 to vector<128x64xf32>
    %52 = arith.mulf %51, %42 : vector<128x64xf32>
    %53 = arith.divf %52, %50 : vector<128x64xf32>
    %54 = arith.subf %42, %53 : vector<128x64xf32>
    %55 = arith.truncf %54 : vector<128x64xf32> to vector<128x64xbf16>
    %c0_32 = arith.constant 0 : index
    %c0_33 = arith.constant 0 : index
    %56 = vector.load %arg8[%c0_32, %c0_33] : memref<64x64xbf16, #tpu.memory_space<vmem>>, vector<64x64xbf16>
    %cst_34 = arith.constant dense<0.000000e+00> : vector<128x64xf32>
    %57 = tpu.matmul %55, %56, %cst_34 {dimension_numbers = #tpu.dot_dimension_numbers<[1], [0], [0], [1], [0, 0, 1, 1], [], []>} : vector<128x64xbf16>, vector<64x64xbf16>, vector<128x64xf32> -> vector<128x64xf32>
    %c0_35 = arith.constant 0 : index
    %c0_36 = arith.constant 0 : index
    %58 = vector.load %arg9[%c0_35, %c0_36] : memref<1x64xf32, #tpu.memory_space<vmem>>, vector<1x64xf32>
    %59 = vector.broadcast %58 : vector<1x64xf32> to vector<128x64xf32>
    %60 = arith.addf %57, %59 : vector<128x64xf32>
    %61 = math.exp %60 : vector<128x64xf32>
    %cst_37 = arith.constant 1.000000e+00 : f32
    %62 = vector.broadcast %cst_37 : f32 to vector<128x64xf32>
    %63 = arith.addf %62, %61 : vector<128x64xf32>
    %cst_38 = arith.constant 1.000000e+00 : f32
    %64 = vector.broadcast %cst_38 : f32 to vector<128x64xf32>
    %65 = arith.addf %64, %61 : vector<128x64xf32>
    %66 = arith.mulf %63, %65 : vector<128x64xf32>
    %cst_39 = arith.constant 1.000000e+00 : f32
    %67 = vector.broadcast %cst_39 : f32 to vector<128x64xf32>
    %68 = arith.addf %66, %67 : vector<128x64xf32>
    %cst_40 = arith.constant 2.000000e+00 : f32
    %69 = vector.broadcast %cst_40 : f32 to vector<128x64xf32>
    %70 = arith.mulf %69, %60 : vector<128x64xf32>
    %71 = arith.divf %70, %68 : vector<128x64xf32>
    %72 = arith.subf %60, %71 : vector<128x64xf32>
    %73 = vector.shape_cast %72 : vector<128x64xf32> to vector<2x8x8x64xf32>
    %c0_41 = arith.constant 0 : index
    %c1 = arith.constant 1 : index
    %c1_42 = arith.constant 1 : index
    %c0_43 = arith.constant 0 : index
    %74 = vector.load %arg22[%c0_41, %c1, %c1_42, %c0_43] : memref<2x10x10x64xf32, #tpu.memory_space<vmem>>, vector<2x8x8x64xf32>
    tpu.vector_store %arg22[%c0_41, %c1, %c1_42, %c0_43], %73 {strides = array<i32>} : memref<2x10x10x64xf32, #tpu.memory_space<vmem>>, vector<2x8x8x64xf32>,
    %cst_44 = arith.constant 0.000000e+00 : f32
    %75 = vector.broadcast %cst_44 : f32 to vector<128x64xf32>
    %c0_45 = arith.constant 0 : index
    %c0_46 = arith.constant 0 : index
    %c0_47 = arith.constant 0 : index
    %c0_48 = arith.constant 0 : index
    %76 = vector.load %arg22[%c0_45, %c0_46, %c0_47, %c0_48] : memref<2x10x10x64xf32, #tpu.memory_space<vmem>>, vector<2x8x8x64xf32>
    %77 = vector.shape_cast %76 : vector<2x8x8x64xf32> to vector<128x64xf32>
    %78 = arith.truncf %77 : vector<128x64xf32> to vector<128x64xbf16>
    %c0_49 = arith.constant 0 : index
    %c0_50 = arith.constant 0 : index
    %c0_51 = arith.constant 0 : index
    %79 = vector.load %arg10[%c0_49, %c0_50, %c0_51] : memref<9x64x64xbf16, #tpu.memory_space<vmem>>, vector<1x64x64xbf16>
    %80 = vector.shape_cast %79 : vector<1x64x64xbf16> to vector<64x64xbf16>
    %cst_52 = arith.constant dense<0.000000e+00> : vector<128x64xf32>
    %81 = tpu.matmul %78, %80, %cst_52 {dimension_numbers = #tpu.dot_dimension_numbers<[1], [0], [0], [1], [0, 0, 1, 1], [], []>} : vector<128x64xbf16>, vector<64x64xbf16>, vector<128x64xf32> -> vector<128x64xf32>
    %82 = arith.addf %75, %81 : vector<128x64xf32>
    %c0_53 = arith.constant 0 : index
    %c0_54 = arith.constant 0 : index
    %c1_55 = arith.constant 1 : index
    %c0_56 = arith.constant 0 : index
    %83 = vector.load %arg22[%c0_53, %c0_54, %c1_55, %c0_56] : memref<2x10x10x64xf32, #tpu.memory_space<vmem>>, vector<2x8x8x64xf32>
    %84 = vector.shape_cast %83 : vector<2x8x8x64xf32> to vector<128x64xf32>
    %85 = arith.truncf %84 : vector<128x64xf32> to vector<128x64xbf16>
    %c1_57 = arith.constant 1 : index
    %c0_58 = arith.constant 0 : index
    %c0_59 = arith.constant 0 : index
    %86 = vector.load %arg10[%c1_57, %c0_58, %c0_59] : memref<9x64x64xbf16, #tpu.memory_space<vmem>>, vector<1x64x64xbf16>
    %87 = vector.shape_cast %86 : vector<1x64x64xbf16> to vector<64x64xbf16>
    %cst_60 = arith.constant dense<0.000000e+00> : vector<128x64xf32>
    %88 = tpu.matmul %85, %87, %cst_60 {dimension_numbers = #tpu.dot_dimension_numbers<[1], [0], [0], [1], [0, 0, 1, 1], [], []>} : vector<128x64xbf16>, vector<64x64xbf16>, vector<128x64xf32> -> vector<128x64xf32>
    %89 = arith.addf %82, %88 : vector<128x64xf32>
    %c0_61 = arith.constant 0 : index
    %c0_62 = arith.constant 0 : index
    %c2 = arith.constant 2 : index
    %c0_63 = arith.constant 0 : index
    %90 = vector.load %arg22[%c0_61, %c0_62, %c2, %c0_63] : memref<2x10x10x64xf32, #tpu.memory_space<vmem>>, vector<2x8x8x64xf32>
    %91 = vector.shape_cast %90 : vector<2x8x8x64xf32> to vector<128x64xf32>
    %92 = arith.truncf %91 : vector<128x64xf32> to vector<128x64xbf16>
    %c2_64 = arith.constant 2 : index
    %c0_65 = arith.constant 0 : index
    %c0_66 = arith.constant 0 : index
    %93 = vector.load %arg10[%c2_64, %c0_65, %c0_66] : memref<9x64x64xbf16, #tpu.memory_space<vmem>>, vector<1x64x64xbf16>
    %94 = vector.shape_cast %93 : vector<1x64x64xbf16> to vector<64x64xbf16>
    %cst_67 = arith.constant dense<0.000000e+00> : vector<128x64xf32>
    %95 = tpu.matmul %92, %94, %cst_67 {dimension_numbers = #tpu.dot_dimension_numbers<[1], [0], [0], [1], [0, 0, 1, 1], [], []>} : vector<128x64xbf16>, vector<64x64xbf16>, vector<128x64xf32> -> vector<128x64xf32>
    %96 = arith.addf %89, %95 : vector<128x64xf32>
    %c0_68 = arith.constant 0 : index
    %c1_69 = arith.constant 1 : index
    %c0_70 = arith.constant 0 : index
    %c0_71 = arith.constant 0 : index
    %97 = vector.load %arg22[%c0_68, %c1_69, %c0_70, %c0_71] : memref<2x10x10x64xf32, #tpu.memory_space<vmem>>, vector<2x8x8x64xf32>
    %98 = vector.shape_cast %97 : vector<2x8x8x64xf32> to vector<128x64xf32>
    %99 = arith.truncf %98 : vector<128x64xf32> to vector<128x64xbf16>
    %c3 = arith.constant 3 : index
    %c0_72 = arith.constant 0 : index
    %c0_73 = arith.constant 0 : index
    %100 = vector.load %arg10[%c3, %c0_72, %c0_73] : memref<9x64x64xbf16, #tpu.memory_space<vmem>>, vector<1x64x64xbf16>
    %101 = vector.shape_cast %100 : vector<1x64x64xbf16> to vector<64x64xbf16>
    %cst_74 = arith.constant dense<0.000000e+00> : vector<128x64xf32>
    %102 = tpu.matmul %99, %101, %cst_74 {dimension_numbers = #tpu.dot_dimension_numbers<[1], [0], [0], [1], [0, 0, 1, 1], [], []>} : vector<128x64xbf16>, vector<64x64xbf16>, vector<128x64xf32> -> vector<128x64xf32>
    %103 = arith.addf %96, %102 : vector<128x64xf32>
    %c0_75 = arith.constant 0 : index
    %c1_76 = arith.constant 1 : index
    %c1_77 = arith.constant 1 : index
    %c0_78 = arith.constant 0 : index
    %104 = vector.load %arg22[%c0_75, %c1_76, %c1_77, %c0_78] : memref<2x10x10x64xf32, #tpu.memory_space<vmem>>, vector<2x8x8x64xf32>
    %105 = vector.shape_cast %104 : vector<2x8x8x64xf32> to vector<128x64xf32>
    %106 = arith.truncf %105 : vector<128x64xf32> to vector<128x64xbf16>
    %c4 = arith.constant 4 : index
    %c0_79 = arith.constant 0 : index
    %c0_80 = arith.constant 0 : index
    %107 = vector.load %arg10[%c4, %c0_79, %c0_80] : memref<9x64x64xbf16, #tpu.memory_space<vmem>>, vector<1x64x64xbf16>
    %108 = vector.shape_cast %107 : vector<1x64x64xbf16> to vector<64x64xbf16>
    %cst_81 = arith.constant dense<0.000000e+00> : vector<128x64xf32>
    %109 = tpu.matmul %106, %108, %cst_81 {dimension_numbers = #tpu.dot_dimension_numbers<[1], [0], [0], [1], [0, 0, 1, 1], [], []>} : vector<128x64xbf16>, vector<64x64xbf16>, vector<128x64xf32> -> vector<128x64xf32>
    %110 = arith.addf %103, %109 : vector<128x64xf32>
    %c0_82 = arith.constant 0 : index
    %c1_83 = arith.constant 1 : index
    %c2_84 = arith.constant 2 : index
    %c0_85 = arith.constant 0 : index
    %111 = vector.load %arg22[%c0_82, %c1_83, %c2_84, %c0_85] : memref<2x10x10x64xf32, #tpu.memory_space<vmem>>, vector<2x8x8x64xf32>
    %112 = vector.shape_cast %111 : vector<2x8x8x64xf32> to vector<128x64xf32>
    %113 = arith.truncf %112 : vector<128x64xf32> to vector<128x64xbf16>
    %c5 = arith.constant 5 : index
    %c0_86 = arith.constant 0 : index
    %c0_87 = arith.constant 0 : index
    %114 = vector.load %arg10[%c5, %c0_86, %c0_87] : memref<9x64x64xbf16, #tpu.memory_space<vmem>>, vector<1x64x64xbf16>
    %115 = vector.shape_cast %114 : vector<1x64x64xbf16> to vector<64x64xbf16>
    %cst_88 = arith.constant dense<0.000000e+00> : vector<128x64xf32>
    %116 = tpu.matmul %113, %115, %cst_88 {dimension_numbers = #tpu.dot_dimension_numbers<[1], [0], [0], [1], [0, 0, 1, 1], [], []>} : vector<128x64xbf16>, vector<64x64xbf16>, vector<128x64xf32> -> vector<128x64xf32>
    %117 = arith.addf %110, %116 : vector<128x64xf32>
    %c0_89 = arith.constant 0 : index
    %c2_90 = arith.constant 2 : index
    %c0_91 = arith.constant 0 : index
    %c0_92 = arith.constant 0 : index
    %118 = vector.load %arg22[%c0_89, %c2_90, %c0_91, %c0_92] : memref<2x10x10x64xf32, #tpu.memory_space<vmem>>, vector<2x8x8x64xf32>
    %119 = vector.shape_cast %118 : vector<2x8x8x64xf32> to vector<128x64xf32>
    %120 = arith.truncf %119 : vector<128x64xf32> to vector<128x64xbf16>
    %c6 = arith.constant 6 : index
    %c0_93 = arith.constant 0 : index
    %c0_94 = arith.constant 0 : index
    %121 = vector.load %arg10[%c6, %c0_93, %c0_94] : memref<9x64x64xbf16, #tpu.memory_space<vmem>>, vector<1x64x64xbf16>
    %122 = vector.shape_cast %121 : vector<1x64x64xbf16> to vector<64x64xbf16>
    %cst_95 = arith.constant dense<0.000000e+00> : vector<128x64xf32>
    %123 = tpu.matmul %120, %122, %cst_95 {dimension_numbers = #tpu.dot_dimension_numbers<[1], [0], [0], [1], [0, 0, 1, 1], [], []>} : vector<128x64xbf16>, vector<64x64xbf16>, vector<128x64xf32> -> vector<128x64xf32>
    %124 = arith.addf %117, %123 : vector<128x64xf32>
    %c0_96 = arith.constant 0 : index
    %c2_97 = arith.constant 2 : index
    %c1_98 = arith.constant 1 : index
    %c0_99 = arith.constant 0 : index
    %125 = vector.load %arg22[%c0_96, %c2_97, %c1_98, %c0_99] : memref<2x10x10x64xf32, #tpu.memory_space<vmem>>, vector<2x8x8x64xf32>
    %126 = vector.shape_cast %125 : vector<2x8x8x64xf32> to vector<128x64xf32>
    %127 = arith.truncf %126 : vector<128x64xf32> to vector<128x64xbf16>
    %c7 = arith.constant 7 : index
    %c0_100 = arith.constant 0 : index
    %c0_101 = arith.constant 0 : index
    %128 = vector.load %arg10[%c7, %c0_100, %c0_101] : memref<9x64x64xbf16, #tpu.memory_space<vmem>>, vector<1x64x64xbf16>
    %129 = vector.shape_cast %128 : vector<1x64x64xbf16> to vector<64x64xbf16>
    %cst_102 = arith.constant dense<0.000000e+00> : vector<128x64xf32>
    %130 = tpu.matmul %127, %129, %cst_102 {dimension_numbers = #tpu.dot_dimension_numbers<[1], [0], [0], [1], [0, 0, 1, 1], [], []>} : vector<128x64xbf16>, vector<64x64xbf16>, vector<128x64xf32> -> vector<128x64xf32>
    %131 = arith.addf %124, %130 : vector<128x64xf32>
    %c0_103 = arith.constant 0 : index
    %c2_104 = arith.constant 2 : index
    %c2_105 = arith.constant 2 : index
    %c0_106 = arith.constant 0 : index
    %132 = vector.load %arg22[%c0_103, %c2_104, %c2_105, %c0_106] : memref<2x10x10x64xf32, #tpu.memory_space<vmem>>, vector<2x8x8x64xf32>
    %133 = vector.shape_cast %132 : vector<2x8x8x64xf32> to vector<128x64xf32>
    %134 = arith.truncf %133 : vector<128x64xf32> to vector<128x64xbf16>
    %c8 = arith.constant 8 : index
    %c0_107 = arith.constant 0 : index
    %c0_108 = arith.constant 0 : index
    %135 = vector.load %arg10[%c8, %c0_107, %c0_108] : memref<9x64x64xbf16, #tpu.memory_space<vmem>>, vector<1x64x64xbf16>
    %136 = vector.shape_cast %135 : vector<1x64x64xbf16> to vector<64x64xbf16>
    %cst_109 = arith.constant dense<0.000000e+00> : vector<128x64xf32>
    %137 = tpu.matmul %134, %136, %cst_109 {dimension_numbers = #tpu.dot_dimension_numbers<[1], [0], [0], [1], [0, 0, 1, 1], [], []>} : vector<128x64xbf16>, vector<64x64xbf16>, vector<128x64xf32> -> vector<128x64xf32>
    %138 = arith.addf %131, %137 : vector<128x64xf32>
    %c0_110 = arith.constant 0 : index
    %c0_111 = arith.constant 0 : index
    %139 = vector.load %arg11[%c0_110, %c0_111] : memref<1x64xf32, #tpu.memory_space<vmem>>, vector<1x64xf32>
    %140 = vector.broadcast %139 : vector<1x64xf32> to vector<128x64xf32>
    %141 = arith.addf %138, %140 : vector<128x64xf32>
    %142 = math.exp %141 : vector<128x64xf32>
    %cst_112 = arith.constant 1.000000e+00 : f32
    %143 = vector.broadcast %cst_112 : f32 to vector<128x64xf32>
    %144 = arith.addf %143, %142 : vector<128x64xf32>
    %cst_113 = arith.constant 1.000000e+00 : f32
    %145 = vector.broadcast %cst_113 : f32 to vector<128x64xf32>
    %146 = arith.addf %145, %142 : vector<128x64xf32>
    %147 = arith.mulf %144, %146 : vector<128x64xf32>
    %cst_114 = arith.constant 1.000000e+00 : f32
    %148 = vector.broadcast %cst_114 : f32 to vector<128x64xf32>
    %149 = arith.addf %147, %148 : vector<128x64xf32>
    %cst_115 = arith.constant 2.000000e+00 : f32
    %150 = vector.broadcast %cst_115 : f32 to vector<128x64xf32>
    %151 = arith.mulf %150, %141 : vector<128x64xf32>
    %152 = arith.divf %151, %149 : vector<128x64xf32>
    %153 = arith.subf %141, %152 : vector<128x64xf32>
    %154 = arith.addf %54, %153 : vector<128x64xf32>
    %155 = arith.truncf %154 : vector<128x64xf32> to vector<128x64xbf16>
    %c0_116 = arith.constant 0 : index
    %c0_117 = arith.constant 0 : index
    %156 = vector.load %arg12[%c0_116, %c0_117] : memref<64x64xbf16, #tpu.memory_space<vmem>>, vector<64x64xbf16>
    %cst_118 = arith.constant dense<0.000000e+00> : vector<128x64xf32>
    %157 = tpu.matmul %155, %156, %cst_118 {dimension_numbers = #tpu.dot_dimension_numbers<[1], [0], [0], [1], [0, 0, 1, 1], [], []>} : vector<128x64xbf16>, vector<64x64xbf16>, vector<128x64xf32> -> vector<128x64xf32>
    %c0_119 = arith.constant 0 : index
    %c0_120 = arith.constant 0 : index
    %158 = vector.load %arg13[%c0_119, %c0_120] : memref<1x64xf32, #tpu.memory_space<vmem>>, vector<1x64xf32>
    %159 = vector.broadcast %158 : vector<1x64xf32> to vector<128x64xf32>
    %160 = arith.addf %157, %159 : vector<128x64xf32>
    %161 = math.exp %160 : vector<128x64xf32>
    %cst_121 = arith.constant 1.000000e+00 : f32
    %162 = vector.broadcast %cst_121 : f32 to vector<128x64xf32>
    %163 = arith.addf %162, %161 : vector<128x64xf32>
    %cst_122 = arith.constant 1.000000e+00 : f32
    %164 = vector.broadcast %cst_122 : f32 to vector<128x64xf32>
    %165 = arith.addf %164, %161 : vector<128x64xf32>
    %166 = arith.mulf %163, %165 : vector<128x64xf32>
    %cst_123 = arith.constant 1.000000e+00 : f32
    %167 = vector.broadcast %cst_123 : f32 to vector<128x64xf32>
    %168 = arith.addf %166, %167 : vector<128x64xf32>
    %cst_124 = arith.constant 2.000000e+00 : f32
    %169 = vector.broadcast %cst_124 : f32 to vector<128x64xf32>
    %170 = arith.mulf %169, %160 : vector<128x64xf32>
    %171 = arith.divf %170, %168 : vector<128x64xf32>
    %172 = arith.subf %160, %171 : vector<128x64xf32>
    %173 = vector.shape_cast %172 : vector<128x64xf32> to vector<2x8x8x64xf32>
    %c0_125 = arith.constant 0 : index
    %c1_126 = arith.constant 1 : index
    %c1_127 = arith.constant 1 : index
    %c0_128 = arith.constant 0 : index
    %174 = vector.load %arg22[%c0_125, %c1_126, %c1_127, %c0_128] : memref<2x10x10x64xf32, #tpu.memory_space<vmem>>, vector<2x8x8x64xf32>
    tpu.vector_store %arg22[%c0_125, %c1_126, %c1_127, %c0_128], %173 {strides = array<i32>} : memref<2x10x10x64xf32, #tpu.memory_space<vmem>>, vector<2x8x8x64xf32>,
    %cst_129 = arith.constant 0.000000e+00 : f32
    %175 = vector.broadcast %cst_129 : f32 to vector<128x64xf32>
    %c0_130 = arith.constant 0 : index
    %c0_131 = arith.constant 0 : index
    %c0_132 = arith.constant 0 : index
    %c0_133 = arith.constant 0 : index
    %176 = vector.load %arg22[%c0_130, %c0_131, %c0_132, %c0_133] : memref<2x10x10x64xf32, #tpu.memory_space<vmem>>, vector<2x8x8x64xf32>
    %177 = vector.shape_cast %176 : vector<2x8x8x64xf32> to vector<128x64xf32>
    %178 = arith.truncf %177 : vector<128x64xf32> to vector<128x64xbf16>
    %c0_134 = arith.constant 0 : index
    %c0_135 = arith.constant 0 : index
    %c0_136 = arith.constant 0 : index
    %179 = vector.load %arg14[%c0_134, %c0_135, %c0_136] : memref<9x64x64xbf16, #tpu.memory_space<vmem>>, vector<1x64x64xbf16>
    %180 = vector.shape_cast %179 : vector<1x64x64xbf16> to vector<64x64xbf16>
    %cst_137 = arith.constant dense<0.000000e+00> : vector<128x64xf32>
    %181 = tpu.matmul %178, %180, %cst_137 {dimension_numbers = #tpu.dot_dimension_numbers<[1], [0], [0], [1], [0, 0, 1, 1], [], []>} : vector<128x64xbf16>, vector<64x64xbf16>, vector<128x64xf32> -> vector<128x64xf32>
    %182 = arith.addf %175, %181 : vector<128x64xf32>
    %c0_138 = arith.constant 0 : index
    %c0_139 = arith.constant 0 : index
    %c1_140 = arith.constant 1 : index
    %c0_141 = arith.constant 0 : index
    %183 = vector.load %arg22[%c0_138, %c0_139, %c1_140, %c0_141] : memref<2x10x10x64xf32, #tpu.memory_space<vmem>>, vector<2x8x8x64xf32>
    %184 = vector.shape_cast %183 : vector<2x8x8x64xf32> to vector<128x64xf32>
    %185 = arith.truncf %184 : vector<128x64xf32> to vector<128x64xbf16>
    %c1_142 = arith.constant 1 : index
    %c0_143 = arith.constant 0 : index
    %c0_144 = arith.constant 0 : index
    %186 = vector.load %arg14[%c1_142, %c0_143, %c0_144] : memref<9x64x64xbf16, #tpu.memory_space<vmem>>, vector<1x64x64xbf16>
    %187 = vector.shape_cast %186 : vector<1x64x64xbf16> to vector<64x64xbf16>
    %cst_145 = arith.constant dense<0.000000e+00> : vector<128x64xf32>
    %188 = tpu.matmul %185, %187, %cst_145 {dimension_numbers = #tpu.dot_dimension_numbers<[1], [0], [0], [1], [0, 0, 1, 1], [], []>} : vector<128x64xbf16>, vector<64x64xbf16>, vector<128x64xf32> -> vector<128x64xf32>
    %189 = arith.addf %182, %188 : vector<128x64xf32>
    %c0_146 = arith.constant 0 : index
    %c0_147 = arith.constant 0 : index
    %c2_148 = arith.constant 2 : index
    %c0_149 = arith.constant 0 : index
    %190 = vector.load %arg22[%c0_146, %c0_147, %c2_148, %c0_149] : memref<2x10x10x64xf32, #tpu.memory_space<vmem>>, vector<2x8x8x64xf32>
    %191 = vector.shape_cast %190 : vector<2x8x8x64xf32> to vector<128x64xf32>
    %192 = arith.truncf %191 : vector<128x64xf32> to vector<128x64xbf16>
    %c2_150 = arith.constant 2 : index
    %c0_151 = arith.constant 0 : index
    %c0_152 = arith.constant 0 : index
    %193 = vector.load %arg14[%c2_150, %c0_151, %c0_152] : memref<9x64x64xbf16, #tpu.memory_space<vmem>>, vector<1x64x64xbf16>
    %194 = vector.shape_cast %193 : vector<1x64x64xbf16> to vector<64x64xbf16>
    %cst_153 = arith.constant dense<0.000000e+00> : vector<128x64xf32>
    %195 = tpu.matmul %192, %194, %cst_153 {dimension_numbers = #tpu.dot_dimension_numbers<[1], [0], [0], [1], [0, 0, 1, 1], [], []>} : vector<128x64xbf16>, vector<64x64xbf16>, vector<128x64xf32> -> vector<128x64xf32>
    %196 = arith.addf %189, %195 : vector<128x64xf32>
    %c0_154 = arith.constant 0 : index
    %c1_155 = arith.constant 1 : index
    %c0_156 = arith.constant 0 : index
    %c0_157 = arith.constant 0 : index
    %197 = vector.load %arg22[%c0_154, %c1_155, %c0_156, %c0_157] : memref<2x10x10x64xf32, #tpu.memory_space<vmem>>, vector<2x8x8x64xf32>
    %198 = vector.shape_cast %197 : vector<2x8x8x64xf32> to vector<128x64xf32>
    %199 = arith.truncf %198 : vector<128x64xf32> to vector<128x64xbf16>
    %c3_158 = arith.constant 3 : index
    %c0_159 = arith.constant 0 : index
    %c0_160 = arith.constant 0 : index
    %200 = vector.load %arg14[%c3_158, %c0_159, %c0_160] : memref<9x64x64xbf16, #tpu.memory_space<vmem>>, vector<1x64x64xbf16>
    %201 = vector.shape_cast %200 : vector<1x64x64xbf16> to vector<64x64xbf16>
    %cst_161 = arith.constant dense<0.000000e+00> : vector<128x64xf32>
    %202 = tpu.matmul %199, %201, %cst_161 {dimension_numbers = #tpu.dot_dimension_numbers<[1], [0], [0], [1], [0, 0, 1, 1], [], []>} : vector<128x64xbf16>, vector<64x64xbf16>, vector<128x64xf32> -> vector<128x64xf32>
    %203 = arith.addf %196, %202 : vector<128x64xf32>
    %c0_162 = arith.constant 0 : index
    %c1_163 = arith.constant 1 : index
    %c1_164 = arith.constant 1 : index
    %c0_165 = arith.constant 0 : index
    %204 = vector.load %arg22[%c0_162, %c1_163, %c1_164, %c0_165] : memref<2x10x10x64xf32, #tpu.memory_space<vmem>>, vector<2x8x8x64xf32>
    %205 = vector.shape_cast %204 : vector<2x8x8x64xf32> to vector<128x64xf32>
    %206 = arith.truncf %205 : vector<128x64xf32> to vector<128x64xbf16>
    %c4_166 = arith.constant 4 : index
    %c0_167 = arith.constant 0 : index
    %c0_168 = arith.constant 0 : index
    %207 = vector.load %arg14[%c4_166, %c0_167, %c0_168] : memref<9x64x64xbf16, #tpu.memory_space<vmem>>, vector<1x64x64xbf16>
    %208 = vector.shape_cast %207 : vector<1x64x64xbf16> to vector<64x64xbf16>
    %cst_169 = arith.constant dense<0.000000e+00> : vector<128x64xf32>
    %209 = tpu.matmul %206, %208, %cst_169 {dimension_numbers = #tpu.dot_dimension_numbers<[1], [0], [0], [1], [0, 0, 1, 1], [], []>} : vector<128x64xbf16>, vector<64x64xbf16>, vector<128x64xf32> -> vector<128x64xf32>
    %210 = arith.addf %203, %209 : vector<128x64xf32>
    %c0_170 = arith.constant 0 : index
    %c1_171 = arith.constant 1 : index
    %c2_172 = arith.constant 2 : index
    %c0_173 = arith.constant 0 : index
    %211 = vector.load %arg22[%c0_170, %c1_171, %c2_172, %c0_173] : memref<2x10x10x64xf32, #tpu.memory_space<vmem>>, vector<2x8x8x64xf32>
    %212 = vector.shape_cast %211 : vector<2x8x8x64xf32> to vector<128x64xf32>
    %213 = arith.truncf %212 : vector<128x64xf32> to vector<128x64xbf16>
    %c5_174 = arith.constant 5 : index
    %c0_175 = arith.constant 0 : index
    %c0_176 = arith.constant 0 : index
    %214 = vector.load %arg14[%c5_174, %c0_175, %c0_176] : memref<9x64x64xbf16, #tpu.memory_space<vmem>>, vector<1x64x64xbf16>
    %215 = vector.shape_cast %214 : vector<1x64x64xbf16> to vector<64x64xbf16>
    %cst_177 = arith.constant dense<0.000000e+00> : vector<128x64xf32>
    %216 = tpu.matmul %213, %215, %cst_177 {dimension_numbers = #tpu.dot_dimension_numbers<[1], [0], [0], [1], [0, 0, 1, 1], [], []>} : vector<128x64xbf16>, vector<64x64xbf16>, vector<128x64xf32> -> vector<128x64xf32>
    %217 = arith.addf %210, %216 : vector<128x64xf32>
    %c0_178 = arith.constant 0 : index
    %c2_179 = arith.constant 2 : index
    %c0_180 = arith.constant 0 : index
    %c0_181 = arith.constant 0 : index
    %218 = vector.load %arg22[%c0_178, %c2_179, %c0_180, %c0_181] : memref<2x10x10x64xf32, #tpu.memory_space<vmem>>, vector<2x8x8x64xf32>
    %219 = vector.shape_cast %218 : vector<2x8x8x64xf32> to vector<128x64xf32>
    %220 = arith.truncf %219 : vector<128x64xf32> to vector<128x64xbf16>
    %c6_182 = arith.constant 6 : index
    %c0_183 = arith.constant 0 : index
    %c0_184 = arith.constant 0 : index
    %221 = vector.load %arg14[%c6_182, %c0_183, %c0_184] : memref<9x64x64xbf16, #tpu.memory_space<vmem>>, vector<1x64x64xbf16>
    %222 = vector.shape_cast %221 : vector<1x64x64xbf16> to vector<64x64xbf16>
    %cst_185 = arith.constant dense<0.000000e+00> : vector<128x64xf32>
    %223 = tpu.matmul %220, %222, %cst_185 {dimension_numbers = #tpu.dot_dimension_numbers<[1], [0], [0], [1], [0, 0, 1, 1], [], []>} : vector<128x64xbf16>, vector<64x64xbf16>, vector<128x64xf32> -> vector<128x64xf32>
    %224 = arith.addf %217, %223 : vector<128x64xf32>
    %c0_186 = arith.constant 0 : index
    %c2_187 = arith.constant 2 : index
    %c1_188 = arith.constant 1 : index
    %c0_189 = arith.constant 0 : index
    %225 = vector.load %arg22[%c0_186, %c2_187, %c1_188, %c0_189] : memref<2x10x10x64xf32, #tpu.memory_space<vmem>>, vector<2x8x8x64xf32>
    %226 = vector.shape_cast %225 : vector<2x8x8x64xf32> to vector<128x64xf32>
    %227 = arith.truncf %226 : vector<128x64xf32> to vector<128x64xbf16>
    %c7_190 = arith.constant 7 : index
    %c0_191 = arith.constant 0 : index
    %c0_192 = arith.constant 0 : index
    %228 = vector.load %arg14[%c7_190, %c0_191, %c0_192] : memref<9x64x64xbf16, #tpu.memory_space<vmem>>, vector<1x64x64xbf16>
    %229 = vector.shape_cast %228 : vector<1x64x64xbf16> to vector<64x64xbf16>
    %cst_193 = arith.constant dense<0.000000e+00> : vector<128x64xf32>
    %230 = tpu.matmul %227, %229, %cst_193 {dimension_numbers = #tpu.dot_dimension_numbers<[1], [0], [0], [1], [0, 0, 1, 1], [], []>} : vector<128x64xbf16>, vector<64x64xbf16>, vector<128x64xf32> -> vector<128x64xf32>
    %231 = arith.addf %224, %230 : vector<128x64xf32>
    %c0_194 = arith.constant 0 : index
    %c2_195 = arith.constant 2 : index
    %c2_196 = arith.constant 2 : index
    %c0_197 = arith.constant 0 : index
    %232 = vector.load %arg22[%c0_194, %c2_195, %c2_196, %c0_197] : memref<2x10x10x64xf32, #tpu.memory_space<vmem>>, vector<2x8x8x64xf32>
    %233 = vector.shape_cast %232 : vector<2x8x8x64xf32> to vector<128x64xf32>
    %234 = arith.truncf %233 : vector<128x64xf32> to vector<128x64xbf16>
    %c8_198 = arith.constant 8 : index
    %c0_199 = arith.constant 0 : index
    %c0_200 = arith.constant 0 : index
    %235 = vector.load %arg14[%c8_198, %c0_199, %c0_200] : memref<9x64x64xbf16, #tpu.memory_space<vmem>>, vector<1x64x64xbf16>
    %236 = vector.shape_cast %235 : vector<1x64x64xbf16> to vector<64x64xbf16>
    %cst_201 = arith.constant dense<0.000000e+00> : vector<128x64xf32>
    %237 = tpu.matmul %234, %236, %cst_201 {dimension_numbers = #tpu.dot_dimension_numbers<[1], [0], [0], [1], [0, 0, 1, 1], [], []>} : vector<128x64xbf16>, vector<64x64xbf16>, vector<128x64xf32> -> vector<128x64xf32>
    %238 = arith.addf %231, %237 : vector<128x64xf32>
    %c0_202 = arith.constant 0 : index
    %c0_203 = arith.constant 0 : index
    %239 = vector.load %arg15[%c0_202, %c0_203] : memref<1x64xf32, #tpu.memory_space<vmem>>, vector<1x64xf32>
    %240 = vector.broadcast %239 : vector<1x64xf32> to vector<128x64xf32>
    %241 = arith.addf %238, %240 : vector<128x64xf32>
    %242 = math.exp %241 : vector<128x64xf32>
    %cst_204 = arith.constant 1.000000e+00 : f32
    %243 = vector.broadcast %cst_204 : f32 to vector<128x64xf32>
    %244 = arith.addf %243, %242 : vector<128x64xf32>
    %cst_205 = arith.constant 1.000000e+00 : f32
    %245 = vector.broadcast %cst_205 : f32 to vector<128x64xf32>
    %246 = arith.addf %245, %242 : vector<128x64xf32>
    %247 = arith.mulf %244, %246 : vector<128x64xf32>
    %cst_206 = arith.constant 1.000000e+00 : f32
    %248 = vector.broadcast %cst_206 : f32 to vector<128x64xf32>
    %249 = arith.addf %247, %248 : vector<128x64xf32>
    %cst_207 = arith.constant 2.000000e+00 : f32
    %250 = vector.broadcast %cst_207 : f32 to vector<128x64xf32>
    %251 = arith.mulf %250, %241 : vector<128x64xf32>
    %252 = arith.divf %251, %249 : vector<128x64xf32>
    %253 = arith.subf %241, %252 : vector<128x64xf32>
    %254 = arith.addf %154, %253 : vector<128x64xf32>
    %255 = arith.truncf %254 : vector<128x64xf32> to vector<128x64xbf16>
    %c0_208 = arith.constant 0 : index
    %c0_209 = arith.constant 0 : index
    %256 = vector.load %arg16[%c0_208, %c0_209] : memref<64x64xbf16, #tpu.memory_space<vmem>>, vector<64x64xbf16>
    %cst_210 = arith.constant dense<0.000000e+00> : vector<128x64xf32>
    %257 = tpu.matmul %255, %256, %cst_210 {dimension_numbers = #tpu.dot_dimension_numbers<[1], [0], [0], [1], [0, 0, 1, 1], [], []>} : vector<128x64xbf16>, vector<64x64xbf16>, vector<128x64xf32> -> vector<128x64xf32>
    %c0_211 = arith.constant 0 : index
    %c0_212 = arith.constant 0 : index
    %258 = vector.load %arg17[%c0_211, %c0_212] : memref<1x64xf32, #tpu.memory_space<vmem>>, vector<1x64xf32>
    %259 = vector.broadcast %258 : vector<1x64xf32> to vector<128x64xf32>
    %260 = arith.addf %257, %259 : vector<128x64xf32>
    %261 = math.exp %260 : vector<128x64xf32>
    %cst_213 = arith.constant 1.000000e+00 : f32
    %262 = vector.broadcast %cst_213 : f32 to vector<128x64xf32>
    %263 = arith.addf %262, %261 : vector<128x64xf32>
    %cst_214 = arith.constant 1.000000e+00 : f32
    %264 = vector.broadcast %cst_214 : f32 to vector<128x64xf32>
    %265 = arith.addf %264, %261 : vector<128x64xf32>
    %266 = arith.mulf %263, %265 : vector<128x64xf32>
    %cst_215 = arith.constant 1.000000e+00 : f32
    %267 = vector.broadcast %cst_215 : f32 to vector<128x64xf32>
    %268 = arith.addf %266, %267 : vector<128x64xf32>
    %cst_216 = arith.constant 2.000000e+00 : f32
    %269 = vector.broadcast %cst_216 : f32 to vector<128x64xf32>
    %270 = arith.mulf %269, %260 : vector<128x64xf32>
    %271 = arith.divf %270, %268 : vector<128x64xf32>
    %272 = arith.subf %260, %271 : vector<128x64xf32>
    %273 = arith.truncf %272 : vector<128x64xf32> to vector<128x64xbf16>
    %c0_217 = arith.constant 0 : index
    %c0_218 = arith.constant 0 : index
    %274 = vector.load %arg18[%c0_217, %c0_218] : memref<64x128xbf16, #tpu.memory_space<vmem>>, vector<64x128xbf16>
    %cst_219 = arith.constant dense<0.000000e+00> : vector<128x128xf32>
    %275 = tpu.matmul %273, %274, %cst_219 {dimension_numbers = #tpu.dot_dimension_numbers<[1], [0], [0], [1], [0, 0, 1, 1], [], []>} : vector<128x64xbf16>, vector<64x128xbf16>, vector<128x128xf32> -> vector<128x128xf32>
    %276 = arith.truncf %37 : vector<128x64xf32> to vector<128x64xbf16>
    %c0_220 = arith.constant 0 : index
    %c0_221 = arith.constant 0 : index
    %277 = vector.load %arg19[%c0_220, %c0_221] : memref<64x128xbf16, #tpu.memory_space<vmem>>, vector<64x128xbf16>
    %cst_222 = arith.constant dense<0.000000e+00> : vector<128x128xf32>
    %278 = tpu.matmul %276, %277, %cst_222 {dimension_numbers = #tpu.dot_dimension_numbers<[1], [0], [0], [1], [0, 0, 1, 1], [], []>} : vector<128x64xbf16>, vector<64x128xbf16>, vector<128x128xf32> -> vector<128x128xf32>
    %279 = arith.addf %275, %278 : vector<128x128xf32>
    %c0_223 = arith.constant 0 : index
    %c0_224 = arith.constant 0 : index
    %280 = vector.load %arg20[%c0_223, %c0_224] : memref<1x128xf32, #tpu.memory_space<vmem>>, vector<1x128xf32>
    %281 = vector.broadcast %280 : vector<1x128xf32> to vector<128x128xf32>
    %282 = arith.addf %279, %281 : vector<128x128xf32>
    %283 = math.exp %282 : vector<128x128xf32>
    %cst_225 = arith.constant 1.000000e+00 : f32
    %284 = vector.broadcast %cst_225 : f32 to vector<128x128xf32>
    %285 = arith.addf %284, %283 : vector<128x128xf32>
    %cst_226 = arith.constant 1.000000e+00 : f32
    %286 = vector.broadcast %cst_226 : f32 to vector<128x128xf32>
    %287 = arith.addf %286, %283 : vector<128x128xf32>
    %288 = arith.mulf %285, %287 : vector<128x128xf32>
    %cst_227 = arith.constant 1.000000e+00 : f32
    %289 = vector.broadcast %cst_227 : f32 to vector<128x128xf32>
    %290 = arith.addf %288, %289 : vector<128x128xf32>
    %cst_228 = arith.constant 2.000000e+00 : f32
    %291 = vector.broadcast %cst_228 : f32 to vector<128x128xf32>
    %292 = arith.mulf %291, %282 : vector<128x128xf32>
    %293 = arith.divf %292, %290 : vector<128x128xf32>
    %294 = arith.subf %282, %293 : vector<128x128xf32>
    %c0_229 = arith.constant 0 : index
    %c0_230 = arith.constant 0 : index
    %295 = vector.load %arg21[%c0_229, %c0_230] : memref<128x128xf32, #tpu.memory_space<vmem>>, vector<128x128xf32>
    tpu.vector_store %arg21[%c0_229, %c0_230], %294 {strides = array<i32>} : memref<128x128xf32, #tpu.memory_space<vmem>>, vector<128x128xf32>,
    return
  }
  func.func @transform_0(%arg0: i32) -> (i32, i32) {
    %c0_i32 = arith.constant 0 : i32
    %c0_i32_0 = arith.constant 0 : i32
    %c0_i32_1 = arith.constant 0 : i32
    return %c0_i32, %c0_i32_0 : i32, i32
  }
  func.func @transform_1(%arg0: i32) -> (i32, i32) {
    %c0_i32 = arith.constant 0 : i32
    %c0_i32_0 = arith.constant 0 : i32
    %c0_i32_1 = arith.constant 0 : i32
    return %c0_i32, %c0_i32_0 : i32, i32
  }
  func.func @transform_2(%arg0: i32) -> (i32, i32) {
    %c0_i32 = arith.constant 0 : i32
    %c0_i32_0 = arith.constant 0 : i32
    %c0_i32_1 = arith.constant 0 : i32
    return %c0_i32, %c0_i32_0 : i32, i32
  }
  func.func @transform_3(%arg0: i32) -> (i32, i32) {
    %c0_i32 = arith.constant 0 : i32
    %c0_i32_0 = arith.constant 0 : i32
    %c0_i32_1 = arith.constant 0 : i32
    return %c0_i32, %c0_i32_0 : i32, i32
  }
  func.func @transform_4(%arg0: i32) -> (i32, i32) {
    %c0_i32 = arith.constant 0 : i32
    %c0_i32_0 = arith.constant 0 : i32
    %c0_i32_1 = arith.constant 0 : i32
    return %c0_i32, %c0_i32_0 : i32, i32
  }
  func.func @transform_5(%arg0: i32) -> (i32, i32) {
    %c0_i32 = arith.constant 0 : i32
    %c0_i32_0 = arith.constant 0 : i32
    %c0_i32_1 = arith.constant 0 : i32
    return %c0_i32, %c0_i32_0 : i32, i32
  }
  func.func @transform_6(%arg0: i32) -> (i32, i32) {
    %c0_i32 = arith.constant 0 : i32
    %c0_i32_0 = arith.constant 0 : i32
    %c0_i32_1 = arith.constant 0 : i32
    return %c0_i32, %c0_i32_0 : i32, i32
  }
  func.func @transform_7(%arg0: i32) -> (i32, i32) {
    %c0_i32 = arith.constant 0 : i32
    %c0_i32_0 = arith.constant 0 : i32
    %c0_i32_1 = arith.constant 0 : i32
    return %c0_i32, %c0_i32_0 : i32, i32
  }
  func.func @transform_8(%arg0: i32) -> (i32, i32) {
    %c0_i32 = arith.constant 0 : i32
    %c0_i32_0 = arith.constant 0 : i32
    %c0_i32_1 = arith.constant 0 : i32
    return %c0_i32, %c0_i32_0 : i32, i32
  }
  func.func @transform_9(%arg0: i32) -> (i32, i32, i32) {
    %c0_i32 = arith.constant 0 : i32
    %c0_i32_0 = arith.constant 0 : i32
    %c0_i32_1 = arith.constant 0 : i32
    %c0_i32_2 = arith.constant 0 : i32
    return %c0_i32, %c0_i32_0, %c0_i32_1 : i32, i32, i32
  }
  func.func @transform_10(%arg0: i32) -> (i32, i32) {
    %c0_i32 = arith.constant 0 : i32
    %c0_i32_0 = arith.constant 0 : i32
    %c0_i32_1 = arith.constant 0 : i32
    return %c0_i32, %c0_i32_0 : i32, i32
  }
  func.func @transform_11(%arg0: i32) -> (i32, i32) {
    %c0_i32 = arith.constant 0 : i32
    %c0_i32_0 = arith.constant 0 : i32
    %c0_i32_1 = arith.constant 0 : i32
    return %c0_i32, %c0_i32_0 : i32, i32
  }
  func.func @transform_12(%arg0: i32) -> (i32, i32) {
    %c0_i32 = arith.constant 0 : i32
    %c0_i32_0 = arith.constant 0 : i32
    %c0_i32_1 = arith.constant 0 : i32
    return %c0_i32, %c0_i32_0 : i32, i32
  }
  func.func @transform_13(%arg0: i32) -> (i32, i32, i32) {
    %c0_i32 = arith.constant 0 : i32
    %c0_i32_0 = arith.constant 0 : i32
    %c0_i32_1 = arith.constant 0 : i32
    %c0_i32_2 = arith.constant 0 : i32
    return %c0_i32, %c0_i32_0, %c0_i32_1 : i32, i32, i32
  }
  func.func @transform_14(%arg0: i32) -> (i32, i32) {
    %c0_i32 = arith.constant 0 : i32
    %c0_i32_0 = arith.constant 0 : i32
    %c0_i32_1 = arith.constant 0 : i32
    return %c0_i32, %c0_i32_0 : i32, i32
  }
  func.func @transform_15(%arg0: i32) -> (i32, i32) {
    %c0_i32 = arith.constant 0 : i32
    %c0_i32_0 = arith.constant 0 : i32
    %c0_i32_1 = arith.constant 0 : i32
    return %c0_i32, %c0_i32_0 : i32, i32
  }
  func.func @transform_16(%arg0: i32) -> (i32, i32) {
    %c0_i32 = arith.constant 0 : i32
    %c0_i32_0 = arith.constant 0 : i32
    %c0_i32_1 = arith.constant 0 : i32
    return %c0_i32, %c0_i32_0 : i32, i32
  }
  func.func @transform_17(%arg0: i32) -> (i32, i32) {
    %c0_i32 = arith.constant 0 : i32
    %c0_i32_0 = arith.constant 0 : i32
    %c0_i32_1 = arith.constant 0 : i32
    return %c0_i32, %c0_i32_0 : i32, i32
  }
  func.func @transform_18(%arg0: i32) -> (i32, i32) {
    %c0_i32 = arith.constant 0 : i32
    %c0_i32_0 = arith.constant 0 : i32
    %c0_i32_1 = arith.constant 0 : i32
    return %c0_i32, %c0_i32_0 : i32, i32
  }
  func.func @transform_19(%arg0: i32) -> (i32, i32) {
    %c0_i32 = arith.constant 0 : i32
    %c0_i32_0 = arith.constant 0 : i32
    %c0_i32_1 = arith.constant 0 : i32
    return %c0_i32, %c0_i32_0 : i32, i32
  }
  func.func @transform_20(%arg0: i32) -> (i32, i32) {
    %c0_i32 = arith.constant 0 : i32
    %c0_i32_0 = arith.constant 0 : i32
    %c0_i32_1 = arith.constant 0 : i32
    return %c0_i32, %c0_i32_0 : i32, i32
  }
}

</mosaic_0001>

<llo_original>
// kernel: downsample2_forward.1
$region0: #{downsample2_forward.1}
  #allocation0 [shape = 'u32[]', space=smem, size = 0x4, offset = 0x4, fixed_abs, tag = 'smem constant byte address 0x4 - core index']
  #allocation1 [shape = 'u32[144,128]{1,0:T(1,128)}', space=vmem, size = 0x12000, scoped, tag = 'internal scratch']
  #allocation2 [shape = 'f32[2,10,10,64]{3,2,1,0:T(8,128)}', space=vmem, size = 0x28000, scoped, tag = 'scratch operand']
  %s0 = inlined_call_operand.vmem [shape: bf16[128,576], index: 0, kind: input, shape index: {}]
  %s1 = inlined_call_operand.vmem [shape: bf16[576,128], index: 1, kind: input, shape index: {}]
  %s2 = inlined_call_operand.vmem [shape: f32[1,128], index: 2, kind: input, shape index: {}]
  %s3 = inlined_call_operand.vmem [shape: bf16[128,64], index: 3, kind: input, shape index: {}]
  %s4 = inlined_call_operand.vmem [shape: f32[1,64], index: 4, kind: input, shape index: {}]
  %s5 = inlined_call_operand.vmem [shape: bf16[128,64], index: 5, kind: input, shape index: {}]
  %s6 = inlined_call_operand.vmem [shape: f32[1,64], index: 6, kind: input, shape index: {}]
  %s7 = inlined_call_operand.vmem [shape: bf16[64,64], index: 7, kind: input, shape index: {}]
  %s8 = inlined_call_operand.vmem [shape: f32[1,64], index: 8, kind: input, shape index: {}]
  %s9 = inlined_call_operand.vmem [shape: bf16[9,64,64], index: 9, kind: input, shape index: {}]
  %s10 = inlined_call_operand.vmem [shape: f32[1,64], index: 10, kind: input, shape index: {}]
  %s11 = inlined_call_operand.vmem [shape: bf16[64,64], index: 11, kind: input, shape index: {}]
  %s12 = inlined_call_operand.vmem [shape: f32[1,64], index: 12, kind: input, shape index: {}]
  %s13 = inlined_call_operand.vmem [shape: bf16[9,64,64], index: 13, kind: input, shape index: {}]
  %s14 = inlined_call_operand.vmem [shape: f32[1,64], index: 14, kind: input, shape index: {}]
  %s15 = inlined_call_operand.vmem [shape: bf16[64,64], index: 15, kind: input, shape index: {}]
  %s16 = inlined_call_operand.vmem [shape: f32[1,64], index: 16, kind: input, shape index: {}]
  %s17 = inlined_call_operand.vmem [shape: bf16[64,128], index: 17, kind: input, shape index: {}]
  %s18 = inlined_call_operand.vmem [shape: bf16[64,128], index: 18, kind: input, shape index: {}]
  %s19 = inlined_call_operand.vmem [shape: f32[1,128], index: 19, kind: input, shape index: {}]
  %s20 = inlined_call_operand.hbm [shape: f32[128,128], index: 20, kind: output, shape index: {}]
  %s21 = sld [smem:[#allocation0]]
  $region90: #{downsample2_forward.1} parent=0
    _
  %s23 = ssub.s32 1, %s21
  %s24 = scalar_select 0, %s23, %s21
  $region1: #{downsample2_forward.1} parent=0
    #allocation3 [shape = 'u8[65536]{0}', space=vmem, size = 0x10000, scoped, tag = 'output window, operand 0, single buffered']
    #allocation4 [shape = 's32[1]{0}', space=sflag, size = 0x4, scoped, tag = 'scoped memory for downsample2_forward.1']
    %25 = vsyncpa [#allocation4], 0
    // Predicated region
    $region2: #{downsample2_forward.1} parent=1 // pred_check
      _
    $region3: #{downsample2_forward.1} parent=1 // pred_check_branch
      %27 = sbr.rel (0) target = $region5
    $region4: #{downsample2_forward.1} parent=1 // pred_region
      _
    $region5: #{downsample2_forward.1} parent=1 // pred_fallthru
      _
    // Predicated region
    $region6: #{downsample2_forward.1} parent=1 // pred_check
      _
    $region7: #{downsample2_forward.1} parent=1 // pred_check_branch
      %29 = sbr.rel (0) target = $region9
    $region8: #{downsample2_forward.1} parent=1 // pred_region
      _
    $region9: #{downsample2_forward.1} parent=1 // pred_fallthru
      _
    // Predicated region
    $region10: #{downsample2_forward.1} parent=1 // pred_check
      _
    $region11: #{downsample2_forward.1} parent=1 // pred_check_branch
      %31 = sbr.rel (0) target = $region13
    $region12: #{downsample2_forward.1} parent=1 // pred_region
      _
    $region13: #{downsample2_forward.1} parent=1 // pred_fallthru
      _
    // Predicated region
    $region14: #{downsample2_forward.1} parent=1 // pred_check
      _
    $region15: #{downsample2_forward.1} parent=1 // pred_check_branch
      %33 = sbr.rel (0) target = $region17
    $region16: #{downsample2_forward.1} parent=1 // pred_region
      _
    $region17: #{downsample2_forward.1} parent=1 // pred_fallthru
      _
    // Predicated region
    $region18: #{downsample2_forward.1} parent=1 // pred_check
      _
    $region19: #{downsample2_forward.1} parent=1 // pred_check_branch
      %35 = sbr.rel (0) target = $region21
    $region20: #{downsample2_forward.1} parent=1 // pred_region
      _
    $region21: #{downsample2_forward.1} parent=1 // pred_fallthru
      _
    // Predicated region
    $region22: #{downsample2_forward.1} parent=1 // pred_check
      _
    $region23: #{downsample2_forward.1} parent=1 // pred_check_branch
      %37 = sbr.rel (0) target = $region25
    $region24: #{downsample2_forward.1} parent=1 // pred_region
      _
    $region25: #{downsample2_forward.1} parent=1 // pred_fallthru
      _
    // Predicated region
    $region26: #{downsample2_forward.1} parent=1 // pred_check
      _
    $region27: #{downsample2_forward.1} parent=1 // pred_check_branch
      %39 = sbr.rel (0) target = $region29
    $region28: #{downsample2_forward.1} parent=1 // pred_region
      _
    $region29: #{downsample2_forward.1} parent=1 // pred_fallthru
      _
    // Predicated region
    $region30: #{downsample2_forward.1} parent=1 // pred_check
      _
    $region31: #{downsample2_forward.1} parent=1 // pred_check_branch
      %41 = sbr.rel (0) target = $region33
    $region32: #{downsample2_forward.1} parent=1 // pred_region
      _
    $region33: #{downsample2_forward.1} parent=1 // pred_fallthru
      _
    // Predicated region
    $region34: #{downsample2_forward.1} parent=1 // pred_check
      _
    $region35: #{downsample2_forward.1} parent=1 // pred_check_branch
      %43 = sbr.rel (0) target = $region37
    $region36: #{downsample2_forward.1} parent=1 // pred_region
      _
    $region37: #{downsample2_forward.1} parent=1 // pred_fallthru
      _
    // Predicated region
    $region38: #{downsample2_forward.1} parent=1 // pred_check
      _
    $region39: #{downsample2_forward.1} parent=1 // pred_check_branch
      %45 = sbr.rel (0) target = $region41
    $region40: #{downsample2_forward.1} parent=1 // pred_region
      _
    $region41: #{downsample2_forward.1} parent=1 // pred_fallthru
      _
    // Predicated region
    $region42: #{downsample2_forward.1} parent=1 // pred_check
      _
    $region43: #{downsample2_forward.1} parent=1 // pred_check_branch
      %47 = sbr.rel (0) target = $region45
    $region44: #{downsample2_forward.1} parent=1 // pred_region
      _
    $region45: #{downsample2_forward.1} parent=1 // pred_fallthru
      _
    // Predicated region
    $region46: #{downsample2_forward.1} parent=1 // pred_check
      _
    $region47: #{downsample2_forward.1} parent=1 // pred_check_branch
      %49 = sbr.rel (0) target = $region49
    $region48: #{downsample2_forward.1} parent=1 // pred_region
      _
    $region49: #{downsample2_forward.1} parent=1 // pred_fallthru
      _
    // Predicated region
    $region50: #{downsample2_forward.1} parent=1 // pred_check
      _
    $region51: #{downsample2_forward.1} parent=1 // pred_check_branch
      %51 = sbr.rel (0) target = $region53
    $region52: #{downsample2_forward.1} parent=1 // pred_region
      _
    $region53: #{downsample2_forward.1} parent=1 // pred_fallthru
      _
    // Predicated region
    $region54: #{downsample2_forward.1} parent=1 // pred_check
      _
    $region55: #{downsample2_forward.1} parent=1 // pred_check_branch
      %53 = sbr.rel (0) target = $region57
    $region56: #{downsample2_forward.1} parent=1 // pred_region
      _
    $region57: #{downsample2_forward.1} parent=1 // pred_fallthru
      _
    // Predicated region
    $region58: #{downsample2_forward.1} parent=1 // pred_check
      _
    $region59: #{downsample2_forward.1} parent=1 // pred_check_branch
      %55 = sbr.rel (0) target = $region61
    $region60: #{downsample2_forward.1} parent=1 // pred_region
      _
    $region61: #{downsample2_forward.1} parent=1 // pred_fallthru
      _
    // Predicated region
    $region62: #{downsample2_forward.1} parent=1 // pred_check
      _
    $region63: #{downsample2_forward.1} parent=1 // pred_check_branch
      %57 = sbr.rel (0) target = $region65
    $region64: #{downsample2_forward.1} parent=1 // pred_region
      _
    $region65: #{downsample2_forward.1} parent=1 // pred_fallthru
      _
    // Predicated region
    $region66: #{downsample2_forward.1} parent=1 // pred_check
      _
    $region67: #{downsample2_forward.1} parent=1 // pred_check_branch
      %59 = sbr.rel (0) target = $region69
    $region68: #{downsample2_forward.1} parent=1 // pred_region
      _
    $region69: #{downsample2_forward.1} parent=1 // pred_fallthru
      _
    // Predicated region
    $region70: #{downsample2_forward.1} parent=1 // pred_check
      _
    $region71: #{downsample2_forward.1} parent=1 // pred_check_branch
      %61 = sbr.rel (0) target = $region73
    $region72: #{downsample2_forward.1} parent=1 // pred_region
      _
    $region73: #{downsample2_forward.1} parent=1 // pred_fallthru
      _
    // Predicated region
    $region74: #{downsample2_forward.1} parent=1 // pred_check
      _
    $region75: #{downsample2_forward.1} parent=1 // pred_check_branch
      %63 = sbr.rel (0) target = $region77
    $region76: #{downsample2_forward.1} parent=1 // pred_region
      _
    $region77: #{downsample2_forward.1} parent=1 // pred_fallthru
      _
    // Predicated region
    $region78: #{downsample2_forward.1} parent=1 // pred_check
      _
    $region79: #{downsample2_forward.1} parent=1 // pred_check_branch
      %65 = sbr.rel (0) target = $region81
    $region80: #{downsample2_forward.1} parent=1 // pred_region
      _
    $region81: #{downsample2_forward.1} parent=1 // pred_fallthru
      _
    %vm67 = vcmask 523264
    %68 = vst.msk [vmem:[#allocation2] sm:$0xff] %vm67, 0.0
    %vm69 = vcmask 517120
    %70 = vst.msk [vmem:[#allocation2 + $0x8] sm:$0x3] %vm69, 0.0
    %71 = vst.msk [vmem:[#allocation2 + $0x10] sm:$0xff] %vm67, 0.0
    %72 = vst.msk [vmem:[#allocation2 + $0x18] sm:$0x3] %vm69, 0.0
    %73 = vst.msk [vmem:[#allocation2 + $0x20] sm:$0xff] %vm67, 0.0
    %74 = vst.msk [vmem:[#allocation2 + $0x28] sm:$0x3] %vm69, 0.0
    %75 = vst.msk [vmem:[#allocation2 + $0x30] sm:$0xff] %vm67, 0.0
    %76 = vst.msk [vmem:[#allocation2 + $0x38] sm:$0x3] %vm69, 0.0
    %77 = vst.msk [vmem:[#allocation2 + $0x40] sm:$0xff] %vm67, 0.0
    %78 = vst.msk [vmem:[#allocation2 + $0x48] sm:$0x3] %vm69, 0.0
    %79 = vst.msk [vmem:[#allocation2 + $0x50] sm:$0xff] %vm67, 0.0
    %80 = vst.msk [vmem:[#allocation2 + $0x58] sm:$0x3] %vm69, 0.0
    %81 = vst.msk [vmem:[#allocation2 + $0x60] sm:$0xff] %vm67, 0.0
    %82 = vst.msk [vmem:[#allocation2 + $0x68] sm:$0x3] %vm69, 0.0
    %83 = vst.msk [vmem:[#allocation2 + $0x70] sm:$0xff] %vm67, 0.0
    %84 = vst.msk [vmem:[#allocation2 + $0x78] sm:$0x3] %vm69, 0.0
    %85 = vst.msk [vmem:[#allocation2 + $0x80] sm:$0xff] %vm67, 0.0
    %86 = vst.msk [vmem:[#allocation2 + $0x88] sm:$0x3] %vm69, 0.0
    %87 = vst.msk [vmem:[#allocation2 + $0x90] sm:$0xff] %vm67, 0.0
    %88 = vst.msk [vmem:[#allocation2 + $0x98] sm:$0x3] %vm69, 0.0
    %89 = vst.msk [vmem:[#allocation2 + $0xa0] sm:$0xff] %vm67, 0.0
    %90 = vst.msk [vmem:[#allocation2 + $0xa8] sm:$0x3] %vm69, 0.0
    %91 = vst.msk [vmem:[#allocation2 + $0xb0] sm:$0xff] %vm67, 0.0
    %92 = vst.msk [vmem:[#allocation2 + $0xb8] sm:$0x3] %vm69, 0.0
    %93 = vst.msk [vmem:[#allocation2 + $0xc0] sm:$0xff] %vm67, 0.0
    %94 = vst.msk [vmem:[#allocation2 + $0xc8] sm:$0x3] %vm69, 0.0
    %95 = vst.msk [vmem:[#allocation2 + $0xd0] sm:$0xff] %vm67, 0.0
    %96 = vst.msk [vmem:[#allocation2 + $0xd8] sm:$0x3] %vm69, 0.0
    %97 = vst.msk [vmem:[#allocation2 + $0xe0] sm:$0xff] %vm67, 0.0
    %98 = vst.msk [vmem:[#allocation2 + $0xe8] sm:$0x3] %vm69, 0.0
    %99 = vst.msk [vmem:[#allocation2 + $0xf0] sm:$0xff] %vm67, 0.0
    %100 = vst.msk [vmem:[#allocation2 + $0xf8] sm:$0x3] %vm69, 0.0
    %101 = vst.msk [vmem:[#allocation2 + $0x100] sm:$0xff] %vm67, 0.0
    %102 = vst.msk [vmem:[#allocation2 + $0x108] sm:$0x3] %vm69, 0.0
    %103 = vst.msk [vmem:[#allocation2 + $0x110] sm:$0xff] %vm67, 0.0
    %104 = vst.msk [vmem:[#allocation2 + $0x118] sm:$0x3] %vm69, 0.0
    %105 = vst.msk [vmem:[#allocation2 + $0x120] sm:$0xff] %vm67, 0.0
    %106 = vst.msk [vmem:[#allocation2 + $0x128] sm:$0x3] %vm69, 0.0
    %107 = vst.msk [vmem:[#allocation2 + $0x130] sm:$0xff] %vm67, 0.0
    %108 = vst.msk [vmem:[#allocation2 + $0x138] sm:$0x3] %vm69, 0.0
    %v109 = vld [vmem:[%s0] sm:$0xff]
    %v110 = vld [vmem:[%s0 + $0x8] sm:$0xff]
    %v111 = vld [vmem:[%s0 + $0x10] sm:$0xf]
    %v112 = vld [vmem:[%s0 + $0x14] sm:$0xff]
    %v113 = vld [vmem:[%s0 + $0x1c] sm:$0xff]
    %v114 = vld [vmem:[%s0 + $0x24] sm:$0xf]
    %v115 = vld [vmem:[%s0 + $0x28] sm:$0xff]
    %v116 = vld [vmem:[%s0 + $0x30] sm:$0xff]
    %v117 = vld [vmem:[%s0 + $0x38] sm:$0xf]
    %v118 = vld [vmem:[%s0 + $0x3c] sm:$0xff]
    %v119 = vld [vmem:[%s0 + $0x44] sm:$0xff]
    %v120 = vld [vmem:[%s0 + $0x4c] sm:$0xf]
    %v121 = vld [vmem:[%s0 + $0x50] sm:$0xff]
    %v122 = vld [vmem:[%s0 + $0x58] sm:$0xff]
    %v123 = vld [vmem:[%s0 + $0x60] sm:$0xf]
    %v124 = vld [vmem:[%s0 + $0x64] sm:$0xff]
    %v125 = vld [vmem:[%s0 + $0x6c] sm:$0xff]
    %v126 = vld [vmem:[%s0 + $0x74] sm:$0xf]
    %v127 = vld [vmem:[%s0 + $0x78] sm:$0xff]
    %v128 = vld [vmem:[%s0 + $0x80] sm:$0xff]
    %v129 = vld [vmem:[%s0 + $0x88] sm:$0xf]
    %v130 = vld [vmem:[%s0 + $0x8c] sm:$0xff]
    %v131 = vld [vmem:[%s0 + $0x94] sm:$0xff]
    %v132 = vld [vmem:[%s0 + $0x9c] sm:$0xf]
    %v133 = vld [vmem:[%s0 + $0xa0] sm:$0xff]
    %v134 = vld [vmem:[%s0 + $0xa8] sm:$0xff]
    %v135 = vld [vmem:[%s0 + $0xb0] sm:$0xf]
    %v136 = vld [vmem:[%s0 + $0xb4] sm:$0xff]
    %v137 = vld [vmem:[%s0 + $0xbc] sm:$0xff]
    %v138 = vld [vmem:[%s0 + $0xc4] sm:$0xf]
    %v139 = vld [vmem:[%s0 + $0xc8] sm:$0xff]
    %v140 = vld [vmem:[%s0 + $0xd0] sm:$0xff]
    %v141 = vld [vmem:[%s0 + $0xd8] sm:$0xf]
    %v142 = vld [vmem:[%s0 + $0xdc] sm:$0xff]
    %v143 = vld [vmem:[%s0 + $0xe4] sm:$0xff]
    %v144 = vld [vmem:[%s0 + $0xec] sm:$0xf]
    %v145 = vld [vmem:[%s0 + $0xf0] sm:$0xff]
    %v146 = vld [vmem:[%s0 + $0xf8] sm:$0xff]
    %v147 = vld [vmem:[%s0 + $0x100] sm:$0xf]
    %v148 = vld [vmem:[%s0 + $0x104] sm:$0xff]
    %v149 = vld [vmem:[%s0 + $0x10c] sm:$0xff]
    %v150 = vld [vmem:[%s0 + $0x114] sm:$0xf]
    %v151 = vld [vmem:[%s0 + $0x118] sm:$0xff]
    %v152 = vld [vmem:[%s0 + $0x120] sm:$0xff]
    %v153 = vld [vmem:[%s0 + $0x128] sm:$0xf]
    %v154 = vld [vmem:[%s0 + $0x12c] sm:$0xff]
    %v155 = vld [vmem:[%s0 + $0x134] sm:$0xff]
    %v156 = vld [vmem:[%s0 + $0x13c] sm:$0xf]
    %v157 = vld [vmem:[%s1] sm:$0xf]
    %v158 = vld [vmem:[%s1 + $0x4] sm:$0xf]
    %v159 = vld [vmem:[%s1 + $0x8] sm:$0xf]
    %v160 = vld [vmem:[%s1 + $0xc] sm:$0xf]
    %v161 = vld [vmem:[%s1 + $0x10] sm:$0xf]
    %v162 = vld [vmem:[%s1 + $0x14] sm:$0xf]
    %v163 = vld [vmem:[%s1 + $0x18] sm:$0xf]
    %v164 = vld [vmem:[%s1 + $0x1c] sm:$0xf]
    %v165 = vld [vmem:[%s1 + $0x20] sm:$0xf]
    %v166 = vld [vmem:[%s1 + $0x24] sm:$0xf]
    %v167 = vld [vmem:[%s1 + $0x28] sm:$0xf]
    %v168 = vld [vmem:[%s1 + $0x2c] sm:$0xf]
    %v169 = vld [vmem:[%s1 + $0x30] sm:$0xf]
    %v170 = vld [vmem:[%s1 + $0x34] sm:$0xf]
    %v171 = vld [vmem:[%s1 + $0x38] sm:$0xf]
    %v172 = vld [vmem:[%s1 + $0x3c] sm:$0xf]
    %v173 = vld [vmem:[%s1 + $0x40] sm:$0xf]
    %v174 = vld [vmem:[%s1 + $0x44] sm:$0xf]
    %v175 = vld [vmem:[%s1 + $0x48] sm:$0xf]
    %v176 = vld [vmem:[%s1 + $0x4c] sm:$0xf]
    %v177 = vld [vmem:[%s1 + $0x50] sm:$0xf]
    %v178 = vld [vmem:[%s1 + $0x54] sm:$0xf]
    %v179 = vld [vmem:[%s1 + $0x58] sm:$0xf]
    %v180 = vld [vmem:[%s1 + $0x5c] sm:$0xf]
    %v181 = vld [vmem:[%s1 + $0x60] sm:$0xf]
    %v182 = vld [vmem:[%s1 + $0x64] sm:$0xf]
    %v183 = vld [vmem:[%s1 + $0x68] sm:$0xf]
    %v184 = vld [vmem:[%s1 + $0x6c] sm:$0xf]
    %v185 = vld [vmem:[%s1 + $0x70] sm:$0xf]
    %v186 = vld [vmem:[%s1 + $0x74] sm:$0xf]
    %v187 = vld [vmem:[%s1 + $0x78] sm:$0xf]
    %v188 = vld [vmem:[%s1 + $0x7c] sm:$0xf]
    %v189 = vld [vmem:[%s1 + $0x80] sm:$0xf]
    %v190 = vld [vmem:[%s1 + $0x84] sm:$0xf]
    %v191 = vld [vmem:[%s1 + $0x88] sm:$0xf]
    %v192 = vld [vmem:[%s1 + $0x8c] sm:$0xf]
    %v193 = vld [vmem:[%s1 + $0x90] sm:$0xf]
    %v194 = vld [vmem:[%s1 + $0x94] sm:$0xf]
    %v195 = vld [vmem:[%s1 + $0x98] sm:$0xf]
    %v196 = vld [vmem:[%s1 + $0x9c] sm:$0xf]
    %v197 = vld [vmem:[%s1 + $0xa0] sm:$0xf]
    %v198 = vld [vmem:[%s1 + $0xa4] sm:$0xf]
    %v199 = vld [vmem:[%s1 + $0xa8] sm:$0xf]
    %v200 = vld [vmem:[%s1 + $0xac] sm:$0xf]
    %v201 = vld [vmem:[%s1 + $0xb0] sm:$0xf]
    %v202 = vld [vmem:[%s1 + $0xb4] sm:$0xf]
    %v203 = vld [vmem:[%s1 + $0xb8] sm:$0xf]
    %v204 = vld [vmem:[%s1 + $0xbc] sm:$0xf]
    %v205 = vld [vmem:[%s1 + $0xc0] sm:$0xf]
    %v206 = vld [vmem:[%s1 + $0xc4] sm:$0xf]
    %v207 = vld [vmem:[%s1 + $0xc8] sm:$0xf]
    %v208 = vld [vmem:[%s1 + $0xcc] sm:$0xf]
    %v209 = vld [vmem:[%s1 + $0xd0] sm:$0xf]
    %v210 = vld [vmem:[%s1 + $0xd4] sm:$0xf]
    %v211 = vld [vmem:[%s1 + $0xd8] sm:$0xf]
    %v212 = vld [vmem:[%s1 + $0xdc] sm:$0xf]
    %v213 = vld [vmem:[%s1 + $0xe0] sm:$0xf]
    %v214 = vld [vmem:[%s1 + $0xe4] sm:$0xf]
    %v215 = vld [vmem:[%s1 + $0xe8] sm:$0xf]
    %v216 = vld [vmem:[%s1 + $0xec] sm:$0xf]
    %v217 = vld [vmem:[%s1 + $0xf0] sm:$0xf]
    %v218 = vld [vmem:[%s1 + $0xf4] sm:$0xf]
    %v219 = vld [vmem:[%s1 + $0xf8] sm:$0xf]
    %v220 = vld [vmem:[%s1 + $0xfc] sm:$0xf]
    %v221 = vld [vmem:[%s1 + $0x100] sm:$0xf]
    %v222 = vld [vmem:[%s1 + $0x104] sm:$0xf]
    %v223 = vld [vmem:[%s1 + $0x108] sm:$0xf]
    %v224 = vld [vmem:[%s1 + $0x10c] sm:$0xf]
    %v225 = vld [vmem:[%s1 + $0x110] sm:$0xf]
    %v226 = vld [vmem:[%s1 + $0x114] sm:$0xf]
    %v227 = vld [vmem:[%s1 + $0x118] sm:$0xf]
    %v228 = vld [vmem:[%s1 + $0x11c] sm:$0xf]
    %v229 = vld [vmem:[%s2] sm:$0x1]
    %v231 = vlaneseq
    %v232 = vshrl.u32 %v231, 7
    %v233 = vsub.s32 0, %v232
    %v234 = vrot.slane %v229, %v233
    %v284 = vunpack.c.l.b16 %v109
    %v285 = vunpack.c.h.b16 %v109
    %v286 = vunpack.c.l.b16 %v110
    %v287 = vunpack.c.h.b16 %v110
    %v288 = vunpack.c.l.b16 %v111
    %v289 = vunpack.c.l.b16 %v112
    %v290 = vunpack.c.h.b16 %v112
    %v291 = vunpack.c.l.b16 %v113
    %v292 = vunpack.c.h.b16 %v113
    %v293 = vunpack.c.l.b16 %v114
    %v294 = vunpack.c.l.b16 %v115
    %v295 = vunpack.c.h.b16 %v115
    %v296 = vunpack.c.l.b16 %v116
    %v297 = vunpack.c.h.b16 %v116
    %v298 = vunpack.c.l.b16 %v117
    %v299 = vunpack.c.l.b16 %v118
    %v300 = vunpack.c.h.b16 %v118
    %v301 = vunpack.c.l.b16 %v119
    %v302 = vunpack.c.h.b16 %v119
    %v303 = vunpack.c.l.b16 %v120
    %v304 = vunpack.c.l.b16 %v121
    %v305 = vunpack.c.h.b16 %v121
    %v306 = vunpack.c.l.b16 %v122
    %v307 = vunpack.c.h.b16 %v122
    %v308 = vunpack.c.l.b16 %v123
    %v309 = vunpack.c.l.b16 %v124
    %v310 = vunpack.c.h.b16 %v124
    %v311 = vunpack.c.l.b16 %v125
    %v312 = vunpack.c.h.b16 %v125
    %v313 = vunpack.c.l.b16 %v126
    %v314 = vunpack.c.l.b16 %v127
    %v315 = vunpack.c.h.b16 %v127
    %v316 = vunpack.c.l.b16 %v128
    %v317 = vunpack.c.h.b16 %v128
    %v318 = vunpack.c.l.b16 %v129
    %v319 = vunpack.c.l.b16 %v130
    %v320 = vunpack.c.h.b16 %v130
    %v321 = vunpack.c.l.b16 %v131
    %v322 = vunpack.c.h.b16 %v131
    %v323 = vunpack.c.l.b16 %v132
    %v324 = vunpack.c.l.b16 %v133
    %v325 = vunpack.c.h.b16 %v133
    %v326 = vunpack.c.l.b16 %v134
    %v327 = vunpack.c.h.b16 %v134
    %v328 = vunpack.c.l.b16 %v135
    %v329 = vunpack.c.l.b16 %v136
    %v330 = vunpack.c.h.b16 %v136
    %v331 = vunpack.c.l.b16 %v137
    %v332 = vunpack.c.h.b16 %v137
    %v333 = vunpack.c.l.b16 %v138
    %v334 = vunpack.c.l.b16 %v139
    %v335 = vunpack.c.h.b16 %v139
    %v336 = vunpack.c.l.b16 %v140
    %v337 = vunpack.c.h.b16 %v140
    %v338 = vunpack.c.l.b16 %v141
    %v339 = vunpack.c.l.b16 %v142
    %v340 = vunpack.c.h.b16 %v142
    %v341 = vunpack.c.l.b16 %v143
    %v342 = vunpack.c.h.b16 %v143
    %v343 = vunpack.c.l.b16 %v144
    %v344 = vunpack.c.l.b16 %v145
    %v345 = vunpack.c.h.b16 %v145
    %v346 = vunpack.c.l.b16 %v146
    %v347 = vunpack.c.h.b16 %v146
    %v348 = vunpack.c.l.b16 %v147
    %v349 = vunpack.c.l.b16 %v148
    %v350 = vunpack.c.h.b16 %v148
    %v351 = vunpack.c.l.b16 %v149
    %v352 = vunpack.c.h.b16 %v149
    %v353 = vunpack.c.l.b16 %v150
    %v354 = vunpack.c.l.b16 %v151
    %v355 = vunpack.c.h.b16 %v151
    %v356 = vunpack.c.l.b16 %v152
    %v357 = vunpack.c.h.b16 %v152
    %v358 = vunpack.c.l.b16 %v153
    %v359 = vunpack.c.l.b16 %v154
    %v360 = vunpack.c.h.b16 %v154
    %v361 = vunpack.c.l.b16 %v155
    %v362 = vunpack.c.h.b16 %v155
    %v363 = vunpack.c.l.b16 %v156
    %v364 = vpack.c.b16 %v289, %v284
    %v365 = vpack.c.b16 %v290, %v285
    %v366 = vpack.c.b16 %v291, %v286
    %v367 = vpack.c.b16 %v292, %v287
    %v368 = vpack.c.b16 %v293, %v288
    %v369 = vpack.c.b16 %v299, %v294
    %v370 = vpack.c.b16 %v300, %v295
    %v371 = vpack.c.b16 %v301, %v296
    %v372 = vpack.c.b16 %v302, %v297
    %v373 = vpack.c.b16 %v303, %v298
    %v374 = vpack.c.b16 %v309, %v304
    %v375 = vpack.c.b16 %v310, %v305
    %v376 = vpack.c.b16 %v311, %v306
    %v377 = vpack.c.b16 %v312, %v307
    %v378 = vpack.c.b16 %v313, %v308
    %v379 = vpack.c.b16 %v319, %v314
    %v380 = vpack.c.b16 %v320, %v315
    %v381 = vpack.c.b16 %v321, %v316
    %v382 = vpack.c.b16 %v322, %v317
    %v383 = vpack.c.b16 %v323, %v318
    %v384 = vpack.c.b16 %v329, %v324
    %v385 = vpack.c.b16 %v330, %v325
    %v386 = vpack.c.b16 %v331, %v326
    %v387 = vpack.c.b16 %v332, %v327
    %v388 = vpack.c.b16 %v333, %v328
    %v389 = vpack.c.b16 %v339, %v334
    %v390 = vpack.c.b16 %v340, %v335
    %v391 = vpack.c.b16 %v341, %v336
    %v392 = vpack.c.b16 %v342, %v337
    %v393 = vpack.c.b16 %v343, %v338
    %v394 = vpack.c.b16 %v349, %v344
    %v395 = vpack.c.b16 %v350, %v345
    %v396 = vpack.c.b16 %v351, %v346
    %v397 = vpack.c.b16 %v352, %v347
    %v398 = vpack.c.b16 %v353, %v348
    %v399 = vpack.c.b16 %v359, %v354
    %v400 = vpack.c.b16 %v360, %v355
    %v401 = vpack.c.b16 %v361, %v356
    %v402 = vpack.c.b16 %v362, %v357
    %v403 = vpack.c.b16 %v363, %v358
    %v508 = vunpack.c.l.b16 %v157
    %v509 = vunpack.c.l.b16 %v158
    %v510 = vunpack.c.l.b16 %v159
    %v511 = vunpack.c.l.b16 %v160
    %v512 = vunpack.c.l.b16 %v161
    %v513 = vunpack.c.l.b16 %v162
    %v514 = vunpack.c.l.b16 %v163
    %v515 = vunpack.c.l.b16 %v164
    %v516 = vunpack.c.l.b16 %v165
    %v517 = vunpack.c.l.b16 %v166
    %v518 = vunpack.c.l.b16 %v167
    %v519 = vunpack.c.l.b16 %v168
    %v520 = vunpack.c.l.b16 %v169
    %v521 = vunpack.c.l.b16 %v170
    %v522 = vunpack.c.l.b16 %v171
    %v523 = vunpack.c.l.b16 %v172
    %v524 = vunpack.c.l.b16 %v173
    %v525 = vunpack.c.l.b16 %v174
    %v526 = vunpack.c.l.b16 %v175
    %v527 = vunpack.c.l.b16 %v176
    %v528 = vunpack.c.l.b16 %v177
    %v529 = vunpack.c.l.b16 %v178
    %v530 = vunpack.c.l.b16 %v179
    %v531 = vunpack.c.l.b16 %v180
    %v532 = vunpack.c.l.b16 %v181
    %v533 = vunpack.c.l.b16 %v182
    %v534 = vunpack.c.l.b16 %v183
    %v535 = vunpack.c.l.b16 %v184
    %v536 = vunpack.c.l.b16 %v185
    %v537 = vunpack.c.l.b16 %v186
    %v538 = vunpack.c.l.b16 %v187
    %v539 = vunpack.c.l.b16 %v188
    %v540 = vunpack.c.l.b16 %v189
    %v541 = vunpack.c.l.b16 %v190
    %v542 = vunpack.c.l.b16 %v191
    %v543 = vunpack.c.l.b16 %v192
    %v544 = vunpack.c.l.b16 %v193
    %v545 = vunpack.c.l.b16 %v194
    %v546 = vunpack.c.l.b16 %v195
    %v547 = vunpack.c.l.b16 %v196
    %v548 = vunpack.c.l.b16 %v197
    %v549 = vunpack.c.l.b16 %v198
    %v550 = vunpack.c.l.b16 %v199
    %v551 = vunpack.c.l.b16 %v200
    %v552 = vunpack.c.l.b16 %v201
    %v553 = vunpack.c.l.b16 %v202
    %v554 = vunpack.c.l.b16 %v203
    %v555 = vunpack.c.l.b16 %v204
    %v556 = vunpack.c.l.b16 %v205
    %v557 = vunpack.c.l.b16 %v206
    %v558 = vunpack.c.l.b16 %v207
    %v559 = vunpack.c.l.b16 %v208
    %v560 = vunpack.c.l.b16 %v209
    %v561 = vunpack.c.l.b16 %v210
    %v562 = vunpack.c.l.b16 %v211
    %v563 = vunpack.c.l.b16 %v212
    %v564 = vunpack.c.l.b16 %v213
    %v565 = vunpack.c.l.b16 %v214
    %v566 = vunpack.c.l.b16 %v215
    %v567 = vunpack.c.l.b16 %v216
    %v568 = vunpack.c.l.b16 %v217
    %v569 = vunpack.c.l.b16 %v218
    %v570 = vunpack.c.l.b16 %v219
    %v571 = vunpack.c.l.b16 %v220
    %v572 = vunpack.c.l.b16 %v221
    %v573 = vunpack.c.l.b16 %v222
    %v574 = vunpack.c.l.b16 %v223
    %v575 = vunpack.c.l.b16 %v224
    %v576 = vunpack.c.l.b16 %v225
    %v577 = vunpack.c.l.b16 %v226
    %v578 = vunpack.c.l.b16 %v227
    %v579 = vunpack.c.l.b16 %v228
    %v580 = vpack.c.b16 %v509, %v508
    %v581 = vpack.c.b16 %v511, %v510
    %v582 = vpack.c.b16 %v513, %v512
    %v583 = vpack.c.b16 %v515, %v514
    %v584 = vpack.c.b16 %v517, %v516
    %v585 = vpack.c.b16 %v519, %v518
    %v586 = vpack.c.b16 %v521, %v520
    %v587 = vpack.c.b16 %v523, %v522
    %v588 = vpack.c.b16 %v525, %v524
    %v589 = vpack.c.b16 %v527, %v526
    %v590 = vpack.c.b16 %v529, %v528
    %v591 = vpack.c.b16 %v531, %v530
    %v592 = vpack.c.b16 %v533, %v532
    %v593 = vpack.c.b16 %v535, %v534
    %v594 = vpack.c.b16 %v537, %v536
    %v595 = vpack.c.b16 %v539, %v538
    %v596 = vpack.c.b16 %v541, %v540
    %v597 = vpack.c.b16 %v543, %v542
    %v598 = vpack.c.b16 %v545, %v544
    %v599 = vpack.c.b16 %v547, %v546
    %v600 = vpack.c.b16 %v549, %v548
    %v601 = vpack.c.b16 %v551, %v550
    %v602 = vpack.c.b16 %v553, %v552
    %v603 = vpack.c.b16 %v555, %v554
    %v604 = vpack.c.b16 %v557, %v556
    %v605 = vpack.c.b16 %v559, %v558
    %v606 = vpack.c.b16 %v561, %v560
    %v607 = vpack.c.b16 %v563, %v562
    %v608 = vpack.c.b16 %v565, %v564
    %v609 = vpack.c.b16 %v567, %v566
    %v610 = vpack.c.b16 %v569, %v568
    %v611 = vpack.c.b16 %v571, %v570
    %v612 = vpack.c.b16 %v573, %v572
    %v613 = vpack.c.b16 %v575, %v574
    %v614 = vpack.c.b16 %v577, %v576
    %v615 = vpack.c.b16 %v579, %v578
    %v653 = vsel %vm67, %v368, 0
    %v656 = vsel %vm67, %v373, 0
    %v659 = vsel %vm67, %v378, 0
    %v662 = vsel %vm67, %v383, 0
    %v665 = vsel %vm67, %v388, 0
    %v668 = vsel %vm67, %v393, 0
    %v671 = vsel %vm67, %v398, 0
    %v674 = vsel %vm67, %v403, 0
    %676 = vmatprep.subr.bf16.mxu0 0
    %677 = vmatpush1.bf16.msra.mxu0 %v587
    %678 = vmatprep.subr.bf16.mxu0 0
    %679 = vmatpush1.bf16.msra.mxu0 %v586
    %680 = vmatprep.subr.bf16.mxu0 0
    %681 = vmatpush1.bf16.msra.mxu0 %v585
    %682 = vmatprep.subr.bf16.mxu0 0
    %683 = vmatpush1.bf16.msra.mxu0 %v584
    %684 = vmatprep.subr.bf16.mxu0 0
    %685 = vmatpush1.bf16.msra.mxu0 %v583
    %686 = vmatprep.subr.bf16.mxu0 0
    %687 = vmatpush1.bf16.msra.mxu0 %v582
    %688 = vmatprep.subr.bf16.mxu0 0
    %689 = vmatpush1.bf16.msra.mxu0 %v581
    %690 = vmatprep.subr.bf16.mxu0 0
    %691 = vmatpush1.bf16.msra.mxu0 %v580
    %692 = vmatprep.subr.bf16.mxu0 0
    %693 = vmatpush2.bf16.msra.mxu0 %v595
    %694 = vmatprep.subr.bf16.mxu0 0
    %695 = vmatpush2.bf16.msra.mxu0 %v594
    %696 = vmatprep.subr.bf16.mxu0 0
    %697 = vmatpush2.bf16.msra.mxu0 %v593
    %698 = vmatprep.subr.bf16.mxu0 0
    %699 = vmatpush2.bf16.msra.mxu0 %v592
    %700 = vmatprep.subr.bf16.mxu0 0
    %701 = vmatpush2.bf16.msra.mxu0 %v591
    %702 = vmatprep.subr.bf16.mxu0 0
    %703 = vmatpush2.bf16.msra.mxu0 %v590
    %704 = vmatprep.subr.bf16.mxu0 0
    %705 = vmatpush2.bf16.msra.mxu0 %v589
    %706 = vmatprep.subr.bf16.mxu0 0
    %707 = vmatpush2.bf16.msra.mxu0 %v588
    %708 = vmatprep.mubr.bf16.mxu0 %v365
    %709 = vmatmul.mubr.bf16.gmra.mxu0 %v364
    %v710 = vpop.f32.mrf.mxu0
    %v711 = vadd.f32 %v234, %v710
    %v712 = vpop.f32.mrf.mxu0
    %v713 = vpop.f32.mrf.mxu0
    %v714 = vadd.f32 %v234, %v713
    %v715 = vpop.f32.mrf.mxu0
    %716 = vmatprep.mubr.bf16.mxu0 %v370
    %717 = vmatmul.mubr.bf16.gmra.mxu0 %v369
    %v718 = vpop.f32.mrf.mxu0
    %v719 = vadd.f32 %v234, %v718
    %v720 = vpop.f32.mrf.mxu0
    %v721 = vpop.f32.mrf.mxu0
    %v722 = vadd.f32 %v234, %v721
    %v723 = vpop.f32.mrf.mxu0
    %724 = vmatprep.mubr.bf16.mxu0 %v375
    %725 = vmatmul.mubr.bf16.gmra.mxu0 %v374
    %v726 = vpop.f32.mrf.mxu0
    %v727 = vadd.f32 %v234, %v726
    %v728 = vpop.f32.mrf.mxu0
    %v729 = vpop.f32.mrf.mxu0
    %v730 = vadd.f32 %v234, %v729
    %v731 = vpop.f32.mrf.mxu0
    %732 = vmatprep.mubr.bf16.mxu0 %v380
    %733 = vmatmul.mubr.bf16.gmra.mxu0 %v379
    %v734 = vpop.f32.mrf.mxu0
    %v735 = vadd.f32 %v234, %v734
    %v736 = vpop.f32.mrf.mxu0
    %v737 = vpop.f32.mrf.mxu0
    %v738 = vadd.f32 %v234, %v737
    %v739 = vpop.f32.mrf.mxu0
    %740 = vmatprep.mubr.bf16.mxu0 %v385
    %741 = vmatmul.mubr.bf16.gmra.mxu0 %v384
    %v742 = vpop.f32.mrf.mxu0
    %v743 = vadd.f32 %v234, %v742
    %v744 = vpop.f32.mrf.mxu0
    %v745 = vpop.f32.mrf.mxu0
    %v746 = vadd.f32 %v234, %v745
    %v747 = vpop.f32.mrf.mxu0
    %748 = vmatprep.mubr.bf16.mxu0 %v390
    %749 = vmatmul.mubr.bf16.gmra.mxu0 %v389
    %v750 = vpop.f32.mrf.mxu0
    %v751 = vadd.f32 %v234, %v750
    %v752 = vpop.f32.mrf.mxu0
    %v753 = vpop.f32.mrf.mxu0
    %v754 = vadd.f32 %v234, %v753
    %v755 = vpop.f32.mrf.mxu0
    %756 = vmatprep.mubr.bf16.mxu0 %v395
    %757 = vmatmul.mubr.bf16.gmra.mxu0 %v394
    %v758 = vpop.f32.mrf.mxu0
    %v759 = vadd.f32 %v234, %v758
    %v760 = vpop.f32.mrf.mxu0
    %v761 = vpop.f32.mrf.mxu0
    %v762 = vadd.f32 %v234, %v761
    %v763 = vpop.f32.mrf.mxu0
    %764 = vmatprep.mubr.bf16.mxu0 %v400
    %765 = vmatmul.mubr.bf16.gmra.mxu0 %v399
    %v766 = vpop.f32.mrf.mxu0
    %v767 = vadd.f32 %v234, %v766
    %v768 = vpop.f32.mrf.mxu0
    %v769 = vpop.f32.mrf.mxu0
    %v770 = vadd.f32 %v234, %v769
    %v771 = vpop.f32.mrf.mxu0
    %772 = vdwg.mxu0
    %773 = vmatprep.subr.bf16.mxu0 0
    %774 = vmatpush1.bf16.msra.mxu0 %v603
    %775 = vmatprep.subr.bf16.mxu0 0
    %776 = vmatpush1.bf16.msra.mxu0 %v602
    %777 = vmatprep.subr.bf16.mxu0 0
    %778 = vmatpush1.bf16.msra.mxu0 %v601
    %779 = vmatprep.subr.bf16.mxu0 0
    %780 = vmatpush1.bf16.msra.mxu0 %v600
    %781 = vmatprep.subr.bf16.mxu0 0
    %782 = vmatpush1.bf16.msra.mxu0 %v599
    %783 = vmatprep.subr.bf16.mxu0 0
    %784 = vmatpush1.bf16.msra.mxu0 %v598
    %785 = vmatprep.subr.bf16.mxu0 0
    %786 = vmatpush1.bf16.msra.mxu0 %v597
    %787 = vmatprep.subr.bf16.mxu0 0
    %788 = vmatpush1.bf16.msra.mxu0 %v596
    %789 = vmatprep.subr.bf16.mxu0 0
    %790 = vmatpush2.bf16.msra.mxu0 %v611
    %791 = vmatprep.subr.bf16.mxu0 0
    %792 = vmatpush2.bf16.msra.mxu0 %v610
    %793 = vmatprep.subr.bf16.mxu0 0
    %794 = vmatpush2.bf16.msra.mxu0 %v609
    %795 = vmatprep.subr.bf16.mxu0 0
    %796 = vmatpush2.bf16.msra.mxu0 %v608
    %797 = vmatprep.subr.bf16.mxu0 0
    %798 = vmatpush2.bf16.msra.mxu0 %v607
    %799 = vmatprep.subr.bf16.mxu0 0
    %800 = vmatpush2.bf16.msra.mxu0 %v606
    %801 = vmatprep.subr.bf16.mxu0 0
    %802 = vmatpush2.bf16.msra.mxu0 %v605
    %803 = vmatprep.subr.bf16.mxu0 0
    %804 = vmatpush2.bf16.msra.mxu0 %v604
    %805 = vmatprep.mubr.bf16.mxu0 %v367
    %806 = vmatmul.mubr.bf16.gmra.mxu0 %v366
    %v807 = vpop.f32.mrf.mxu0
    %v808 = vadd.f32 %v711, %v807
    %v809 = vpop.f32.mrf.mxu0
    %v810 = vpop.f32.mrf.mxu0
    %v811 = vadd.f32 %v714, %v810
    %v812 = vpop.f32.mrf.mxu0
    %813 = vmatprep.mubr.bf16.mxu0 %v372
    %814 = vmatmul.mubr.bf16.gmra.mxu0 %v371
    %v815 = vpop.f32.mrf.mxu0
    %v816 = vadd.f32 %v719, %v815
    %v817 = vpop.f32.mrf.mxu0
    %v818 = vpop.f32.mrf.mxu0
    %v819 = vadd.f32 %v722, %v818
    %v820 = vpop.f32.mrf.mxu0
    %821 = vmatprep.mubr.bf16.mxu0 %v377
    %822 = vmatmul.mubr.bf16.gmra.mxu0 %v376
    %v823 = vpop.f32.mrf.mxu0
    %v824 = vadd.f32 %v727, %v823
    %v825 = vpop.f32.mrf.mxu0
    %v826 = vpop.f32.mrf.mxu0
    %v827 = vadd.f32 %v730, %v826
    %v828 = vpop.f32.mrf.mxu0
    %829 = vmatprep.mubr.bf16.mxu0 %v382
    %830 = vmatmul.mubr.bf16.gmra.mxu0 %v381
    %v831 = vpop.f32.mrf.mxu0
    %v832 = vadd.f32 %v735, %v831
    %v833 = vpop.f32.mrf.mxu0
    %v834 = vpop.f32.mrf.mxu0
    %v835 = vadd.f32 %v738, %v834
    %v836 = vpop.f32.mrf.mxu0
    %837 = vmatprep.mubr.bf16.mxu0 %v387
    %838 = vmatmul.mubr.bf16.gmra.mxu0 %v386
    %v839 = vpop.f32.mrf.mxu0
    %v840 = vadd.f32 %v743, %v839
    %v841 = vpop.f32.mrf.mxu0
    %v842 = vpop.f32.mrf.mxu0
    %v843 = vadd.f32 %v746, %v842
    %v844 = vpop.f32.mrf.mxu0
    %845 = vmatprep.mubr.bf16.mxu0 %v392
    %846 = vmatmul.mubr.bf16.gmra.mxu0 %v391
    %v847 = vpop.f32.mrf.mxu0
    %v848 = vadd.f32 %v751, %v847
    %v849 = vpop.f32.mrf.mxu0
    %v850 = vpop.f32.mrf.mxu0
    %v851 = vadd.f32 %v754, %v850
    %v852 = vpop.f32.mrf.mxu0
    %853 = vmatprep.mubr.bf16.mxu0 %v397
    %854 = vmatmul.mubr.bf16.gmra.mxu0 %v396
    %v855 = vpop.f32.mrf.mxu0
    %v856 = vadd.f32 %v759, %v855
    %v857 = vpop.f32.mrf.mxu0
    %v858 = vpop.f32.mrf.mxu0
    %v859 = vadd.f32 %v762, %v858
    %v860 = vpop.f32.mrf.mxu0
    %861 = vmatprep.mubr.bf16.mxu0 %v402
    %862 = vmatmul.mubr.bf16.gmra.mxu0 %v401
    %v863 = vpop.f32.mrf.mxu0
    %v864 = vadd.f32 %v767, %v863
    %v865 = vpop.f32.mrf.mxu0
    %v866 = vpop.f32.mrf.mxu0
    %v867 = vadd.f32 %v770, %v866
    %v868 = vpop.f32.mrf.mxu0
    %869 = vdwg.mxu0
    %870 = vmatprep.subr.bf16.mxu0 0
    %871 = vmatpush1.bf16.msra.mxu0 0
    %872 = vmatprep.subr.bf16.mxu0 0
    %873 = vmatpush1.bf16.msra.mxu0 0
    %874 = vmatprep.subr.bf16.mxu0 0
    %875 = vmatpush1.bf16.msra.mxu0 0
    %876 = vmatprep.subr.bf16.mxu0 0
    %877 = vmatpush1.bf16.msra.mxu0 0
    %878 = vmatprep.subr.bf16.mxu0 0
    %879 = vmatpush1.bf16.msra.mxu0 %v615
    %880 = vmatprep.subr.bf16.mxu0 0
    %881 = vmatpush1.bf16.msra.mxu0 %v614
    %882 = vmatprep.subr.bf16.mxu0 0
    %883 = vmatpush1.bf16.msra.mxu0 %v613
    %884 = vmatprep.subr.bf16.mxu0 0
    %885 = vmatpush1.bf16.msra.mxu0 %v612
    %886 = vmatprep.subr.bf16.mxu0 0
    %887 = vmatpush2.bf16.msra.mxu0 0
    %888 = vmatprep.subr.bf16.mxu0 0
    %889 = vmatpush2.bf16.msra.mxu0 0
    %890 = vmatprep.subr.bf16.mxu0 0
    %891 = vmatpush2.bf16.msra.mxu0 0
    %892 = vmatprep.subr.bf16.mxu0 0
    %893 = vmatpush2.bf16.msra.mxu0 0
    %894 = vmatprep.subr.bf16.mxu0 0
    %895 = vmatpush2.bf16.msra.mxu0 0
    %896 = vmatprep.subr.bf16.mxu0 0
    %897 = vmatpush2.bf16.msra.mxu0 0
    %898 = vmatprep.subr.bf16.mxu0 0
    %899 = vmatpush2.bf16.msra.mxu0 0
    %900 = vmatprep.subr.bf16.mxu0 0
    %901 = vmatpush2.bf16.msra.mxu0 0
    %902 = vmatprep.mubr.bf16.mxu0 0
    %903 = vmatmul.mubr.bf16.gmra.mxu0 %v653
    %v904 = vpop.f32.mrf.mxu0
    %v905 = vadd.f32 %v808, %v904
    %v906 = vpop.f32.mrf.mxu0
    %v907 = vpop.f32.mrf.mxu0
    %v908 = vadd.f32 %v811, %v907
    %v909 = vpop.f32.mrf.mxu0
    %910 = vmatprep.mubr.bf16.mxu0 0
    %911 = vmatmul.mubr.bf16.gmra.mxu0 %v656
    %v912 = vpop.f32.mrf.mxu0
    %v913 = vadd.f32 %v816, %v912
    %v914 = vpop.f32.mrf.mxu0
    %v915 = vpop.f32.mrf.mxu0
    %v916 = vadd.f32 %v819, %v915
    %v917 = vpop.f32.mrf.mxu0
    %918 = vmatprep.mubr.bf16.mxu0 0
    %919 = vmatmul.mubr.bf16.gmra.mxu0 %v659
    %v920 = vpop.f32.mrf.mxu0
    %v921 = vadd.f32 %v824, %v920
    %v922 = vpop.f32.mrf.mxu0
    %v923 = vpop.f32.mrf.mxu0
    %v924 = vadd.f32 %v827, %v923
    %v925 = vpop.f32.mrf.mxu0
    %926 = vmatprep.mubr.bf16.mxu0 0
    %927 = vmatmul.mubr.bf16.gmra.mxu0 %v662
    %v928 = vpop.f32.mrf.mxu0
    %v929 = vadd.f32 %v832, %v928
    %v930 = vpop.f32.mrf.mxu0
    %v931 = vpop.f32.mrf.mxu0
    %v932 = vadd.f32 %v835, %v931
    %v933 = vpop.f32.mrf.mxu0
    %934 = vmatprep.mubr.bf16.mxu0 0
    %935 = vmatmul.mubr.bf16.gmra.mxu0 %v665
    %v936 = vpop.f32.mrf.mxu0
    %v937 = vadd.f32 %v840, %v936
    %v938 = vpop.f32.mrf.mxu0
    %v939 = vpop.f32.mrf.mxu0
    %v940 = vadd.f32 %v843, %v939
    %v941 = vpop.f32.mrf.mxu0
    %942 = vmatprep.mubr.bf16.mxu0 0
    %943 = vmatmul.mubr.bf16.gmra.mxu0 %v668
    %v944 = vpop.f32.mrf.mxu0
    %v945 = vadd.f32 %v848, %v944
    %v946 = vpop.f32.mrf.mxu0
    %v947 = vpop.f32.mrf.mxu0
    %v948 = vadd.f32 %v851, %v947
    %v949 = vpop.f32.mrf.mxu0
    %950 = vmatprep.mubr.bf16.mxu0 0
    %951 = vmatmul.mubr.bf16.gmra.mxu0 %v671
    %v952 = vpop.f32.mrf.mxu0
    %v953 = vadd.f32 %v856, %v952
    %v954 = vpop.f32.mrf.mxu0
    %v955 = vpop.f32.mrf.mxu0
    %v956 = vadd.f32 %v859, %v955
    %v957 = vpop.f32.mrf.mxu0
    %958 = vmatprep.mubr.bf16.mxu0 0
    %959 = vmatmul.mubr.bf16.gmra.mxu0 %v674
    %v960 = vpop.f32.mrf.mxu0
    %v961 = vadd.f32 %v864, %v960
    %v962 = vpop.f32.mrf.mxu0
    %v963 = vpop.f32.mrf.mxu0
    %v964 = vadd.f32 %v867, %v963
    %v965 = vpop.f32.mrf.mxu0
    %966 = vdwg.mxu0
    %v967 = vmul.f32 %v905, 1.442695
    %v968 = vpow.pop %v967
    %v969 = vmul.f32 %v908, 1.442695
    %v970 = vpow.pop %v969
    %v971 = vmul.f32 %v913, 1.442695
    %v972 = vpow.pop %v971
    %v973 = vmul.f32 %v916, 1.442695
    %v974 = vpow.pop %v973
    %v975 = vmul.f32 %v921, 1.442695
    %v976 = vpow.pop %v975
    %v977 = vmul.f32 %v924, 1.442695
    %v978 = vpow.pop %v977
    %v979 = vmul.f32 %v929, 1.442695
    %v980 = vpow.pop %v979
    %v981 = vmul.f32 %v932, 1.442695
    %v982 = vpow.pop %v981
    %v983 = vmul.f32 %v937, 1.442695
    %v984 = vpow.pop %v983
    %v985 = vmul.f32 %v940, 1.442695
    %v986 = vpow.pop %v985
    %v987 = vmul.f32 %v945, 1.442695
    %v988 = vpow.pop %v987
    %v989 = vmul.f32 %v948, 1.442695
    %v990 = vpow.pop %v989
    %v991 = vmul.f32 %v953, 1.442695
    %v992 = vpow.pop %v991
    %v993 = vmul.f32 %v956, 1.442695
    %v994 = vpow.pop %v993
    %v995 = vmul.f32 %v961, 1.442695
    %v996 = vpow.pop %v995
    %v997 = vmul.f32 %v964, 1.442695
    %v998 = vpow.pop %v997
    %v999 = vadd.f32 %v968, 1.0
    %v1000 = vadd.f32 %v970, 1.0
    %v1001 = vadd.f32 %v972, 1.0
    %v1002 = vadd.f32 %v974, 1.0
    %v1003 = vadd.f32 %v976, 1.0
    %v1004 = vadd.f32 %v978, 1.0
    %v1005 = vadd.f32 %v980, 1.0
    %v1006 = vadd.f32 %v982, 1.0
    %v1007 = vadd.f32 %v984, 1.0
    %v1008 = vadd.f32 %v986, 1.0
    %v1009 = vadd.f32 %v988, 1.0
    %v1010 = vadd.f32 %v990, 1.0
    %v1011 = vadd.f32 %v992, 1.0
    %v1012 = vadd.f32 %v994, 1.0
    %v1013 = vadd.f32 %v996, 1.0
    %v1014 = vadd.f32 %v998, 1.0
    %v1015 = vmul.f32 %v999, %v999
    %v1016 = vmul.f32 %v1000, %v1000
    %v1017 = vmul.f32 %v1001, %v1001
    %v1018 = vmul.f32 %v1002, %v1002
    %v1019 = vmul.f32 %v1003, %v1003
    %v1020 = vmul.f32 %v1004, %v1004
    %v1021 = vmul.f32 %v1005, %v1005
    %v1022 = vmul.f32 %v1006, %v1006
    %v1023 = vmul.f32 %v1007, %v1007
    %v1024 = vmul.f32 %v1008, %v1008
    %v1025 = vmul.f32 %v1009, %v1009
    %v1026 = vmul.f32 %v1010, %v1010
    %v1027 = vmul.f32 %v1011, %v1011
    %v1028 = vmul.f32 %v1012, %v1012
    %v1029 = vmul.f32 %v1013, %v1013
    %v1030 = vmul.f32 %v1014, %v1014
    %v1031 = vadd.f32 %v1015, 1.0
    %v1032 = vadd.f32 %v1016, 1.0
    %v1033 = vadd.f32 %v1017, 1.0
    %v1034 = vadd.f32 %v1018, 1.0
    %v1035 = vadd.f32 %v1019, 1.0
    %v1036 = vadd.f32 %v1020, 1.0
    %v1037 = vadd.f32 %v1021, 1.0
    %v1038 = vadd.f32 %v1022, 1.0
    %v1039 = vadd.f32 %v1023, 1.0
    %v1040 = vadd.f32 %v1024, 1.0
    %v1041 = vadd.f32 %v1025, 1.0
    %v1042 = vadd.f32 %v1026, 1.0
    %v1043 = vadd.f32 %v1027, 1.0
    %v1044 = vadd.f32 %v1028, 1.0
    %v1045 = vadd.f32 %v1029, 1.0
    %v1046 = vadd.f32 %v1030, 1.0
    %v1047 = vmul.f32 %v905, 2.0
    %v1048 = vmul.f32 %v908, 2.0
    %v1049 = vmul.f32 %v913, 2.0
    %v1050 = vmul.f32 %v916, 2.0
    %v1051 = vmul.f32 %v921, 2.0
    %v1052 = vmul.f32 %v924, 2.0
    %v1053 = vmul.f32 %v929, 2.0
    %v1054 = vmul.f32 %v932, 2.0
    %v1055 = vmul.f32 %v937, 2.0
    %v1056 = vmul.f32 %v940, 2.0
    %v1057 = vmul.f32 %v945, 2.0
    %v1058 = vmul.f32 %v948, 2.0
    %v1059 = vmul.f32 %v953, 2.0
    %v1060 = vmul.f32 %v956, 2.0
    %v1061 = vmul.f32 %v961, 2.0
    %v1062 = vmul.f32 %v964, 2.0
    %v1063 = vrcp.pop %v1031
    %v1064 = vmul.f32 %v1047, %v1063
    %v1065 = vrcp.pop %v1032
    %v1066 = vmul.f32 %v1048, %v1065
    %v1067 = vrcp.pop %v1033
    %v1068 = vmul.f32 %v1049, %v1067
    %v1069 = vrcp.pop %v1034
    %v1070 = vmul.f32 %v1050, %v1069
    %v1071 = vrcp.pop %v1035
    %v1072 = vmul.f32 %v1051, %v1071
    %v1073 = vrcp.pop %v1036
    %v1074 = vmul.f32 %v1052, %v1073
    %v1075 = vrcp.pop %v1037
    %v1076 = vmul.f32 %v1053, %v1075
    %v1077 = vrcp.pop %v1038
    %v1078 = vmul.f32 %v1054, %v1077
    %v1079 = vrcp.pop %v1039
    %v1080 = vmul.f32 %v1055, %v1079
    %v1081 = vrcp.pop %v1040
    %v1082 = vmul.f32 %v1056, %v1081
    %v1083 = vrcp.pop %v1041
    %v1084 = vmul.f32 %v1057, %v1083
    %v1085 = vrcp.pop %v1042
    %v1086 = vmul.f32 %v1058, %v1085
    %v1087 = vrcp.pop %v1043
    %v1088 = vmul.f32 %v1059, %v1087
    %v1089 = vrcp.pop %v1044
    %v1090 = vmul.f32 %v1060, %v1089
    %v1091 = vrcp.pop %v1045
    %v1092 = vmul.f32 %v1061, %v1091
    %v1093 = vrcp.pop %v1046
    %v1094 = vmul.f32 %v1062, %v1093
    %v1095 = vsub.f32 %v905, %v1064
    %v1096 = vsub.f32 %v908, %v1066
    %v1097 = vsub.f32 %v913, %v1068
    %v1098 = vsub.f32 %v916, %v1070
    %v1099 = vsub.f32 %v921, %v1072
    %v1100 = vsub.f32 %v924, %v1074
    %v1101 = vsub.f32 %v929, %v1076
    %v1102 = vsub.f32 %v932, %v1078
    %v1103 = vsub.f32 %v937, %v1080
    %v1104 = vsub.f32 %v940, %v1082
    %v1105 = vsub.f32 %v945, %v1084
    %v1106 = vsub.f32 %v948, %v1086
    %v1107 = vsub.f32 %v953, %v1088
    %v1108 = vsub.f32 %v956, %v1090
    %v1109 = vsub.f32 %v961, %v1092
    %v1110 = vsub.f32 %v964, %v1094
    %v1111 = vpack.c.bf16 %v1096, %v1095
    %v1112 = vpack.c.bf16 %v1098, %v1097
    %v1113 = vpack.c.bf16 %v1100, %v1099
    %v1114 = vpack.c.bf16 %v1102, %v1101
    %v1115 = vpack.c.bf16 %v1104, %v1103
    %v1116 = vpack.c.bf16 %v1106, %v1105
    %v1117 = vpack.c.bf16 %v1108, %v1107
    %v1118 = vpack.c.bf16 %v1110, %v1109
    %v1119 = vld [vmem:[%s3] sm:$0xf]
    %v1120 = vld [vmem:[%s3 + $0x4] sm:$0xf]
    %v1121 = vld [vmem:[%s3 + $0x8] sm:$0xf]
    %v1122 = vld [vmem:[%s3 + $0xc] sm:$0xf]
    %v1123 = vld [vmem:[%s3 + $0x10] sm:$0xf]
    %v1124 = vld [vmem:[%s3 + $0x14] sm:$0xf]
    %v1125 = vld [vmem:[%s3 + $0x18] sm:$0xf]
    %v1126 = vld [vmem:[%s3 + $0x1c] sm:$0xf]
    %v1127 = vld [vmem:[%s3 + $0x20] sm:$0xf]
    %v1128 = vld [vmem:[%s3 + $0x24] sm:$0xf]
    %v1129 = vld [vmem:[%s3 + $0x28] sm:$0xf]
    %v1130 = vld [vmem:[%s3 + $0x2c] sm:$0xf]
    %v1131 = vld [vmem:[%s3 + $0x30] sm:$0xf]
    %v1132 = vld [vmem:[%s3 + $0x34] sm:$0xf]
    %v1133 = vld [vmem:[%s3 + $0x38] sm:$0xf]
    %v1134 = vld [vmem:[%s3 + $0x3c] sm:$0xf]
    %v1135 = vld [vmem:[%s4] sm:$0x1]
    %v1137 = vlaneseq
    %v1138 = vshrl.u32 %v1137, 7
    %v1139 = vsub.s32 0, %v1138
    %v1140 = vrot.slane %v1135, %v1139
    %v1158 = vunpack.c.l.b16 %v1119
    %v1159 = vunpack.c.l.b16 %v1120
    %v1160 = vunpack.c.l.b16 %v1121
    %v1161 = vunpack.c.l.b16 %v1122
    %v1162 = vunpack.c.l.b16 %v1123
    %v1163 = vunpack.c.l.b16 %v1124
    %v1164 = vunpack.c.l.b16 %v1125
    %v1165 = vunpack.c.l.b16 %v1126
    %v1166 = vunpack.c.l.b16 %v1127
    %v1167 = vunpack.c.l.b16 %v1128
    %v1168 = vunpack.c.l.b16 %v1129
    %v1169 = vunpack.c.l.b16 %v1130
    %v1170 = vunpack.c.l.b16 %v1131
    %v1171 = vunpack.c.l.b16 %v1132
    %v1172 = vunpack.c.l.b16 %v1133
    %v1173 = vunpack.c.l.b16 %v1134
    %v1174 = vpack.c.b16 %v1159, %v1158
    %v1175 = vpack.c.b16 %v1161, %v1160
    %v1176 = vpack.c.b16 %v1163, %v1162
    %v1177 = vpack.c.b16 %v1165, %v1164
    %v1178 = vpack.c.b16 %v1167, %v1166
    %v1179 = vpack.c.b16 %v1169, %v1168
    %v1180 = vpack.c.b16 %v1171, %v1170
    %v1181 = vpack.c.b16 %v1173, %v1172
    %1190 = vmatprep.subr.bf16.mxu0 0
    %1191 = vmatpush1.bf16.msra.mxu0 %v1181
    %1192 = vmatprep.subr.bf16.mxu0 0
    %1193 = vmatpush1.bf16.msra.mxu0 %v1180
    %1194 = vmatprep.subr.bf16.mxu0 0
    %1195 = vmatpush1.bf16.msra.mxu0 %v1179
    %1196 = vmatprep.subr.bf16.mxu0 0
    %1197 = vmatpush1.bf16.msra.mxu0 %v1178
    %1198 = vmatprep.subr.bf16.mxu0 0
    %1199 = vmatpush1.bf16.msra.mxu0 %v1177
    %1200 = vmatprep.subr.bf16.mxu0 0
    %1201 = vmatpush1.bf16.msra.mxu0 %v1176
    %1202 = vmatprep.subr.bf16.mxu0 0
    %1203 = vmatpush1.bf16.msra.mxu0 %v1175
    %1204 = vmatprep.subr.bf16.mxu0 0
    %1205 = vmatpush1.bf16.msra.mxu0 %v1174
    %1206 = vmatprep.subr.bf16.mxu0 0
    %1207 = vmatpush2.bf16.msra.mxu0 0
    %1208 = vmatprep.subr.bf16.mxu0 0
    %1209 = vmatpush2.bf16.msra.mxu0 0
    %1210 = vmatprep.subr.bf16.mxu0 0
    %1211 = vmatpush2.bf16.msra.mxu0 0
    %1212 = vmatprep.subr.bf16.mxu0 0
    %1213 = vmatpush2.bf16.msra.mxu0 0
    %1214 = vmatprep.subr.bf16.mxu0 0
    %1215 = vmatpush2.bf16.msra.mxu0 0
    %1216 = vmatprep.subr.bf16.mxu0 0
    %1217 = vmatpush2.bf16.msra.mxu0 0
    %1218 = vmatprep.subr.bf16.mxu0 0
    %1219 = vmatpush2.bf16.msra.mxu0 0
    %1220 = vmatprep.subr.bf16.mxu0 0
    %1221 = vmatpush2.bf16.msra.mxu0 0
    %1222 = vmatprep.mubr.bf16.mxu0 0
    %1223 = vmatmul.mubr.bf16.gmra.mxu0 %v1111
    %v1224 = vpop.f32.mrf.mxu0
    %v1225 = vadd.f32 %v1140, %v1224
    %v1226 = vpop.f32.mrf.mxu0
    %v1227 = vpop.f32.mrf.mxu0
    %v1228 = vadd.f32 %v1140, %v1227
    %v1229 = vpop.f32.mrf.mxu0
    %1230 = vmatprep.mubr.bf16.mxu0 0
    %1231 = vmatmul.mubr.bf16.gmra.mxu0 %v1112
    %v1232 = vpop.f32.mrf.mxu0
    %v1233 = vadd.f32 %v1140, %v1232
    %v1234 = vpop.f32.mrf.mxu0
    %v1235 = vpop.f32.mrf.mxu0
    %v1236 = vadd.f32 %v1140, %v1235
    %v1237 = vpop.f32.mrf.mxu0
    %1238 = vmatprep.mubr.bf16.mxu0 0
    %1239 = vmatmul.mubr.bf16.gmra.mxu0 %v1113
    %v1240 = vpop.f32.mrf.mxu0
    %v1241 = vadd.f32 %v1140, %v1240
    %v1242 = vpop.f32.mrf.mxu0
    %v1243 = vpop.f32.mrf.mxu0
    %v1244 = vadd.f32 %v1140, %v1243
    %v1245 = vpop.f32.mrf.mxu0
    %1246 = vmatprep.mubr.bf16.mxu0 0
    %1247 = vmatmul.mubr.bf16.gmra.mxu0 %v1114
    %v1248 = vpop.f32.mrf.mxu0
    %v1249 = vadd.f32 %v1140, %v1248
    %v1250 = vpop.f32.mrf.mxu0
    %v1251 = vpop.f32.mrf.mxu0
    %v1252 = vadd.f32 %v1140, %v1251
    %v1253 = vpop.f32.mrf.mxu0
    %1254 = vmatprep.mubr.bf16.mxu0 0
    %1255 = vmatmul.mubr.bf16.gmra.mxu0 %v1115
    %v1256 = vpop.f32.mrf.mxu0
    %v1257 = vadd.f32 %v1140, %v1256
    %v1258 = vpop.f32.mrf.mxu0
    %v1259 = vpop.f32.mrf.mxu0
    %v1260 = vadd.f32 %v1140, %v1259
    %v1261 = vpop.f32.mrf.mxu0
    %1262 = vmatprep.mubr.bf16.mxu0 0
    %1263 = vmatmul.mubr.bf16.gmra.mxu0 %v1116
    %v1264 = vpop.f32.mrf.mxu0
    %v1265 = vadd.f32 %v1140, %v1264
    %v1266 = vpop.f32.mrf.mxu0
    %v1267 = vpop.f32.mrf.mxu0
    %v1268 = vadd.f32 %v1140, %v1267
    %v1269 = vpop.f32.mrf.mxu0
    %1270 = vmatprep.mubr.bf16.mxu0 0
    %1271 = vmatmul.mubr.bf16.gmra.mxu0 %v1117
    %v1272 = vpop.f32.mrf.mxu0
    %v1273 = vadd.f32 %v1140, %v1272
    %v1274 = vpop.f32.mrf.mxu0
    %v1275 = vpop.f32.mrf.mxu0
    %v1276 = vadd.f32 %v1140, %v1275
    %v1277 = vpop.f32.mrf.mxu0
    %1278 = vmatprep.mubr.bf16.mxu0 0
    %1279 = vmatmul.mubr.bf16.gmra.mxu0 %v1118
    %v1280 = vpop.f32.mrf.mxu0
    %v1281 = vadd.f32 %v1140, %v1280
    %v1282 = vpop.f32.mrf.mxu0
    %v1283 = vpop.f32.mrf.mxu0
    %v1284 = vadd.f32 %v1140, %v1283
    %v1285 = vpop.f32.mrf.mxu0
    %1286 = vdwg.mxu0
    %v1287 = vmul.f32 %v1225, 1.442695
    %v1288 = vpow.pop %v1287
    %v1289 = vmul.f32 %v1228, 1.442695
    %v1290 = vpow.pop %v1289
    %v1291 = vmul.f32 %v1233, 1.442695
    %v1292 = vpow.pop %v1291
    %v1293 = vmul.f32 %v1236, 1.442695
    %v1294 = vpow.pop %v1293
    %v1295 = vmul.f32 %v1241, 1.442695
    %v1296 = vpow.pop %v1295
    %v1297 = vmul.f32 %v1244, 1.442695
    %v1298 = vpow.pop %v1297
    %v1299 = vmul.f32 %v1249, 1.442695
    %v1300 = vpow.pop %v1299
    %v1301 = vmul.f32 %v1252, 1.442695
    %v1302 = vpow.pop %v1301
    %v1303 = vmul.f32 %v1257, 1.442695
    %v1304 = vpow.pop %v1303
    %v1305 = vmul.f32 %v1260, 1.442695
    %v1306 = vpow.pop %v1305
    %v1307 = vmul.f32 %v1265, 1.442695
    %v1308 = vpow.pop %v1307
    %v1309 = vmul.f32 %v1268, 1.442695
    %v1310 = vpow.pop %v1309
    %v1311 = vmul.f32 %v1273, 1.442695
    %v1312 = vpow.pop %v1311
    %v1313 = vmul.f32 %v1276, 1.442695
    %v1314 = vpow.pop %v1313
    %v1315 = vmul.f32 %v1281, 1.442695
    %v1316 = vpow.pop %v1315
    %v1317 = vmul.f32 %v1284, 1.442695
    %v1318 = vpow.pop %v1317
    %v1319 = vadd.f32 %v1288, 1.0
    %v1320 = vadd.f32 %v1290, 1.0
    %v1321 = vadd.f32 %v1292, 1.0
    %v1322 = vadd.f32 %v1294, 1.0
    %v1323 = vadd.f32 %v1296, 1.0
    %v1324 = vadd.f32 %v1298, 1.0
    %v1325 = vadd.f32 %v1300, 1.0
    %v1326 = vadd.f32 %v1302, 1.0
    %v1327 = vadd.f32 %v1304, 1.0
    %v1328 = vadd.f32 %v1306, 1.0
    %v1329 = vadd.f32 %v1308, 1.0
    %v1330 = vadd.f32 %v1310, 1.0
    %v1331 = vadd.f32 %v1312, 1.0
    %v1332 = vadd.f32 %v1314, 1.0
    %v1333 = vadd.f32 %v1316, 1.0
    %v1334 = vadd.f32 %v1318, 1.0
    %v1335 = vmul.f32 %v1319, %v1319
    %v1336 = vmul.f32 %v1320, %v1320
    %v1337 = vmul.f32 %v1321, %v1321
    %v1338 = vmul.f32 %v1322, %v1322
    %v1339 = vmul.f32 %v1323, %v1323
    %v1340 = vmul.f32 %v1324, %v1324
    %v1341 = vmul.f32 %v1325, %v1325
    %v1342 = vmul.f32 %v1326, %v1326
    %v1343 = vmul.f32 %v1327, %v1327
    %v1344 = vmul.f32 %v1328, %v1328
    %v1345 = vmul.f32 %v1329, %v1329
    %v1346 = vmul.f32 %v1330, %v1330
    %v1347 = vmul.f32 %v1331, %v1331
    %v1348 = vmul.f32 %v1332, %v1332
    %v1349 = vmul.f32 %v1333, %v1333
    %v1350 = vmul.f32 %v1334, %v1334
    %v1351 = vadd.f32 %v1335, 1.0
    %v1352 = vadd.f32 %v1336, 1.0
    %v1353 = vadd.f32 %v1337, 1.0
    %v1354 = vadd.f32 %v1338, 1.0
    %v1355 = vadd.f32 %v1339, 1.0
    %v1356 = vadd.f32 %v1340, 1.0
    %v1357 = vadd.f32 %v1341, 1.0
    %v1358 = vadd.f32 %v1342, 1.0
    %v1359 = vadd.f32 %v1343, 1.0
    %v1360 = vadd.f32 %v1344, 1.0
    %v1361 = vadd.f32 %v1345, 1.0
    %v1362 = vadd.f32 %v1346, 1.0
    %v1363 = vadd.f32 %v1347, 1.0
    %v1364 = vadd.f32 %v1348, 1.0
    %v1365 = vadd.f32 %v1349, 1.0
    %v1366 = vadd.f32 %v1350, 1.0
    %v1367 = vmul.f32 %v1225, 2.0
    %v1368 = vmul.f32 %v1228, 2.0
    %v1369 = vmul.f32 %v1233, 2.0
    %v1370 = vmul.f32 %v1236, 2.0
    %v1371 = vmul.f32 %v1241, 2.0
    %v1372 = vmul.f32 %v1244, 2.0
    %v1373 = vmul.f32 %v1249, 2.0
    %v1374 = vmul.f32 %v1252, 2.0
    %v1375 = vmul.f32 %v1257, 2.0
    %v1376 = vmul.f32 %v1260, 2.0
    %v1377 = vmul.f32 %v1265, 2.0
    %v1378 = vmul.f32 %v1268, 2.0
    %v1379 = vmul.f32 %v1273, 2.0
    %v1380 = vmul.f32 %v1276, 2.0
    %v1381 = vmul.f32 %v1281, 2.0
    %v1382 = vmul.f32 %v1284, 2.0
    %v1383 = vrcp.pop %v1351
    %v1384 = vmul.f32 %v1367, %v1383
    %v1385 = vrcp.pop %v1352
    %v1386 = vmul.f32 %v1368, %v1385
    %v1387 = vrcp.pop %v1353
    %v1388 = vmul.f32 %v1369, %v1387
    %v1389 = vrcp.pop %v1354
    %v1390 = vmul.f32 %v1370, %v1389
    %v1391 = vrcp.pop %v1355
    %v1392 = vmul.f32 %v1371, %v1391
    %v1393 = vrcp.pop %v1356
    %v1394 = vmul.f32 %v1372, %v1393
    %v1395 = vrcp.pop %v1357
    %v1396 = vmul.f32 %v1373, %v1395
    %v1397 = vrcp.pop %v1358
    %v1398 = vmul.f32 %v1374, %v1397
    %v1399 = vrcp.pop %v1359
    %v1400 = vmul.f32 %v1375, %v1399
    %v1401 = vrcp.pop %v1360
    %v1402 = vmul.f32 %v1376, %v1401
    %v1403 = vrcp.pop %v1361
    %v1404 = vmul.f32 %v1377, %v1403
    %v1405 = vrcp.pop %v1362
    %v1406 = vmul.f32 %v1378, %v1405
    %v1407 = vrcp.pop %v1363
    %v1408 = vmul.f32 %v1379, %v1407
    %v1409 = vrcp.pop %v1364
    %v1410 = vmul.f32 %v1380, %v1409
    %v1411 = vrcp.pop %v1365
    %v1412 = vmul.f32 %v1381, %v1411
    %v1413 = vrcp.pop %v1366
    %v1414 = vmul.f32 %v1382, %v1413
    %v1415 = vsub.f32 %v1225, %v1384
    %v1416 = vsub.f32 %v1228, %v1386
    %v1417 = vsub.f32 %v1233, %v1388
    %v1418 = vsub.f32 %v1236, %v1390
    %v1419 = vsub.f32 %v1241, %v1392
    %v1420 = vsub.f32 %v1244, %v1394
    %v1421 = vsub.f32 %v1249, %v1396
    %v1422 = vsub.f32 %v1252, %v1398
    %v1423 = vsub.f32 %v1257, %v1400
    %v1424 = vsub.f32 %v1260, %v1402
    %v1425 = vsub.f32 %v1265, %v1404
    %v1426 = vsub.f32 %v1268, %v1406
    %v1427 = vsub.f32 %v1273, %v1408
    %v1428 = vsub.f32 %v1276, %v1410
    %v1429 = vsub.f32 %v1281, %v1412
    %v1430 = vsub.f32 %v1284, %v1414
    %v1431 = vld [vmem:[%s5] sm:$0xf]
    %v1432 = vld [vmem:[%s5 + $0x4] sm:$0xf]
    %v1433 = vld [vmem:[%s5 + $0x8] sm:$0xf]
    %v1434 = vld [vmem:[%s5 + $0xc] sm:$0xf]
    %v1435 = vld [vmem:[%s5 + $0x10] sm:$0xf]
    %v1436 = vld [vmem:[%s5 + $0x14] sm:$0xf]
    %v1437 = vld [vmem:[%s5 + $0x18] sm:$0xf]
    %v1438 = vld [vmem:[%s5 + $0x1c] sm:$0xf]
    %v1439 = vld [vmem:[%s5 + $0x20] sm:$0xf]
    %v1440 = vld [vmem:[%s5 + $0x24] sm:$0xf]
    %v1441 = vld [vmem:[%s5 + $0x28] sm:$0xf]
    %v1442 = vld [vmem:[%s5 + $0x2c] sm:$0xf]
    %v1443 = vld [vmem:[%s5 + $0x30] sm:$0xf]
    %v1444 = vld [vmem:[%s5 + $0x34] sm:$0xf]
    %v1445 = vld [vmem:[%s5 + $0x38] sm:$0xf]
    %v1446 = vld [vmem:[%s5 + $0x3c] sm:$0xf]
    %v1447 = vld [vmem:[%s6] sm:$0x1]
    %v1449 = vlaneseq
    %v1450 = vshrl.u32 %v1449, 7
    %v1451 = vsub.s32 0, %v1450
    %v1452 = vrot.slane %v1447, %v1451
    %v1470 = vunpack.c.l.b16 %v1431
    %v1471 = vunpack.c.l.b16 %v1432
    %v1472 = vunpack.c.l.b16 %v1433
    %v1473 = vunpack.c.l.b16 %v1434
    %v1474 = vunpack.c.l.b16 %v1435
    %v1475 = vunpack.c.l.b16 %v1436
    %v1476 = vunpack.c.l.b16 %v1437
    %v1477 = vunpack.c.l.b16 %v1438
    %v1478 = vunpack.c.l.b16 %v1439
    %v1479 = vunpack.c.l.b16 %v1440
    %v1480 = vunpack.c.l.b16 %v1441
    %v1481 = vunpack.c.l.b16 %v1442
    %v1482 = vunpack.c.l.b16 %v1443
    %v1483 = vunpack.c.l.b16 %v1444
    %v1484 = vunpack.c.l.b16 %v1445
    %v1485 = vunpack.c.l.b16 %v1446
    %v1486 = vpack.c.b16 %v1471, %v1470
    %v1487 = vpack.c.b16 %v1473, %v1472
    %v1488 = vpack.c.b16 %v1475, %v1474
    %v1489 = vpack.c.b16 %v1477, %v1476
    %v1490 = vpack.c.b16 %v1479, %v1478
    %v1491 = vpack.c.b16 %v1481, %v1480
    %v1492 = vpack.c.b16 %v1483, %v1482
    %v1493 = vpack.c.b16 %v1485, %v1484
    %1502 = vmatprep.subr.bf16.mxu0 0
    %1503 = vmatpush1.bf16.msra.mxu0 %v1493
    %1504 = vmatprep.subr.bf16.mxu0 0
    %1505 = vmatpush1.bf16.msra.mxu0 %v1492
    %1506 = vmatprep.subr.bf16.mxu0 0
    %1507 = vmatpush1.bf16.msra.mxu0 %v1491
    %1508 = vmatprep.subr.bf16.mxu0 0
    %1509 = vmatpush1.bf16.msra.mxu0 %v1490
    %1510 = vmatprep.subr.bf16.mxu0 0
    %1511 = vmatpush1.bf16.msra.mxu0 %v1489
    %1512 = vmatprep.subr.bf16.mxu0 0
    %1513 = vmatpush1.bf16.msra.mxu0 %v1488
    %1514 = vmatprep.subr.bf16.mxu0 0
    %1515 = vmatpush1.bf16.msra.mxu0 %v1487
    %1516 = vmatprep.subr.bf16.mxu0 0
    %1517 = vmatpush1.bf16.msra.mxu0 %v1486
    %1518 = vmatprep.subr.bf16.mxu0 0
    %1519 = vmatpush2.bf16.msra.mxu0 0
    %1520 = vmatprep.subr.bf16.mxu0 0
    %1521 = vmatpush2.bf16.msra.mxu0 0
    %1522 = vmatprep.subr.bf16.mxu0 0
    %1523 = vmatpush2.bf16.msra.mxu0 0
    %1524 = vmatprep.subr.bf16.mxu0 0
    %1525 = vmatpush2.bf16.msra.mxu0 0
    %1526 = vmatprep.subr.bf16.mxu0 0
    %1527 = vmatpush2.bf16.msra.mxu0 0
    %1528 = vmatprep.subr.bf16.mxu0 0
    %1529 = vmatpush2.bf16.msra.mxu0 0
    %1530 = vmatprep.subr.bf16.mxu0 0
    %1531 = vmatpush2.bf16.msra.mxu0 0
    %1532 = vmatprep.subr.bf16.mxu0 0
    %1533 = vmatpush2.bf16.msra.mxu0 0
    %1534 = vmatprep.mubr.bf16.mxu0 0
    %1535 = vmatmul.mubr.bf16.gmra.mxu0 %v1111
    %v1536 = vpop.f32.mrf.mxu0
    %v1537 = vadd.f32 %v1452, %v1536
    %v1538 = vpop.f32.mrf.mxu0
    %v1539 = vpop.f32.mrf.mxu0
    %v1540 = vadd.f32 %v1452, %v1539
    %v1541 = vpop.f32.mrf.mxu0
    %1542 = vmatprep.mubr.bf16.mxu0 0
    %1543 = vmatmul.mubr.bf16.gmra.mxu0 %v1112
    %v1544 = vpop.f32.mrf.mxu0
    %v1545 = vadd.f32 %v1452, %v1544
    %v1546 = vpop.f32.mrf.mxu0
    %v1547 = vpop.f32.mrf.mxu0
    %v1548 = vadd.f32 %v1452, %v1547
    %v1549 = vpop.f32.mrf.mxu0
    %1550 = vmatprep.mubr.bf16.mxu0 0
    %1551 = vmatmul.mubr.bf16.gmra.mxu0 %v1113
    %v1552 = vpop.f32.mrf.mxu0
    %v1553 = vadd.f32 %v1452, %v1552
    %v1554 = vpop.f32.mrf.mxu0
    %v1555 = vpop.f32.mrf.mxu0
    %v1556 = vadd.f32 %v1452, %v1555
    %v1557 = vpop.f32.mrf.mxu0
    %1558 = vmatprep.mubr.bf16.mxu0 0
    %1559 = vmatmul.mubr.bf16.gmra.mxu0 %v1114
    %v1560 = vpop.f32.mrf.mxu0
    %v1561 = vadd.f32 %v1452, %v1560
    %v1562 = vpop.f32.mrf.mxu0
    %v1563 = vpop.f32.mrf.mxu0
    %v1564 = vadd.f32 %v1452, %v1563
    %v1565 = vpop.f32.mrf.mxu0
    %1566 = vmatprep.mubr.bf16.mxu0 0
    %1567 = vmatmul.mubr.bf16.gmra.mxu0 %v1115
    %v1568 = vpop.f32.mrf.mxu0
    %v1569 = vadd.f32 %v1452, %v1568
    %v1570 = vpop.f32.mrf.mxu0
    %v1571 = vpop.f32.mrf.mxu0
    %v1572 = vadd.f32 %v1452, %v1571
    %v1573 = vpop.f32.mrf.mxu0
    %1574 = vmatprep.mubr.bf16.mxu0 0
    %1575 = vmatmul.mubr.bf16.gmra.mxu0 %v1116
    %v1576 = vpop.f32.mrf.mxu0
    %v1577 = vadd.f32 %v1452, %v1576
    %v1578 = vpop.f32.mrf.mxu0
    %v1579 = vpop.f32.mrf.mxu0
    %v1580 = vadd.f32 %v1452, %v1579
    %v1581 = vpop.f32.mrf.mxu0
    %1582 = vmatprep.mubr.bf16.mxu0 0
    %1583 = vmatmul.mubr.bf16.gmra.mxu0 %v1117
    %v1584 = vpop.f32.mrf.mxu0
    %v1585 = vadd.f32 %v1452, %v1584
    %v1586 = vpop.f32.mrf.mxu0
    %v1587 = vpop.f32.mrf.mxu0
    %v1588 = vadd.f32 %v1452, %v1587
    %v1589 = vpop.f32.mrf.mxu0
    %1590 = vmatprep.mubr.bf16.mxu0 0
    %1591 = vmatmul.mubr.bf16.gmra.mxu0 %v1118
    %v1592 = vpop.f32.mrf.mxu0
    %v1593 = vadd.f32 %v1452, %v1592
    %v1594 = vpop.f32.mrf.mxu0
    %v1595 = vpop.f32.mrf.mxu0
    %v1596 = vadd.f32 %v1452, %v1595
    %v1597 = vpop.f32.mrf.mxu0
    %1598 = vdwg.mxu0
    %v1599 = vmul.f32 %v1537, 1.442695
    %v1600 = vpow.pop %v1599
    %v1601 = vmul.f32 %v1540, 1.442695
    %v1602 = vpow.pop %v1601
    %v1603 = vmul.f32 %v1545, 1.442695
    %v1604 = vpow.pop %v1603
    %v1605 = vmul.f32 %v1548, 1.442695
    %v1606 = vpow.pop %v1605
    %v1607 = vmul.f32 %v1553, 1.442695
    %v1608 = vpow.pop %v1607
    %v1609 = vmul.f32 %v1556, 1.442695
    %v1610 = vpow.pop %v1609
    %v1611 = vmul.f32 %v1561, 1.442695
    %v1612 = vpow.pop %v1611
    %v1613 = vmul.f32 %v1564, 1.442695
    %v1614 = vpow.pop %v1613
    %v1615 = vmul.f32 %v1569, 1.442695
    %v1616 = vpow.pop %v1615
    %v1617 = vmul.f32 %v1572, 1.442695
    %v1618 = vpow.pop %v1617
    %v1619 = vmul.f32 %v1577, 1.442695
    %v1620 = vpow.pop %v1619
    %v1621 = vmul.f32 %v1580, 1.442695
    %v1622 = vpow.pop %v1621
    %v1623 = vmul.f32 %v1585, 1.442695
    %v1624 = vpow.pop %v1623
    %v1625 = vmul.f32 %v1588, 1.442695
    %v1626 = vpow.pop %v1625
    %v1627 = vmul.f32 %v1593, 1.442695
    %v1628 = vpow.pop %v1627
    %v1629 = vmul.f32 %v1596, 1.442695
    %v1630 = vpow.pop %v1629
    %v1631 = vadd.f32 %v1600, 1.0
    %v1632 = vadd.f32 %v1602, 1.0
    %v1633 = vadd.f32 %v1604, 1.0
    %v1634 = vadd.f32 %v1606, 1.0
    %v1635 = vadd.f32 %v1608, 1.0
    %v1636 = vadd.f32 %v1610, 1.0
    %v1637 = vadd.f32 %v1612, 1.0
    %v1638 = vadd.f32 %v1614, 1.0
    %v1639 = vadd.f32 %v1616, 1.0
    %v1640 = vadd.f32 %v1618, 1.0
    %v1641 = vadd.f32 %v1620, 1.0
    %v1642 = vadd.f32 %v1622, 1.0
    %v1643 = vadd.f32 %v1624, 1.0
    %v1644 = vadd.f32 %v1626, 1.0
    %v1645 = vadd.f32 %v1628, 1.0
    %v1646 = vadd.f32 %v1630, 1.0
    %v1647 = vmul.f32 %v1631, %v1631
    %v1648 = vmul.f32 %v1632, %v1632
    %v1649 = vmul.f32 %v1633, %v1633
    %v1650 = vmul.f32 %v1634, %v1634
    %v1651 = vmul.f32 %v1635, %v1635
    %v1652 = vmul.f32 %v1636, %v1636
    %v1653 = vmul.f32 %v1637, %v1637
    %v1654 = vmul.f32 %v1638, %v1638
    %v1655 = vmul.f32 %v1639, %v1639
    %v1656 = vmul.f32 %v1640, %v1640
    %v1657 = vmul.f32 %v1641, %v1641
    %v1658 = vmul.f32 %v1642, %v1642
    %v1659 = vmul.f32 %v1643, %v1643
    %v1660 = vmul.f32 %v1644, %v1644
    %v1661 = vmul.f32 %v1645, %v1645
    %v1662 = vmul.f32 %v1646, %v1646
    %v1663 = vadd.f32 %v1647, 1.0
    %v1664 = vadd.f32 %v1648, 1.0
    %v1665 = vadd.f32 %v1649, 1.0
    %v1666 = vadd.f32 %v1650, 1.0
    %v1667 = vadd.f32 %v1651, 1.0
    %v1668 = vadd.f32 %v1652, 1.0
    %v1669 = vadd.f32 %v1653, 1.0
    %v1670 = vadd.f32 %v1654, 1.0
    %v1671 = vadd.f32 %v1655, 1.0
    %v1672 = vadd.f32 %v1656, 1.0
    %v1673 = vadd.f32 %v1657, 1.0
    %v1674 = vadd.f32 %v1658, 1.0
    %v1675 = vadd.f32 %v1659, 1.0
    %v1676 = vadd.f32 %v1660, 1.0
    %v1677 = vadd.f32 %v1661, 1.0
    %v1678 = vadd.f32 %v1662, 1.0
    %v1679 = vmul.f32 %v1537, 2.0
    %v1680 = vmul.f32 %v1540, 2.0
    %v1681 = vmul.f32 %v1545, 2.0
    %v1682 = vmul.f32 %v1548, 2.0
    %v1683 = vmul.f32 %v1553, 2.0
    %v1684 = vmul.f32 %v1556, 2.0
    %v1685 = vmul.f32 %v1561, 2.0
    %v1686 = vmul.f32 %v1564, 2.0
    %v1687 = vmul.f32 %v1569, 2.0
    %v1688 = vmul.f32 %v1572, 2.0
    %v1689 = vmul.f32 %v1577, 2.0
    %v1690 = vmul.f32 %v1580, 2.0
    %v1691 = vmul.f32 %v1585, 2.0
    %v1692 = vmul.f32 %v1588, 2.0
    %v1693 = vmul.f32 %v1593, 2.0
    %v1694 = vmul.f32 %v1596, 2.0
    %v1695 = vrcp.pop %v1663
    %v1696 = vmul.f32 %v1679, %v1695
    %v1697 = vrcp.pop %v1664
    %v1698 = vmul.f32 %v1680, %v1697
    %v1699 = vrcp.pop %v1665
    %v1700 = vmul.f32 %v1681, %v1699
    %v1701 = vrcp.pop %v1666
    %v1702 = vmul.f32 %v1682, %v1701
    %v1703 = vrcp.pop %v1667
    %v1704 = vmul.f32 %v1683, %v1703
    %v1705 = vrcp.pop %v1668
    %v1706 = vmul.f32 %v1684, %v1705
    %v1707 = vrcp.pop %v1669
    %v1708 = vmul.f32 %v1685, %v1707
    %v1709 = vrcp.pop %v1670
    %v1710 = vmul.f32 %v1686, %v1709
    %v1711 = vrcp.pop %v1671
    %v1712 = vmul.f32 %v1687, %v1711
    %v1713 = vrcp.pop %v1672
    %v1714 = vmul.f32 %v1688, %v1713
    %v1715 = vrcp.pop %v1673
    %v1716 = vmul.f32 %v1689, %v1715
    %v1717 = vrcp.pop %v1674
    %v1718 = vmul.f32 %v1690, %v1717
    %v1719 = vrcp.pop %v1675
    %v1720 = vmul.f32 %v1691, %v1719
    %v1721 = vrcp.pop %v1676
    %v1722 = vmul.f32 %v1692, %v1721
    %v1723 = vrcp.pop %v1677
    %v1724 = vmul.f32 %v1693, %v1723
    %v1725 = vrcp.pop %v1678
    %v1726 = vmul.f32 %v1694, %v1725
    %v1727 = vsub.f32 %v1537, %v1696
    %v1728 = vsub.f32 %v1540, %v1698
    %v1729 = vsub.f32 %v1545, %v1700
    %v1730 = vsub.f32 %v1548, %v1702
    %v1731 = vsub.f32 %v1553, %v1704
    %v1732 = vsub.f32 %v1556, %v1706
    %v1733 = vsub.f32 %v1561, %v1708
    %v1734 = vsub.f32 %v1564, %v1710
    %v1735 = vsub.f32 %v1569, %v1712
    %v1736 = vsub.f32 %v1572, %v1714
    %v1737 = vsub.f32 %v1577, %v1716
    %v1738 = vsub.f32 %v1580, %v1718
    %v1739 = vsub.f32 %v1585, %v1720
    %v1740 = vsub.f32 %v1588, %v1722
    %v1741 = vsub.f32 %v1593, %v1724
    %v1742 = vsub.f32 %v1596, %v1726
    %v1743 = vpack.c.bf16 %v1728, %v1727
    %v1744 = vpack.c.bf16 %v1730, %v1729
    %v1745 = vpack.c.bf16 %v1732, %v1731
    %v1746 = vpack.c.bf16 %v1734, %v1733
    %v1747 = vpack.c.bf16 %v1736, %v1735
    %v1748 = vpack.c.bf16 %v1738, %v1737
    %v1749 = vpack.c.bf16 %v1740, %v1739
    %v1750 = vpack.c.bf16 %v1742, %v1741
    %v1751 = vld [vmem:[%s7] sm:$0xf]
    %v1752 = vld [vmem:[%s7 + $0x4] sm:$0xf]
    %v1753 = vld [vmem:[%s7 + $0x8] sm:$0xf]
    %v1754 = vld [vmem:[%s7 + $0xc] sm:$0xf]
    %v1755 = vld [vmem:[%s7 + $0x10] sm:$0xf]
    %v1756 = vld [vmem:[%s7 + $0x14] sm:$0xf]
    %v1757 = vld [vmem:[%s7 + $0x18] sm:$0xf]
    %v1758 = vld [vmem:[%s7 + $0x1c] sm:$0xf]
    %v1759 = vld [vmem:[%s8] sm:$0x1]
    %v1761 = vlaneseq
    %v1762 = vshrl.u32 %v1761, 7
    %v1763 = vsub.s32 0, %v1762
    %v1764 = vrot.slane %v1759, %v1763
    %v1774 = vunpack.c.l.b16 %v1751
    %v1775 = vunpack.c.l.b16 %v1752
    %v1776 = vunpack.c.l.b16 %v1753
    %v1777 = vunpack.c.l.b16 %v1754
    %v1778 = vunpack.c.l.b16 %v1755
    %v1779 = vunpack.c.l.b16 %v1756
    %v1780 = vunpack.c.l.b16 %v1757
    %v1781 = vunpack.c.l.b16 %v1758
    %v1782 = vpack.c.b16 %v1775, %v1774
    %v1783 = vpack.c.b16 %v1777, %v1776
    %v1784 = vpack.c.b16 %v1779, %v1778
    %v1785 = vpack.c.b16 %v1781, %v1780
    %v1791 = vsel %vm67, %v1743, 0
    %v1794 = vsel %vm67, %v1744, 0
    %v1797 = vsel %vm67, %v1745, 0
    %v1800 = vsel %vm67, %v1746, 0
    %v1803 = vsel %vm67, %v1747, 0
    %v1806 = vsel %vm67, %v1748, 0
    %v1809 = vsel %vm67, %v1749, 0
    %v1812 = vsel %vm67, %v1750, 0
    %1814 = vmatprep.subr.bf16.mxu0 0
    %1815 = vmatpush1.bf16.msra.mxu0 0
    %1816 = vmatprep.subr.bf16.mxu0 0
    %1817 = vmatpush1.bf16.msra.mxu0 0
    %1818 = vmatprep.subr.bf16.mxu0 0
    %1819 = vmatpush1.bf16.msra.mxu0 0
    %1820 = vmatprep.subr.bf16.mxu0 0
    %1821 = vmatpush1.bf16.msra.mxu0 0
    %1822 = vmatprep.subr.bf16.mxu0 0
    %1823 = vmatpush1.bf16.msra.mxu0 %v1785
    %1824 = vmatprep.subr.bf16.mxu0 0
    %1825 = vmatpush1.bf16.msra.mxu0 %v1784
    %1826 = vmatprep.subr.bf16.mxu0 0
    %1827 = vmatpush1.bf16.msra.mxu0 %v1783
    %1828 = vmatprep.subr.bf16.mxu0 0
    %1829 = vmatpush1.bf16.msra.mxu0 %v1782
    %1830 = vmatprep.subr.bf16.mxu0 0
    %1831 = vmatpush2.bf16.msra.mxu0 0
    %1832 = vmatprep.subr.bf16.mxu0 0
    %1833 = vmatpush2.bf16.msra.mxu0 0
    %1834 = vmatprep.subr.bf16.mxu0 0
    %1835 = vmatpush2.bf16.msra.mxu0 0
    %1836 = vmatprep.subr.bf16.mxu0 0
    %1837 = vmatpush2.bf16.msra.mxu0 0
    %1838 = vmatprep.subr.bf16.mxu0 0
    %1839 = vmatpush2.bf16.msra.mxu0 0
    %1840 = vmatprep.subr.bf16.mxu0 0
    %1841 = vmatpush2.bf16.msra.mxu0 0
    %1842 = vmatprep.subr.bf16.mxu0 0
    %1843 = vmatpush2.bf16.msra.mxu0 0
    %1844 = vmatprep.subr.bf16.mxu0 0
    %1845 = vmatpush2.bf16.msra.mxu0 0
    %1846 = vmatprep.mubr.bf16.mxu0 0
    %1847 = vmatmul.mubr.bf16.gmra.mxu0 %v1791
    %v1848 = vpop.f32.mrf.mxu0
    %v1849 = vadd.f32 %v1764, %v1848
    %v1850 = vpop.f32.mrf.mxu0
    %v1851 = vpop.f32.mrf.mxu0
    %v1852 = vadd.f32 %v1764, %v1851
    %v1853 = vpop.f32.mrf.mxu0
    %1854 = vmatprep.mubr.bf16.mxu0 0
    %1855 = vmatmul.mubr.bf16.gmra.mxu0 %v1794
    %v1856 = vpop.f32.mrf.mxu0
    %v1857 = vadd.f32 %v1764, %v1856
    %v1858 = vpop.f32.mrf.mxu0
    %v1859 = vpop.f32.mrf.mxu0
    %v1860 = vadd.f32 %v1764, %v1859
    %v1861 = vpop.f32.mrf.mxu0
    %1862 = vmatprep.mubr.bf16.mxu0 0
    %1863 = vmatmul.mubr.bf16.gmra.mxu0 %v1797
    %v1864 = vpop.f32.mrf.mxu0
    %v1865 = vadd.f32 %v1764, %v1864
    %v1866 = vpop.f32.mrf.mxu0
    %v1867 = vpop.f32.mrf.mxu0
    %v1868 = vadd.f32 %v1764, %v1867
    %v1869 = vpop.f32.mrf.mxu0
    %1870 = vmatprep.mubr.bf16.mxu0 0
    %1871 = vmatmul.mubr.bf16.gmra.mxu0 %v1800
    %v1872 = vpop.f32.mrf.mxu0
    %v1873 = vadd.f32 %v1764, %v1872
    %v1874 = vpop.f32.mrf.mxu0
    %v1875 = vpop.f32.mrf.mxu0
    %v1876 = vadd.f32 %v1764, %v1875
    %v1877 = vpop.f32.mrf.mxu0
    %1878 = vmatprep.mubr.bf16.mxu0 0
    %1879 = vmatmul.mubr.bf16.gmra.mxu0 %v1803
    %v1880 = vpop.f32.mrf.mxu0
    %v1881 = vadd.f32 %v1764, %v1880
    %v1882 = vpop.f32.mrf.mxu0
    %v1883 = vpop.f32.mrf.mxu0
    %v1884 = vadd.f32 %v1764, %v1883
    %v1885 = vpop.f32.mrf.mxu0
    %1886 = vmatprep.mubr.bf16.mxu0 0
    %1887 = vmatmul.mubr.bf16.gmra.mxu0 %v1806
    %v1888 = vpop.f32.mrf.mxu0
    %v1889 = vadd.f32 %v1764, %v1888
    %v1890 = vpop.f32.mrf.mxu0
    %v1891 = vpop.f32.mrf.mxu0
    %v1892 = vadd.f32 %v1764, %v1891
    %v1893 = vpop.f32.mrf.mxu0
    %1894 = vmatprep.mubr.bf16.mxu0 0
    %1895 = vmatmul.mubr.bf16.gmra.mxu0 %v1809
    %v1896 = vpop.f32.mrf.mxu0
    %v1897 = vadd.f32 %v1764, %v1896
    %v1898 = vpop.f32.mrf.mxu0
    %v1899 = vpop.f32.mrf.mxu0
    %v1900 = vadd.f32 %v1764, %v1899
    %v1901 = vpop.f32.mrf.mxu0
    %1902 = vmatprep.mubr.bf16.mxu0 0
    %1903 = vmatmul.mubr.bf16.gmra.mxu0 %v1812
    %v1904 = vpop.f32.mrf.mxu0
    %v1905 = vadd.f32 %v1764, %v1904
    %v1906 = vpop.f32.mrf.mxu0
    %v1907 = vpop.f32.mrf.mxu0
    %v1908 = vadd.f32 %v1764, %v1907
    %v1909 = vpop.f32.mrf.mxu0
    %1910 = vdwg.mxu0
    %v1911 = vmul.f32 %v1849, 1.442695
    %v1912 = vpow.pop %v1911
    %v1913 = vmul.f32 %v1852, 1.442695
    %v1914 = vpow.pop %v1913
    %v1915 = vmul.f32 %v1857, 1.442695
    %v1916 = vpow.pop %v1915
    %v1917 = vmul.f32 %v1860, 1.442695
    %v1918 = vpow.pop %v1917
    %v1919 = vmul.f32 %v1865, 1.442695
    %v1920 = vpow.pop %v1919
    %v1921 = vmul.f32 %v1868, 1.442695
    %v1922 = vpow.pop %v1921
    %v1923 = vmul.f32 %v1873, 1.442695
    %v1924 = vpow.pop %v1923
    %v1925 = vmul.f32 %v1876, 1.442695
    %v1926 = vpow.pop %v1925
    %v1927 = vmul.f32 %v1881, 1.442695
    %v1928 = vpow.pop %v1927
    %v1929 = vmul.f32 %v1884, 1.442695
    %v1930 = vpow.pop %v1929
    %v1931 = vmul.f32 %v1889, 1.442695
    %v1932 = vpow.pop %v1931
    %v1933 = vmul.f32 %v1892, 1.442695
    %v1934 = vpow.pop %v1933
    %v1935 = vmul.f32 %v1897, 1.442695
    %v1936 = vpow.pop %v1935
    %v1937 = vmul.f32 %v1900, 1.442695
    %v1938 = vpow.pop %v1937
    %v1939 = vmul.f32 %v1905, 1.442695
    %v1940 = vpow.pop %v1939
    %v1941 = vmul.f32 %v1908, 1.442695
    %v1942 = vpow.pop %v1941
    %v1943 = vadd.f32 %v1912, 1.0
    %v1944 = vadd.f32 %v1914, 1.0
    %v1945 = vadd.f32 %v1916, 1.0
    %v1946 = vadd.f32 %v1918, 1.0
    %v1947 = vadd.f32 %v1920, 1.0
    %v1948 = vadd.f32 %v1922, 1.0
    %v1949 = vadd.f32 %v1924, 1.0
    %v1950 = vadd.f32 %v1926, 1.0
    %v1951 = vadd.f32 %v1928, 1.0
    %v1952 = vadd.f32 %v1930, 1.0
    %v1953 = vadd.f32 %v1932, 1.0
    %v1954 = vadd.f32 %v1934, 1.0
    %v1955 = vadd.f32 %v1936, 1.0
    %v1956 = vadd.f32 %v1938, 1.0
    %v1957 = vadd.f32 %v1940, 1.0
    %v1958 = vadd.f32 %v1942, 1.0
    %v1959 = vmul.f32 %v1943, %v1943
    %v1960 = vmul.f32 %v1944, %v1944
    %v1961 = vmul.f32 %v1945, %v1945
    %v1962 = vmul.f32 %v1946, %v1946
    %v1963 = vmul.f32 %v1947, %v1947
    %v1964 = vmul.f32 %v1948, %v1948
    %v1965 = vmul.f32 %v1949, %v1949
    %v1966 = vmul.f32 %v1950, %v1950
    %v1967 = vmul.f32 %v1951, %v1951
    %v1968 = vmul.f32 %v1952, %v1952
    %v1969 = vmul.f32 %v1953, %v1953
    %v1970 = vmul.f32 %v1954, %v1954
    %v1971 = vmul.f32 %v1955, %v1955
    %v1972 = vmul.f32 %v1956, %v1956
    %v1973 = vmul.f32 %v1957, %v1957
    %v1974 = vmul.f32 %v1958, %v1958
    %v1975 = vadd.f32 %v1959, 1.0
    %v1976 = vadd.f32 %v1960, 1.0
    %v1977 = vadd.f32 %v1961, 1.0
    %v1978 = vadd.f32 %v1962, 1.0
    %v1979 = vadd.f32 %v1963, 1.0
    %v1980 = vadd.f32 %v1964, 1.0
    %v1981 = vadd.f32 %v1965, 1.0
    %v1982 = vadd.f32 %v1966, 1.0
    %v1983 = vadd.f32 %v1967, 1.0
    %v1984 = vadd.f32 %v1968, 1.0
    %v1985 = vadd.f32 %v1969, 1.0
    %v1986 = vadd.f32 %v1970, 1.0
    %v1987 = vadd.f32 %v1971, 1.0
    %v1988 = vadd.f32 %v1972, 1.0
    %v1989 = vadd.f32 %v1973, 1.0
    %v1990 = vadd.f32 %v1974, 1.0
    %v1991 = vmul.f32 %v1849, 2.0
    %v1992 = vmul.f32 %v1852, 2.0
    %v1993 = vmul.f32 %v1857, 2.0
    %v1994 = vmul.f32 %v1860, 2.0
    %v1995 = vmul.f32 %v1865, 2.0
    %v1996 = vmul.f32 %v1868, 2.0
    %v1997 = vmul.f32 %v1873, 2.0
    %v1998 = vmul.f32 %v1876, 2.0
    %v1999 = vmul.f32 %v1881, 2.0
    %v2000 = vmul.f32 %v1884, 2.0
    %v2001 = vmul.f32 %v1889, 2.0
    %v2002 = vmul.f32 %v1892, 2.0
    %v2003 = vmul.f32 %v1897, 2.0
    %v2004 = vmul.f32 %v1900, 2.0
    %v2005 = vmul.f32 %v1905, 2.0
    %v2006 = vmul.f32 %v1908, 2.0
    %v2007 = vrcp.pop %v1975
    %v2008 = vmul.f32 %v1991, %v2007
    %v2009 = vrcp.pop %v1976
    %v2010 = vmul.f32 %v1992, %v2009
    %v2011 = vrcp.pop %v1977
    %v2012 = vmul.f32 %v1993, %v2011
    %v2013 = vrcp.pop %v1978
    %v2014 = vmul.f32 %v1994, %v2013
    %v2015 = vrcp.pop %v1979
    %v2016 = vmul.f32 %v1995, %v2015
    %v2017 = vrcp.pop %v1980
    %v2018 = vmul.f32 %v1996, %v2017
    %v2019 = vrcp.pop %v1981
    %v2020 = vmul.f32 %v1997, %v2019
    %v2021 = vrcp.pop %v1982
    %v2022 = vmul.f32 %v1998, %v2021
    %v2023 = vrcp.pop %v1983
    %v2024 = vmul.f32 %v1999, %v2023
    %v2025 = vrcp.pop %v1984
    %v2026 = vmul.f32 %v2000, %v2025
    %v2027 = vrcp.pop %v1985
    %v2028 = vmul.f32 %v2001, %v2027
    %v2029 = vrcp.pop %v1986
    %v2030 = vmul.f32 %v2002, %v2029
    %v2031 = vrcp.pop %v1987
    %v2032 = vmul.f32 %v2003, %v2031
    %v2033 = vrcp.pop %v1988
    %v2034 = vmul.f32 %v2004, %v2033
    %v2035 = vrcp.pop %v1989
    %v2036 = vmul.f32 %v2005, %v2035
    %v2037 = vrcp.pop %v1990
    %v2038 = vmul.f32 %v2006, %v2037
    %v2039 = vsub.f32 %v1849, %v2008
    %v2040 = vsub.f32 %v1852, %v2010
    %v2041 = vsub.f32 %v1857, %v2012
    %v2042 = vsub.f32 %v1860, %v2014
    %v2043 = vsub.f32 %v1865, %v2016
    %v2044 = vsub.f32 %v1868, %v2018
    %v2045 = vsub.f32 %v1873, %v2020
    %v2046 = vsub.f32 %v1876, %v2022
    %v2047 = vsub.f32 %v1881, %v2024
    %v2048 = vsub.f32 %v1884, %v2026
    %v2049 = vsub.f32 %v1889, %v2028
    %v2050 = vsub.f32 %v1892, %v2030
    %v2051 = vsub.f32 %v1897, %v2032
    %v2052 = vsub.f32 %v1900, %v2034
    %v2053 = vsub.f32 %v1905, %v2036
    %v2054 = vsub.f32 %v1908, %v2038
    %s2055 = scalar_lea.vmem [#allocation2], 16
    %2056 = vst.msk [vmem:[%s2055 + $0x1] sm:$0xff] %vm67, %v2039
    %2057 = vst.msk [vmem:[%s2055 + $0x11] sm:$0xff] %vm67, %v2040
    %2058 = vst.msk [vmem:[%s2055 + $0x21] sm:$0xff] %vm67, %v2041
    %2059 = vst.msk [vmem:[%s2055 + $0x31] sm:$0xff] %vm67, %v2042
    %2060 = vst.msk [vmem:[%s2055 + $0x41] sm:$0xff] %vm67, %v2043
    %2061 = vst.msk [vmem:[%s2055 + $0x51] sm:$0xff] %vm67, %v2044
    %2062 = vst.msk [vmem:[%s2055 + $0x61] sm:$0xff] %vm67, %v2045
    %2063 = vst.msk [vmem:[%s2055 + $0x71] sm:$0xff] %vm67, %v2046
    %2064 = vst.msk [vmem:[%s2055 + $0xa1] sm:$0xff] %vm67, %v2047
    %2065 = vst.msk [vmem:[%s2055 + $0xb1] sm:$0xff] %vm67, %v2048
    %2066 = vst.msk [vmem:[%s2055 + $0xc1] sm:$0xff] %vm67, %v2049
    %2067 = vst.msk [vmem:[%s2055 + $0xd1] sm:$0xff] %vm67, %v2050
    %2068 = vst.msk [vmem:[%s2055 + $0xe1] sm:$0xff] %vm67, %v2051
    %2069 = vst.msk [vmem:[%s2055 + $0xf1] sm:$0xff] %vm67, %v2052
    %2070 = vst.msk [vmem:[%s2055 + $0x101] sm:$0xff] %vm67, %v2053
    %2071 = vst.msk [vmem:[%s2055 + $0x111] sm:$0xff] %vm67, %v2054
    %v2072 = vld [vmem:[#allocation2] sm:$0xff]
    %v2073 = vld [vmem:[#allocation2 + $0x10] sm:$0xff]
    %v2074 = vld [vmem:[#allocation2 + $0x20] sm:$0xff]
    %v2075 = vld [vmem:[#allocation2 + $0x30] sm:$0xff]
    %v2076 = vld [vmem:[#allocation2 + $0x40] sm:$0xff]
    %v2077 = vld [vmem:[#allocation2 + $0x50] sm:$0xff]
    %v2078 = vld [vmem:[#allocation2 + $0x60] sm:$0xff]
    %v2079 = vld [vmem:[#allocation2 + $0x70] sm:$0xff]
    %v2080 = vld [vmem:[#allocation2 + $0xa0] sm:$0xff]
    %v2081 = vld [vmem:[#allocation2 + $0xb0] sm:$0xff]
    %v2082 = vld [vmem:[#allocation2 + $0xc0] sm:$0xff]
    %v2083 = vld [vmem:[#allocation2 + $0xd0] sm:$0xff]
    %v2084 = vld [vmem:[#allocation2 + $0xe0] sm:$0xff]
    %v2085 = vld [vmem:[#allocation2 + $0xf0] sm:$0xff]
    %v2086 = vld [vmem:[#allocation2 + $0x100] sm:$0xff]
    %v2087 = vld [vmem:[#allocation2 + $0x110] sm:$0xff]
    %v2088 = vpack.c.bf16 %v2073, %v2072
    %v2089 = vpack.c.bf16 %v2075, %v2074
    %v2090 = vpack.c.bf16 %v2077, %v2076
    %v2091 = vpack.c.bf16 %v2079, %v2078
    %v2092 = vpack.c.bf16 %v2081, %v2080
    %v2093 = vpack.c.bf16 %v2083, %v2082
    %v2094 = vpack.c.bf16 %v2085, %v2084
    %v2095 = vpack.c.bf16 %v2087, %v2086
    %v2096 = vld [vmem:[%s9] sm:$0xf]
    %v2097 = vld [vmem:[%s9 + $0x4] sm:$0xf]
    %v2098 = vld [vmem:[%s9 + $0x8] sm:$0xf]
    %v2099 = vld [vmem:[%s9 + $0xc] sm:$0xf]
    %v2100 = vld [vmem:[%s9 + $0x10] sm:$0xf]
    %v2101 = vld [vmem:[%s9 + $0x14] sm:$0xf]
    %v2102 = vld [vmem:[%s9 + $0x18] sm:$0xf]
    %v2103 = vld [vmem:[%s9 + $0x1c] sm:$0xf]
    %v2104 = vld [vmem:[#allocation2 + $0x1] sm:$0xff]
    %v2105 = vld [vmem:[#allocation2 + $0x11] sm:$0xff]
    %v2106 = vld [vmem:[#allocation2 + $0x21] sm:$0xff]
    %v2107 = vld [vmem:[#allocation2 + $0x31] sm:$0xff]
    %v2108 = vld [vmem:[#allocation2 + $0x41] sm:$0xff]
    %v2109 = vld [vmem:[#allocation2 + $0x51] sm:$0xff]
    %v2110 = vld [vmem:[#allocation2 + $0x61] sm:$0xff]
    %v2111 = vld [vmem:[#allocation2 + $0x71] sm:$0xff]
    %v2112 = vld [vmem:[#allocation2 + $0xa1] sm:$0xff]
    %v2113 = vld [vmem:[#allocation2 + $0xb1] sm:$0xff]
    %v2114 = vld [vmem:[#allocation2 + $0xc1] sm:$0xff]
    %v2115 = vld [vmem:[#allocation2 + $0xd1] sm:$0xff]
    %v2116 = vld [vmem:[#allocation2 + $0xe1] sm:$0xff]
    %v2117 = vld [vmem:[#allocation2 + $0xf1] sm:$0xff]
    %v2118 = vld [vmem:[#allocation2 + $0x101] sm:$0xff]
    %v2119 = vld [vmem:[#allocation2 + $0x111] sm:$0xff]
    %v2120 = vpack.c.bf16 %v2105, %v2104
    %v2121 = vpack.c.bf16 %v2107, %v2106
    %v2122 = vpack.c.bf16 %v2109, %v2108
    %v2123 = vpack.c.bf16 %v2111, %v2110
    %v2124 = vpack.c.bf16 %v2113, %v2112
    %v2125 = vpack.c.bf16 %v2115, %v2114
    %v2126 = vpack.c.bf16 %v2117, %v2116
    %v2127 = vpack.c.bf16 %v2119, %v2118
    %s2128 = scalar_lea.vmem %s9, 32
    %v2129 = vld [vmem:[%s2128] sm:$0xf]
    %v2130 = vld [vmem:[%s2128 + $0x4] sm:$0xf]
    %v2131 = vld [vmem:[%s2128 + $0x8] sm:$0xf]
    %v2132 = vld [vmem:[%s2128 + $0xc] sm:$0xf]
    %v2133 = vld [vmem:[%s2128 + $0x10] sm:$0xf]
    %v2134 = vld [vmem:[%s2128 + $0x14] sm:$0xf]
    %v2135 = vld [vmem:[%s2128 + $0x18] sm:$0xf]
    %v2136 = vld [vmem:[%s2128 + $0x1c] sm:$0xf]
    %v2145 = vunpack.c.l.b16 %v2129
    %v2146 = vunpack.c.l.b16 %v2130
    %v2147 = vunpack.c.l.b16 %v2131
    %v2148 = vunpack.c.l.b16 %v2132
    %v2149 = vunpack.c.l.b16 %v2133
    %v2150 = vunpack.c.l.b16 %v2134
    %v2151 = vunpack.c.l.b16 %v2135
    %v2152 = vunpack.c.l.b16 %v2136
    %v2153 = vpack.c.b16 %v2146, %v2145
    %v2154 = vpack.c.b16 %v2148, %v2147
    %v2155 = vpack.c.b16 %v2150, %v2149
    %v2156 = vpack.c.b16 %v2152, %v2151
    %v2162 = vsel %vm67, %v2120, 0
    %v2165 = vsel %vm67, %v2121, 0
    %v2168 = vsel %vm67, %v2122, 0
    %v2171 = vsel %vm67, %v2123, 0
    %v2174 = vsel %vm67, %v2124, 0
    %v2177 = vsel %vm67, %v2125, 0
    %v2180 = vsel %vm67, %v2126, 0
    %v2183 = vsel %vm67, %v2127, 0
    %2185 = vmatprep.subr.bf16.mxu0 0
    %2186 = vmatpush1.bf16.msra.mxu0 0
    %2187 = vmatprep.subr.bf16.mxu0 0
    %2188 = vmatpush1.bf16.msra.mxu0 0
    %2189 = vmatprep.subr.bf16.mxu0 0
    %2190 = vmatpush1.bf16.msra.mxu0 0
    %2191 = vmatprep.subr.bf16.mxu0 0
    %2192 = vmatpush1.bf16.msra.mxu0 0
    %2193 = vmatprep.subr.bf16.mxu0 0
    %2194 = vmatpush1.bf16.msra.mxu0 %v2156
    %2195 = vmatprep.subr.bf16.mxu0 0
    %2196 = vmatpush1.bf16.msra.mxu0 %v2155
    %2197 = vmatprep.subr.bf16.mxu0 0
    %2198 = vmatpush1.bf16.msra.mxu0 %v2154
    %2199 = vmatprep.subr.bf16.mxu0 0
    %2200 = vmatpush1.bf16.msra.mxu0 %v2153
    %2201 = vmatprep.subr.bf16.mxu0 0
    %2202 = vmatpush2.bf16.msra.mxu0 0
    %2203 = vmatprep.subr.bf16.mxu0 0
    %2204 = vmatpush2.bf16.msra.mxu0 0
    %2205 = vmatprep.subr.bf16.mxu0 0
    %2206 = vmatpush2.bf16.msra.mxu0 0
    %2207 = vmatprep.subr.bf16.mxu0 0
    %2208 = vmatpush2.bf16.msra.mxu0 0
    %2209 = vmatprep.subr.bf16.mxu0 0
    %2210 = vmatpush2.bf16.msra.mxu0 0
    %2211 = vmatprep.subr.bf16.mxu0 0
    %2212 = vmatpush2.bf16.msra.mxu0 0
    %2213 = vmatprep.subr.bf16.mxu0 0
    %2214 = vmatpush2.bf16.msra.mxu0 0
    %2215 = vmatprep.subr.bf16.mxu0 0
    %2216 = vmatpush2.bf16.msra.mxu0 0
    %2217 = vmatprep.mubr.bf16.mxu0 0
    %2218 = vmatmul.mubr.bf16.gmra.mxu0 %v2162
    %v2219 = vpop.f32.mrf.mxu0
    %v2220 = vadd.f32 0.0, %v2219
    %v2221 = vpop.f32.mrf.mxu0
    %v2222 = vpop.f32.mrf.mxu0
    %v2223 = vadd.f32 0.0, %v2222
    %v2224 = vpop.f32.mrf.mxu0
    %2225 = vmatprep.mubr.bf16.mxu0 0
    %2226 = vmatmul.mubr.bf16.gmra.mxu0 %v2165
    %v2227 = vpop.f32.mrf.mxu0
    %v2228 = vadd.f32 0.0, %v2227
    %v2229 = vpop.f32.mrf.mxu0
    %v2230 = vpop.f32.mrf.mxu0
    %v2231 = vadd.f32 0.0, %v2230
    %v2232 = vpop.f32.mrf.mxu0
    %2233 = vmatprep.mubr.bf16.mxu0 0
    %2234 = vmatmul.mubr.bf16.gmra.mxu0 %v2168
    %v2235 = vpop.f32.mrf.mxu0
    %v2236 = vadd.f32 0.0, %v2235
    %v2237 = vpop.f32.mrf.mxu0
    %v2238 = vpop.f32.mrf.mxu0
    %v2239 = vadd.f32 0.0, %v2238
    %v2240 = vpop.f32.mrf.mxu0
    %2241 = vmatprep.mubr.bf16.mxu0 0
    %2242 = vmatmul.mubr.bf16.gmra.mxu0 %v2171
    %v2243 = vpop.f32.mrf.mxu0
    %v2244 = vadd.f32 0.0, %v2243
    %v2245 = vpop.f32.mrf.mxu0
    %v2246 = vpop.f32.mrf.mxu0
    %v2247 = vadd.f32 0.0, %v2246
    %v2248 = vpop.f32.mrf.mxu0
    %2249 = vmatprep.mubr.bf16.mxu0 0
    %2250 = vmatmul.mubr.bf16.gmra.mxu0 %v2174
    %v2251 = vpop.f32.mrf.mxu0
    %v2252 = vadd.f32 0.0, %v2251
    %v2253 = vpop.f32.mrf.mxu0
    %v2254 = vpop.f32.mrf.mxu0
    %v2255 = vadd.f32 0.0, %v2254
    %v2256 = vpop.f32.mrf.mxu0
    %2257 = vmatprep.mubr.bf16.mxu0 0
    %2258 = vmatmul.mubr.bf16.gmra.mxu0 %v2177
    %v2259 = vpop.f32.mrf.mxu0
    %v2260 = vadd.f32 0.0, %v2259
    %v2261 = vpop.f32.mrf.mxu0
    %v2262 = vpop.f32.mrf.mxu0
    %v2263 = vadd.f32 0.0, %v2262
    %v2264 = vpop.f32.mrf.mxu0
    %2265 = vmatprep.mubr.bf16.mxu0 0
    %2266 = vmatmul.mubr.bf16.gmra.mxu0 %v2180
    %v2267 = vpop.f32.mrf.mxu0
    %v2268 = vadd.f32 0.0, %v2267
    %v2269 = vpop.f32.mrf.mxu0
    %v2270 = vpop.f32.mrf.mxu0
    %v2271 = vadd.f32 0.0, %v2270
    %v2272 = vpop.f32.mrf.mxu0
    %2273 = vmatprep.mubr.bf16.mxu0 0
    %2274 = vmatmul.mubr.bf16.gmra.mxu0 %v2183
    %v2275 = vpop.f32.mrf.mxu0
    %v2276 = vadd.f32 0.0, %v2275
    %v2277 = vpop.f32.mrf.mxu0
    %v2278 = vpop.f32.mrf.mxu0
    %v2279 = vadd.f32 0.0, %v2278
    %v2280 = vpop.f32.mrf.mxu0
    %2281 = vdwg.mxu0
    %v2290 = vunpack.c.l.b16 %v2096
    %v2291 = vunpack.c.l.b16 %v2097
    %v2292 = vunpack.c.l.b16 %v2098
    %v2293 = vunpack.c.l.b16 %v2099
    %v2294 = vunpack.c.l.b16 %v2100
    %v2295 = vunpack.c.l.b16 %v2101
    %v2296 = vunpack.c.l.b16 %v2102
    %v2297 = vunpack.c.l.b16 %v2103
    %v2298 = vpack.c.b16 %v2291, %v2290
    %v2299 = vpack.c.b16 %v2293, %v2292
    %v2300 = vpack.c.b16 %v2295, %v2294
    %v2301 = vpack.c.b16 %v2297, %v2296
    %v2307 = vsel %vm67, %v2088, 0
    %v2310 = vsel %vm67, %v2089, 0
    %v2313 = vsel %vm67, %v2090, 0
    %v2316 = vsel %vm67, %v2091, 0
    %v2319 = vsel %vm67, %v2092, 0
    %v2322 = vsel %vm67, %v2093, 0
    %v2325 = vsel %vm67, %v2094, 0
    %v2328 = vsel %vm67, %v2095, 0
    %2330 = vmatprep.subr.bf16.mxu0 0
    %2331 = vmatpush1.bf16.msra.mxu0 0
    %2332 = vmatprep.subr.bf16.mxu0 0
    %2333 = vmatpush1.bf16.msra.mxu0 0
    %2334 = vmatprep.subr.bf16.mxu0 0
    %2335 = vmatpush1.bf16.msra.mxu0 0
    %2336 = vmatprep.subr.bf16.mxu0 0
    %2337 = vmatpush1.bf16.msra.mxu0 0
    %2338 = vmatprep.subr.bf16.mxu0 0
    %2339 = vmatpush1.bf16.msra.mxu0 %v2301
    %2340 = vmatprep.subr.bf16.mxu0 0
    %2341 = vmatpush1.bf16.msra.mxu0 %v2300
    %2342 = vmatprep.subr.bf16.mxu0 0
    %2343 = vmatpush1.bf16.msra.mxu0 %v2299
    %2344 = vmatprep.subr.bf16.mxu0 0
    %2345 = vmatpush1.bf16.msra.mxu0 %v2298
    %2346 = vmatprep.subr.bf16.mxu0 0
    %2347 = vmatpush2.bf16.msra.mxu0 0
    %2348 = vmatprep.subr.bf16.mxu0 0
    %2349 = vmatpush2.bf16.msra.mxu0 0
    %2350 = vmatprep.subr.bf16.mxu0 0
    %2351 = vmatpush2.bf16.msra.mxu0 0
    %2352 = vmatprep.subr.bf16.mxu0 0
    %2353 = vmatpush2.bf16.msra.mxu0 0
    %2354 = vmatprep.subr.bf16.mxu0 0
    %2355 = vmatpush2.bf16.msra.mxu0 0
    %2356 = vmatprep.subr.bf16.mxu0 0
    %2357 = vmatpush2.bf16.msra.mxu0 0
    %2358 = vmatprep.subr.bf16.mxu0 0
    %2359 = vmatpush2.bf16.msra.mxu0 0
    %2360 = vmatprep.subr.bf16.mxu0 0
    %2361 = vmatpush2.bf16.msra.mxu0 0
    %2362 = vmatprep.mubr.bf16.mxu0 0
    %2363 = vmatmul.mubr.bf16.gmra.mxu0 %v2307
    %v2364 = vpop.f32.mrf.mxu0
    %v2365 = vadd.f32 %v2220, %v2364
    %v2366 = vpop.f32.mrf.mxu0
    %v2367 = vpop.f32.mrf.mxu0
    %v2368 = vadd.f32 %v2223, %v2367
    %v2369 = vpop.f32.mrf.mxu0
    %2370 = vmatprep.mubr.bf16.mxu0 0
    %2371 = vmatmul.mubr.bf16.gmra.mxu0 %v2310
    %v2372 = vpop.f32.mrf.mxu0
    %v2373 = vadd.f32 %v2228, %v2372
    %v2374 = vpop.f32.mrf.mxu0
    %v2375 = vpop.f32.mrf.mxu0
    %v2376 = vadd.f32 %v2231, %v2375
    %v2377 = vpop.f32.mrf.mxu0
    %2378 = vmatprep.mubr.bf16.mxu0 0
    %2379 = vmatmul.mubr.bf16.gmra.mxu0 %v2313
    %v2380 = vpop.f32.mrf.mxu0
    %v2381 = vadd.f32 %v2236, %v2380
    %v2382 = vpop.f32.mrf.mxu0
    %v2383 = vpop.f32.mrf.mxu0
    %v2384 = vadd.f32 %v2239, %v2383
    %v2385 = vpop.f32.mrf.mxu0
    %2386 = vmatprep.mubr.bf16.mxu0 0
    %2387 = vmatmul.mubr.bf16.gmra.mxu0 %v2316
    %v2388 = vpop.f32.mrf.mxu0
    %v2389 = vadd.f32 %v2244, %v2388
    %v2390 = vpop.f32.mrf.mxu0
    %v2391 = vpop.f32.mrf.mxu0
    %v2392 = vadd.f32 %v2247, %v2391
    %v2393 = vpop.f32.mrf.mxu0
    %2394 = vmatprep.mubr.bf16.mxu0 0
    %2395 = vmatmul.mubr.bf16.gmra.mxu0 %v2319
    %v2396 = vpop.f32.mrf.mxu0
    %v2397 = vadd.f32 %v2252, %v2396
    %v2398 = vpop.f32.mrf.mxu0
    %v2399 = vpop.f32.mrf.mxu0
    %v2400 = vadd.f32 %v2255, %v2399
    %v2401 = vpop.f32.mrf.mxu0
    %2402 = vmatprep.mubr.bf16.mxu0 0
    %2403 = vmatmul.mubr.bf16.gmra.mxu0 %v2322
    %v2404 = vpop.f32.mrf.mxu0
    %v2405 = vadd.f32 %v2260, %v2404
    %v2406 = vpop.f32.mrf.mxu0
    %v2407 = vpop.f32.mrf.mxu0
    %v2408 = vadd.f32 %v2263, %v2407
    %v2409 = vpop.f32.mrf.mxu0
    %2410 = vmatprep.mubr.bf16.mxu0 0
    %2411 = vmatmul.mubr.bf16.gmra.mxu0 %v2325
    %v2412 = vpop.f32.mrf.mxu0
    %v2413 = vadd.f32 %v2268, %v2412
    %v2414 = vpop.f32.mrf.mxu0
    %v2415 = vpop.f32.mrf.mxu0
    %v2416 = vadd.f32 %v2271, %v2415
    %v2417 = vpop.f32.mrf.mxu0
    %2418 = vmatprep.mubr.bf16.mxu0 0
    %2419 = vmatmul.mubr.bf16.gmra.mxu0 %v2328
    %v2420 = vpop.f32.mrf.mxu0
    %v2421 = vadd.f32 %v2276, %v2420
    %v2422 = vpop.f32.mrf.mxu0
    %v2423 = vpop.f32.mrf.mxu0
    %v2424 = vadd.f32 %v2279, %v2423
    %v2425 = vpop.f32.mrf.mxu0
    %2426 = vdwg.mxu0
    %v2427 = vld [vmem:[#allocation2 + $0x2] sm:$0xff]
    %v2428 = vld [vmem:[#allocation2 + $0x12] sm:$0xff]
    %v2429 = vld [vmem:[#allocation2 + $0x22] sm:$0xff]
    %v2430 = vld [vmem:[#allocation2 + $0x32] sm:$0xff]
    %v2431 = vld [vmem:[#allocation2 + $0x42] sm:$0xff]
    %v2432 = vld [vmem:[#allocation2 + $0x52] sm:$0xff]
    %v2433 = vld [vmem:[#allocation2 + $0x62] sm:$0xff]
    %v2434 = vld [vmem:[#allocation2 + $0x72] sm:$0xff]
    %v2435 = vld [vmem:[#allocation2 + $0xa2] sm:$0xff]
    %v2436 = vld [vmem:[#allocation2 + $0xb2] sm:$0xff]
    %v2437 = vld [vmem:[#allocation2 + $0xc2] sm:$0xff]
    %v2438 = vld [vmem:[#allocation2 + $0xd2] sm:$0xff]
    %v2439 = vld [vmem:[#allocation2 + $0xe2] sm:$0xff]
    %v2440 = vld [vmem:[#allocation2 + $0xf2] sm:$0xff]
    %v2441 = vld [vmem:[#allocation2 + $0x102] sm:$0xff]
    %v2442 = vld [vmem:[#allocation2 + $0x112] sm:$0xff]
    %v2443 = vpack.c.bf16 %v2428, %v2427
    %v2444 = vpack.c.bf16 %v2430, %v2429
    %v2445 = vpack.c.bf16 %v2432, %v2431
    %v2446 = vpack.c.bf16 %v2434, %v2433
    %v2447 = vpack.c.bf16 %v2436, %v2435
    %v2448 = vpack.c.bf16 %v2438, %v2437
    %v2449 = vpack.c.bf16 %v2440, %v2439
    %v2450 = vpack.c.bf16 %v2442, %v2441
    %s2451 = scalar_lea.vmem %s9, 64
    %v2452 = vld [vmem:[%s2451] sm:$0xf]
    %v2453 = vld [vmem:[%s2451 + $0x4] sm:$0xf]
    %v2454 = vld [vmem:[%s2451 + $0x8] sm:$0xf]
    %v2455 = vld [vmem:[%s2451 + $0xc] sm:$0xf]
    %v2456 = vld [vmem:[%s2451 + $0x10] sm:$0xf]
    %v2457 = vld [vmem:[%s2451 + $0x14] sm:$0xf]
    %v2458 = vld [vmem:[%s2451 + $0x18] sm:$0xf]
    %v2459 = vld [vmem:[%s2451 + $0x1c] sm:$0xf]
    %v2468 = vunpack.c.l.b16 %v2452
    %v2469 = vunpack.c.l.b16 %v2453
    %v2470 = vunpack.c.l.b16 %v2454
    %v2471 = vunpack.c.l.b16 %v2455
    %v2472 = vunpack.c.l.b16 %v2456
    %v2473 = vunpack.c.l.b16 %v2457
    %v2474 = vunpack.c.l.b16 %v2458
    %v2475 = vunpack.c.l.b16 %v2459
    %v2476 = vpack.c.b16 %v2469, %v2468
    %v2477 = vpack.c.b16 %v2471, %v2470
    %v2478 = vpack.c.b16 %v2473, %v2472
    %v2479 = vpack.c.b16 %v2475, %v2474
    %v2485 = vsel %vm67, %v2443, 0
    %v2488 = vsel %vm67, %v2444, 0
    %v2491 = vsel %vm67, %v2445, 0
    %v2494 = vsel %vm67, %v2446, 0
    %v2497 = vsel %vm67, %v2447, 0
    %v2500 = vsel %vm67, %v2448, 0
    %v2503 = vsel %vm67, %v2449, 0
    %v2506 = vsel %vm67, %v2450, 0
    %2508 = vmatprep.subr.bf16.mxu0 0
    %2509 = vmatpush1.bf16.msra.mxu0 0
    %2510 = vmatprep.subr.bf16.mxu0 0
    %2511 = vmatpush1.bf16.msra.mxu0 0
    %2512 = vmatprep.subr.bf16.mxu0 0
    %2513 = vmatpush1.bf16.msra.mxu0 0
    %2514 = vmatprep.subr.bf16.mxu0 0
    %2515 = vmatpush1.bf16.msra.mxu0 0
    %2516 = vmatprep.subr.bf16.mxu0 0
    %2517 = vmatpush1.bf16.msra.mxu0 %v2479
    %2518 = vmatprep.subr.bf16.mxu0 0
    %2519 = vmatpush1.bf16.msra.mxu0 %v2478
    %2520 = vmatprep.subr.bf16.mxu0 0
    %2521 = vmatpush1.bf16.msra.mxu0 %v2477
    %2522 = vmatprep.subr.bf16.mxu0 0
    %2523 = vmatpush1.bf16.msra.mxu0 %v2476
    %2524 = vmatprep.subr.bf16.mxu0 0
    %2525 = vmatpush2.bf16.msra.mxu0 0
    %2526 = vmatprep.subr.bf16.mxu0 0
    %2527 = vmatpush2.bf16.msra.mxu0 0
    %2528 = vmatprep.subr.bf16.mxu0 0
    %2529 = vmatpush2.bf16.msra.mxu0 0
    %2530 = vmatprep.subr.bf16.mxu0 0
    %2531 = vmatpush2.bf16.msra.mxu0 0
    %2532 = vmatprep.subr.bf16.mxu0 0
    %2533 = vmatpush2.bf16.msra.mxu0 0
    %2534 = vmatprep.subr.bf16.mxu0 0
    %2535 = vmatpush2.bf16.msra.mxu0 0
    %2536 = vmatprep.subr.bf16.mxu0 0
    %2537 = vmatpush2.bf16.msra.mxu0 0
    %2538 = vmatprep.subr.bf16.mxu0 0
    %2539 = vmatpush2.bf16.msra.mxu0 0
    %2540 = vmatprep.mubr.bf16.mxu0 0
    %2541 = vmatmul.mubr.bf16.gmra.mxu0 %v2485
    %v2542 = vpop.f32.mrf.mxu0
    %v2543 = vadd.f32 0.0, %v2542
    %v2544 = vpop.f32.mrf.mxu0
    %v2545 = vpop.f32.mrf.mxu0
    %v2546 = vadd.f32 0.0, %v2545
    %v2547 = vpop.f32.mrf.mxu0
    %2548 = vmatprep.mubr.bf16.mxu0 0
    %2549 = vmatmul.mubr.bf16.gmra.mxu0 %v2488
    %v2550 = vpop.f32.mrf.mxu0
    %v2551 = vadd.f32 0.0, %v2550
    %v2552 = vpop.f32.mrf.mxu0
    %v2553 = vpop.f32.mrf.mxu0
    %v2554 = vadd.f32 0.0, %v2553
    %v2555 = vpop.f32.mrf.mxu0
    %2556 = vmatprep.mubr.bf16.mxu0 0
    %2557 = vmatmul.mubr.bf16.gmra.mxu0 %v2491
    %v2558 = vpop.f32.mrf.mxu0
    %v2559 = vadd.f32 0.0, %v2558
    %v2560 = vpop.f32.mrf.mxu0
    %v2561 = vpop.f32.mrf.mxu0
    %v2562 = vadd.f32 0.0, %v2561
    %v2563 = vpop.f32.mrf.mxu0
    %2564 = vmatprep.mubr.bf16.mxu0 0
    %2565 = vmatmul.mubr.bf16.gmra.mxu0 %v2494
    %v2566 = vpop.f32.mrf.mxu0
    %v2567 = vadd.f32 0.0, %v2566
    %v2568 = vpop.f32.mrf.mxu0
    %v2569 = vpop.f32.mrf.mxu0
    %v2570 = vadd.f32 0.0, %v2569
    %v2571 = vpop.f32.mrf.mxu0
    %2572 = vmatprep.mubr.bf16.mxu0 0
    %2573 = vmatmul.mubr.bf16.gmra.mxu0 %v2497
    %v2574 = vpop.f32.mrf.mxu0
    %v2575 = vadd.f32 0.0, %v2574
    %v2576 = vpop.f32.mrf.mxu0
    %v2577 = vpop.f32.mrf.mxu0
    %v2578 = vadd.f32 0.0, %v2577
    %v2579 = vpop.f32.mrf.mxu0
    %2580 = vmatprep.mubr.bf16.mxu0 0
    %2581 = vmatmul.mubr.bf16.gmra.mxu0 %v2500
    %v2582 = vpop.f32.mrf.mxu0
    %v2583 = vadd.f32 0.0, %v2582
    %v2584 = vpop.f32.mrf.mxu0
    %v2585 = vpop.f32.mrf.mxu0
    %v2586 = vadd.f32 0.0, %v2585
    %v2587 = vpop.f32.mrf.mxu0
    %2588 = vmatprep.mubr.bf16.mxu0 0
    %2589 = vmatmul.mubr.bf16.gmra.mxu0 %v2503
    %v2590 = vpop.f32.mrf.mxu0
    %v2591 = vadd.f32 0.0, %v2590
    %v2592 = vpop.f32.mrf.mxu0
    %v2593 = vpop.f32.mrf.mxu0
    %v2594 = vadd.f32 0.0, %v2593
    %v2595 = vpop.f32.mrf.mxu0
    %2596 = vmatprep.mubr.bf16.mxu0 0
    %2597 = vmatmul.mubr.bf16.gmra.mxu0 %v2506
    %v2598 = vpop.f32.mrf.mxu0
    %v2599 = vadd.f32 0.0, %v2598
    %v2600 = vpop.f32.mrf.mxu0
    %v2601 = vpop.f32.mrf.mxu0
    %v2602 = vadd.f32 0.0, %v2601
    %v2603 = vpop.f32.mrf.mxu0
    %2604 = vdwg.mxu0
    %v2605 = vadd.f32 %v2365, %v2543
    %v2606 = vadd.f32 %v2368, %v2546
    %v2607 = vadd.f32 %v2373, %v2551
    %v2608 = vadd.f32 %v2376, %v2554
    %v2609 = vadd.f32 %v2381, %v2559
    %v2610 = vadd.f32 %v2384, %v2562
    %v2611 = vadd.f32 %v2389, %v2567
    %v2612 = vadd.f32 %v2392, %v2570
    %v2613 = vadd.f32 %v2397, %v2575
    %v2614 = vadd.f32 %v2400, %v2578
    %v2615 = vadd.f32 %v2405, %v2583
    %v2616 = vadd.f32 %v2408, %v2586
    %v2617 = vadd.f32 %v2413, %v2591
    %v2618 = vadd.f32 %v2416, %v2594
    %v2619 = vadd.f32 %v2421, %v2599
    %v2620 = vadd.f32 %v2424, %v2602
    %v2621 = vld [vmem:[%s2055] sm:$0xff]
    %v2622 = vld [vmem:[%s2055 + $0x10] sm:$0xff]
    %v2623 = vld [vmem:[%s2055 + $0x20] sm:$0xff]
    %v2624 = vld [vmem:[%s2055 + $0x30] sm:$0xff]
    %v2625 = vld [vmem:[%s2055 + $0x40] sm:$0xff]
    %v2626 = vld [vmem:[%s2055 + $0x50] sm:$0xff]
    %v2627 = vld [vmem:[%s2055 + $0x60] sm:$0xff]
    %v2628 = vld [vmem:[%s2055 + $0x70] sm:$0xff]
    %v2629 = vld [vmem:[%s2055 + $0xa0] sm:$0xff]
    %v2630 = vld [vmem:[%s2055 + $0xb0] sm:$0xff]
    %v2631 = vld [vmem:[%s2055 + $0xc0] sm:$0xff]
    %v2632 = vld [vmem:[%s2055 + $0xd0] sm:$0xff]
    %v2633 = vld [vmem:[%s2055 + $0xe0] sm:$0xff]
    %v2634 = vld [vmem:[%s2055 + $0xf0] sm:$0xff]
    %v2635 = vld [vmem:[%s2055 + $0x100] sm:$0xff]
    %v2636 = vld [vmem:[%s2055 + $0x110] sm:$0xff]
    %v2637 = vpack.c.bf16 %v2622, %v2621
    %v2638 = vpack.c.bf16 %v2624, %v2623
    %v2639 = vpack.c.bf16 %v2626, %v2625
    %v2640 = vpack.c.bf16 %v2628, %v2627
    %v2641 = vpack.c.bf16 %v2630, %v2629
    %v2642 = vpack.c.bf16 %v2632, %v2631
    %v2643 = vpack.c.bf16 %v2634, %v2633
    %v2644 = vpack.c.bf16 %v2636, %v2635
    %s2645 = scalar_lea.vmem %s9, 96
    %v2646 = vld [vmem:[%s2645] sm:$0xf]
    %v2647 = vld [vmem:[%s2645 + $0x4] sm:$0xf]
    %v2648 = vld [vmem:[%s2645 + $0x8] sm:$0xf]
    %v2649 = vld [vmem:[%s2645 + $0xc] sm:$0xf]
    %v2650 = vld [vmem:[%s2645 + $0x10] sm:$0xf]
    %v2651 = vld [vmem:[%s2645 + $0x14] sm:$0xf]
    %v2652 = vld [vmem:[%s2645 + $0x18] sm:$0xf]
    %v2653 = vld [vmem:[%s2645 + $0x1c] sm:$0xf]
    %v2662 = vunpack.c.l.b16 %v2646
    %v2663 = vunpack.c.l.b16 %v2647
    %v2664 = vunpack.c.l.b16 %v2648
    %v2665 = vunpack.c.l.b16 %v2649
    %v2666 = vunpack.c.l.b16 %v2650
    %v2667 = vunpack.c.l.b16 %v2651
    %v2668 = vunpack.c.l.b16 %v2652
    %v2669 = vunpack.c.l.b16 %v2653
    %v2670 = vpack.c.b16 %v2663, %v2662
    %v2671 = vpack.c.b16 %v2665, %v2664
    %v2672 = vpack.c.b16 %v2667, %v2666
    %v2673 = vpack.c.b16 %v2669, %v2668
    %v2679 = vsel %vm67, %v2637, 0
    %v2682 = vsel %vm67, %v2638, 0
    %v2685 = vsel %vm67, %v2639, 0
    %v2688 = vsel %vm67, %v2640, 0
    %v2691 = vsel %vm67, %v2641, 0
    %v2694 = vsel %vm67, %v2642, 0
    %v2697 = vsel %vm67, %v2643, 0
    %v2700 = vsel %vm67, %v2644, 0
    %2702 = vmatprep.subr.bf16.mxu0 0
    %2703 = vmatpush1.bf16.msra.mxu0 0
    %2704 = vmatprep.subr.bf16.mxu0 0
    %2705 = vmatpush1.bf16.msra.mxu0 0
    %2706 = vmatprep.subr.bf16.mxu0 0
    %2707 = vmatpush1.bf16.msra.mxu0 0
    %2708 = vmatprep.subr.bf16.mxu0 0
    %2709 = vmatpush1.bf16.msra.mxu0 0
    %2710 = vmatprep.subr.bf16.mxu0 0
    %2711 = vmatpush1.bf16.msra.mxu0 %v2673
    %2712 = vmatprep.subr.bf16.mxu0 0
    %2713 = vmatpush1.bf16.msra.mxu0 %v2672
    %2714 = vmatprep.subr.bf16.mxu0 0
    %2715 = vmatpush1.bf16.msra.mxu0 %v2671
    %2716 = vmatprep.subr.bf16.mxu0 0
    %2717 = vmatpush1.bf16.msra.mxu0 %v2670
    %2718 = vmatprep.subr.bf16.mxu0 0
    %2719 = vmatpush2.bf16.msra.mxu0 0
    %2720 = vmatprep.subr.bf16.mxu0 0
    %2721 = vmatpush2.bf16.msra.mxu0 0
    %2722 = vmatprep.subr.bf16.mxu0 0
    %2723 = vmatpush2.bf16.msra.mxu0 0
    %2724 = vmatprep.subr.bf16.mxu0 0
    %2725 = vmatpush2.bf16.msra.mxu0 0
    %2726 = vmatprep.subr.bf16.mxu0 0
    %2727 = vmatpush2.bf16.msra.mxu0 0
    %2728 = vmatprep.subr.bf16.mxu0 0
    %2729 = vmatpush2.bf16.msra.mxu0 0
    %2730 = vmatprep.subr.bf16.mxu0 0
    %2731 = vmatpush2.bf16.msra.mxu0 0
    %2732 = vmatprep.subr.bf16.mxu0 0
    %2733 = vmatpush2.bf16.msra.mxu0 0
    %2734 = vmatprep.mubr.bf16.mxu0 0
    %2735 = vmatmul.mubr.bf16.gmra.mxu0 %v2679
    %v2736 = vpop.f32.mrf.mxu0
    %v2737 = vadd.f32 0.0, %v2736
    %v2738 = vpop.f32.mrf.mxu0
    %v2739 = vpop.f32.mrf.mxu0
    %v2740 = vadd.f32 0.0, %v2739
    %v2741 = vpop.f32.mrf.mxu0
    %2742 = vmatprep.mubr.bf16.mxu0 0
    %2743 = vmatmul.mubr.bf16.gmra.mxu0 %v2682
    %v2744 = vpop.f32.mrf.mxu0
    %v2745 = vadd.f32 0.0, %v2744
    %v2746 = vpop.f32.mrf.mxu0
    %v2747 = vpop.f32.mrf.mxu0
    %v2748 = vadd.f32 0.0, %v2747
    %v2749 = vpop.f32.mrf.mxu0
    %2750 = vmatprep.mubr.bf16.mxu0 0
    %2751 = vmatmul.mubr.bf16.gmra.mxu0 %v2685
    %v2752 = vpop.f32.mrf.mxu0
    %v2753 = vadd.f32 0.0, %v2752
    %v2754 = vpop.f32.mrf.mxu0
    %v2755 = vpop.f32.mrf.mxu0
    %v2756 = vadd.f32 0.0, %v2755
    %v2757 = vpop.f32.mrf.mxu0
    %2758 = vmatprep.mubr.bf16.mxu0 0
    %2759 = vmatmul.mubr.bf16.gmra.mxu0 %v2688
    %v2760 = vpop.f32.mrf.mxu0
    %v2761 = vadd.f32 0.0, %v2760
    %v2762 = vpop.f32.mrf.mxu0
    %v2763 = vpop.f32.mrf.mxu0
    %v2764 = vadd.f32 0.0, %v2763
    %v2765 = vpop.f32.mrf.mxu0
    %2766 = vmatprep.mubr.bf16.mxu0 0
    %2767 = vmatmul.mubr.bf16.gmra.mxu0 %v2691
    %v2768 = vpop.f32.mrf.mxu0
    %v2769 = vadd.f32 0.0, %v2768
    %v2770 = vpop.f32.mrf.mxu0
    %v2771 = vpop.f32.mrf.mxu0
    %v2772 = vadd.f32 0.0, %v2771
    %v2773 = vpop.f32.mrf.mxu0
    %2774 = vmatprep.mubr.bf16.mxu0 0
    %2775 = vmatmul.mubr.bf16.gmra.mxu0 %v2694
    %v2776 = vpop.f32.mrf.mxu0
    %v2777 = vadd.f32 0.0, %v2776
    %v2778 = vpop.f32.mrf.mxu0
    %v2779 = vpop.f32.mrf.mxu0
    %v2780 = vadd.f32 0.0, %v2779
    %v2781 = vpop.f32.mrf.mxu0
    %2782 = vmatprep.mubr.bf16.mxu0 0
    %2783 = vmatmul.mubr.bf16.gmra.mxu0 %v2697
    %v2784 = vpop.f32.mrf.mxu0
    %v2785 = vadd.f32 0.0, %v2784
    %v2786 = vpop.f32.mrf.mxu0
    %v2787 = vpop.f32.mrf.mxu0
    %v2788 = vadd.f32 0.0, %v2787
    %v2789 = vpop.f32.mrf.mxu0
    %2790 = vmatprep.mubr.bf16.mxu0 0
    %2791 = vmatmul.mubr.bf16.gmra.mxu0 %v2700
    %v2792 = vpop.f32.mrf.mxu0
    %v2793 = vadd.f32 0.0, %v2792
    %v2794 = vpop.f32.mrf.mxu0
    %v2795 = vpop.f32.mrf.mxu0
    %v2796 = vadd.f32 0.0, %v2795
    %v2797 = vpop.f32.mrf.mxu0
    %2798 = vdwg.mxu0
    %v2799 = vadd.f32 %v2605, %v2737
    %v2800 = vadd.f32 %v2606, %v2740
    %v2801 = vadd.f32 %v2607, %v2745
    %v2802 = vadd.f32 %v2608, %v2748
    %v2803 = vadd.f32 %v2609, %v2753
    %v2804 = vadd.f32 %v2610, %v2756
    %v2805 = vadd.f32 %v2611, %v2761
    %v2806 = vadd.f32 %v2612, %v2764
    %v2807 = vadd.f32 %v2613, %v2769
    %v2808 = vadd.f32 %v2614, %v2772
    %v2809 = vadd.f32 %v2615, %v2777
    %v2810 = vadd.f32 %v2616, %v2780
    %v2811 = vadd.f32 %v2617, %v2785
    %v2812 = vadd.f32 %v2618, %v2788
    %v2813 = vadd.f32 %v2619, %v2793
    %v2814 = vadd.f32 %v2620, %v2796
    %v2815 = vld [vmem:[%s2055 + $0x1] sm:$0xff]
    %v2816 = vld [vmem:[%s2055 + $0x11] sm:$0xff]
    %v2817 = vld [vmem:[%s2055 + $0x21] sm:$0xff]
    %v2818 = vld [vmem:[%s2055 + $0x31] sm:$0xff]
    %v2819 = vld [vmem:[%s2055 + $0x41] sm:$0xff]
    %v2820 = vld [vmem:[%s2055 + $0x51] sm:$0xff]
    %v2821 = vld [vmem:[%s2055 + $0x61] sm:$0xff]
    %v2822 = vld [vmem:[%s2055 + $0x71] sm:$0xff]
    %v2823 = vld [vmem:[%s2055 + $0xa1] sm:$0xff]
    %v2824 = vld [vmem:[%s2055 + $0xb1] sm:$0xff]
    %v2825 = vld [vmem:[%s2055 + $0xc1] sm:$0xff]
    %v2826 = vld [vmem:[%s2055 + $0xd1] sm:$0xff]
    %v2827 = vld [vmem:[%s2055 + $0xe1] sm:$0xff]
    %v2828 = vld [vmem:[%s2055 + $0xf1] sm:$0xff]
    %v2829 = vld [vmem:[%s2055 + $0x101] sm:$0xff]
    %v2830 = vld [vmem:[%s2055 + $0x111] sm:$0xff]
    %v2831 = vpack.c.bf16 %v2816, %v2815
    %v2832 = vpack.c.bf16 %v2818, %v2817
    %v2833 = vpack.c.bf16 %v2820, %v2819
    %v2834 = vpack.c.bf16 %v2822, %v2821
    %v2835 = vpack.c.bf16 %v2824, %v2823
    %v2836 = vpack.c.bf16 %v2826, %v2825
    %v2837 = vpack.c.bf16 %v2828, %v2827
    %v2838 = vpack.c.bf16 %v2830, %v2829
    %s2839 = scalar_lea.vmem %s9, 128
    %v2840 = vld [vmem:[%s2839] sm:$0xf]
    %v2841 = vld [vmem:[%s2839 + $0x4] sm:$0xf]
    %v2842 = vld [vmem:[%s2839 + $0x8] sm:$0xf]
    %v2843 = vld [vmem:[%s2839 + $0xc] sm:$0xf]
    %v2844 = vld [vmem:[%s2839 + $0x10] sm:$0xf]
    %v2845 = vld [vmem:[%s2839 + $0x14] sm:$0xf]
    %v2846 = vld [vmem:[%s2839 + $0x18] sm:$0xf]
    %v2847 = vld [vmem:[%s2839 + $0x1c] sm:$0xf]
    %v2856 = vunpack.c.l.b16 %v2840
    %v2857 = vunpack.c.l.b16 %v2841
    %v2858 = vunpack.c.l.b16 %v2842
    %v2859 = vunpack.c.l.b16 %v2843
    %v2860 = vunpack.c.l.b16 %v2844
    %v2861 = vunpack.c.l.b16 %v2845
    %v2862 = vunpack.c.l.b16 %v2846
    %v2863 = vunpack.c.l.b16 %v2847
    %v2864 = vpack.c.b16 %v2857, %v2856
    %v2865 = vpack.c.b16 %v2859, %v2858
    %v2866 = vpack.c.b16 %v2861, %v2860
    %v2867 = vpack.c.b16 %v2863, %v2862
    %v2873 = vsel %vm67, %v2831, 0
    %v2876 = vsel %vm67, %v2832, 0
    %v2879 = vsel %vm67, %v2833, 0
    %v2882 = vsel %vm67, %v2834, 0
    %v2885 = vsel %vm67, %v2835, 0
    %v2888 = vsel %vm67, %v2836, 0
    %v2891 = vsel %vm67, %v2837, 0
    %v2894 = vsel %vm67, %v2838, 0
    %2896 = vmatprep.subr.bf16.mxu0 0
    %2897 = vmatpush1.bf16.msra.mxu0 0
    %2898 = vmatprep.subr.bf16.mxu0 0
    %2899 = vmatpush1.bf16.msra.mxu0 0
    %2900 = vmatprep.subr.bf16.mxu0 0
    %2901 = vmatpush1.bf16.msra.mxu0 0
    %2902 = vmatprep.subr.bf16.mxu0 0
    %2903 = vmatpush1.bf16.msra.mxu0 0
    %2904 = vmatprep.subr.bf16.mxu0 0
    %2905 = vmatpush1.bf16.msra.mxu0 %v2867
    %2906 = vmatprep.subr.bf16.mxu0 0
    %2907 = vmatpush1.bf16.msra.mxu0 %v2866
    %2908 = vmatprep.subr.bf16.mxu0 0
    %2909 = vmatpush1.bf16.msra.mxu0 %v2865
    %2910 = vmatprep.subr.bf16.mxu0 0
    %2911 = vmatpush1.bf16.msra.mxu0 %v2864
    %2912 = vmatprep.subr.bf16.mxu0 0
    %2913 = vmatpush2.bf16.msra.mxu0 0
    %2914 = vmatprep.subr.bf16.mxu0 0
    %2915 = vmatpush2.bf16.msra.mxu0 0
    %2916 = vmatprep.subr.bf16.mxu0 0
    %2917 = vmatpush2.bf16.msra.mxu0 0
    %2918 = vmatprep.subr.bf16.mxu0 0
    %2919 = vmatpush2.bf16.msra.mxu0 0
    %2920 = vmatprep.subr.bf16.mxu0 0
    %2921 = vmatpush2.bf16.msra.mxu0 0
    %2922 = vmatprep.subr.bf16.mxu0 0
    %2923 = vmatpush2.bf16.msra.mxu0 0
    %2924 = vmatprep.subr.bf16.mxu0 0
    %2925 = vmatpush2.bf16.msra.mxu0 0
    %2926 = vmatprep.subr.bf16.mxu0 0
    %2927 = vmatpush2.bf16.msra.mxu0 0
    %2928 = vmatprep.mubr.bf16.mxu0 0
    %2929 = vmatmul.mubr.bf16.gmra.mxu0 %v2873
    %v2930 = vpop.f32.mrf.mxu0
    %v2931 = vadd.f32 0.0, %v2930
    %v2932 = vpop.f32.mrf.mxu0
    %v2933 = vpop.f32.mrf.mxu0
    %v2934 = vadd.f32 0.0, %v2933
    %v2935 = vpop.f32.mrf.mxu0
    %2936 = vmatprep.mubr.bf16.mxu0 0
    %2937 = vmatmul.mubr.bf16.gmra.mxu0 %v2876
    %v2938 = vpop.f32.mrf.mxu0
    %v2939 = vadd.f32 0.0, %v2938
    %v2940 = vpop.f32.mrf.mxu0
    %v2941 = vpop.f32.mrf.mxu0
    %v2942 = vadd.f32 0.0, %v2941
    %v2943 = vpop.f32.mrf.mxu0
    %2944 = vmatprep.mubr.bf16.mxu0 0
    %2945 = vmatmul.mubr.bf16.gmra.mxu0 %v2879
    %v2946 = vpop.f32.mrf.mxu0
    %v2947 = vadd.f32 0.0, %v2946
    %v2948 = vpop.f32.mrf.mxu0
    %v2949 = vpop.f32.mrf.mxu0
    %v2950 = vadd.f32 0.0, %v2949
    %v2951 = vpop.f32.mrf.mxu0
    %2952 = vmatprep.mubr.bf16.mxu0 0
    %2953 = vmatmul.mubr.bf16.gmra.mxu0 %v2882
    %v2954 = vpop.f32.mrf.mxu0
    %v2955 = vadd.f32 0.0, %v2954
    %v2956 = vpop.f32.mrf.mxu0
    %v2957 = vpop.f32.mrf.mxu0
    %v2958 = vadd.f32 0.0, %v2957
    %v2959 = vpop.f32.mrf.mxu0
    %2960 = vmatprep.mubr.bf16.mxu0 0
    %2961 = vmatmul.mubr.bf16.gmra.mxu0 %v2885
    %v2962 = vpop.f32.mrf.mxu0
    %v2963 = vadd.f32 0.0, %v2962
    %v2964 = vpop.f32.mrf.mxu0
    %v2965 = vpop.f32.mrf.mxu0
    %v2966 = vadd.f32 0.0, %v2965
    %v2967 = vpop.f32.mrf.mxu0
    %2968 = vmatprep.mubr.bf16.mxu0 0
    %2969 = vmatmul.mubr.bf16.gmra.mxu0 %v2888
    %v2970 = vpop.f32.mrf.mxu0
    %v2971 = vadd.f32 0.0, %v2970
    %v2972 = vpop.f32.mrf.mxu0
    %v2973 = vpop.f32.mrf.mxu0
    %v2974 = vadd.f32 0.0, %v2973
    %v2975 = vpop.f32.mrf.mxu0
    %2976 = vmatprep.mubr.bf16.mxu0 0
    %2977 = vmatmul.mubr.bf16.gmra.mxu0 %v2891
    %v2978 = vpop.f32.mrf.mxu0
    %v2979 = vadd.f32 0.0, %v2978
    %v2980 = vpop.f32.mrf.mxu0
    %v2981 = vpop.f32.mrf.mxu0
    %v2982 = vadd.f32 0.0, %v2981
    %v2983 = vpop.f32.mrf.mxu0
    %2984 = vmatprep.mubr.bf16.mxu0 0
    %2985 = vmatmul.mubr.bf16.gmra.mxu0 %v2894
    %v2986 = vpop.f32.mrf.mxu0
    %v2987 = vadd.f32 0.0, %v2986
    %v2988 = vpop.f32.mrf.mxu0
    %v2989 = vpop.f32.mrf.mxu0
    %v2990 = vadd.f32 0.0, %v2989
    %v2991 = vpop.f32.mrf.mxu0
    %2992 = vdwg.mxu0
    %v2993 = vadd.f32 %v2799, %v2931
    %v2994 = vadd.f32 %v2800, %v2934
    %v2995 = vadd.f32 %v2801, %v2939
    %v2996 = vadd.f32 %v2802, %v2942
    %v2997 = vadd.f32 %v2803, %v2947
    %v2998 = vadd.f32 %v2804, %v2950
    %v2999 = vadd.f32 %v2805, %v2955
    %v3000 = vadd.f32 %v2806, %v2958
    %v3001 = vadd.f32 %v2807, %v2963
    %v3002 = vadd.f32 %v2808, %v2966
    %v3003 = vadd.f32 %v2809, %v2971
    %v3004 = vadd.f32 %v2810, %v2974
    %v3005 = vadd.f32 %v2811, %v2979
    %v3006 = vadd.f32 %v2812, %v2982
    %v3007 = vadd.f32 %v2813, %v2987
    %v3008 = vadd.f32 %v2814, %v2990
    %v3009 = vld [vmem:[%s2055 + $0x2] sm:$0xff]
    %v3010 = vld [vmem:[%s2055 + $0x12] sm:$0xff]
    %v3011 = vld [vmem:[%s2055 + $0x22] sm:$0xff]
    %v3012 = vld [vmem:[%s2055 + $0x32] sm:$0xff]
    %v3013 = vld [vmem:[%s2055 + $0x42] sm:$0xff]
    %v3014 = vld [vmem:[%s2055 + $0x52] sm:$0xff]
    %v3015 = vld [vmem:[%s2055 + $0x62] sm:$0xff]
    %v3016 = vld [vmem:[%s2055 + $0x72] sm:$0xff]
    %v3017 = vld [vmem:[%s2055 + $0xa2] sm:$0xff]
    %v3018 = vld [vmem:[%s2055 + $0xb2] sm:$0xff]
    %v3019 = vld [vmem:[%s2055 + $0xc2] sm:$0xff]
    %v3020 = vld [vmem:[%s2055 + $0xd2] sm:$0xff]
    %v3021 = vld [vmem:[%s2055 + $0xe2] sm:$0xff]
    %v3022 = vld [vmem:[%s2055 + $0xf2] sm:$0xff]
    %v3023 = vld [vmem:[%s2055 + $0x102] sm:$0xff]
    %v3024 = vld [vmem:[%s2055 + $0x112] sm:$0xff]
    %v3025 = vpack.c.bf16 %v3010, %v3009
    %v3026 = vpack.c.bf16 %v3012, %v3011
    %v3027 = vpack.c.bf16 %v3014, %v3013
    %v3028 = vpack.c.bf16 %v3016, %v3015
    %v3029 = vpack.c.bf16 %v3018, %v3017
    %v3030 = vpack.c.bf16 %v3020, %v3019
    %v3031 = vpack.c.bf16 %v3022, %v3021
    %v3032 = vpack.c.bf16 %v3024, %v3023
    %s3033 = scalar_lea.vmem %s9, 160
    %v3034 = vld [vmem:[%s3033] sm:$0xf]
    %v3035 = vld [vmem:[%s3033 + $0x4] sm:$0xf]
    %v3036 = vld [vmem:[%s3033 + $0x8] sm:$0xf]
    %v3037 = vld [vmem:[%s3033 + $0xc] sm:$0xf]
    %v3038 = vld [vmem:[%s3033 + $0x10] sm:$0xf]
    %v3039 = vld [vmem:[%s3033 + $0x14] sm:$0xf]
    %v3040 = vld [vmem:[%s3033 + $0x18] sm:$0xf]
    %v3041 = vld [vmem:[%s3033 + $0x1c] sm:$0xf]
    %v3050 = vunpack.c.l.b16 %v3034
    %v3051 = vunpack.c.l.b16 %v3035
    %v3052 = vunpack.c.l.b16 %v3036
    %v3053 = vunpack.c.l.b16 %v3037
    %v3054 = vunpack.c.l.b16 %v3038
    %v3055 = vunpack.c.l.b16 %v3039
    %v3056 = vunpack.c.l.b16 %v3040
    %v3057 = vunpack.c.l.b16 %v3041
    %v3058 = vpack.c.b16 %v3051, %v3050
    %v3059 = vpack.c.b16 %v3053, %v3052
    %v3060 = vpack.c.b16 %v3055, %v3054
    %v3061 = vpack.c.b16 %v3057, %v3056
    %v3067 = vsel %vm67, %v3025, 0
    %v3070 = vsel %vm67, %v3026, 0
    %v3073 = vsel %vm67, %v3027, 0
    %v3076 = vsel %vm67, %v3028, 0
    %v3079 = vsel %vm67, %v3029, 0
    %v3082 = vsel %vm67, %v3030, 0
    %v3085 = vsel %vm67, %v3031, 0
    %v3088 = vsel %vm67, %v3032, 0
    %3090 = vmatprep.subr.bf16.mxu0 0
    %3091 = vmatpush1.bf16.msra.mxu0 0
    %3092 = vmatprep.subr.bf16.mxu0 0
    %3093 = vmatpush1.bf16.msra.mxu0 0
    %3094 = vmatprep.subr.bf16.mxu0 0
    %3095 = vmatpush1.bf16.msra.mxu0 0
    %3096 = vmatprep.subr.bf16.mxu0 0
    %3097 = vmatpush1.bf16.msra.mxu0 0
    %3098 = vmatprep.subr.bf16.mxu0 0
    %3099 = vmatpush1.bf16.msra.mxu0 %v3061
    %3100 = vmatprep.subr.bf16.mxu0 0
    %3101 = vmatpush1.bf16.msra.mxu0 %v3060
    %3102 = vmatprep.subr.bf16.mxu0 0
    %3103 = vmatpush1.bf16.msra.mxu0 %v3059
    %3104 = vmatprep.subr.bf16.mxu0 0
    %3105 = vmatpush1.bf16.msra.mxu0 %v3058
    %3106 = vmatprep.subr.bf16.mxu0 0
    %3107 = vmatpush2.bf16.msra.mxu0 0
    %3108 = vmatprep.subr.bf16.mxu0 0
    %3109 = vmatpush2.bf16.msra.mxu0 0
    %3110 = vmatprep.subr.bf16.mxu0 0
    %3111 = vmatpush2.bf16.msra.mxu0 0
    %3112 = vmatprep.subr.bf16.mxu0 0
    %3113 = vmatpush2.bf16.msra.mxu0 0
    %3114 = vmatprep.subr.bf16.mxu0 0
    %3115 = vmatpush2.bf16.msra.mxu0 0
    %3116 = vmatprep.subr.bf16.mxu0 0
    %3117 = vmatpush2.bf16.msra.mxu0 0
    %3118 = vmatprep.subr.bf16.mxu0 0
    %3119 = vmatpush2.bf16.msra.mxu0 0
    %3120 = vmatprep.subr.bf16.mxu0 0
    %3121 = vmatpush2.bf16.msra.mxu0 0
    %3122 = vmatprep.mubr.bf16.mxu0 0
    %3123 = vmatmul.mubr.bf16.gmra.mxu0 %v3067
    %v3124 = vpop.f32.mrf.mxu0
    %v3125 = vadd.f32 0.0, %v3124
    %v3126 = vpop.f32.mrf.mxu0
    %v3127 = vpop.f32.mrf.mxu0
    %v3128 = vadd.f32 0.0, %v3127
    %v3129 = vpop.f32.mrf.mxu0
    %3130 = vmatprep.mubr.bf16.mxu0 0
    %3131 = vmatmul.mubr.bf16.gmra.mxu0 %v3070
    %v3132 = vpop.f32.mrf.mxu0
    %v3133 = vadd.f32 0.0, %v3132
    %v3134 = vpop.f32.mrf.mxu0
    %v3135 = vpop.f32.mrf.mxu0
    %v3136 = vadd.f32 0.0, %v3135
    %v3137 = vpop.f32.mrf.mxu0
    %3138 = vmatprep.mubr.bf16.mxu0 0
    %3139 = vmatmul.mubr.bf16.gmra.mxu0 %v3073
    %v3140 = vpop.f32.mrf.mxu0
    %v3141 = vadd.f32 0.0, %v3140
    %v3142 = vpop.f32.mrf.mxu0
    %v3143 = vpop.f32.mrf.mxu0
    %v3144 = vadd.f32 0.0, %v3143
    %v3145 = vpop.f32.mrf.mxu0
    %3146 = vmatprep.mubr.bf16.mxu0 0
    %3147 = vmatmul.mubr.bf16.gmra.mxu0 %v3076
    %v3148 = vpop.f32.mrf.mxu0
    %v3149 = vadd.f32 0.0, %v3148
    %v3150 = vpop.f32.mrf.mxu0
    %v3151 = vpop.f32.mrf.mxu0
    %v3152 = vadd.f32 0.0, %v3151
    %v3153 = vpop.f32.mrf.mxu0
    %3154 = vmatprep.mubr.bf16.mxu0 0
    %3155 = vmatmul.mubr.bf16.gmra.mxu0 %v3079
    %v3156 = vpop.f32.mrf.mxu0
    %v3157 = vadd.f32 0.0, %v3156
    %v3158 = vpop.f32.mrf.mxu0
    %v3159 = vpop.f32.mrf.mxu0
    %v3160 = vadd.f32 0.0, %v3159
    %v3161 = vpop.f32.mrf.mxu0
    %3162 = vmatprep.mubr.bf16.mxu0 0
    %3163 = vmatmul.mubr.bf16.gmra.mxu0 %v3082
    %v3164 = vpop.f32.mrf.mxu0
    %v3165 = vadd.f32 0.0, %v3164
    %v3166 = vpop.f32.mrf.mxu0
    %v3167 = vpop.f32.mrf.mxu0
    %v3168 = vadd.f32 0.0, %v3167
    %v3169 = vpop.f32.mrf.mxu0
    %3170 = vmatprep.mubr.bf16.mxu0 0
    %3171 = vmatmul.mubr.bf16.gmra.mxu0 %v3085
    %v3172 = vpop.f32.mrf.mxu0
    %v3173 = vadd.f32 0.0, %v3172
    %v3174 = vpop.f32.mrf.mxu0
    %v3175 = vpop.f32.mrf.mxu0
    %v3176 = vadd.f32 0.0, %v3175
    %v3177 = vpop.f32.mrf.mxu0
    %3178 = vmatprep.mubr.bf16.mxu0 0
    %3179 = vmatmul.mubr.bf16.gmra.mxu0 %v3088
    %v3180 = vpop.f32.mrf.mxu0
    %v3181 = vadd.f32 0.0, %v3180
    %v3182 = vpop.f32.mrf.mxu0
    %v3183 = vpop.f32.mrf.mxu0
    %v3184 = vadd.f32 0.0, %v3183
    %v3185 = vpop.f32.mrf.mxu0
    %3186 = vdwg.mxu0
    %v3187 = vadd.f32 %v2993, %v3125
    %v3188 = vadd.f32 %v2994, %v3128
    %v3189 = vadd.f32 %v2995, %v3133
    %v3190 = vadd.f32 %v2996, %v3136
    %v3191 = vadd.f32 %v2997, %v3141
    %v3192 = vadd.f32 %v2998, %v3144
    %v3193 = vadd.f32 %v2999, %v3149
    %v3194 = vadd.f32 %v3000, %v3152
    %v3195 = vadd.f32 %v3001, %v3157
    %v3196 = vadd.f32 %v3002, %v3160
    %v3197 = vadd.f32 %v3003, %v3165
    %v3198 = vadd.f32 %v3004, %v3168
    %v3199 = vadd.f32 %v3005, %v3173
    %v3200 = vadd.f32 %v3006, %v3176
    %v3201 = vadd.f32 %v3007, %v3181
    %v3202 = vadd.f32 %v3008, %v3184
    %s3203 = scalar_lea.vmem [#allocation2], 32
    %v3204 = vld [vmem:[%s3203] sm:$0xff]
    %v3205 = vld [vmem:[%s3203 + $0x10] sm:$0xff]
    %v3206 = vld [vmem:[%s3203 + $0x20] sm:$0xff]
    %v3207 = vld [vmem:[%s3203 + $0x30] sm:$0xff]
    %v3208 = vld [vmem:[%s3203 + $0x40] sm:$0xff]
    %v3209 = vld [vmem:[%s3203 + $0x50] sm:$0xff]
    %v3210 = vld [vmem:[%s3203 + $0x60] sm:$0xff]
    %v3211 = vld [vmem:[%s3203 + $0x70] sm:$0xff]
    %v3212 = vld [vmem:[%s3203 + $0xa0] sm:$0xff]
    %v3213 = vld [vmem:[%s3203 + $0xb0] sm:$0xff]
    %v3214 = vld [vmem:[%s3203 + $0xc0] sm:$0xff]
    %v3215 = vld [vmem:[%s3203 + $0xd0] sm:$0xff]
    %v3216 = vld [vmem:[%s3203 + $0xe0] sm:$0xff]
    %v3217 = vld [vmem:[%s3203 + $0xf0] sm:$0xff]
    %v3218 = vld [vmem:[%s3203 + $0x100] sm:$0xff]
    %v3219 = vld [vmem:[%s3203 + $0x110] sm:$0xff]
    %v3220 = vpack.c.bf16 %v3205, %v3204
    %v3221 = vpack.c.bf16 %v3207, %v3206
    %v3222 = vpack.c.bf16 %v3209, %v3208
    %v3223 = vpack.c.bf16 %v3211, %v3210
    %v3224 = vpack.c.bf16 %v3213, %v3212
    %v3225 = vpack.c.bf16 %v3215, %v3214
    %v3226 = vpack.c.bf16 %v3217, %v3216
    %v3227 = vpack.c.bf16 %v3219, %v3218
    %s3228 = scalar_lea.vmem %s9, 192
    %v3229 = vld [vmem:[%s3228] sm:$0xf]
    %v3230 = vld [vmem:[%s3228 + $0x4] sm:$0xf]
    %v3231 = vld [vmem:[%s3228 + $0x8] sm:$0xf]
    %v3232 = vld [vmem:[%s3228 + $0xc] sm:$0xf]
    %v3233 = vld [vmem:[%s3228 + $0x10] sm:$0xf]
    %v3234 = vld [vmem:[%s3228 + $0x14] sm:$0xf]
    %v3235 = vld [vmem:[%s3228 + $0x18] sm:$0xf]
    %v3236 = vld [vmem:[%s3228 + $0x1c] sm:$0xf]
    %v3245 = vunpack.c.l.b16 %v3229
    %v3246 = vunpack.c.l.b16 %v3230
    %v3247 = vunpack.c.l.b16 %v3231
    %v3248 = vunpack.c.l.b16 %v3232
    %v3249 = vunpack.c.l.b16 %v3233
    %v3250 = vunpack.c.l.b16 %v3234
    %v3251 = vunpack.c.l.b16 %v3235
    %v3252 = vunpack.c.l.b16 %v3236
    %v3253 = vpack.c.b16 %v3246, %v3245
    %v3254 = vpack.c.b16 %v3248, %v3247
    %v3255 = vpack.c.b16 %v3250, %v3249
    %v3256 = vpack.c.b16 %v3252, %v3251
    %v3262 = vsel %vm67, %v3220, 0
    %v3265 = vsel %vm67, %v3221, 0
    %v3268 = vsel %vm67, %v3222, 0
    %v3271 = vsel %vm67, %v3223, 0
    %v3274 = vsel %vm67, %v3224, 0
    %v3277 = vsel %vm67, %v3225, 0
    %v3280 = vsel %vm67, %v3226, 0
    %v3283 = vsel %vm67, %v3227, 0
    %3285 = vmatprep.subr.bf16.mxu0 0
    %3286 = vmatpush1.bf16.msra.mxu0 0
    %3287 = vmatprep.subr.bf16.mxu0 0
    %3288 = vmatpush1.bf16.msra.mxu0 0
    %3289 = vmatprep.subr.bf16.mxu0 0
    %3290 = vmatpush1.bf16.msra.mxu0 0
    %3291 = vmatprep.subr.bf16.mxu0 0
    %3292 = vmatpush1.bf16.msra.mxu0 0
    %3293 = vmatprep.subr.bf16.mxu0 0
    %3294 = vmatpush1.bf16.msra.mxu0 %v3256
    %3295 = vmatprep.subr.bf16.mxu0 0
    %3296 = vmatpush1.bf16.msra.mxu0 %v3255
    %3297 = vmatprep.subr.bf16.mxu0 0
    %3298 = vmatpush1.bf16.msra.mxu0 %v3254
    %3299 = vmatprep.subr.bf16.mxu0 0
    %3300 = vmatpush1.bf16.msra.mxu0 %v3253
    %3301 = vmatprep.subr.bf16.mxu0 0
    %3302 = vmatpush2.bf16.msra.mxu0 0
    %3303 = vmatprep.subr.bf16.mxu0 0
    %3304 = vmatpush2.bf16.msra.mxu0 0
    %3305 = vmatprep.subr.bf16.mxu0 0
    %3306 = vmatpush2.bf16.msra.mxu0 0
    %3307 = vmatprep.subr.bf16.mxu0 0
    %3308 = vmatpush2.bf16.msra.mxu0 0
    %3309 = vmatprep.subr.bf16.mxu0 0
    %3310 = vmatpush2.bf16.msra.mxu0 0
    %3311 = vmatprep.subr.bf16.mxu0 0
    %3312 = vmatpush2.bf16.msra.mxu0 0
    %3313 = vmatprep.subr.bf16.mxu0 0
    %3314 = vmatpush2.bf16.msra.mxu0 0
    %3315 = vmatprep.subr.bf16.mxu0 0
    %3316 = vmatpush2.bf16.msra.mxu0 0
    %3317 = vmatprep.mubr.bf16.mxu0 0
    %3318 = vmatmul.mubr.bf16.gmra.mxu0 %v3262
    %v3319 = vpop.f32.mrf.mxu0
    %v3320 = vadd.f32 0.0, %v3319
    %v3321 = vpop.f32.mrf.mxu0
    %v3322 = vpop.f32.mrf.mxu0
    %v3323 = vadd.f32 0.0, %v3322
    %v3324 = vpop.f32.mrf.mxu0
    %3325 = vmatprep.mubr.bf16.mxu0 0
    %3326 = vmatmul.mubr.bf16.gmra.mxu0 %v3265
    %v3327 = vpop.f32.mrf.mxu0
    %v3328 = vadd.f32 0.0, %v3327
    %v3329 = vpop.f32.mrf.mxu0
    %v3330 = vpop.f32.mrf.mxu0
    %v3331 = vadd.f32 0.0, %v3330
    %v3332 = vpop.f32.mrf.mxu0
    %3333 = vmatprep.mubr.bf16.mxu0 0
    %3334 = vmatmul.mubr.bf16.gmra.mxu0 %v3268
    %v3335 = vpop.f32.mrf.mxu0
    %v3336 = vadd.f32 0.0, %v3335
    %v3337 = vpop.f32.mrf.mxu0
    %v3338 = vpop.f32.mrf.mxu0
    %v3339 = vadd.f32 0.0, %v3338
    %v3340 = vpop.f32.mrf.mxu0
    %3341 = vmatprep.mubr.bf16.mxu0 0
    %3342 = vmatmul.mubr.bf16.gmra.mxu0 %v3271
    %v3343 = vpop.f32.mrf.mxu0
    %v3344 = vadd.f32 0.0, %v3343
    %v3345 = vpop.f32.mrf.mxu0
    %v3346 = vpop.f32.mrf.mxu0
    %v3347 = vadd.f32 0.0, %v3346
    %v3348 = vpop.f32.mrf.mxu0
    %3349 = vmatprep.mubr.bf16.mxu0 0
    %3350 = vmatmul.mubr.bf16.gmra.mxu0 %v3274
    %v3351 = vpop.f32.mrf.mxu0
    %v3352 = vadd.f32 0.0, %v3351
    %v3353 = vpop.f32.mrf.mxu0
    %v3354 = vpop.f32.mrf.mxu0
    %v3355 = vadd.f32 0.0, %v3354
    %v3356 = vpop.f32.mrf.mxu0
    %3357 = vmatprep.mubr.bf16.mxu0 0
    %3358 = vmatmul.mubr.bf16.gmra.mxu0 %v3277
    %v3359 = vpop.f32.mrf.mxu0
    %v3360 = vadd.f32 0.0, %v3359
    %v3361 = vpop.f32.mrf.mxu0
    %v3362 = vpop.f32.mrf.mxu0
    %v3363 = vadd.f32 0.0, %v3362
    %v3364 = vpop.f32.mrf.mxu0
    %3365 = vmatprep.mubr.bf16.mxu0 0
    %3366 = vmatmul.mubr.bf16.gmra.mxu0 %v3280
    %v3367 = vpop.f32.mrf.mxu0
    %v3368 = vadd.f32 0.0, %v3367
    %v3369 = vpop.f32.mrf.mxu0
    %v3370 = vpop.f32.mrf.mxu0
    %v3371 = vadd.f32 0.0, %v3370
    %v3372 = vpop.f32.mrf.mxu0
    %3373 = vmatprep.mubr.bf16.mxu0 0
    %3374 = vmatmul.mubr.bf16.gmra.mxu0 %v3283
    %v3375 = vpop.f32.mrf.mxu0
    %v3376 = vadd.f32 0.0, %v3375
    %v3377 = vpop.f32.mrf.mxu0
    %v3378 = vpop.f32.mrf.mxu0
    %v3379 = vadd.f32 0.0, %v3378
    %v3380 = vpop.f32.mrf.mxu0
    %3381 = vdwg.mxu0
    %v3382 = vadd.f32 %v3187, %v3320
    %v3383 = vadd.f32 %v3188, %v3323
    %v3384 = vadd.f32 %v3189, %v3328
    %v3385 = vadd.f32 %v3190, %v3331
    %v3386 = vadd.f32 %v3191, %v3336
    %v3387 = vadd.f32 %v3192, %v3339
    %v3388 = vadd.f32 %v3193, %v3344
    %v3389 = vadd.f32 %v3194, %v3347
    %v3390 = vadd.f32 %v3195, %v3352
    %v3391 = vadd.f32 %v3196, %v3355
    %v3392 = vadd.f32 %v3197, %v3360
    %v3393 = vadd.f32 %v3198, %v3363
    %v3394 = vadd.f32 %v3199, %v3368
    %v3395 = vadd.f32 %v3200, %v3371
    %v3396 = vadd.f32 %v3201, %v3376
    %v3397 = vadd.f32 %v3202, %v3379
    %v3398 = vld [vmem:[%s3203 + $0x1] sm:$0xff]
    %v3399 = vld [vmem:[%s3203 + $0x11] sm:$0xff]
    %v3400 = vld [vmem:[%s3203 + $0x21] sm:$0xff]
    %v3401 = vld [vmem:[%s3203 + $0x31] sm:$0xff]
    %v3402 = vld [vmem:[%s3203 + $0x41] sm:$0xff]
    %v3403 = vld [vmem:[%s3203 + $0x51] sm:$0xff]
    %v3404 = vld [vmem:[%s3203 + $0x61] sm:$0xff]
    %v3405 = vld [vmem:[%s3203 + $0x71] sm:$0xff]
    %v3406 = vld [vmem:[%s3203 + $0xa1] sm:$0xff]
    %v3407 = vld [vmem:[%s3203 + $0xb1] sm:$0xff]
    %v3408 = vld [vmem:[%s3203 + $0xc1] sm:$0xff]
    %v3409 = vld [vmem:[%s3203 + $0xd1] sm:$0xff]
    %v3410 = vld [vmem:[%s3203 + $0xe1] sm:$0xff]
    %v3411 = vld [vmem:[%s3203 + $0xf1] sm:$0xff]
    %v3412 = vld [vmem:[%s3203 + $0x101] sm:$0xff]
    %v3413 = vld [vmem:[%s3203 + $0x111] sm:$0xff]
    %v3414 = vpack.c.bf16 %v3399, %v3398
    %v3415 = vpack.c.bf16 %v3401, %v3400
    %v3416 = vpack.c.bf16 %v3403, %v3402
    %v3417 = vpack.c.bf16 %v3405, %v3404
    %v3418 = vpack.c.bf16 %v3407, %v3406
    %v3419 = vpack.c.bf16 %v3409, %v3408
    %v3420 = vpack.c.bf16 %v3411, %v3410
    %v3421 = vpack.c.bf16 %v3413, %v3412
    %s3422 = scalar_lea.vmem %s9, 224
    %v3423 = vld [vmem:[%s3422] sm:$0xf]
    %v3424 = vld [vmem:[%s3422 + $0x4] sm:$0xf]
    %v3425 = vld [vmem:[%s3422 + $0x8] sm:$0xf]
    %v3426 = vld [vmem:[%s3422 + $0xc] sm:$0xf]
    %v3427 = vld [vmem:[%s3422 + $0x10] sm:$0xf]
    %v3428 = vld [vmem:[%s3422 + $0x14] sm:$0xf]
    %v3429 = vld [vmem:[%s3422 + $0x18] sm:$0xf]
    %v3430 = vld [vmem:[%s3422 + $0x1c] sm:$0xf]
    %v3439 = vunpack.c.l.b16 %v3423
    %v3440 = vunpack.c.l.b16 %v3424
    %v3441 = vunpack.c.l.b16 %v3425
    %v3442 = vunpack.c.l.b16 %v3426
    %v3443 = vunpack.c.l.b16 %v3427
    %v3444 = vunpack.c.l.b16 %v3428
    %v3445 = vunpack.c.l.b16 %v3429
    %v3446 = vunpack.c.l.b16 %v3430
    %v3447 = vpack.c.b16 %v3440, %v3439
    %v3448 = vpack.c.b16 %v3442, %v3441
    %v3449 = vpack.c.b16 %v3444, %v3443
    %v3450 = vpack.c.b16 %v3446, %v3445
    %v3456 = vsel %vm67, %v3414, 0
    %v3459 = vsel %vm67, %v3415, 0
    %v3462 = vsel %vm67, %v3416, 0
    %v3465 = vsel %vm67, %v3417, 0
    %v3468 = vsel %vm67, %v3418, 0
    %v3471 = vsel %vm67, %v3419, 0
    %v3474 = vsel %vm67, %v3420, 0
    %v3477 = vsel %vm67, %v3421, 0
    %3479 = vmatprep.subr.bf16.mxu0 0
    %3480 = vmatpush1.bf16.msra.mxu0 0
    %3481 = vmatprep.subr.bf16.mxu0 0
    %3482 = vmatpush1.bf16.msra.mxu0 0
    %3483 = vmatprep.subr.bf16.mxu0 0
    %3484 = vmatpush1.bf16.msra.mxu0 0
    %3485 = vmatprep.subr.bf16.mxu0 0
    %3486 = vmatpush1.bf16.msra.mxu0 0
    %3487 = vmatprep.subr.bf16.mxu0 0
    %3488 = vmatpush1.bf16.msra.mxu0 %v3450
    %3489 = vmatprep.subr.bf16.mxu0 0
    %3490 = vmatpush1.bf16.msra.mxu0 %v3449
    %3491 = vmatprep.subr.bf16.mxu0 0
    %3492 = vmatpush1.bf16.msra.mxu0 %v3448
    %3493 = vmatprep.subr.bf16.mxu0 0
    %3494 = vmatpush1.bf16.msra.mxu0 %v3447
    %3495 = vmatprep.subr.bf16.mxu0 0
    %3496 = vmatpush2.bf16.msra.mxu0 0
    %3497 = vmatprep.subr.bf16.mxu0 0
    %3498 = vmatpush2.bf16.msra.mxu0 0
    %3499 = vmatprep.subr.bf16.mxu0 0
    %3500 = vmatpush2.bf16.msra.mxu0 0
    %3501 = vmatprep.subr.bf16.mxu0 0
    %3502 = vmatpush2.bf16.msra.mxu0 0
    %3503 = vmatprep.subr.bf16.mxu0 0
    %3504 = vmatpush2.bf16.msra.mxu0 0
    %3505 = vmatprep.subr.bf16.mxu0 0
    %3506 = vmatpush2.bf16.msra.mxu0 0
    %3507 = vmatprep.subr.bf16.mxu0 0
    %3508 = vmatpush2.bf16.msra.mxu0 0
    %3509 = vmatprep.subr.bf16.mxu0 0
    %3510 = vmatpush2.bf16.msra.mxu0 0
    %3511 = vmatprep.mubr.bf16.mxu0 0
    %3512 = vmatmul.mubr.bf16.gmra.mxu0 %v3456
    %v3513 = vpop.f32.mrf.mxu0
    %v3514 = vadd.f32 0.0, %v3513
    %v3515 = vpop.f32.mrf.mxu0
    %v3516 = vpop.f32.mrf.mxu0
    %v3517 = vadd.f32 0.0, %v3516
    %v3518 = vpop.f32.mrf.mxu0
    %3519 = vmatprep.mubr.bf16.mxu0 0
    %3520 = vmatmul.mubr.bf16.gmra.mxu0 %v3459
    %v3521 = vpop.f32.mrf.mxu0
    %v3522 = vadd.f32 0.0, %v3521
    %v3523 = vpop.f32.mrf.mxu0
    %v3524 = vpop.f32.mrf.mxu0
    %v3525 = vadd.f32 0.0, %v3524
    %v3526 = vpop.f32.mrf.mxu0
    %3527 = vmatprep.mubr.bf16.mxu0 0
    %3528 = vmatmul.mubr.bf16.gmra.mxu0 %v3462
    %v3529 = vpop.f32.mrf.mxu0
    %v3530 = vadd.f32 0.0, %v3529
    %v3531 = vpop.f32.mrf.mxu0
    %v3532 = vpop.f32.mrf.mxu0
    %v3533 = vadd.f32 0.0, %v3532
    %v3534 = vpop.f32.mrf.mxu0
    %3535 = vmatprep.mubr.bf16.mxu0 0
    %3536 = vmatmul.mubr.bf16.gmra.mxu0 %v3465
    %v3537 = vpop.f32.mrf.mxu0
    %v3538 = vadd.f32 0.0, %v3537
    %v3539 = vpop.f32.mrf.mxu0
    %v3540 = vpop.f32.mrf.mxu0
    %v3541 = vadd.f32 0.0, %v3540
    %v3542 = vpop.f32.mrf.mxu0
    %3543 = vmatprep.mubr.bf16.mxu0 0
    %3544 = vmatmul.mubr.bf16.gmra.mxu0 %v3468
    %v3545 = vpop.f32.mrf.mxu0
    %v3546 = vadd.f32 0.0, %v3545
    %v3547 = vpop.f32.mrf.mxu0
    %v3548 = vpop.f32.mrf.mxu0
    %v3549 = vadd.f32 0.0, %v3548
    %v3550 = vpop.f32.mrf.mxu0
    %3551 = vmatprep.mubr.bf16.mxu0 0
    %3552 = vmatmul.mubr.bf16.gmra.mxu0 %v3471
    %v3553 = vpop.f32.mrf.mxu0
    %v3554 = vadd.f32 0.0, %v3553
    %v3555 = vpop.f32.mrf.mxu0
    %v3556 = vpop.f32.mrf.mxu0
    %v3557 = vadd.f32 0.0, %v3556
    %v3558 = vpop.f32.mrf.mxu0
    %3559 = vmatprep.mubr.bf16.mxu0 0
    %3560 = vmatmul.mubr.bf16.gmra.mxu0 %v3474
    %v3561 = vpop.f32.mrf.mxu0
    %v3562 = vadd.f32 0.0, %v3561
    %v3563 = vpop.f32.mrf.mxu0
    %v3564 = vpop.f32.mrf.mxu0
    %v3565 = vadd.f32 0.0, %v3564
    %v3566 = vpop.f32.mrf.mxu0
    %3567 = vmatprep.mubr.bf16.mxu0 0
    %3568 = vmatmul.mubr.bf16.gmra.mxu0 %v3477
    %v3569 = vpop.f32.mrf.mxu0
    %v3570 = vadd.f32 0.0, %v3569
    %v3571 = vpop.f32.mrf.mxu0
    %v3572 = vpop.f32.mrf.mxu0
    %v3573 = vadd.f32 0.0, %v3572
    %v3574 = vpop.f32.mrf.mxu0
    %3575 = vdwg.mxu0
    %v3576 = vadd.f32 %v3382, %v3514
    %v3577 = vadd.f32 %v3383, %v3517
    %v3578 = vadd.f32 %v3384, %v3522
    %v3579 = vadd.f32 %v3385, %v3525
    %v3580 = vadd.f32 %v3386, %v3530
    %v3581 = vadd.f32 %v3387, %v3533
    %v3582 = vadd.f32 %v3388, %v3538
    %v3583 = vadd.f32 %v3389, %v3541
    %v3584 = vadd.f32 %v3390, %v3546
    %v3585 = vadd.f32 %v3391, %v3549
    %v3586 = vadd.f32 %v3392, %v3554
    %v3587 = vadd.f32 %v3393, %v3557
    %v3588 = vadd.f32 %v3394, %v3562
    %v3589 = vadd.f32 %v3395, %v3565
    %v3590 = vadd.f32 %v3396, %v3570
    %v3591 = vadd.f32 %v3397, %v3573
    %v3592 = vld [vmem:[%s3203 + $0x2] sm:$0xff]
    %v3593 = vld [vmem:[%s3203 + $0x12] sm:$0xff]
    %v3594 = vld [vmem:[%s3203 + $0x22] sm:$0xff]
    %v3595 = vld [vmem:[%s3203 + $0x32] sm:$0xff]
    %v3596 = vld [vmem:[%s3203 + $0x42] sm:$0xff]
    %v3597 = vld [vmem:[%s3203 + $0x52] sm:$0xff]
    %v3598 = vld [vmem:[%s3203 + $0x62] sm:$0xff]
    %v3599 = vld [vmem:[%s3203 + $0x72] sm:$0xff]
    %v3600 = vld [vmem:[%s3203 + $0xa2] sm:$0xff]
    %v3601 = vld [vmem:[%s3203 + $0xb2] sm:$0xff]
    %v3602 = vld [vmem:[%s3203 + $0xc2] sm:$0xff]
    %v3603 = vld [vmem:[%s3203 + $0xd2] sm:$0xff]
    %v3604 = vld [vmem:[%s3203 + $0xe2] sm:$0xff]
    %v3605 = vld [vmem:[%s3203 + $0xf2] sm:$0xff]
    %v3606 = vld [vmem:[%s3203 + $0x102] sm:$0xff]
    %v3607 = vld [vmem:[%s3203 + $0x112] sm:$0xff]
    %v3608 = vpack.c.bf16 %v3593, %v3592
    %v3609 = vpack.c.bf16 %v3595, %v3594
    %v3610 = vpack.c.bf16 %v3597, %v3596
    %v3611 = vpack.c.bf16 %v3599, %v3598
    %v3612 = vpack.c.bf16 %v3601, %v3600
    %v3613 = vpack.c.bf16 %v3603, %v3602
    %v3614 = vpack.c.bf16 %v3605, %v3604
    %v3615 = vpack.c.bf16 %v3607, %v3606
    %s3616 = scalar_lea.vmem %s9, 256
    %v3617 = vld [vmem:[%s3616] sm:$0xf]
    %v3618 = vld [vmem:[%s3616 + $0x4] sm:$0xf]
    %v3619 = vld [vmem:[%s3616 + $0x8] sm:$0xf]
    %v3620 = vld [vmem:[%s3616 + $0xc] sm:$0xf]
    %v3621 = vld [vmem:[%s3616 + $0x10] sm:$0xf]
    %v3622 = vld [vmem:[%s3616 + $0x14] sm:$0xf]
    %v3623 = vld [vmem:[%s3616 + $0x18] sm:$0xf]
    %v3624 = vld [vmem:[%s3616 + $0x1c] sm:$0xf]
    %v3633 = vunpack.c.l.b16 %v3617
    %v3634 = vunpack.c.l.b16 %v3618
    %v3635 = vunpack.c.l.b16 %v3619
    %v3636 = vunpack.c.l.b16 %v3620
    %v3637 = vunpack.c.l.b16 %v3621
    %v3638 = vunpack.c.l.b16 %v3622
    %v3639 = vunpack.c.l.b16 %v3623
    %v3640 = vunpack.c.l.b16 %v3624
    %v3641 = vpack.c.b16 %v3634, %v3633
    %v3642 = vpack.c.b16 %v3636, %v3635
    %v3643 = vpack.c.b16 %v3638, %v3637
    %v3644 = vpack.c.b16 %v3640, %v3639
    %v3650 = vsel %vm67, %v3608, 0
    %v3653 = vsel %vm67, %v3609, 0
    %v3656 = vsel %vm67, %v3610, 0
    %v3659 = vsel %vm67, %v3611, 0
    %v3662 = vsel %vm67, %v3612, 0
    %v3665 = vsel %vm67, %v3613, 0
    %v3668 = vsel %vm67, %v3614, 0
    %v3671 = vsel %vm67, %v3615, 0
    %3673 = vmatprep.subr.bf16.mxu0 0
    %3674 = vmatpush1.bf16.msra.mxu0 0
    %3675 = vmatprep.subr.bf16.mxu0 0
    %3676 = vmatpush1.bf16.msra.mxu0 0
    %3677 = vmatprep.subr.bf16.mxu0 0
    %3678 = vmatpush1.bf16.msra.mxu0 0
    %3679 = vmatprep.subr.bf16.mxu0 0
    %3680 = vmatpush1.bf16.msra.mxu0 0
    %3681 = vmatprep.subr.bf16.mxu0 0
    %3682 = vmatpush1.bf16.msra.mxu0 %v3644
    %3683 = vmatprep.subr.bf16.mxu0 0
    %3684 = vmatpush1.bf16.msra.mxu0 %v3643
    %3685 = vmatprep.subr.bf16.mxu0 0
    %3686 = vmatpush1.bf16.msra.mxu0 %v3642
    %3687 = vmatprep.subr.bf16.mxu0 0
    %3688 = vmatpush1.bf16.msra.mxu0 %v3641
    %3689 = vmatprep.subr.bf16.mxu0 0
    %3690 = vmatpush2.bf16.msra.mxu0 0
    %3691 = vmatprep.subr.bf16.mxu0 0
    %3692 = vmatpush2.bf16.msra.mxu0 0
    %3693 = vmatprep.subr.bf16.mxu0 0
    %3694 = vmatpush2.bf16.msra.mxu0 0
    %3695 = vmatprep.subr.bf16.mxu0 0
    %3696 = vmatpush2.bf16.msra.mxu0 0
    %3697 = vmatprep.subr.bf16.mxu0 0
    %3698 = vmatpush2.bf16.msra.mxu0 0
    %3699 = vmatprep.subr.bf16.mxu0 0
    %3700 = vmatpush2.bf16.msra.mxu0 0
    %3701 = vmatprep.subr.bf16.mxu0 0
    %3702 = vmatpush2.bf16.msra.mxu0 0
    %3703 = vmatprep.subr.bf16.mxu0 0
    %3704 = vmatpush2.bf16.msra.mxu0 0
    %3705 = vmatprep.mubr.bf16.mxu0 0
    %3706 = vmatmul.mubr.bf16.gmra.mxu0 %v3650
    %v3707 = vpop.f32.mrf.mxu0
    %v3708 = vadd.f32 0.0, %v3707
    %v3709 = vpop.f32.mrf.mxu0
    %v3710 = vpop.f32.mrf.mxu0
    %v3711 = vadd.f32 0.0, %v3710
    %v3712 = vpop.f32.mrf.mxu0
    %3713 = vmatprep.mubr.bf16.mxu0 0
    %3714 = vmatmul.mubr.bf16.gmra.mxu0 %v3653
    %v3715 = vpop.f32.mrf.mxu0
    %v3716 = vadd.f32 0.0, %v3715
    %v3717 = vpop.f32.mrf.mxu0
    %v3718 = vpop.f32.mrf.mxu0
    %v3719 = vadd.f32 0.0, %v3718
    %v3720 = vpop.f32.mrf.mxu0
    %3721 = vmatprep.mubr.bf16.mxu0 0
    %3722 = vmatmul.mubr.bf16.gmra.mxu0 %v3656
    %v3723 = vpop.f32.mrf.mxu0
    %v3724 = vadd.f32 0.0, %v3723
    %v3725 = vpop.f32.mrf.mxu0
    %v3726 = vpop.f32.mrf.mxu0
    %v3727 = vadd.f32 0.0, %v3726
    %v3728 = vpop.f32.mrf.mxu0
    %3729 = vmatprep.mubr.bf16.mxu0 0
    %3730 = vmatmul.mubr.bf16.gmra.mxu0 %v3659
    %v3731 = vpop.f32.mrf.mxu0
    %v3732 = vadd.f32 0.0, %v3731
    %v3733 = vpop.f32.mrf.mxu0
    %v3734 = vpop.f32.mrf.mxu0
    %v3735 = vadd.f32 0.0, %v3734
    %v3736 = vpop.f32.mrf.mxu0
    %3737 = vmatprep.mubr.bf16.mxu0 0
    %3738 = vmatmul.mubr.bf16.gmra.mxu0 %v3662
    %v3739 = vpop.f32.mrf.mxu0
    %v3740 = vadd.f32 0.0, %v3739
    %v3741 = vpop.f32.mrf.mxu0
    %v3742 = vpop.f32.mrf.mxu0
    %v3743 = vadd.f32 0.0, %v3742
    %v3744 = vpop.f32.mrf.mxu0
    %3745 = vmatprep.mubr.bf16.mxu0 0
    %3746 = vmatmul.mubr.bf16.gmra.mxu0 %v3665
    %v3747 = vpop.f32.mrf.mxu0
    %v3748 = vadd.f32 0.0, %v3747
    %v3749 = vpop.f32.mrf.mxu0
    %v3750 = vpop.f32.mrf.mxu0
    %v3751 = vadd.f32 0.0, %v3750
    %v3752 = vpop.f32.mrf.mxu0
    %3753 = vmatprep.mubr.bf16.mxu0 0
    %3754 = vmatmul.mubr.bf16.gmra.mxu0 %v3668
    %v3755 = vpop.f32.mrf.mxu0
    %v3756 = vadd.f32 0.0, %v3755
    %v3757 = vpop.f32.mrf.mxu0
    %v3758 = vpop.f32.mrf.mxu0
    %v3759 = vadd.f32 0.0, %v3758
    %v3760 = vpop.f32.mrf.mxu0
    %3761 = vmatprep.mubr.bf16.mxu0 0
    %3762 = vmatmul.mubr.bf16.gmra.mxu0 %v3671
    %v3763 = vpop.f32.mrf.mxu0
    %v3764 = vadd.f32 0.0, %v3763
    %v3765 = vpop.f32.mrf.mxu0
    %v3766 = vpop.f32.mrf.mxu0
    %v3767 = vadd.f32 0.0, %v3766
    %v3768 = vpop.f32.mrf.mxu0
    %3769 = vdwg.mxu0
    %v3770 = vadd.f32 %v3576, %v3708
    %v3771 = vadd.f32 %v3577, %v3711
    %v3772 = vadd.f32 %v3578, %v3716
    %v3773 = vadd.f32 %v3579, %v3719
    %v3774 = vadd.f32 %v3580, %v3724
    %v3775 = vadd.f32 %v3581, %v3727
    %v3776 = vadd.f32 %v3582, %v3732
    %v3777 = vadd.f32 %v3583, %v3735
    %v3778 = vadd.f32 %v3584, %v3740
    %v3779 = vadd.f32 %v3585, %v3743
    %v3780 = vadd.f32 %v3586, %v3748
    %v3781 = vadd.f32 %v3587, %v3751
    %v3782 = vadd.f32 %v3588, %v3756
    %v3783 = vadd.f32 %v3589, %v3759
    %v3784 = vadd.f32 %v3590, %v3764
    %v3785 = vadd.f32 %v3591, %v3767
    %v3786 = vld [vmem:[%s10] sm:$0x1]
    %v3788 = vlaneseq
    %v3789 = vshrl.u32 %v3788, 7
    %v3790 = vsub.s32 0, %v3789
    %v3791 = vrot.slane %v3786, %v3790
    %v3793 = vadd.f32 %v3770, %v3791
    %v3794 = vadd.f32 %v3771, %v3791
    %v3795 = vadd.f32 %v3772, %v3791
    %v3796 = vadd.f32 %v3773, %v3791
    %v3797 = vadd.f32 %v3774, %v3791
    %v3798 = vadd.f32 %v3775, %v3791
    %v3799 = vadd.f32 %v3776, %v3791
    %v3800 = vadd.f32 %v3777, %v3791
    %v3801 = vadd.f32 %v3778, %v3791
    %v3802 = vadd.f32 %v3779, %v3791
    %v3803 = vadd.f32 %v3780, %v3791
    %v3804 = vadd.f32 %v3781, %v3791
    %v3805 = vadd.f32 %v3782, %v3791
    %v3806 = vadd.f32 %v3783, %v3791
    %v3807 = vadd.f32 %v3784, %v3791
    %v3808 = vadd.f32 %v3785, %v3791
    %v3809 = vmul.f32 %v3793, 1.442695
    %v3810 = vpow.pop %v3809
    %v3811 = vmul.f32 %v3794, 1.442695
    %v3812 = vpow.pop %v3811
    %v3813 = vmul.f32 %v3795, 1.442695
    %v3814 = vpow.pop %v3813
    %v3815 = vmul.f32 %v3796, 1.442695
    %v3816 = vpow.pop %v3815
    %v3817 = vmul.f32 %v3797, 1.442695
    %v3818 = vpow.pop %v3817
    %v3819 = vmul.f32 %v3798, 1.442695
    %v3820 = vpow.pop %v3819
    %v3821 = vmul.f32 %v3799, 1.442695
    %v3822 = vpow.pop %v3821
    %v3823 = vmul.f32 %v3800, 1.442695
    %v3824 = vpow.pop %v3823
    %v3825 = vmul.f32 %v3801, 1.442695
    %v3826 = vpow.pop %v3825
    %v3827 = vmul.f32 %v3802, 1.442695
    %v3828 = vpow.pop %v3827
    %v3829 = vmul.f32 %v3803, 1.442695
    %v3830 = vpow.pop %v3829
    %v3831 = vmul.f32 %v3804, 1.442695
    %v3832 = vpow.pop %v3831
    %v3833 = vmul.f32 %v3805, 1.442695
    %v3834 = vpow.pop %v3833
    %v3835 = vmul.f32 %v3806, 1.442695
    %v3836 = vpow.pop %v3835
    %v3837 = vmul.f32 %v3807, 1.442695
    %v3838 = vpow.pop %v3837
    %v3839 = vmul.f32 %v3808, 1.442695
    %v3840 = vpow.pop %v3839
    %v3841 = vadd.f32 %v3810, 1.0
    %v3842 = vadd.f32 %v3812, 1.0
    %v3843 = vadd.f32 %v3814, 1.0
    %v3844 = vadd.f32 %v3816, 1.0
    %v3845 = vadd.f32 %v3818, 1.0
    %v3846 = vadd.f32 %v3820, 1.0
    %v3847 = vadd.f32 %v3822, 1.0
    %v3848 = vadd.f32 %v3824, 1.0
    %v3849 = vadd.f32 %v3826, 1.0
    %v3850 = vadd.f32 %v3828, 1.0
    %v3851 = vadd.f32 %v3830, 1.0
    %v3852 = vadd.f32 %v3832, 1.0
    %v3853 = vadd.f32 %v3834, 1.0
    %v3854 = vadd.f32 %v3836, 1.0
    %v3855 = vadd.f32 %v3838, 1.0
    %v3856 = vadd.f32 %v3840, 1.0
    %v3857 = vmul.f32 %v3841, %v3841
    %v3858 = vmul.f32 %v3842, %v3842
    %v3859 = vmul.f32 %v3843, %v3843
    %v3860 = vmul.f32 %v3844, %v3844
    %v3861 = vmul.f32 %v3845, %v3845
    %v3862 = vmul.f32 %v3846, %v3846
    %v3863 = vmul.f32 %v3847, %v3847
    %v3864 = vmul.f32 %v3848, %v3848
    %v3865 = vmul.f32 %v3849, %v3849
    %v3866 = vmul.f32 %v3850, %v3850
    %v3867 = vmul.f32 %v3851, %v3851
    %v3868 = vmul.f32 %v3852, %v3852
    %v3869 = vmul.f32 %v3853, %v3853
    %v3870 = vmul.f32 %v3854, %v3854
    %v3871 = vmul.f32 %v3855, %v3855
    %v3872 = vmul.f32 %v3856, %v3856
    %v3873 = vadd.f32 %v3857, 1.0
    %v3874 = vadd.f32 %v3858, 1.0
    %v3875 = vadd.f32 %v3859, 1.0
    %v3876 = vadd.f32 %v3860, 1.0
    %v3877 = vadd.f32 %v3861, 1.0
    %v3878 = vadd.f32 %v3862, 1.0
    %v3879 = vadd.f32 %v3863, 1.0
    %v3880 = vadd.f32 %v3864, 1.0
    %v3881 = vadd.f32 %v3865, 1.0
    %v3882 = vadd.f32 %v3866, 1.0
    %v3883 = vadd.f32 %v3867, 1.0
    %v3884 = vadd.f32 %v3868, 1.0
    %v3885 = vadd.f32 %v3869, 1.0
    %v3886 = vadd.f32 %v3870, 1.0
    %v3887 = vadd.f32 %v3871, 1.0
    %v3888 = vadd.f32 %v3872, 1.0
    %v3889 = vmul.f32 %v3793, 2.0
    %v3890 = vmul.f32 %v3794, 2.0
    %v3891 = vmul.f32 %v3795, 2.0
    %v3892 = vmul.f32 %v3796, 2.0
    %v3893 = vmul.f32 %v3797, 2.0
    %v3894 = vmul.f32 %v3798, 2.0
    %v3895 = vmul.f32 %v3799, 2.0
    %v3896 = vmul.f32 %v3800, 2.0
    %v3897 = vmul.f32 %v3801, 2.0
    %v3898 = vmul.f32 %v3802, 2.0
    %v3899 = vmul.f32 %v3803, 2.0
    %v3900 = vmul.f32 %v3804, 2.0
    %v3901 = vmul.f32 %v3805, 2.0
    %v3902 = vmul.f32 %v3806, 2.0
    %v3903 = vmul.f32 %v3807, 2.0
    %v3904 = vmul.f32 %v3808, 2.0
    %v3905 = vrcp.pop %v3873
    %v3906 = vmul.f32 %v3889, %v3905
    %v3907 = vrcp.pop %v3874
    %v3908 = vmul.f32 %v3890, %v3907
    %v3909 = vrcp.pop %v3875
    %v3910 = vmul.f32 %v3891, %v3909
    %v3911 = vrcp.pop %v3876
    %v3912 = vmul.f32 %v3892, %v3911
    %v3913 = vrcp.pop %v3877
    %v3914 = vmul.f32 %v3893, %v3913
    %v3915 = vrcp.pop %v3878
    %v3916 = vmul.f32 %v3894, %v3915
    %v3917 = vrcp.pop %v3879
    %v3918 = vmul.f32 %v3895, %v3917
    %v3919 = vrcp.pop %v3880
    %v3920 = vmul.f32 %v3896, %v3919
    %v3921 = vrcp.pop %v3881
    %v3922 = vmul.f32 %v3897, %v3921
    %v3923 = vrcp.pop %v3882
    %v3924 = vmul.f32 %v3898, %v3923
    %v3925 = vrcp.pop %v3883
    %v3926 = vmul.f32 %v3899, %v3925
    %v3927 = vrcp.pop %v3884
    %v3928 = vmul.f32 %v3900, %v3927
    %v3929 = vrcp.pop %v3885
    %v3930 = vmul.f32 %v3901, %v3929
    %v3931 = vrcp.pop %v3886
    %v3932 = vmul.f32 %v3902, %v3931
    %v3933 = vrcp.pop %v3887
    %v3934 = vmul.f32 %v3903, %v3933
    %v3935 = vrcp.pop %v3888
    %v3936 = vmul.f32 %v3904, %v3935
    %v3937 = vsub.f32 %v3793, %v3906
    %v3938 = vsub.f32 %v3794, %v3908
    %v3939 = vsub.f32 %v3795, %v3910
    %v3940 = vsub.f32 %v3796, %v3912
    %v3941 = vsub.f32 %v3797, %v3914
    %v3942 = vsub.f32 %v3798, %v3916
    %v3943 = vsub.f32 %v3799, %v3918
    %v3944 = vsub.f32 %v3800, %v3920
    %v3945 = vsub.f32 %v3801, %v3922
    %v3946 = vsub.f32 %v3802, %v3924
    %v3947 = vsub.f32 %v3803, %v3926
    %v3948 = vsub.f32 %v3804, %v3928
    %v3949 = vsub.f32 %v3805, %v3930
    %v3950 = vsub.f32 %v3806, %v3932
    %v3951 = vsub.f32 %v3807, %v3934
    %v3952 = vsub.f32 %v3808, %v3936
    %v3953 = vadd.f32 %v1727, %v3937
    %v3954 = vadd.f32 %v1728, %v3938
    %v3955 = vadd.f32 %v1729, %v3939
    %v3956 = vadd.f32 %v1730, %v3940
    %v3957 = vadd.f32 %v1731, %v3941
    %v3958 = vadd.f32 %v1732, %v3942
    %v3959 = vadd.f32 %v1733, %v3943
    %v3960 = vadd.f32 %v1734, %v3944
    %v3961 = vadd.f32 %v1735, %v3945
    %v3962 = vadd.f32 %v1736, %v3946
    %v3963 = vadd.f32 %v1737, %v3947
    %v3964 = vadd.f32 %v1738, %v3948
    %v3965 = vadd.f32 %v1739, %v3949
    %v3966 = vadd.f32 %v1740, %v3950
    %v3967 = vadd.f32 %v1741, %v3951
    %v3968 = vadd.f32 %v1742, %v3952
    %v3969 = vpack.c.bf16 %v3954, %v3953
    %v3970 = vpack.c.bf16 %v3956, %v3955
    %v3971 = vpack.c.bf16 %v3958, %v3957
    %v3972 = vpack.c.bf16 %v3960, %v3959
    %v3973 = vpack.c.bf16 %v3962, %v3961
    %v3974 = vpack.c.bf16 %v3964, %v3963
    %v3975 = vpack.c.bf16 %v3966, %v3965
    %v3976 = vpack.c.bf16 %v3968, %v3967
    %v3977 = vld [vmem:[%s11] sm:$0xf]
    %v3978 = vld [vmem:[%s11 + $0x4] sm:$0xf]
    %v3979 = vld [vmem:[%s11 + $0x8] sm:$0xf]
    %v3980 = vld [vmem:[%s11 + $0xc] sm:$0xf]
    %v3981 = vld [vmem:[%s11 + $0x10] sm:$0xf]
    %v3982 = vld [vmem:[%s11 + $0x14] sm:$0xf]
    %v3983 = vld [vmem:[%s11 + $0x18] sm:$0xf]
    %v3984 = vld [vmem:[%s11 + $0x1c] sm:$0xf]
    %v3985 = vld [vmem:[%s12] sm:$0x1]
    %v3987 = vlaneseq
    %v3988 = vshrl.u32 %v3987, 7
    %v3989 = vsub.s32 0, %v3988
    %v3990 = vrot.slane %v3985, %v3989
    %v4000 = vunpack.c.l.b16 %v3977
    %v4001 = vunpack.c.l.b16 %v3978
    %v4002 = vunpack.c.l.b16 %v3979
    %v4003 = vunpack.c.l.b16 %v3980
    %v4004 = vunpack.c.l.b16 %v3981
    %v4005 = vunpack.c.l.b16 %v3982
    %v4006 = vunpack.c.l.b16 %v3983
    %v4007 = vunpack.c.l.b16 %v3984
    %v4008 = vpack.c.b16 %v4001, %v4000
    %v4009 = vpack.c.b16 %v4003, %v4002
    %v4010 = vpack.c.b16 %v4005, %v4004
    %v4011 = vpack.c.b16 %v4007, %v4006
    %v4017 = vsel %vm67, %v3969, 0
    %v4020 = vsel %vm67, %v3970, 0
    %v4023 = vsel %vm67, %v3971, 0
    %v4026 = vsel %vm67, %v3972, 0
    %v4029 = vsel %vm67, %v3973, 0
    %v4032 = vsel %vm67, %v3974, 0
    %v4035 = vsel %vm67, %v3975, 0
    %v4038 = vsel %vm67, %v3976, 0
    %4040 = vmatprep.subr.bf16.mxu0 0
    %4041 = vmatpush1.bf16.msra.mxu0 0
    %4042 = vmatprep.subr.bf16.mxu0 0
    %4043 = vmatpush1.bf16.msra.mxu0 0
    %4044 = vmatprep.subr.bf16.mxu0 0
    %4045 = vmatpush1.bf16.msra.mxu0 0
    %4046 = vmatprep.subr.bf16.mxu0 0
    %4047 = vmatpush1.bf16.msra.mxu0 0
    %4048 = vmatprep.subr.bf16.mxu0 0
    %4049 = vmatpush1.bf16.msra.mxu0 %v4011
    %4050 = vmatprep.subr.bf16.mxu0 0
    %4051 = vmatpush1.bf16.msra.mxu0 %v4010
    %4052 = vmatprep.subr.bf16.mxu0 0
    %4053 = vmatpush1.bf16.msra.mxu0 %v4009
    %4054 = vmatprep.subr.bf16.mxu0 0
    %4055 = vmatpush1.bf16.msra.mxu0 %v4008
    %4056 = vmatprep.subr.bf16.mxu0 0
    %4057 = vmatpush2.bf16.msra.mxu0 0
    %4058 = vmatprep.subr.bf16.mxu0 0
    %4059 = vmatpush2.bf16.msra.mxu0 0
    %4060 = vmatprep.subr.bf16.mxu0 0
    %4061 = vmatpush2.bf16.msra.mxu0 0
    %4062 = vmatprep.subr.bf16.mxu0 0
    %4063 = vmatpush2.bf16.msra.mxu0 0
    %4064 = vmatprep.subr.bf16.mxu0 0
    %4065 = vmatpush2.bf16.msra.mxu0 0
    %4066 = vmatprep.subr.bf16.mxu0 0
    %4067 = vmatpush2.bf16.msra.mxu0 0
    %4068 = vmatprep.subr.bf16.mxu0 0
    %4069 = vmatpush2.bf16.msra.mxu0 0
    %4070 = vmatprep.subr.bf16.mxu0 0
    %4071 = vmatpush2.bf16.msra.mxu0 0
    %4072 = vmatprep.mubr.bf16.mxu0 0
    %4073 = vmatmul.mubr.bf16.gmra.mxu0 %v4017
    %v4074 = vpop.f32.mrf.mxu0
    %v4075 = vadd.f32 %v3990, %v4074
    %v4076 = vpop.f32.mrf.mxu0
    %v4077 = vpop.f32.mrf.mxu0
    %v4078 = vadd.f32 %v3990, %v4077
    %v4079 = vpop.f32.mrf.mxu0
    %4080 = vmatprep.mubr.bf16.mxu0 0
    %4081 = vmatmul.mubr.bf16.gmra.mxu0 %v4020
    %v4082 = vpop.f32.mrf.mxu0
    %v4083 = vadd.f32 %v3990, %v4082
    %v4084 = vpop.f32.mrf.mxu0
    %v4085 = vpop.f32.mrf.mxu0
    %v4086 = vadd.f32 %v3990, %v4085
    %v4087 = vpop.f32.mrf.mxu0
    %4088 = vmatprep.mubr.bf16.mxu0 0
    %4089 = vmatmul.mubr.bf16.gmra.mxu0 %v4023
    %v4090 = vpop.f32.mrf.mxu0
    %v4091 = vadd.f32 %v3990, %v4090
    %v4092 = vpop.f32.mrf.mxu0
    %v4093 = vpop.f32.mrf.mxu0
    %v4094 = vadd.f32 %v3990, %v4093
    %v4095 = vpop.f32.mrf.mxu0
    %4096 = vmatprep.mubr.bf16.mxu0 0
    %4097 = vmatmul.mubr.bf16.gmra.mxu0 %v4026
    %v4098 = vpop.f32.mrf.mxu0
    %v4099 = vadd.f32 %v3990, %v4098
    %v4100 = vpop.f32.mrf.mxu0
    %v4101 = vpop.f32.mrf.mxu0
    %v4102 = vadd.f32 %v3990, %v4101
    %v4103 = vpop.f32.mrf.mxu0
    %4104 = vmatprep.mubr.bf16.mxu0 0
    %4105 = vmatmul.mubr.bf16.gmra.mxu0 %v4029
    %v4106 = vpop.f32.mrf.mxu0
    %v4107 = vadd.f32 %v3990, %v4106
    %v4108 = vpop.f32.mrf.mxu0
    %v4109 = vpop.f32.mrf.mxu0
    %v4110 = vadd.f32 %v3990, %v4109
    %v4111 = vpop.f32.mrf.mxu0
    %4112 = vmatprep.mubr.bf16.mxu0 0
    %4113 = vmatmul.mubr.bf16.gmra.mxu0 %v4032
    %v4114 = vpop.f32.mrf.mxu0
    %v4115 = vadd.f32 %v3990, %v4114
    %v4116 = vpop.f32.mrf.mxu0
    %v4117 = vpop.f32.mrf.mxu0
    %v4118 = vadd.f32 %v3990, %v4117
    %v4119 = vpop.f32.mrf.mxu0
    %4120 = vmatprep.mubr.bf16.mxu0 0
    %4121 = vmatmul.mubr.bf16.gmra.mxu0 %v4035
    %v4122 = vpop.f32.mrf.mxu0
    %v4123 = vadd.f32 %v3990, %v4122
    %v4124 = vpop.f32.mrf.mxu0
    %v4125 = vpop.f32.mrf.mxu0
    %v4126 = vadd.f32 %v3990, %v4125
    %v4127 = vpop.f32.mrf.mxu0
    %4128 = vmatprep.mubr.bf16.mxu0 0
    %4129 = vmatmul.mubr.bf16.gmra.mxu0 %v4038
    %v4130 = vpop.f32.mrf.mxu0
    %v4131 = vadd.f32 %v3990, %v4130
    %v4132 = vpop.f32.mrf.mxu0
    %v4133 = vpop.f32.mrf.mxu0
    %v4134 = vadd.f32 %v3990, %v4133
    %v4135 = vpop.f32.mrf.mxu0
    %4136 = vdwg.mxu0
    %v4137 = vmul.f32 %v4075, 1.442695
    %v4138 = vpow.pop %v4137
    %v4139 = vmul.f32 %v4078, 1.442695
    %v4140 = vpow.pop %v4139
    %v4141 = vmul.f32 %v4083, 1.442695
    %v4142 = vpow.pop %v4141
    %v4143 = vmul.f32 %v4086, 1.442695
    %v4144 = vpow.pop %v4143
    %v4145 = vmul.f32 %v4091, 1.442695
    %v4146 = vpow.pop %v4145
    %v4147 = vmul.f32 %v4094, 1.442695
    %v4148 = vpow.pop %v4147
    %v4149 = vmul.f32 %v4099, 1.442695
    %v4150 = vpow.pop %v4149
    %v4151 = vmul.f32 %v4102, 1.442695
    %v4152 = vpow.pop %v4151
    %v4153 = vmul.f32 %v4107, 1.442695
    %v4154 = vpow.pop %v4153
    %v4155 = vmul.f32 %v4110, 1.442695
    %v4156 = vpow.pop %v4155
    %v4157 = vmul.f32 %v4115, 1.442695
    %v4158 = vpow.pop %v4157
    %v4159 = vmul.f32 %v4118, 1.442695
    %v4160 = vpow.pop %v4159
    %v4161 = vmul.f32 %v4123, 1.442695
    %v4162 = vpow.pop %v4161
    %v4163 = vmul.f32 %v4126, 1.442695
    %v4164 = vpow.pop %v4163
    %v4165 = vmul.f32 %v4131, 1.442695
    %v4166 = vpow.pop %v4165
    %v4167 = vmul.f32 %v4134, 1.442695
    %v4168 = vpow.pop %v4167
    %v4169 = vadd.f32 %v4138, 1.0
    %v4170 = vadd.f32 %v4140, 1.0
    %v4171 = vadd.f32 %v4142, 1.0
    %v4172 = vadd.f32 %v4144, 1.0
    %v4173 = vadd.f32 %v4146, 1.0
    %v4174 = vadd.f32 %v4148, 1.0
    %v4175 = vadd.f32 %v4150, 1.0
    %v4176 = vadd.f32 %v4152, 1.0
    %v4177 = vadd.f32 %v4154, 1.0
    %v4178 = vadd.f32 %v4156, 1.0
    %v4179 = vadd.f32 %v4158, 1.0
    %v4180 = vadd.f32 %v4160, 1.0
    %v4181 = vadd.f32 %v4162, 1.0
    %v4182 = vadd.f32 %v4164, 1.0
    %v4183 = vadd.f32 %v4166, 1.0
    %v4184 = vadd.f32 %v4168, 1.0
    %v4185 = vmul.f32 %v4169, %v4169
    %v4186 = vmul.f32 %v4170, %v4170
    %v4187 = vmul.f32 %v4171, %v4171
    %v4188 = vmul.f32 %v4172, %v4172
    %v4189 = vmul.f32 %v4173, %v4173
    %v4190 = vmul.f32 %v4174, %v4174
    %v4191 = vmul.f32 %v4175, %v4175
    %v4192 = vmul.f32 %v4176, %v4176
    %v4193 = vmul.f32 %v4177, %v4177
    %v4194 = vmul.f32 %v4178, %v4178
    %v4195 = vmul.f32 %v4179, %v4179
    %v4196 = vmul.f32 %v4180, %v4180
    %v4197 = vmul.f32 %v4181, %v4181
    %v4198 = vmul.f32 %v4182, %v4182
    %v4199 = vmul.f32 %v4183, %v4183
    %v4200 = vmul.f32 %v4184, %v4184
    %v4201 = vadd.f32 %v4185, 1.0
    %v4202 = vadd.f32 %v4186, 1.0
    %v4203 = vadd.f32 %v4187, 1.0
    %v4204 = vadd.f32 %v4188, 1.0
    %v4205 = vadd.f32 %v4189, 1.0
    %v4206 = vadd.f32 %v4190, 1.0
    %v4207 = vadd.f32 %v4191, 1.0
    %v4208 = vadd.f32 %v4192, 1.0
    %v4209 = vadd.f32 %v4193, 1.0
    %v4210 = vadd.f32 %v4194, 1.0
    %v4211 = vadd.f32 %v4195, 1.0
    %v4212 = vadd.f32 %v4196, 1.0
    %v4213 = vadd.f32 %v4197, 1.0
    %v4214 = vadd.f32 %v4198, 1.0
    %v4215 = vadd.f32 %v4199, 1.0
    %v4216 = vadd.f32 %v4200, 1.0
    %v4217 = vmul.f32 %v4075, 2.0
    %v4218 = vmul.f32 %v4078, 2.0
    %v4219 = vmul.f32 %v4083, 2.0
    %v4220 = vmul.f32 %v4086, 2.0
    %v4221 = vmul.f32 %v4091, 2.0
    %v4222 = vmul.f32 %v4094, 2.0
    %v4223 = vmul.f32 %v4099, 2.0
    %v4224 = vmul.f32 %v4102, 2.0
    %v4225 = vmul.f32 %v4107, 2.0
    %v4226 = vmul.f32 %v4110, 2.0
    %v4227 = vmul.f32 %v4115, 2.0
    %v4228 = vmul.f32 %v4118, 2.0
    %v4229 = vmul.f32 %v4123, 2.0
    %v4230 = vmul.f32 %v4126, 2.0
    %v4231 = vmul.f32 %v4131, 2.0
    %v4232 = vmul.f32 %v4134, 2.0
    %v4233 = vrcp.pop %v4201
    %v4234 = vmul.f32 %v4217, %v4233
    %v4235 = vrcp.pop %v4202
    %v4236 = vmul.f32 %v4218, %v4235
    %v4237 = vrcp.pop %v4203
    %v4238 = vmul.f32 %v4219, %v4237
    %v4239 = vrcp.pop %v4204
    %v4240 = vmul.f32 %v4220, %v4239
    %v4241 = vrcp.pop %v4205
    %v4242 = vmul.f32 %v4221, %v4241
    %v4243 = vrcp.pop %v4206
    %v4244 = vmul.f32 %v4222, %v4243
    %v4245 = vrcp.pop %v4207
    %v4246 = vmul.f32 %v4223, %v4245
    %v4247 = vrcp.pop %v4208
    %v4248 = vmul.f32 %v4224, %v4247
    %v4249 = vrcp.pop %v4209
    %v4250 = vmul.f32 %v4225, %v4249
    %v4251 = vrcp.pop %v4210
    %v4252 = vmul.f32 %v4226, %v4251
    %v4253 = vrcp.pop %v4211
    %v4254 = vmul.f32 %v4227, %v4253
    %v4255 = vrcp.pop %v4212
    %v4256 = vmul.f32 %v4228, %v4255
    %v4257 = vrcp.pop %v4213
    %v4258 = vmul.f32 %v4229, %v4257
    %v4259 = vrcp.pop %v4214
    %v4260 = vmul.f32 %v4230, %v4259
    %v4261 = vrcp.pop %v4215
    %v4262 = vmul.f32 %v4231, %v4261
    %v4263 = vrcp.pop %v4216
    %v4264 = vmul.f32 %v4232, %v4263
    %v4265 = vsub.f32 %v4075, %v4234
    %v4266 = vsub.f32 %v4078, %v4236
    %v4267 = vsub.f32 %v4083, %v4238
    %v4268 = vsub.f32 %v4086, %v4240
    %v4269 = vsub.f32 %v4091, %v4242
    %v4270 = vsub.f32 %v4094, %v4244
    %v4271 = vsub.f32 %v4099, %v4246
    %v4272 = vsub.f32 %v4102, %v4248
    %v4273 = vsub.f32 %v4107, %v4250
    %v4274 = vsub.f32 %v4110, %v4252
    %v4275 = vsub.f32 %v4115, %v4254
    %v4276 = vsub.f32 %v4118, %v4256
    %v4277 = vsub.f32 %v4123, %v4258
    %v4278 = vsub.f32 %v4126, %v4260
    %v4279 = vsub.f32 %v4131, %v4262
    %v4280 = vsub.f32 %v4134, %v4264
    %4281 = vst.msk [vmem:[%s2055 + $0x1] sm:$0xff] %vm67, %v4265
    %4282 = vst.msk [vmem:[%s2055 + $0x11] sm:$0xff] %vm67, %v4266
    %4283 = vst.msk [vmem:[%s2055 + $0x21] sm:$0xff] %vm67, %v4267
    %4284 = vst.msk [vmem:[%s2055 + $0x31] sm:$0xff] %vm67, %v4268
    %4285 = vst.msk [vmem:[%s2055 + $0x41] sm:$0xff] %vm67, %v4269
    %4286 = vst.msk [vmem:[%s2055 + $0x51] sm:$0xff] %vm67, %v4270
    %4287 = vst.msk [vmem:[%s2055 + $0x61] sm:$0xff] %vm67, %v4271
    %4288 = vst.msk [vmem:[%s2055 + $0x71] sm:$0xff] %vm67, %v4272
    %4289 = vst.msk [vmem:[%s2055 + $0xa1] sm:$0xff] %vm67, %v4273
    %4290 = vst.msk [vmem:[%s2055 + $0xb1] sm:$0xff] %vm67, %v4274
    %4291 = vst.msk [vmem:[%s2055 + $0xc1] sm:$0xff] %vm67, %v4275
    %4292 = vst.msk [vmem:[%s2055 + $0xd1] sm:$0xff] %vm67, %v4276
    %4293 = vst.msk [vmem:[%s2055 + $0xe1] sm:$0xff] %vm67, %v4277
    %4294 = vst.msk [vmem:[%s2055 + $0xf1] sm:$0xff] %vm67, %v4278
    %4295 = vst.msk [vmem:[%s2055 + $0x101] sm:$0xff] %vm67, %v4279
    %4296 = vst.msk [vmem:[%s2055 + $0x111] sm:$0xff] %vm67, %v4280
    %v4297 = vld [vmem:[#allocation2] sm:$0xff]
    %v4298 = vld [vmem:[#allocation2 + $0x10] sm:$0xff]
    %v4299 = vld [vmem:[#allocation2 + $0x20] sm:$0xff]
    %v4300 = vld [vmem:[#allocation2 + $0x30] sm:$0xff]
    %v4301 = vld [vmem:[#allocation2 + $0x40] sm:$0xff]
    %v4302 = vld [vmem:[#allocation2 + $0x50] sm:$0xff]
    %v4303 = vld [vmem:[#allocation2 + $0x60] sm:$0xff]
    %v4304 = vld [vmem:[#allocation2 + $0x70] sm:$0xff]
    %v4305 = vld [vmem:[#allocation2 + $0xa0] sm:$0xff]
    %v4306 = vld [vmem:[#allocation2 + $0xb0] sm:$0xff]
    %v4307 = vld [vmem:[#allocation2 + $0xc0] sm:$0xff]
    %v4308 = vld [vmem:[#allocation2 + $0xd0] sm:$0xff]
    %v4309 = vld [vmem:[#allocation2 + $0xe0] sm:$0xff]
    %v4310 = vld [vmem:[#allocation2 + $0xf0] sm:$0xff]
    %v4311 = vld [vmem:[#allocation2 + $0x100] sm:$0xff]
    %v4312 = vld [vmem:[#allocation2 + $0x110] sm:$0xff]
    %v4313 = vpack.c.bf16 %v4298, %v4297
    %v4314 = vpack.c.bf16 %v4300, %v4299
    %v4315 = vpack.c.bf16 %v4302, %v4301
    %v4316 = vpack.c.bf16 %v4304, %v4303
    %v4317 = vpack.c.bf16 %v4306, %v4305
    %v4318 = vpack.c.bf16 %v4308, %v4307
    %v4319 = vpack.c.bf16 %v4310, %v4309
    %v4320 = vpack.c.bf16 %v4312, %v4311
    %v4321 = vld [vmem:[%s13] sm:$0xf]
    %v4322 = vld [vmem:[%s13 + $0x4] sm:$0xf]
    %v4323 = vld [vmem:[%s13 + $0x8] sm:$0xf]
    %v4324 = vld [vmem:[%s13 + $0xc] sm:$0xf]
    %v4325 = vld [vmem:[%s13 + $0x10] sm:$0xf]
    %v4326 = vld [vmem:[%s13 + $0x14] sm:$0xf]
    %v4327 = vld [vmem:[%s13 + $0x18] sm:$0xf]
    %v4328 = vld [vmem:[%s13 + $0x1c] sm:$0xf]
    %v4329 = vld [vmem:[#allocation2 + $0x1] sm:$0xff]
    %v4330 = vld [vmem:[#allocation2 + $0x11] sm:$0xff]
    %v4331 = vld [vmem:[#allocation2 + $0x21] sm:$0xff]
    %v4332 = vld [vmem:[#allocation2 + $0x31] sm:$0xff]
    %v4333 = vld [vmem:[#allocation2 + $0x41] sm:$0xff]
    %v4334 = vld [vmem:[#allocation2 + $0x51] sm:$0xff]
    %v4335 = vld [vmem:[#allocation2 + $0x61] sm:$0xff]
    %v4336 = vld [vmem:[#allocation2 + $0x71] sm:$0xff]
    %v4337 = vld [vmem:[#allocation2 + $0xa1] sm:$0xff]
    %v4338 = vld [vmem:[#allocation2 + $0xb1] sm:$0xff]
    %v4339 = vld [vmem:[#allocation2 + $0xc1] sm:$0xff]
    %v4340 = vld [vmem:[#allocation2 + $0xd1] sm:$0xff]
    %v4341 = vld [vmem:[#allocation2 + $0xe1] sm:$0xff]
    %v4342 = vld [vmem:[#allocation2 + $0xf1] sm:$0xff]
    %v4343 = vld [vmem:[#allocation2 + $0x101] sm:$0xff]
    %v4344 = vld [vmem:[#allocation2 + $0x111] sm:$0xff]
    %v4345 = vpack.c.bf16 %v4330, %v4329
    %v4346 = vpack.c.bf16 %v4332, %v4331
    %v4347 = vpack.c.bf16 %v4334, %v4333
    %v4348 = vpack.c.bf16 %v4336, %v4335
    %v4349 = vpack.c.bf16 %v4338, %v4337
    %v4350 = vpack.c.bf16 %v4340, %v4339
    %v4351 = vpack.c.bf16 %v4342, %v4341
    %v4352 = vpack.c.bf16 %v4344, %v4343
    %s4353 = scalar_lea.vmem %s13, 32
    %v4354 = vld [vmem:[%s4353] sm:$0xf]
    %v4355 = vld [vmem:[%s4353 + $0x4] sm:$0xf]
    %v4356 = vld [vmem:[%s4353 + $0x8] sm:$0xf]
    %v4357 = vld [vmem:[%s4353 + $0xc] sm:$0xf]
    %v4358 = vld [vmem:[%s4353 + $0x10] sm:$0xf]
    %v4359 = vld [vmem:[%s4353 + $0x14] sm:$0xf]
    %v4360 = vld [vmem:[%s4353 + $0x18] sm:$0xf]
    %v4361 = vld [vmem:[%s4353 + $0x1c] sm:$0xf]
    %v4370 = vunpack.c.l.b16 %v4354
    %v4371 = vunpack.c.l.b16 %v4355
    %v4372 = vunpack.c.l.b16 %v4356
    %v4373 = vunpack.c.l.b16 %v4357
    %v4374 = vunpack.c.l.b16 %v4358
    %v4375 = vunpack.c.l.b16 %v4359
    %v4376 = vunpack.c.l.b16 %v4360
    %v4377 = vunpack.c.l.b16 %v4361
    %v4378 = vpack.c.b16 %v4371, %v4370
    %v4379 = vpack.c.b16 %v4373, %v4372
    %v4380 = vpack.c.b16 %v4375, %v4374
    %v4381 = vpack.c.b16 %v4377, %v4376
    %v4387 = vsel %vm67, %v4345, 0
    %v4390 = vsel %vm67, %v4346, 0
    %v4393 = vsel %vm67, %v4347, 0
    %v4396 = vsel %vm67, %v4348, 0
    %v4399 = vsel %vm67, %v4349, 0
    %v4402 = vsel %vm67, %v4350, 0
    %v4405 = vsel %vm67, %v4351, 0
    %v4408 = vsel %vm67, %v4352, 0
    %4410 = vmatprep.subr.bf16.mxu0 0
    %4411 = vmatpush1.bf16.msra.mxu0 0
    %4412 = vmatprep.subr.bf16.mxu0 0
    %4413 = vmatpush1.bf16.msra.mxu0 0
    %4414 = vmatprep.subr.bf16.mxu0 0
    %4415 = vmatpush1.bf16.msra.mxu0 0
    %4416 = vmatprep.subr.bf16.mxu0 0
    %4417 = vmatpush1.bf16.msra.mxu0 0
    %4418 = vmatprep.subr.bf16.mxu0 0
    %4419 = vmatpush1.bf16.msra.mxu0 %v4381
    %4420 = vmatprep.subr.bf16.mxu0 0
    %4421 = vmatpush1.bf16.msra.mxu0 %v4380
    %4422 = vmatprep.subr.bf16.mxu0 0
    %4423 = vmatpush1.bf16.msra.mxu0 %v4379
    %4424 = vmatprep.subr.bf16.mxu0 0
    %4425 = vmatpush1.bf16.msra.mxu0 %v4378
    %4426 = vmatprep.subr.bf16.mxu0 0
    %4427 = vmatpush2.bf16.msra.mxu0 0
    %4428 = vmatprep.subr.bf16.mxu0 0
    %4429 = vmatpush2.bf16.msra.mxu0 0
    %4430 = vmatprep.subr.bf16.mxu0 0
    %4431 = vmatpush2.bf16.msra.mxu0 0
    %4432 = vmatprep.subr.bf16.mxu0 0
    %4433 = vmatpush2.bf16.msra.mxu0 0
    %4434 = vmatprep.subr.bf16.mxu0 0
    %4435 = vmatpush2.bf16.msra.mxu0 0
    %4436 = vmatprep.subr.bf16.mxu0 0
    %4437 = vmatpush2.bf16.msra.mxu0 0
    %4438 = vmatprep.subr.bf16.mxu0 0
    %4439 = vmatpush2.bf16.msra.mxu0 0
    %4440 = vmatprep.subr.bf16.mxu0 0
    %4441 = vmatpush2.bf16.msra.mxu0 0
    %4442 = vmatprep.mubr.bf16.mxu0 0
    %4443 = vmatmul.mubr.bf16.gmra.mxu0 %v4387
    %v4444 = vpop.f32.mrf.mxu0
    %v4445 = vadd.f32 0.0, %v4444
    %v4446 = vpop.f32.mrf.mxu0
    %v4447 = vpop.f32.mrf.mxu0
    %v4448 = vadd.f32 0.0, %v4447
    %v4449 = vpop.f32.mrf.mxu0
    %4450 = vmatprep.mubr.bf16.mxu0 0
    %4451 = vmatmul.mubr.bf16.gmra.mxu0 %v4390
    %v4452 = vpop.f32.mrf.mxu0
    %v4453 = vadd.f32 0.0, %v4452
    %v4454 = vpop.f32.mrf.mxu0
    %v4455 = vpop.f32.mrf.mxu0
    %v4456 = vadd.f32 0.0, %v4455
    %v4457 = vpop.f32.mrf.mxu0
    %4458 = vmatprep.mubr.bf16.mxu0 0
    %4459 = vmatmul.mubr.bf16.gmra.mxu0 %v4393
    %v4460 = vpop.f32.mrf.mxu0
    %v4461 = vadd.f32 0.0, %v4460
    %v4462 = vpop.f32.mrf.mxu0
    %v4463 = vpop.f32.mrf.mxu0
    %v4464 = vadd.f32 0.0, %v4463
    %v4465 = vpop.f32.mrf.mxu0
    %4466 = vmatprep.mubr.bf16.mxu0 0
    %4467 = vmatmul.mubr.bf16.gmra.mxu0 %v4396
    %v4468 = vpop.f32.mrf.mxu0
    %v4469 = vadd.f32 0.0, %v4468
    %v4470 = vpop.f32.mrf.mxu0
    %v4471 = vpop.f32.mrf.mxu0
    %v4472 = vadd.f32 0.0, %v4471
    %v4473 = vpop.f32.mrf.mxu0
    %4474 = vmatprep.mubr.bf16.mxu0 0
    %4475 = vmatmul.mubr.bf16.gmra.mxu0 %v4399
    %v4476 = vpop.f32.mrf.mxu0
    %v4477 = vadd.f32 0.0, %v4476
    %v4478 = vpop.f32.mrf.mxu0
    %v4479 = vpop.f32.mrf.mxu0
    %v4480 = vadd.f32 0.0, %v4479
    %v4481 = vpop.f32.mrf.mxu0
    %4482 = vmatprep.mubr.bf16.mxu0 0
    %4483 = vmatmul.mubr.bf16.gmra.mxu0 %v4402
    %v4484 = vpop.f32.mrf.mxu0
    %v4485 = vadd.f32 0.0, %v4484
    %v4486 = vpop.f32.mrf.mxu0
    %v4487 = vpop.f32.mrf.mxu0
    %v4488 = vadd.f32 0.0, %v4487
    %v4489 = vpop.f32.mrf.mxu0
    %4490 = vmatprep.mubr.bf16.mxu0 0
    %4491 = vmatmul.mubr.bf16.gmra.mxu0 %v4405
    %v4492 = vpop.f32.mrf.mxu0
    %v4493 = vadd.f32 0.0, %v4492
    %v4494 = vpop.f32.mrf.mxu0
    %v4495 = vpop.f32.mrf.mxu0
    %v4496 = vadd.f32 0.0, %v4495
    %v4497 = vpop.f32.mrf.mxu0
    %4498 = vmatprep.mubr.bf16.mxu0 0
    %4499 = vmatmul.mubr.bf16.gmra.mxu0 %v4408
    %v4500 = vpop.f32.mrf.mxu0
    %v4501 = vadd.f32 0.0, %v4500
    %v4502 = vpop.f32.mrf.mxu0
    %v4503 = vpop.f32.mrf.mxu0
    %v4504 = vadd.f32 0.0, %v4503
    %v4505 = vpop.f32.mrf.mxu0
    %4506 = vdwg.mxu0
    %v4515 = vunpack.c.l.b16 %v4321
    %v4516 = vunpack.c.l.b16 %v4322
    %v4517 = vunpack.c.l.b16 %v4323
    %v4518 = vunpack.c.l.b16 %v4324
    %v4519 = vunpack.c.l.b16 %v4325
    %v4520 = vunpack.c.l.b16 %v4326
    %v4521 = vunpack.c.l.b16 %v4327
    %v4522 = vunpack.c.l.b16 %v4328
    %v4523 = vpack.c.b16 %v4516, %v4515
    %v4524 = vpack.c.b16 %v4518, %v4517
    %v4525 = vpack.c.b16 %v4520, %v4519
    %v4526 = vpack.c.b16 %v4522, %v4521
    %v4532 = vsel %vm67, %v4313, 0
    %v4535 = vsel %vm67, %v4314, 0
    %v4538 = vsel %vm67, %v4315, 0
    %v4541 = vsel %vm67, %v4316, 0
    %v4544 = vsel %vm67, %v4317, 0
    %v4547 = vsel %vm67, %v4318, 0
    %v4550 = vsel %vm67, %v4319, 0
    %v4553 = vsel %vm67, %v4320, 0
    %4555 = vmatprep.subr.bf16.mxu0 0
    %4556 = vmatpush1.bf16.msra.mxu0 0
    %4557 = vmatprep.subr.bf16.mxu0 0
    %4558 = vmatpush1.bf16.msra.mxu0 0
    %4559 = vmatprep.subr.bf16.mxu0 0
    %4560 = vmatpush1.bf16.msra.mxu0 0
    %4561 = vmatprep.subr.bf16.mxu0 0
    %4562 = vmatpush1.bf16.msra.mxu0 0
    %4563 = vmatprep.subr.bf16.mxu0 0
    %4564 = vmatpush1.bf16.msra.mxu0 %v4526
    %4565 = vmatprep.subr.bf16.mxu0 0
    %4566 = vmatpush1.bf16.msra.mxu0 %v4525
    %4567 = vmatprep.subr.bf16.mxu0 0
    %4568 = vmatpush1.bf16.msra.mxu0 %v4524
    %4569 = vmatprep.subr.bf16.mxu0 0
    %4570 = vmatpush1.bf16.msra.mxu0 %v4523
    %4571 = vmatprep.subr.bf16.mxu0 0
    %4572 = vmatpush2.bf16.msra.mxu0 0
    %4573 = vmatprep.subr.bf16.mxu0 0
    %4574 = vmatpush2.bf16.msra.mxu0 0
    %4575 = vmatprep.subr.bf16.mxu0 0
    %4576 = vmatpush2.bf16.msra.mxu0 0
    %4577 = vmatprep.subr.bf16.mxu0 0
    %4578 = vmatpush2.bf16.msra.mxu0 0
    %4579 = vmatprep.subr.bf16.mxu0 0
    %4580 = vmatpush2.bf16.msra.mxu0 0
    %4581 = vmatprep.subr.bf16.mxu0 0
    %4582 = vmatpush2.bf16.msra.mxu0 0
    %4583 = vmatprep.subr.bf16.mxu0 0
    %4584 = vmatpush2.bf16.msra.mxu0 0
    %4585 = vmatprep.subr.bf16.mxu0 0
    %4586 = vmatpush2.bf16.msra.mxu0 0
    %4587 = vmatprep.mubr.bf16.mxu0 0
    %4588 = vmatmul.mubr.bf16.gmra.mxu0 %v4532
    %v4589 = vpop.f32.mrf.mxu0
    %v4590 = vadd.f32 %v4445, %v4589
    %v4591 = vpop.f32.mrf.mxu0
    %v4592 = vpop.f32.mrf.mxu0
    %v4593 = vadd.f32 %v4448, %v4592
    %v4594 = vpop.f32.mrf.mxu0
    %4595 = vmatprep.mubr.bf16.mxu0 0
    %4596 = vmatmul.mubr.bf16.gmra.mxu0 %v4535
    %v4597 = vpop.f32.mrf.mxu0
    %v4598 = vadd.f32 %v4453, %v4597
    %v4599 = vpop.f32.mrf.mxu0
    %v4600 = vpop.f32.mrf.mxu0
    %v4601 = vadd.f32 %v4456, %v4600
    %v4602 = vpop.f32.mrf.mxu0
    %4603 = vmatprep.mubr.bf16.mxu0 0
    %4604 = vmatmul.mubr.bf16.gmra.mxu0 %v4538
    %v4605 = vpop.f32.mrf.mxu0
    %v4606 = vadd.f32 %v4461, %v4605
    %v4607 = vpop.f32.mrf.mxu0
    %v4608 = vpop.f32.mrf.mxu0
    %v4609 = vadd.f32 %v4464, %v4608
    %v4610 = vpop.f32.mrf.mxu0
    %4611 = vmatprep.mubr.bf16.mxu0 0
    %4612 = vmatmul.mubr.bf16.gmra.mxu0 %v4541
    %v4613 = vpop.f32.mrf.mxu0
    %v4614 = vadd.f32 %v4469, %v4613
    %v4615 = vpop.f32.mrf.mxu0
    %v4616 = vpop.f32.mrf.mxu0
    %v4617 = vadd.f32 %v4472, %v4616
    %v4618 = vpop.f32.mrf.mxu0
    %4619 = vmatprep.mubr.bf16.mxu0 0
    %4620 = vmatmul.mubr.bf16.gmra.mxu0 %v4544
    %v4621 = vpop.f32.mrf.mxu0
    %v4622 = vadd.f32 %v4477, %v4621
    %v4623 = vpop.f32.mrf.mxu0
    %v4624 = vpop.f32.mrf.mxu0
    %v4625 = vadd.f32 %v4480, %v4624
    %v4626 = vpop.f32.mrf.mxu0
    %4627 = vmatprep.mubr.bf16.mxu0 0
    %4628 = vmatmul.mubr.bf16.gmra.mxu0 %v4547
    %v4629 = vpop.f32.mrf.mxu0
    %v4630 = vadd.f32 %v4485, %v4629
    %v4631 = vpop.f32.mrf.mxu0
    %v4632 = vpop.f32.mrf.mxu0
    %v4633 = vadd.f32 %v4488, %v4632
    %v4634 = vpop.f32.mrf.mxu0
    %4635 = vmatprep.mubr.bf16.mxu0 0
    %4636 = vmatmul.mubr.bf16.gmra.mxu0 %v4550
    %v4637 = vpop.f32.mrf.mxu0
    %v4638 = vadd.f32 %v4493, %v4637
    %v4639 = vpop.f32.mrf.mxu0
    %v4640 = vpop.f32.mrf.mxu0
    %v4641 = vadd.f32 %v4496, %v4640
    %v4642 = vpop.f32.mrf.mxu0
    %4643 = vmatprep.mubr.bf16.mxu0 0
    %4644 = vmatmul.mubr.bf16.gmra.mxu0 %v4553
    %v4645 = vpop.f32.mrf.mxu0
    %v4646 = vadd.f32 %v4501, %v4645
    %v4647 = vpop.f32.mrf.mxu0
    %v4648 = vpop.f32.mrf.mxu0
    %v4649 = vadd.f32 %v4504, %v4648
    %v4650 = vpop.f32.mrf.mxu0
    %4651 = vdwg.mxu0
    %v4652 = vld [vmem:[#allocation2 + $0x2] sm:$0xff]
    %v4653 = vld [vmem:[#allocation2 + $0x12] sm:$0xff]
    %v4654 = vld [vmem:[#allocation2 + $0x22] sm:$0xff]
    %v4655 = vld [vmem:[#allocation2 + $0x32] sm:$0xff]
    %v4656 = vld [vmem:[#allocation2 + $0x42] sm:$0xff]
    %v4657 = vld [vmem:[#allocation2 + $0x52] sm:$0xff]
    %v4658 = vld [vmem:[#allocation2 + $0x62] sm:$0xff]
    %v4659 = vld [vmem:[#allocation2 + $0x72] sm:$0xff]
    %v4660 = vld [vmem:[#allocation2 + $0xa2] sm:$0xff]
    %v4661 = vld [vmem:[#allocation2 + $0xb2] sm:$0xff]
    %v4662 = vld [vmem:[#allocation2 + $0xc2] sm:$0xff]
    %v4663 = vld [vmem:[#allocation2 + $0xd2] sm:$0xff]
    %v4664 = vld [vmem:[#allocation2 + $0xe2] sm:$0xff]
    %v4665 = vld [vmem:[#allocation2 + $0xf2] sm:$0xff]
    %v4666 = vld [vmem:[#allocation2 + $0x102] sm:$0xff]
    %v4667 = vld [vmem:[#allocation2 + $0x112] sm:$0xff]
    %v4668 = vpack.c.bf16 %v4653, %v4652
    %v4669 = vpack.c.bf16 %v4655, %v4654
    %v4670 = vpack.c.bf16 %v4657, %v4656
    %v4671 = vpack.c.bf16 %v4659, %v4658
    %v4672 = vpack.c.bf16 %v4661, %v4660
    %v4673 = vpack.c.bf16 %v4663, %v4662
    %v4674 = vpack.c.bf16 %v4665, %v4664
    %v4675 = vpack.c.bf16 %v4667, %v4666
    %s4676 = scalar_lea.vmem %s13, 64
    %v4677 = vld [vmem:[%s4676] sm:$0xf]
    %v4678 = vld [vmem:[%s4676 + $0x4] sm:$0xf]
    %v4679 = vld [vmem:[%s4676 + $0x8] sm:$0xf]
    %v4680 = vld [vmem:[%s4676 + $0xc] sm:$0xf]
    %v4681 = vld [vmem:[%s4676 + $0x10] sm:$0xf]
    %v4682 = vld [vmem:[%s4676 + $0x14] sm:$0xf]
    %v4683 = vld [vmem:[%s4676 + $0x18] sm:$0xf]
    %v4684 = vld [vmem:[%s4676 + $0x1c] sm:$0xf]
    %v4693 = vunpack.c.l.b16 %v4677
    %v4694 = vunpack.c.l.b16 %v4678
    %v4695 = vunpack.c.l.b16 %v4679
    %v4696 = vunpack.c.l.b16 %v4680
    %v4697 = vunpack.c.l.b16 %v4681
    %v4698 = vunpack.c.l.b16 %v4682
    %v4699 = vunpack.c.l.b16 %v4683
    %v4700 = vunpack.c.l.b16 %v4684
    %v4701 = vpack.c.b16 %v4694, %v4693
    %v4702 = vpack.c.b16 %v4696, %v4695
    %v4703 = vpack.c.b16 %v4698, %v4697
    %v4704 = vpack.c.b16 %v4700, %v4699
    %v4710 = vsel %vm67, %v4668, 0
    %v4713 = vsel %vm67, %v4669, 0
    %v4716 = vsel %vm67, %v4670, 0
    %v4719 = vsel %vm67, %v4671, 0
    %v4722 = vsel %vm67, %v4672, 0
    %v4725 = vsel %vm67, %v4673, 0
    %v4728 = vsel %vm67, %v4674, 0
    %v4731 = vsel %vm67, %v4675, 0
    %4733 = vmatprep.subr.bf16.mxu0 0
    %4734 = vmatpush1.bf16.msra.mxu0 0
    %4735 = vmatprep.subr.bf16.mxu0 0
    %4736 = vmatpush1.bf16.msra.mxu0 0
    %4737 = vmatprep.subr.bf16.mxu0 0
    %4738 = vmatpush1.bf16.msra.mxu0 0
    %4739 = vmatprep.subr.bf16.mxu0 0
    %4740 = vmatpush1.bf16.msra.mxu0 0
    %4741 = vmatprep.subr.bf16.mxu0 0
    %4742 = vmatpush1.bf16.msra.mxu0 %v4704
    %4743 = vmatprep.subr.bf16.mxu0 0
    %4744 = vmatpush1.bf16.msra.mxu0 %v4703
    %4745 = vmatprep.subr.bf16.mxu0 0
    %4746 = vmatpush1.bf16.msra.mxu0 %v4702
    %4747 = vmatprep.subr.bf16.mxu0 0
    %4748 = vmatpush1.bf16.msra.mxu0 %v4701
    %4749 = vmatprep.subr.bf16.mxu0 0
    %4750 = vmatpush2.bf16.msra.mxu0 0
    %4751 = vmatprep.subr.bf16.mxu0 0
    %4752 = vmatpush2.bf16.msra.mxu0 0
    %4753 = vmatprep.subr.bf16.mxu0 0
    %4754 = vmatpush2.bf16.msra.mxu0 0
    %4755 = vmatprep.subr.bf16.mxu0 0
    %4756 = vmatpush2.bf16.msra.mxu0 0
    %4757 = vmatprep.subr.bf16.mxu0 0
    %4758 = vmatpush2.bf16.msra.mxu0 0
    %4759 = vmatprep.subr.bf16.mxu0 0
    %4760 = vmatpush2.bf16.msra.mxu0 0
    %4761 = vmatprep.subr.bf16.mxu0 0
    %4762 = vmatpush2.bf16.msra.mxu0 0
    %4763 = vmatprep.subr.bf16.mxu0 0
    %4764 = vmatpush2.bf16.msra.mxu0 0
    %4765 = vmatprep.mubr.bf16.mxu0 0
    %4766 = vmatmul.mubr.bf16.gmra.mxu0 %v4710
    %v4767 = vpop.f32.mrf.mxu0
    %v4768 = vadd.f32 0.0, %v4767
    %v4769 = vpop.f32.mrf.mxu0
    %v4770 = vpop.f32.mrf.mxu0
    %v4771 = vadd.f32 0.0, %v4770
    %v4772 = vpop.f32.mrf.mxu0
    %4773 = vmatprep.mubr.bf16.mxu0 0
    %4774 = vmatmul.mubr.bf16.gmra.mxu0 %v4713
    %v4775 = vpop.f32.mrf.mxu0
    %v4776 = vadd.f32 0.0, %v4775
    %v4777 = vpop.f32.mrf.mxu0
    %v4778 = vpop.f32.mrf.mxu0
    %v4779 = vadd.f32 0.0, %v4778
    %v4780 = vpop.f32.mrf.mxu0
    %4781 = vmatprep.mubr.bf16.mxu0 0
    %4782 = vmatmul.mubr.bf16.gmra.mxu0 %v4716
    %v4783 = vpop.f32.mrf.mxu0
    %v4784 = vadd.f32 0.0, %v4783
    %v4785 = vpop.f32.mrf.mxu0
    %v4786 = vpop.f32.mrf.mxu0
    %v4787 = vadd.f32 0.0, %v4786
    %v4788 = vpop.f32.mrf.mxu0
    %4789 = vmatprep.mubr.bf16.mxu0 0
    %4790 = vmatmul.mubr.bf16.gmra.mxu0 %v4719
    %v4791 = vpop.f32.mrf.mxu0
    %v4792 = vadd.f32 0.0, %v4791
    %v4793 = vpop.f32.mrf.mxu0
    %v4794 = vpop.f32.mrf.mxu0
    %v4795 = vadd.f32 0.0, %v4794
    %v4796 = vpop.f32.mrf.mxu0
    %4797 = vmatprep.mubr.bf16.mxu0 0
    %4798 = vmatmul.mubr.bf16.gmra.mxu0 %v4722
    %v4799 = vpop.f32.mrf.mxu0
    %v4800 = vadd.f32 0.0, %v4799
    %v4801 = vpop.f32.mrf.mxu0
    %v4802 = vpop.f32.mrf.mxu0
    %v4803 = vadd.f32 0.0, %v4802
    %v4804 = vpop.f32.mrf.mxu0
    %4805 = vmatprep.mubr.bf16.mxu0 0
    %4806 = vmatmul.mubr.bf16.gmra.mxu0 %v4725
    %v4807 = vpop.f32.mrf.mxu0
    %v4808 = vadd.f32 0.0, %v4807
    %v4809 = vpop.f32.mrf.mxu0
    %v4810 = vpop.f32.mrf.mxu0
    %v4811 = vadd.f32 0.0, %v4810
    %v4812 = vpop.f32.mrf.mxu0
    %4813 = vmatprep.mubr.bf16.mxu0 0
    %4814 = vmatmul.mubr.bf16.gmra.mxu0 %v4728
    %v4815 = vpop.f32.mrf.mxu0
    %v4816 = vadd.f32 0.0, %v4815
    %v4817 = vpop.f32.mrf.mxu0
    %v4818 = vpop.f32.mrf.mxu0
    %v4819 = vadd.f32 0.0, %v4818
    %v4820 = vpop.f32.mrf.mxu0
    %4821 = vmatprep.mubr.bf16.mxu0 0
    %4822 = vmatmul.mubr.bf16.gmra.mxu0 %v4731
    %v4823 = vpop.f32.mrf.mxu0
    %v4824 = vadd.f32 0.0, %v4823
    %v4825 = vpop.f32.mrf.mxu0
    %v4826 = vpop.f32.mrf.mxu0
    %v4827 = vadd.f32 0.0, %v4826
    %v4828 = vpop.f32.mrf.mxu0
    %4829 = vdwg.mxu0
    %v4830 = vadd.f32 %v4590, %v4768
    %v4831 = vadd.f32 %v4593, %v4771
    %v4832 = vadd.f32 %v4598, %v4776
    %v4833 = vadd.f32 %v4601, %v4779
    %v4834 = vadd.f32 %v4606, %v4784
    %v4835 = vadd.f32 %v4609, %v4787
    %v4836 = vadd.f32 %v4614, %v4792
    %v4837 = vadd.f32 %v4617, %v4795
    %v4838 = vadd.f32 %v4622, %v4800
    %v4839 = vadd.f32 %v4625, %v4803
    %v4840 = vadd.f32 %v4630, %v4808
    %v4841 = vadd.f32 %v4633, %v4811
    %v4842 = vadd.f32 %v4638, %v4816
    %v4843 = vadd.f32 %v4641, %v4819
    %v4844 = vadd.f32 %v4646, %v4824
    %v4845 = vadd.f32 %v4649, %v4827
    %v4846 = vld [vmem:[%s2055] sm:$0xff]
    %v4847 = vld [vmem:[%s2055 + $0x10] sm:$0xff]
    %v4848 = vld [vmem:[%s2055 + $0x20] sm:$0xff]
    %v4849 = vld [vmem:[%s2055 + $0x30] sm:$0xff]
    %v4850 = vld [vmem:[%s2055 + $0x40] sm:$0xff]
    %v4851 = vld [vmem:[%s2055 + $0x50] sm:$0xff]
    %v4852 = vld [vmem:[%s2055 + $0x60] sm:$0xff]
    %v4853 = vld [vmem:[%s2055 + $0x70] sm:$0xff]
    %v4854 = vld [vmem:[%s2055 + $0xa0] sm:$0xff]
    %v4855 = vld [vmem:[%s2055 + $0xb0] sm:$0xff]
    %v4856 = vld [vmem:[%s2055 + $0xc0] sm:$0xff]
    %v4857 = vld [vmem:[%s2055 + $0xd0] sm:$0xff]
    %v4858 = vld [vmem:[%s2055 + $0xe0] sm:$0xff]
    %v4859 = vld [vmem:[%s2055 + $0xf0] sm:$0xff]
    %v4860 = vld [vmem:[%s2055 + $0x100] sm:$0xff]
    %v4861 = vld [vmem:[%s2055 + $0x110] sm:$0xff]
    %v4862 = vpack.c.bf16 %v4847, %v4846
    %v4863 = vpack.c.bf16 %v4849, %v4848
    %v4864 = vpack.c.bf16 %v4851, %v4850
    %v4865 = vpack.c.bf16 %v4853, %v4852
    %v4866 = vpack.c.bf16 %v4855, %v4854
    %v4867 = vpack.c.bf16 %v4857, %v4856
    %v4868 = vpack.c.bf16 %v4859, %v4858
    %v4869 = vpack.c.bf16 %v4861, %v4860
    %s4870 = scalar_lea.vmem %s13, 96
    %v4871 = vld [vmem:[%s4870] sm:$0xf]
    %v4872 = vld [vmem:[%s4870 + $0x4] sm:$0xf]
    %v4873 = vld [vmem:[%s4870 + $0x8] sm:$0xf]
    %v4874 = vld [vmem:[%s4870 + $0xc] sm:$0xf]
    %v4875 = vld [vmem:[%s4870 + $0x10] sm:$0xf]
    %v4876 = vld [vmem:[%s4870 + $0x14] sm:$0xf]
    %v4877 = vld [vmem:[%s4870 + $0x18] sm:$0xf]
    %v4878 = vld [vmem:[%s4870 + $0x1c] sm:$0xf]
    %v4887 = vunpack.c.l.b16 %v4871
    %v4888 = vunpack.c.l.b16 %v4872
    %v4889 = vunpack.c.l.b16 %v4873
    %v4890 = vunpack.c.l.b16 %v4874
    %v4891 = vunpack.c.l.b16 %v4875
    %v4892 = vunpack.c.l.b16 %v4876
    %v4893 = vunpack.c.l.b16 %v4877
    %v4894 = vunpack.c.l.b16 %v4878
    %v4895 = vpack.c.b16 %v4888, %v4887
    %v4896 = vpack.c.b16 %v4890, %v4889
    %v4897 = vpack.c.b16 %v4892, %v4891
    %v4898 = vpack.c.b16 %v4894, %v4893
    %v4904 = vsel %vm67, %v4862, 0
    %v4907 = vsel %vm67, %v4863, 0
    %v4910 = vsel %vm67, %v4864, 0
    %v4913 = vsel %vm67, %v4865, 0
    %v4916 = vsel %vm67, %v4866, 0
    %v4919 = vsel %vm67, %v4867, 0
    %v4922 = vsel %vm67, %v4868, 0
    %v4925 = vsel %vm67, %v4869, 0
    %4927 = vmatprep.subr.bf16.mxu0 0
    %4928 = vmatpush1.bf16.msra.mxu0 0
    %4929 = vmatprep.subr.bf16.mxu0 0
    %4930 = vmatpush1.bf16.msra.mxu0 0
    %4931 = vmatprep.subr.bf16.mxu0 0
    %4932 = vmatpush1.bf16.msra.mxu0 0
    %4933 = vmatprep.subr.bf16.mxu0 0
    %4934 = vmatpush1.bf16.msra.mxu0 0
    %4935 = vmatprep.subr.bf16.mxu0 0
    %4936 = vmatpush1.bf16.msra.mxu0 %v4898
    %4937 = vmatprep.subr.bf16.mxu0 0
    %4938 = vmatpush1.bf16.msra.mxu0 %v4897
    %4939 = vmatprep.subr.bf16.mxu0 0
    %4940 = vmatpush1.bf16.msra.mxu0 %v4896
    %4941 = vmatprep.subr.bf16.mxu0 0
    %4942 = vmatpush1.bf16.msra.mxu0 %v4895
    %4943 = vmatprep.subr.bf16.mxu0 0
    %4944 = vmatpush2.bf16.msra.mxu0 0
    %4945 = vmatprep.subr.bf16.mxu0 0
    %4946 = vmatpush2.bf16.msra.mxu0 0
    %4947 = vmatprep.subr.bf16.mxu0 0
    %4948 = vmatpush2.bf16.msra.mxu0 0
    %4949 = vmatprep.subr.bf16.mxu0 0
    %4950 = vmatpush2.bf16.msra.mxu0 0
    %4951 = vmatprep.subr.bf16.mxu0 0
    %4952 = vmatpush2.bf16.msra.mxu0 0
    %4953 = vmatprep.subr.bf16.mxu0 0
    %4954 = vmatpush2.bf16.msra.mxu0 0
    %4955 = vmatprep.subr.bf16.mxu0 0
    %4956 = vmatpush2.bf16.msra.mxu0 0
    %4957 = vmatprep.subr.bf16.mxu0 0
    %4958 = vmatpush2.bf16.msra.mxu0 0
    %4959 = vmatprep.mubr.bf16.mxu0 0
    %4960 = vmatmul.mubr.bf16.gmra.mxu0 %v4904
    %v4961 = vpop.f32.mrf.mxu0
    %v4962 = vadd.f32 0.0, %v4961
    %v4963 = vpop.f32.mrf.mxu0
    %v4964 = vpop.f32.mrf.mxu0
    %v4965 = vadd.f32 0.0, %v4964
    %v4966 = vpop.f32.mrf.mxu0
    %4967 = vmatprep.mubr.bf16.mxu0 0
    %4968 = vmatmul.mubr.bf16.gmra.mxu0 %v4907
    %v4969 = vpop.f32.mrf.mxu0
    %v4970 = vadd.f32 0.0, %v4969
    %v4971 = vpop.f32.mrf.mxu0
    %v4972 = vpop.f32.mrf.mxu0
    %v4973 = vadd.f32 0.0, %v4972
    %v4974 = vpop.f32.mrf.mxu0
    %4975 = vmatprep.mubr.bf16.mxu0 0
    %4976 = vmatmul.mubr.bf16.gmra.mxu0 %v4910
    %v4977 = vpop.f32.mrf.mxu0
    %v4978 = vadd.f32 0.0, %v4977
    %v4979 = vpop.f32.mrf.mxu0
    %v4980 = vpop.f32.mrf.mxu0
    %v4981 = vadd.f32 0.0, %v4980
    %v4982 = vpop.f32.mrf.mxu0
    %4983 = vmatprep.mubr.bf16.mxu0 0
    %4984 = vmatmul.mubr.bf16.gmra.mxu0 %v4913
    %v4985 = vpop.f32.mrf.mxu0
    %v4986 = vadd.f32 0.0, %v4985
    %v4987 = vpop.f32.mrf.mxu0
    %v4988 = vpop.f32.mrf.mxu0
    %v4989 = vadd.f32 0.0, %v4988
    %v4990 = vpop.f32.mrf.mxu0
    %4991 = vmatprep.mubr.bf16.mxu0 0
    %4992 = vmatmul.mubr.bf16.gmra.mxu0 %v4916
    %v4993 = vpop.f32.mrf.mxu0
    %v4994 = vadd.f32 0.0, %v4993
    %v4995 = vpop.f32.mrf.mxu0
    %v4996 = vpop.f32.mrf.mxu0
    %v4997 = vadd.f32 0.0, %v4996
    %v4998 = vpop.f32.mrf.mxu0
    %4999 = vmatprep.mubr.bf16.mxu0 0
    %5000 = vmatmul.mubr.bf16.gmra.mxu0 %v4919
    %v5001 = vpop.f32.mrf.mxu0
    %v5002 = vadd.f32 0.0, %v5001
    %v5003 = vpop.f32.mrf.mxu0
    %v5004 = vpop.f32.mrf.mxu0
    %v5005 = vadd.f32 0.0, %v5004
    %v5006 = vpop.f32.mrf.mxu0
    %5007 = vmatprep.mubr.bf16.mxu0 0
    %5008 = vmatmul.mubr.bf16.gmra.mxu0 %v4922
    %v5009 = vpop.f32.mrf.mxu0
    %v5010 = vadd.f32 0.0, %v5009
    %v5011 = vpop.f32.mrf.mxu0
    %v5012 = vpop.f32.mrf.mxu0
    %v5013 = vadd.f32 0.0, %v5012
    %v5014 = vpop.f32.mrf.mxu0
    %5015 = vmatprep.mubr.bf16.mxu0 0
    %5016 = vmatmul.mubr.bf16.gmra.mxu0 %v4925
    %v5017 = vpop.f32.mrf.mxu0
    %v5018 = vadd.f32 0.0, %v5017
    %v5019 = vpop.f32.mrf.mxu0
    %v5020 = vpop.f32.mrf.mxu0
    %v5021 = vadd.f32 0.0, %v5020
    %v5022 = vpop.f32.mrf.mxu0
    %5023 = vdwg.mxu0
    %v5024 = vadd.f32 %v4830, %v4962
    %v5025 = vadd.f32 %v4831, %v4965
    %v5026 = vadd.f32 %v4832, %v4970
    %v5027 = vadd.f32 %v4833, %v4973
    %v5028 = vadd.f32 %v4834, %v4978
    %v5029 = vadd.f32 %v4835, %v4981
    %v5030 = vadd.f32 %v4836, %v4986
    %v5031 = vadd.f32 %v4837, %v4989
    %v5032 = vadd.f32 %v4838, %v4994
    %v5033 = vadd.f32 %v4839, %v4997
    %v5034 = vadd.f32 %v4840, %v5002
    %v5035 = vadd.f32 %v4841, %v5005
    %v5036 = vadd.f32 %v4842, %v5010
    %v5037 = vadd.f32 %v4843, %v5013
    %v5038 = vadd.f32 %v4844, %v5018
    %v5039 = vadd.f32 %v4845, %v5021
    %v5040 = vld [vmem:[%s2055 + $0x1] sm:$0xff]
    %v5041 = vld [vmem:[%s2055 + $0x11] sm:$0xff]
    %v5042 = vld [vmem:[%s2055 + $0x21] sm:$0xff]
    %v5043 = vld [vmem:[%s2055 + $0x31] sm:$0xff]
    %v5044 = vld [vmem:[%s2055 + $0x41] sm:$0xff]
    %v5045 = vld [vmem:[%s2055 + $0x51] sm:$0xff]
    %v5046 = vld [vmem:[%s2055 + $0x61] sm:$0xff]
    %v5047 = vld [vmem:[%s2055 + $0x71] sm:$0xff]
    %v5048 = vld [vmem:[%s2055 + $0xa1] sm:$0xff]
    %v5049 = vld [vmem:[%s2055 + $0xb1] sm:$0xff]
    %v5050 = vld [vmem:[%s2055 + $0xc1] sm:$0xff]
    %v5051 = vld [vmem:[%s2055 + $0xd1] sm:$0xff]
    %v5052 = vld [vmem:[%s2055 + $0xe1] sm:$0xff]
    %v5053 = vld [vmem:[%s2055 + $0xf1] sm:$0xff]
    %v5054 = vld [vmem:[%s2055 + $0x101] sm:$0xff]
    %v5055 = vld [vmem:[%s2055 + $0x111] sm:$0xff]
    %v5056 = vpack.c.bf16 %v5041, %v5040
    %v5057 = vpack.c.bf16 %v5043, %v5042
    %v5058 = vpack.c.bf16 %v5045, %v5044
    %v5059 = vpack.c.bf16 %v5047, %v5046
    %v5060 = vpack.c.bf16 %v5049, %v5048
    %v5061 = vpack.c.bf16 %v5051, %v5050
    %v5062 = vpack.c.bf16 %v5053, %v5052
    %v5063 = vpack.c.bf16 %v5055, %v5054
    %s5064 = scalar_lea.vmem %s13, 128
    %v5065 = vld [vmem:[%s5064] sm:$0xf]
    %v5066 = vld [vmem:[%s5064 + $0x4] sm:$0xf]
    %v5067 = vld [vmem:[%s5064 + $0x8] sm:$0xf]
    %v5068 = vld [vmem:[%s5064 + $0xc] sm:$0xf]
    %v5069 = vld [vmem:[%s5064 + $0x10] sm:$0xf]
    %v5070 = vld [vmem:[%s5064 + $0x14] sm:$0xf]
    %v5071 = vld [vmem:[%s5064 + $0x18] sm:$0xf]
    %v5072 = vld [vmem:[%s5064 + $0x1c] sm:$0xf]
    %v5081 = vunpack.c.l.b16 %v5065
    %v5082 = vunpack.c.l.b16 %v5066
    %v5083 = vunpack.c.l.b16 %v5067
    %v5084 = vunpack.c.l.b16 %v5068
    %v5085 = vunpack.c.l.b16 %v5069
    %v5086 = vunpack.c.l.b16 %v5070
    %v5087 = vunpack.c.l.b16 %v5071
    %v5088 = vunpack.c.l.b16 %v5072
    %v5089 = vpack.c.b16 %v5082, %v5081
    %v5090 = vpack.c.b16 %v5084, %v5083
    %v5091 = vpack.c.b16 %v5086, %v5085
    %v5092 = vpack.c.b16 %v5088, %v5087
    %v5098 = vsel %vm67, %v5056, 0
    %v5101 = vsel %vm67, %v5057, 0
    %v5104 = vsel %vm67, %v5058, 0
    %v5107 = vsel %vm67, %v5059, 0
    %v5110 = vsel %vm67, %v5060, 0
    %v5113 = vsel %vm67, %v5061, 0
    %v5116 = vsel %vm67, %v5062, 0
    %v5119 = vsel %vm67, %v5063, 0
    %5121 = vmatprep.subr.bf16.mxu0 0
    %5122 = vmatpush1.bf16.msra.mxu0 0
    %5123 = vmatprep.subr.bf16.mxu0 0
    %5124 = vmatpush1.bf16.msra.mxu0 0
    %5125 = vmatprep.subr.bf16.mxu0 0
    %5126 = vmatpush1.bf16.msra.mxu0 0
    %5127 = vmatprep.subr.bf16.mxu0 0
    %5128 = vmatpush1.bf16.msra.mxu0 0
    %5129 = vmatprep.subr.bf16.mxu0 0
    %5130 = vmatpush1.bf16.msra.mxu0 %v5092
    %5131 = vmatprep.subr.bf16.mxu0 0
    %5132 = vmatpush1.bf16.msra.mxu0 %v5091
    %5133 = vmatprep.subr.bf16.mxu0 0
    %5134 = vmatpush1.bf16.msra.mxu0 %v5090
    %5135 = vmatprep.subr.bf16.mxu0 0
    %5136 = vmatpush1.bf16.msra.mxu0 %v5089
    %5137 = vmatprep.subr.bf16.mxu0 0
    %5138 = vmatpush2.bf16.msra.mxu0 0
    %5139 = vmatprep.subr.bf16.mxu0 0
    %5140 = vmatpush2.bf16.msra.mxu0 0
    %5141 = vmatprep.subr.bf16.mxu0 0
    %5142 = vmatpush2.bf16.msra.mxu0 0
    %5143 = vmatprep.subr.bf16.mxu0 0
    %5144 = vmatpush2.bf16.msra.mxu0 0
    %5145 = vmatprep.subr.bf16.mxu0 0
    %5146 = vmatpush2.bf16.msra.mxu0 0
    %5147 = vmatprep.subr.bf16.mxu0 0
    %5148 = vmatpush2.bf16.msra.mxu0 0
    %5149 = vmatprep.subr.bf16.mxu0 0
    %5150 = vmatpush2.bf16.msra.mxu0 0
    %5151 = vmatprep.subr.bf16.mxu0 0
    %5152 = vmatpush2.bf16.msra.mxu0 0
    %5153 = vmatprep.mubr.bf16.mxu0 0
    %5154 = vmatmul.mubr.bf16.gmra.mxu0 %v5098
    %v5155 = vpop.f32.mrf.mxu0
    %v5156 = vadd.f32 0.0, %v5155
    %v5157 = vpop.f32.mrf.mxu0
    %v5158 = vpop.f32.mrf.mxu0
    %v5159 = vadd.f32 0.0, %v5158
    %v5160 = vpop.f32.mrf.mxu0
    %5161 = vmatprep.mubr.bf16.mxu0 0
    %5162 = vmatmul.mubr.bf16.gmra.mxu0 %v5101
    %v5163 = vpop.f32.mrf.mxu0
    %v5164 = vadd.f32 0.0, %v5163
    %v5165 = vpop.f32.mrf.mxu0
    %v5166 = vpop.f32.mrf.mxu0
    %v5167 = vadd.f32 0.0, %v5166
    %v5168 = vpop.f32.mrf.mxu0
    %5169 = vmatprep.mubr.bf16.mxu0 0
    %5170 = vmatmul.mubr.bf16.gmra.mxu0 %v5104
    %v5171 = vpop.f32.mrf.mxu0
    %v5172 = vadd.f32 0.0, %v5171
    %v5173 = vpop.f32.mrf.mxu0
    %v5174 = vpop.f32.mrf.mxu0
    %v5175 = vadd.f32 0.0, %v5174
    %v5176 = vpop.f32.mrf.mxu0
    %5177 = vmatprep.mubr.bf16.mxu0 0
    %5178 = vmatmul.mubr.bf16.gmra.mxu0 %v5107
    %v5179 = vpop.f32.mrf.mxu0
    %v5180 = vadd.f32 0.0, %v5179
    %v5181 = vpop.f32.mrf.mxu0
    %v5182 = vpop.f32.mrf.mxu0
    %v5183 = vadd.f32 0.0, %v5182
    %v5184 = vpop.f32.mrf.mxu0
    %5185 = vmatprep.mubr.bf16.mxu0 0
    %5186 = vmatmul.mubr.bf16.gmra.mxu0 %v5110
    %v5187 = vpop.f32.mrf.mxu0
    %v5188 = vadd.f32 0.0, %v5187
    %v5189 = vpop.f32.mrf.mxu0
    %v5190 = vpop.f32.mrf.mxu0
    %v5191 = vadd.f32 0.0, %v5190
    %v5192 = vpop.f32.mrf.mxu0
    %5193 = vmatprep.mubr.bf16.mxu0 0
    %5194 = vmatmul.mubr.bf16.gmra.mxu0 %v5113
    %v5195 = vpop.f32.mrf.mxu0
    %v5196 = vadd.f32 0.0, %v5195
    %v5197 = vpop.f32.mrf.mxu0
    %v5198 = vpop.f32.mrf.mxu0
    %v5199 = vadd.f32 0.0, %v5198
    %v5200 = vpop.f32.mrf.mxu0
    %5201 = vmatprep.mubr.bf16.mxu0 0
    %5202 = vmatmul.mubr.bf16.gmra.mxu0 %v5116
    %v5203 = vpop.f32.mrf.mxu0
    %v5204 = vadd.f32 0.0, %v5203
    %v5205 = vpop.f32.mrf.mxu0
    %v5206 = vpop.f32.mrf.mxu0
    %v5207 = vadd.f32 0.0, %v5206
    %v5208 = vpop.f32.mrf.mxu0
    %5209 = vmatprep.mubr.bf16.mxu0 0
    %5210 = vmatmul.mubr.bf16.gmra.mxu0 %v5119
    %v5211 = vpop.f32.mrf.mxu0
    %v5212 = vadd.f32 0.0, %v5211
    %v5213 = vpop.f32.mrf.mxu0
    %v5214 = vpop.f32.mrf.mxu0
    %v5215 = vadd.f32 0.0, %v5214
    %v5216 = vpop.f32.mrf.mxu0
    %5217 = vdwg.mxu0
    %v5218 = vadd.f32 %v5024, %v5156
    %v5219 = vadd.f32 %v5025, %v5159
    %v5220 = vadd.f32 %v5026, %v5164
    %v5221 = vadd.f32 %v5027, %v5167
    %v5222 = vadd.f32 %v5028, %v5172
    %v5223 = vadd.f32 %v5029, %v5175
    %v5224 = vadd.f32 %v5030, %v5180
    %v5225 = vadd.f32 %v5031, %v5183
    %v5226 = vadd.f32 %v5032, %v5188
    %v5227 = vadd.f32 %v5033, %v5191
    %v5228 = vadd.f32 %v5034, %v5196
    %v5229 = vadd.f32 %v5035, %v5199
    %v5230 = vadd.f32 %v5036, %v5204
    %v5231 = vadd.f32 %v5037, %v5207
    %v5232 = vadd.f32 %v5038, %v5212
    %v5233 = vadd.f32 %v5039, %v5215
    %v5234 = vld [vmem:[%s2055 + $0x2] sm:$0xff]
    %v5235 = vld [vmem:[%s2055 + $0x12] sm:$0xff]
    %v5236 = vld [vmem:[%s2055 + $0x22] sm:$0xff]
    %v5237 = vld [vmem:[%s2055 + $0x32] sm:$0xff]
    %v5238 = vld [vmem:[%s2055 + $0x42] sm:$0xff]
    %v5239 = vld [vmem:[%s2055 + $0x52] sm:$0xff]
    %v5240 = vld [vmem:[%s2055 + $0x62] sm:$0xff]
    %v5241 = vld [vmem:[%s2055 + $0x72] sm:$0xff]
    %v5242 = vld [vmem:[%s2055 + $0xa2] sm:$0xff]
    %v5243 = vld [vmem:[%s2055 + $0xb2] sm:$0xff]
    %v5244 = vld [vmem:[%s2055 + $0xc2] sm:$0xff]
    %v5245 = vld [vmem:[%s2055 + $0xd2] sm:$0xff]
    %v5246 = vld [vmem:[%s2055 + $0xe2] sm:$0xff]
    %v5247 = vld [vmem:[%s2055 + $0xf2] sm:$0xff]
    %v5248 = vld [vmem:[%s2055 + $0x102] sm:$0xff]
    %v5249 = vld [vmem:[%s2055 + $0x112] sm:$0xff]
    %v5250 = vpack.c.bf16 %v5235, %v5234
    %v5251 = vpack.c.bf16 %v5237, %v5236
    %v5252 = vpack.c.bf16 %v5239, %v5238
    %v5253 = vpack.c.bf16 %v5241, %v5240
    %v5254 = vpack.c.bf16 %v5243, %v5242
    %v5255 = vpack.c.bf16 %v5245, %v5244
    %v5256 = vpack.c.bf16 %v5247, %v5246
    %v5257 = vpack.c.bf16 %v5249, %v5248
    %s5258 = scalar_lea.vmem %s13, 160
    %v5259 = vld [vmem:[%s5258] sm:$0xf]
    %v5260 = vld [vmem:[%s5258 + $0x4] sm:$0xf]
    %v5261 = vld [vmem:[%s5258 + $0x8] sm:$0xf]
    %v5262 = vld [vmem:[%s5258 + $0xc] sm:$0xf]
    %v5263 = vld [vmem:[%s5258 + $0x10] sm:$0xf]
    %v5264 = vld [vmem:[%s5258 + $0x14] sm:$0xf]
    %v5265 = vld [vmem:[%s5258 + $0x18] sm:$0xf]
    %v5266 = vld [vmem:[%s5258 + $0x1c] sm:$0xf]
    %v5275 = vunpack.c.l.b16 %v5259
    %v5276 = vunpack.c.l.b16 %v5260
    %v5277 = vunpack.c.l.b16 %v5261
    %v5278 = vunpack.c.l.b16 %v5262
    %v5279 = vunpack.c.l.b16 %v5263
    %v5280 = vunpack.c.l.b16 %v5264
    %v5281 = vunpack.c.l.b16 %v5265
    %v5282 = vunpack.c.l.b16 %v5266
    %v5283 = vpack.c.b16 %v5276, %v5275
    %v5284 = vpack.c.b16 %v5278, %v5277
    %v5285 = vpack.c.b16 %v5280, %v5279
    %v5286 = vpack.c.b16 %v5282, %v5281
    %v5292 = vsel %vm67, %v5250, 0
    %v5295 = vsel %vm67, %v5251, 0
    %v5298 = vsel %vm67, %v5252, 0
    %v5301 = vsel %vm67, %v5253, 0
    %v5304 = vsel %vm67, %v5254, 0
    %v5307 = vsel %vm67, %v5255, 0
    %v5310 = vsel %vm67, %v5256, 0
    %v5313 = vsel %vm67, %v5257, 0
    %5315 = vmatprep.subr.bf16.mxu0 0
    %5316 = vmatpush1.bf16.msra.mxu0 0
    %5317 = vmatprep.subr.bf16.mxu0 0
    %5318 = vmatpush1.bf16.msra.mxu0 0
    %5319 = vmatprep.subr.bf16.mxu0 0
    %5320 = vmatpush1.bf16.msra.mxu0 0
    %5321 = vmatprep.subr.bf16.mxu0 0
    %5322 = vmatpush1.bf16.msra.mxu0 0
    %5323 = vmatprep.subr.bf16.mxu0 0
    %5324 = vmatpush1.bf16.msra.mxu0 %v5286
    %5325 = vmatprep.subr.bf16.mxu0 0
    %5326 = vmatpush1.bf16.msra.mxu0 %v5285
    %5327 = vmatprep.subr.bf16.mxu0 0
    %5328 = vmatpush1.bf16.msra.mxu0 %v5284
    %5329 = vmatprep.subr.bf16.mxu0 0
    %5330 = vmatpush1.bf16.msra.mxu0 %v5283
    %5331 = vmatprep.subr.bf16.mxu0 0
    %5332 = vmatpush2.bf16.msra.mxu0 0
    %5333 = vmatprep.subr.bf16.mxu0 0
    %5334 = vmatpush2.bf16.msra.mxu0 0
    %5335 = vmatprep.subr.bf16.mxu0 0
    %5336 = vmatpush2.bf16.msra.mxu0 0
    %5337 = vmatprep.subr.bf16.mxu0 0
    %5338 = vmatpush2.bf16.msra.mxu0 0
    %5339 = vmatprep.subr.bf16.mxu0 0
    %5340 = vmatpush2.bf16.msra.mxu0 0
    %5341 = vmatprep.subr.bf16.mxu0 0
    %5342 = vmatpush2.bf16.msra.mxu0 0
    %5343 = vmatprep.subr.bf16.mxu0 0
    %5344 = vmatpush2.bf16.msra.mxu0 0
    %5345 = vmatprep.subr.bf16.mxu0 0
    %5346 = vmatpush2.bf16.msra.mxu0 0
    %5347 = vmatprep.mubr.bf16.mxu0 0
    %5348 = vmatmul.mubr.bf16.gmra.mxu0 %v5292
    %v5349 = vpop.f32.mrf.mxu0
    %v5350 = vadd.f32 0.0, %v5349
    %v5351 = vpop.f32.mrf.mxu0
    %v5352 = vpop.f32.mrf.mxu0
    %v5353 = vadd.f32 0.0, %v5352
    %v5354 = vpop.f32.mrf.mxu0
    %5355 = vmatprep.mubr.bf16.mxu0 0
    %5356 = vmatmul.mubr.bf16.gmra.mxu0 %v5295
    %v5357 = vpop.f32.mrf.mxu0
    %v5358 = vadd.f32 0.0, %v5357
    %v5359 = vpop.f32.mrf.mxu0
    %v5360 = vpop.f32.mrf.mxu0
    %v5361 = vadd.f32 0.0, %v5360
    %v5362 = vpop.f32.mrf.mxu0
    %5363 = vmatprep.mubr.bf16.mxu0 0
    %5364 = vmatmul.mubr.bf16.gmra.mxu0 %v5298
    %v5365 = vpop.f32.mrf.mxu0
    %v5366 = vadd.f32 0.0, %v5365
    %v5367 = vpop.f32.mrf.mxu0
    %v5368 = vpop.f32.mrf.mxu0
    %v5369 = vadd.f32 0.0, %v5368
    %v5370 = vpop.f32.mrf.mxu0
    %5371 = vmatprep.mubr.bf16.mxu0 0
    %5372 = vmatmul.mubr.bf16.gmra.mxu0 %v5301
    %v5373 = vpop.f32.mrf.mxu0
    %v5374 = vadd.f32 0.0, %v5373
    %v5375 = vpop.f32.mrf.mxu0
    %v5376 = vpop.f32.mrf.mxu0
    %v5377 = vadd.f32 0.0, %v5376
    %v5378 = vpop.f32.mrf.mxu0
    %5379 = vmatprep.mubr.bf16.mxu0 0
    %5380 = vmatmul.mubr.bf16.gmra.mxu0 %v5304
    %v5381 = vpop.f32.mrf.mxu0
    %v5382 = vadd.f32 0.0, %v5381
    %v5383 = vpop.f32.mrf.mxu0
    %v5384 = vpop.f32.mrf.mxu0
    %v5385 = vadd.f32 0.0, %v5384
    %v5386 = vpop.f32.mrf.mxu0
    %5387 = vmatprep.mubr.bf16.mxu0 0
    %5388 = vmatmul.mubr.bf16.gmra.mxu0 %v5307
    %v5389 = vpop.f32.mrf.mxu0
    %v5390 = vadd.f32 0.0, %v5389
    %v5391 = vpop.f32.mrf.mxu0
    %v5392 = vpop.f32.mrf.mxu0
    %v5393 = vadd.f32 0.0, %v5392
    %v5394 = vpop.f32.mrf.mxu0
    %5395 = vmatprep.mubr.bf16.mxu0 0
    %5396 = vmatmul.mubr.bf16.gmra.mxu0 %v5310
    %v5397 = vpop.f32.mrf.mxu0
    %v5398 = vadd.f32 0.0, %v5397
    %v5399 = vpop.f32.mrf.mxu0
    %v5400 = vpop.f32.mrf.mxu0
    %v5401 = vadd.f32 0.0, %v5400
    %v5402 = vpop.f32.mrf.mxu0
    %5403 = vmatprep.mubr.bf16.mxu0 0
    %5404 = vmatmul.mubr.bf16.gmra.mxu0 %v5313
    %v5405 = vpop.f32.mrf.mxu0
    %v5406 = vadd.f32 0.0, %v5405
    %v5407 = vpop.f32.mrf.mxu0
    %v5408 = vpop.f32.mrf.mxu0
    %v5409 = vadd.f32 0.0, %v5408
    %v5410 = vpop.f32.mrf.mxu0
    %5411 = vdwg.mxu0
    %v5412 = vadd.f32 %v5218, %v5350
    %v5413 = vadd.f32 %v5219, %v5353
    %v5414 = vadd.f32 %v5220, %v5358
    %v5415 = vadd.f32 %v5221, %v5361
    %v5416 = vadd.f32 %v5222, %v5366
    %v5417 = vadd.f32 %v5223, %v5369
    %v5418 = vadd.f32 %v5224, %v5374
    %v5419 = vadd.f32 %v5225, %v5377
    %v5420 = vadd.f32 %v5226, %v5382
    %v5421 = vadd.f32 %v5227, %v5385
    %v5422 = vadd.f32 %v5228, %v5390
    %v5423 = vadd.f32 %v5229, %v5393
    %v5424 = vadd.f32 %v5230, %v5398
    %v5425 = vadd.f32 %v5231, %v5401
    %v5426 = vadd.f32 %v5232, %v5406
    %v5427 = vadd.f32 %v5233, %v5409
    %v5428 = vld [vmem:[%s3203] sm:$0xff]
    %v5429 = vld [vmem:[%s3203 + $0x10] sm:$0xff]
    %v5430 = vld [vmem:[%s3203 + $0x20] sm:$0xff]
    %v5431 = vld [vmem:[%s3203 + $0x30] sm:$0xff]
    %v5432 = vld [vmem:[%s3203 + $0x40] sm:$0xff]
    %v5433 = vld [vmem:[%s3203 + $0x50] sm:$0xff]
    %v5434 = vld [vmem:[%s3203 + $0x60] sm:$0xff]
    %v5435 = vld [vmem:[%s3203 + $0x70] sm:$0xff]
    %v5436 = vld [vmem:[%s3203 + $0xa0] sm:$0xff]
    %v5437 = vld [vmem:[%s3203 + $0xb0] sm:$0xff]
    %v5438 = vld [vmem:[%s3203 + $0xc0] sm:$0xff]
    %v5439 = vld [vmem:[%s3203 + $0xd0] sm:$0xff]
    %v5440 = vld [vmem:[%s3203 + $0xe0] sm:$0xff]
    %v5441 = vld [vmem:[%s3203 + $0xf0] sm:$0xff]
    %v5442 = vld [vmem:[%s3203 + $0x100] sm:$0xff]
    %v5443 = vld [vmem:[%s3203 + $0x110] sm:$0xff]
    %v5444 = vpack.c.bf16 %v5429, %v5428
    %v5445 = vpack.c.bf16 %v5431, %v5430
    %v5446 = vpack.c.bf16 %v5433, %v5432
    %v5447 = vpack.c.bf16 %v5435, %v5434
    %v5448 = vpack.c.bf16 %v5437, %v5436
    %v5449 = vpack.c.bf16 %v5439, %v5438
    %v5450 = vpack.c.bf16 %v5441, %v5440
    %v5451 = vpack.c.bf16 %v5443, %v5442
    %s5452 = scalar_lea.vmem %s13, 192
    %v5453 = vld [vmem:[%s5452] sm:$0xf]
    %v5454 = vld [vmem:[%s5452 + $0x4] sm:$0xf]
    %v5455 = vld [vmem:[%s5452 + $0x8] sm:$0xf]
    %v5456 = vld [vmem:[%s5452 + $0xc] sm:$0xf]
    %v5457 = vld [vmem:[%s5452 + $0x10] sm:$0xf]
    %v5458 = vld [vmem:[%s5452 + $0x14] sm:$0xf]
    %v5459 = vld [vmem:[%s5452 + $0x18] sm:$0xf]
    %v5460 = vld [vmem:[%s5452 + $0x1c] sm:$0xf]
    %v5469 = vunpack.c.l.b16 %v5453
    %v5470 = vunpack.c.l.b16 %v5454
    %v5471 = vunpack.c.l.b16 %v5455
    %v5472 = vunpack.c.l.b16 %v5456
    %v5473 = vunpack.c.l.b16 %v5457
    %v5474 = vunpack.c.l.b16 %v5458
    %v5475 = vunpack.c.l.b16 %v5459
    %v5476 = vunpack.c.l.b16 %v5460
    %v5477 = vpack.c.b16 %v5470, %v5469
    %v5478 = vpack.c.b16 %v5472, %v5471
    %v5479 = vpack.c.b16 %v5474, %v5473
    %v5480 = vpack.c.b16 %v5476, %v5475
    %v5486 = vsel %vm67, %v5444, 0
    %v5489 = vsel %vm67, %v5445, 0
    %v5492 = vsel %vm67, %v5446, 0
    %v5495 = vsel %vm67, %v5447, 0
    %v5498 = vsel %vm67, %v5448, 0
    %v5501 = vsel %vm67, %v5449, 0
    %v5504 = vsel %vm67, %v5450, 0
    %v5507 = vsel %vm67, %v5451, 0
    %5509 = vmatprep.subr.bf16.mxu0 0
    %5510 = vmatpush1.bf16.msra.mxu0 0
    %5511 = vmatprep.subr.bf16.mxu0 0
    %5512 = vmatpush1.bf16.msra.mxu0 0
    %5513 = vmatprep.subr.bf16.mxu0 0
    %5514 = vmatpush1.bf16.msra.mxu0 0
    %5515 = vmatprep.subr.bf16.mxu0 0
    %5516 = vmatpush1.bf16.msra.mxu0 0
    %5517 = vmatprep.subr.bf16.mxu0 0
    %5518 = vmatpush1.bf16.msra.mxu0 %v5480
    %5519 = vmatprep.subr.bf16.mxu0 0
    %5520 = vmatpush1.bf16.msra.mxu0 %v5479
    %5521 = vmatprep.subr.bf16.mxu0 0
    %5522 = vmatpush1.bf16.msra.mxu0 %v5478
    %5523 = vmatprep.subr.bf16.mxu0 0
    %5524 = vmatpush1.bf16.msra.mxu0 %v5477
    %5525 = vmatprep.subr.bf16.mxu0 0
    %5526 = vmatpush2.bf16.msra.mxu0 0
    %5527 = vmatprep.subr.bf16.mxu0 0
    %5528 = vmatpush2.bf16.msra.mxu0 0
    %5529 = vmatprep.subr.bf16.mxu0 0
    %5530 = vmatpush2.bf16.msra.mxu0 0
    %5531 = vmatprep.subr.bf16.mxu0 0
    %5532 = vmatpush2.bf16.msra.mxu0 0
    %5533 = vmatprep.subr.bf16.mxu0 0
    %5534 = vmatpush2.bf16.msra.mxu0 0
    %5535 = vmatprep.subr.bf16.mxu0 0
    %5536 = vmatpush2.bf16.msra.mxu0 0
    %5537 = vmatprep.subr.bf16.mxu0 0
    %5538 = vmatpush2.bf16.msra.mxu0 0
    %5539 = vmatprep.subr.bf16.mxu0 0
    %5540 = vmatpush2.bf16.msra.mxu0 0
    %5541 = vmatprep.mubr.bf16.mxu0 0
    %5542 = vmatmul.mubr.bf16.gmra.mxu0 %v5486
    %v5543 = vpop.f32.mrf.mxu0
    %v5544 = vadd.f32 0.0, %v5543
    %v5545 = vpop.f32.mrf.mxu0
    %v5546 = vpop.f32.mrf.mxu0
    %v5547 = vadd.f32 0.0, %v5546
    %v5548 = vpop.f32.mrf.mxu0
    %5549 = vmatprep.mubr.bf16.mxu0 0
    %5550 = vmatmul.mubr.bf16.gmra.mxu0 %v5489
    %v5551 = vpop.f32.mrf.mxu0
    %v5552 = vadd.f32 0.0, %v5551
    %v5553 = vpop.f32.mrf.mxu0
    %v5554 = vpop.f32.mrf.mxu0
    %v5555 = vadd.f32 0.0, %v5554
    %v5556 = vpop.f32.mrf.mxu0
    %5557 = vmatprep.mubr.bf16.mxu0 0
    %5558 = vmatmul.mubr.bf16.gmra.mxu0 %v5492
    %v5559 = vpop.f32.mrf.mxu0
    %v5560 = vadd.f32 0.0, %v5559
    %v5561 = vpop.f32.mrf.mxu0
    %v5562 = vpop.f32.mrf.mxu0
    %v5563 = vadd.f32 0.0, %v5562
    %v5564 = vpop.f32.mrf.mxu0
    %5565 = vmatprep.mubr.bf16.mxu0 0
    %5566 = vmatmul.mubr.bf16.gmra.mxu0 %v5495
    %v5567 = vpop.f32.mrf.mxu0
    %v5568 = vadd.f32 0.0, %v5567
    %v5569 = vpop.f32.mrf.mxu0
    %v5570 = vpop.f32.mrf.mxu0
    %v5571 = vadd.f32 0.0, %v5570
    %v5572 = vpop.f32.mrf.mxu0
    %5573 = vmatprep.mubr.bf16.mxu0 0
    %5574 = vmatmul.mubr.bf16.gmra.mxu0 %v5498
    %v5575 = vpop.f32.mrf.mxu0
    %v5576 = vadd.f32 0.0, %v5575
    %v5577 = vpop.f32.mrf.mxu0
    %v5578 = vpop.f32.mrf.mxu0
    %v5579 = vadd.f32 0.0, %v5578
    %v5580 = vpop.f32.mrf.mxu0
    %5581 = vmatprep.mubr.bf16.mxu0 0
    %5582 = vmatmul.mubr.bf16.gmra.mxu0 %v5501
    %v5583 = vpop.f32.mrf.mxu0
    %v5584 = vadd.f32 0.0, %v5583
    %v5585 = vpop.f32.mrf.mxu0
    %v5586 = vpop.f32.mrf.mxu0
    %v5587 = vadd.f32 0.0, %v5586
    %v5588 = vpop.f32.mrf.mxu0
    %5589 = vmatprep.mubr.bf16.mxu0 0
    %5590 = vmatmul.mubr.bf16.gmra.mxu0 %v5504
    %v5591 = vpop.f32.mrf.mxu0
    %v5592 = vadd.f32 0.0, %v5591
    %v5593 = vpop.f32.mrf.mxu0
    %v5594 = vpop.f32.mrf.mxu0
    %v5595 = vadd.f32 0.0, %v5594
    %v5596 = vpop.f32.mrf.mxu0
    %5597 = vmatprep.mubr.bf16.mxu0 0
    %5598 = vmatmul.mubr.bf16.gmra.mxu0 %v5507
    %v5599 = vpop.f32.mrf.mxu0
    %v5600 = vadd.f32 0.0, %v5599
    %v5601 = vpop.f32.mrf.mxu0
    %v5602 = vpop.f32.mrf.mxu0
    %v5603 = vadd.f32 0.0, %v5602
    %v5604 = vpop.f32.mrf.mxu0
    %5605 = vdwg.mxu0
    %v5606 = vadd.f32 %v5412, %v5544
    %v5607 = vadd.f32 %v5413, %v5547
    %v5608 = vadd.f32 %v5414, %v5552
    %v5609 = vadd.f32 %v5415, %v5555
    %v5610 = vadd.f32 %v5416, %v5560
    %v5611 = vadd.f32 %v5417, %v5563
    %v5612 = vadd.f32 %v5418, %v5568
    %v5613 = vadd.f32 %v5419, %v5571
    %v5614 = vadd.f32 %v5420, %v5576
    %v5615 = vadd.f32 %v5421, %v5579
    %v5616 = vadd.f32 %v5422, %v5584
    %v5617 = vadd.f32 %v5423, %v5587
    %v5618 = vadd.f32 %v5424, %v5592
    %v5619 = vadd.f32 %v5425, %v5595
    %v5620 = vadd.f32 %v5426, %v5600
    %v5621 = vadd.f32 %v5427, %v5603
    %v5622 = vld [vmem:[%s3203 + $0x1] sm:$0xff]
    %v5623 = vld [vmem:[%s3203 + $0x11] sm:$0xff]
    %v5624 = vld [vmem:[%s3203 + $0x21] sm:$0xff]
    %v5625 = vld [vmem:[%s3203 + $0x31] sm:$0xff]
    %v5626 = vld [vmem:[%s3203 + $0x41] sm:$0xff]
    %v5627 = vld [vmem:[%s3203 + $0x51] sm:$0xff]
    %v5628 = vld [vmem:[%s3203 + $0x61] sm:$0xff]
    %v5629 = vld [vmem:[%s3203 + $0x71] sm:$0xff]
    %v5630 = vld [vmem:[%s3203 + $0xa1] sm:$0xff]
    %v5631 = vld [vmem:[%s3203 + $0xb1] sm:$0xff]
    %v5632 = vld [vmem:[%s3203 + $0xc1] sm:$0xff]
    %v5633 = vld [vmem:[%s3203 + $0xd1] sm:$0xff]
    %v5634 = vld [vmem:[%s3203 + $0xe1] sm:$0xff]
    %v5635 = vld [vmem:[%s3203 + $0xf1] sm:$0xff]
    %v5636 = vld [vmem:[%s3203 + $0x101] sm:$0xff]
    %v5637 = vld [vmem:[%s3203 + $0x111] sm:$0xff]
    %v5638 = vpack.c.bf16 %v5623, %v5622
    %v5639 = vpack.c.bf16 %v5625, %v5624
    %v5640 = vpack.c.bf16 %v5627, %v5626
    %v5641 = vpack.c.bf16 %v5629, %v5628
    %v5642 = vpack.c.bf16 %v5631, %v5630
    %v5643 = vpack.c.bf16 %v5633, %v5632
    %v5644 = vpack.c.bf16 %v5635, %v5634
    %v5645 = vpack.c.bf16 %v5637, %v5636
    %s5646 = scalar_lea.vmem %s13, 224
    %v5647 = vld [vmem:[%s5646] sm:$0xf]
    %v5648 = vld [vmem:[%s5646 + $0x4] sm:$0xf]
    %v5649 = vld [vmem:[%s5646 + $0x8] sm:$0xf]
    %v5650 = vld [vmem:[%s5646 + $0xc] sm:$0xf]
    %v5651 = vld [vmem:[%s5646 + $0x10] sm:$0xf]
    %v5652 = vld [vmem:[%s5646 + $0x14] sm:$0xf]
    %v5653 = vld [vmem:[%s5646 + $0x18] sm:$0xf]
    %v5654 = vld [vmem:[%s5646 + $0x1c] sm:$0xf]
    %v5663 = vunpack.c.l.b16 %v5647
    %v5664 = vunpack.c.l.b16 %v5648
    %v5665 = vunpack.c.l.b16 %v5649
    %v5666 = vunpack.c.l.b16 %v5650
    %v5667 = vunpack.c.l.b16 %v5651
    %v5668 = vunpack.c.l.b16 %v5652
    %v5669 = vunpack.c.l.b16 %v5653
    %v5670 = vunpack.c.l.b16 %v5654
    %v5671 = vpack.c.b16 %v5664, %v5663
    %v5672 = vpack.c.b16 %v5666, %v5665
    %v5673 = vpack.c.b16 %v5668, %v5667
    %v5674 = vpack.c.b16 %v5670, %v5669
    %v5680 = vsel %vm67, %v5638, 0
    %v5683 = vsel %vm67, %v5639, 0
    %v5686 = vsel %vm67, %v5640, 0
    %v5689 = vsel %vm67, %v5641, 0
    %v5692 = vsel %vm67, %v5642, 0
    %v5695 = vsel %vm67, %v5643, 0
    %v5698 = vsel %vm67, %v5644, 0
    %v5701 = vsel %vm67, %v5645, 0
    %5703 = vmatprep.subr.bf16.mxu0 0
    %5704 = vmatpush1.bf16.msra.mxu0 0
    %5705 = vmatprep.subr.bf16.mxu0 0
    %5706 = vmatpush1.bf16.msra.mxu0 0
    %5707 = vmatprep.subr.bf16.mxu0 0
    %5708 = vmatpush1.bf16.msra.mxu0 0
    %5709 = vmatprep.subr.bf16.mxu0 0
    %5710 = vmatpush1.bf16.msra.mxu0 0
    %5711 = vmatprep.subr.bf16.mxu0 0
    %5712 = vmatpush1.bf16.msra.mxu0 %v5674
    %5713 = vmatprep.subr.bf16.mxu0 0
    %5714 = vmatpush1.bf16.msra.mxu0 %v5673
    %5715 = vmatprep.subr.bf16.mxu0 0
    %5716 = vmatpush1.bf16.msra.mxu0 %v5672
    %5717 = vmatprep.subr.bf16.mxu0 0
    %5718 = vmatpush1.bf16.msra.mxu0 %v5671
    %5719 = vmatprep.subr.bf16.mxu0 0
    %5720 = vmatpush2.bf16.msra.mxu0 0
    %5721 = vmatprep.subr.bf16.mxu0 0
    %5722 = vmatpush2.bf16.msra.mxu0 0
    %5723 = vmatprep.subr.bf16.mxu0 0
    %5724 = vmatpush2.bf16.msra.mxu0 0
    %5725 = vmatprep.subr.bf16.mxu0 0
    %5726 = vmatpush2.bf16.msra.mxu0 0
    %5727 = vmatprep.subr.bf16.mxu0 0
    %5728 = vmatpush2.bf16.msra.mxu0 0
    %5729 = vmatprep.subr.bf16.mxu0 0
    %5730 = vmatpush2.bf16.msra.mxu0 0
    %5731 = vmatprep.subr.bf16.mxu0 0
    %5732 = vmatpush2.bf16.msra.mxu0 0
    %5733 = vmatprep.subr.bf16.mxu0 0
    %5734 = vmatpush2.bf16.msra.mxu0 0
    %5735 = vmatprep.mubr.bf16.mxu0 0
    %5736 = vmatmul.mubr.bf16.gmra.mxu0 %v5680
    %v5737 = vpop.f32.mrf.mxu0
    %v5738 = vadd.f32 0.0, %v5737
    %v5739 = vpop.f32.mrf.mxu0
    %v5740 = vpop.f32.mrf.mxu0
    %v5741 = vadd.f32 0.0, %v5740
    %v5742 = vpop.f32.mrf.mxu0
    %5743 = vmatprep.mubr.bf16.mxu0 0
    %5744 = vmatmul.mubr.bf16.gmra.mxu0 %v5683
    %v5745 = vpop.f32.mrf.mxu0
    %v5746 = vadd.f32 0.0, %v5745
    %v5747 = vpop.f32.mrf.mxu0
    %v5748 = vpop.f32.mrf.mxu0
    %v5749 = vadd.f32 0.0, %v5748
    %v5750 = vpop.f32.mrf.mxu0
    %5751 = vmatprep.mubr.bf16.mxu0 0
    %5752 = vmatmul.mubr.bf16.gmra.mxu0 %v5686
    %v5753 = vpop.f32.mrf.mxu0
    %v5754 = vadd.f32 0.0, %v5753
    %v5755 = vpop.f32.mrf.mxu0
    %v5756 = vpop.f32.mrf.mxu0
    %v5757 = vadd.f32 0.0, %v5756
    %v5758 = vpop.f32.mrf.mxu0
    %5759 = vmatprep.mubr.bf16.mxu0 0
    %5760 = vmatmul.mubr.bf16.gmra.mxu0 %v5689
    %v5761 = vpop.f32.mrf.mxu0
    %v5762 = vadd.f32 0.0, %v5761
    %v5763 = vpop.f32.mrf.mxu0
    %v5764 = vpop.f32.mrf.mxu0
    %v5765 = vadd.f32 0.0, %v5764
    %v5766 = vpop.f32.mrf.mxu0
    %5767 = vmatprep.mubr.bf16.mxu0 0
    %5768 = vmatmul.mubr.bf16.gmra.mxu0 %v5692
    %v5769 = vpop.f32.mrf.mxu0
    %v5770 = vadd.f32 0.0, %v5769
    %v5771 = vpop.f32.mrf.mxu0
    %v5772 = vpop.f32.mrf.mxu0
    %v5773 = vadd.f32 0.0, %v5772
    %v5774 = vpop.f32.mrf.mxu0
    %5775 = vmatprep.mubr.bf16.mxu0 0
    %5776 = vmatmul.mubr.bf16.gmra.mxu0 %v5695
    %v5777 = vpop.f32.mrf.mxu0
    %v5778 = vadd.f32 0.0, %v5777
    %v5779 = vpop.f32.mrf.mxu0
    %v5780 = vpop.f32.mrf.mxu0
    %v5781 = vadd.f32 0.0, %v5780
    %v5782 = vpop.f32.mrf.mxu0
    %5783 = vmatprep.mubr.bf16.mxu0 0
    %5784 = vmatmul.mubr.bf16.gmra.mxu0 %v5698
    %v5785 = vpop.f32.mrf.mxu0
    %v5786 = vadd.f32 0.0, %v5785
    %v5787 = vpop.f32.mrf.mxu0
    %v5788 = vpop.f32.mrf.mxu0
    %v5789 = vadd.f32 0.0, %v5788
    %v5790 = vpop.f32.mrf.mxu0
    %5791 = vmatprep.mubr.bf16.mxu0 0
    %5792 = vmatmul.mubr.bf16.gmra.mxu0 %v5701
    %v5793 = vpop.f32.mrf.mxu0
    %v5794 = vadd.f32 0.0, %v5793
    %v5795 = vpop.f32.mrf.mxu0
    %v5796 = vpop.f32.mrf.mxu0
    %v5797 = vadd.f32 0.0, %v5796
    %v5798 = vpop.f32.mrf.mxu0
    %5799 = vdwg.mxu0
    %v5800 = vadd.f32 %v5606, %v5738
    %v5801 = vadd.f32 %v5607, %v5741
    %v5802 = vadd.f32 %v5608, %v5746
    %v5803 = vadd.f32 %v5609, %v5749
    %v5804 = vadd.f32 %v5610, %v5754
    %v5805 = vadd.f32 %v5611, %v5757
    %v5806 = vadd.f32 %v5612, %v5762
    %v5807 = vadd.f32 %v5613, %v5765
    %v5808 = vadd.f32 %v5614, %v5770
    %v5809 = vadd.f32 %v5615, %v5773
    %v5810 = vadd.f32 %v5616, %v5778
    %v5811 = vadd.f32 %v5617, %v5781
    %v5812 = vadd.f32 %v5618, %v5786
    %v5813 = vadd.f32 %v5619, %v5789
    %v5814 = vadd.f32 %v5620, %v5794
    %v5815 = vadd.f32 %v5621, %v5797
    %v5816 = vld [vmem:[%s3203 + $0x2] sm:$0xff]
    %v5817 = vld [vmem:[%s3203 + $0x12] sm:$0xff]
    %v5818 = vld [vmem:[%s3203 + $0x22] sm:$0xff]
    %v5819 = vld [vmem:[%s3203 + $0x32] sm:$0xff]
    %v5820 = vld [vmem:[%s3203 + $0x42] sm:$0xff]
    %v5821 = vld [vmem:[%s3203 + $0x52] sm:$0xff]
    %v5822 = vld [vmem:[%s3203 + $0x62] sm:$0xff]
    %v5823 = vld [vmem:[%s3203 + $0x72] sm:$0xff]
    %v5824 = vld [vmem:[%s3203 + $0xa2] sm:$0xff]
    %v5825 = vld [vmem:[%s3203 + $0xb2] sm:$0xff]
    %v5826 = vld [vmem:[%s3203 + $0xc2] sm:$0xff]
    %v5827 = vld [vmem:[%s3203 + $0xd2] sm:$0xff]
    %v5828 = vld [vmem:[%s3203 + $0xe2] sm:$0xff]
    %v5829 = vld [vmem:[%s3203 + $0xf2] sm:$0xff]
    %v5830 = vld [vmem:[%s3203 + $0x102] sm:$0xff]
    %v5831 = vld [vmem:[%s3203 + $0x112] sm:$0xff]
    %v5832 = vpack.c.bf16 %v5817, %v5816
    %v5833 = vpack.c.bf16 %v5819, %v5818
    %v5834 = vpack.c.bf16 %v5821, %v5820
    %v5835 = vpack.c.bf16 %v5823, %v5822
    %v5836 = vpack.c.bf16 %v5825, %v5824
    %v5837 = vpack.c.bf16 %v5827, %v5826
    %v5838 = vpack.c.bf16 %v5829, %v5828
    %v5839 = vpack.c.bf16 %v5831, %v5830
    %s5840 = scalar_lea.vmem %s13, 256
    %v5841 = vld [vmem:[%s5840] sm:$0xf]
    %v5842 = vld [vmem:[%s5840 + $0x4] sm:$0xf]
    %v5843 = vld [vmem:[%s5840 + $0x8] sm:$0xf]
    %v5844 = vld [vmem:[%s5840 + $0xc] sm:$0xf]
    %v5845 = vld [vmem:[%s5840 + $0x10] sm:$0xf]
    %v5846 = vld [vmem:[%s5840 + $0x14] sm:$0xf]
    %v5847 = vld [vmem:[%s5840 + $0x18] sm:$0xf]
    %v5848 = vld [vmem:[%s5840 + $0x1c] sm:$0xf]
    %v5857 = vunpack.c.l.b16 %v5841
    %v5858 = vunpack.c.l.b16 %v5842
    %v5859 = vunpack.c.l.b16 %v5843
    %v5860 = vunpack.c.l.b16 %v5844
    %v5861 = vunpack.c.l.b16 %v5845
    %v5862 = vunpack.c.l.b16 %v5846
    %v5863 = vunpack.c.l.b16 %v5847
    %v5864 = vunpack.c.l.b16 %v5848
    %v5865 = vpack.c.b16 %v5858, %v5857
    %v5866 = vpack.c.b16 %v5860, %v5859
    %v5867 = vpack.c.b16 %v5862, %v5861
    %v5868 = vpack.c.b16 %v5864, %v5863
    %v5874 = vsel %vm67, %v5832, 0
    %v5877 = vsel %vm67, %v5833, 0
    %v5880 = vsel %vm67, %v5834, 0
    %v5883 = vsel %vm67, %v5835, 0
    %v5886 = vsel %vm67, %v5836, 0
    %v5889 = vsel %vm67, %v5837, 0
    %v5892 = vsel %vm67, %v5838, 0
    %v5895 = vsel %vm67, %v5839, 0
    %5897 = vmatprep.subr.bf16.mxu0 0
    %5898 = vmatpush1.bf16.msra.mxu0 0
    %5899 = vmatprep.subr.bf16.mxu0 0
    %5900 = vmatpush1.bf16.msra.mxu0 0
    %5901 = vmatprep.subr.bf16.mxu0 0
    %5902 = vmatpush1.bf16.msra.mxu0 0
    %5903 = vmatprep.subr.bf16.mxu0 0
    %5904 = vmatpush1.bf16.msra.mxu0 0
    %5905 = vmatprep.subr.bf16.mxu0 0
    %5906 = vmatpush1.bf16.msra.mxu0 %v5868
    %5907 = vmatprep.subr.bf16.mxu0 0
    %5908 = vmatpush1.bf16.msra.mxu0 %v5867
    %5909 = vmatprep.subr.bf16.mxu0 0
    %5910 = vmatpush1.bf16.msra.mxu0 %v5866
    %5911 = vmatprep.subr.bf16.mxu0 0
    %5912 = vmatpush1.bf16.msra.mxu0 %v5865
    %5913 = vmatprep.subr.bf16.mxu0 0
    %5914 = vmatpush2.bf16.msra.mxu0 0
    %5915 = vmatprep.subr.bf16.mxu0 0
    %5916 = vmatpush2.bf16.msra.mxu0 0
    %5917 = vmatprep.subr.bf16.mxu0 0
    %5918 = vmatpush2.bf16.msra.mxu0 0
    %5919 = vmatprep.subr.bf16.mxu0 0
    %5920 = vmatpush2.bf16.msra.mxu0 0
    %5921 = vmatprep.subr.bf16.mxu0 0
    %5922 = vmatpush2.bf16.msra.mxu0 0
    %5923 = vmatprep.subr.bf16.mxu0 0
    %5924 = vmatpush2.bf16.msra.mxu0 0
    %5925 = vmatprep.subr.bf16.mxu0 0
    %5926 = vmatpush2.bf16.msra.mxu0 0
    %5927 = vmatprep.subr.bf16.mxu0 0
    %5928 = vmatpush2.bf16.msra.mxu0 0
    %5929 = vmatprep.mubr.bf16.mxu0 0
    %5930 = vmatmul.mubr.bf16.gmra.mxu0 %v5874
    %v5931 = vpop.f32.mrf.mxu0
    %v5932 = vadd.f32 0.0, %v5931
    %v5933 = vpop.f32.mrf.mxu0
    %v5934 = vpop.f32.mrf.mxu0
    %v5935 = vadd.f32 0.0, %v5934
    %v5936 = vpop.f32.mrf.mxu0
    %5937 = vmatprep.mubr.bf16.mxu0 0
    %5938 = vmatmul.mubr.bf16.gmra.mxu0 %v5877
    %v5939 = vpop.f32.mrf.mxu0
    %v5940 = vadd.f32 0.0, %v5939
    %v5941 = vpop.f32.mrf.mxu0
    %v5942 = vpop.f32.mrf.mxu0
    %v5943 = vadd.f32 0.0, %v5942
    %v5944 = vpop.f32.mrf.mxu0
    %5945 = vmatprep.mubr.bf16.mxu0 0
    %5946 = vmatmul.mubr.bf16.gmra.mxu0 %v5880
    %v5947 = vpop.f32.mrf.mxu0
    %v5948 = vadd.f32 0.0, %v5947
    %v5949 = vpop.f32.mrf.mxu0
    %v5950 = vpop.f32.mrf.mxu0
    %v5951 = vadd.f32 0.0, %v5950
    %v5952 = vpop.f32.mrf.mxu0
    %5953 = vmatprep.mubr.bf16.mxu0 0
    %5954 = vmatmul.mubr.bf16.gmra.mxu0 %v5883
    %v5955 = vpop.f32.mrf.mxu0
    %v5956 = vadd.f32 0.0, %v5955
    %v5957 = vpop.f32.mrf.mxu0
    %v5958 = vpop.f32.mrf.mxu0
    %v5959 = vadd.f32 0.0, %v5958
    %v5960 = vpop.f32.mrf.mxu0
    %5961 = vmatprep.mubr.bf16.mxu0 0
    %5962 = vmatmul.mubr.bf16.gmra.mxu0 %v5886
    %v5963 = vpop.f32.mrf.mxu0
    %v5964 = vadd.f32 0.0, %v5963
    %v5965 = vpop.f32.mrf.mxu0
    %v5966 = vpop.f32.mrf.mxu0
    %v5967 = vadd.f32 0.0, %v5966
    %v5968 = vpop.f32.mrf.mxu0
    %5969 = vmatprep.mubr.bf16.mxu0 0
    %5970 = vmatmul.mubr.bf16.gmra.mxu0 %v5889
    %v5971 = vpop.f32.mrf.mxu0
    %v5972 = vadd.f32 0.0, %v5971
    %v5973 = vpop.f32.mrf.mxu0
    %v5974 = vpop.f32.mrf.mxu0
    %v5975 = vadd.f32 0.0, %v5974
    %v5976 = vpop.f32.mrf.mxu0
    %5977 = vmatprep.mubr.bf16.mxu0 0
    %5978 = vmatmul.mubr.bf16.gmra.mxu0 %v5892
    %v5979 = vpop.f32.mrf.mxu0
    %v5980 = vadd.f32 0.0, %v5979
    %v5981 = vpop.f32.mrf.mxu0
    %v5982 = vpop.f32.mrf.mxu0
    %v5983 = vadd.f32 0.0, %v5982
    %v5984 = vpop.f32.mrf.mxu0
    %5985 = vmatprep.mubr.bf16.mxu0 0
    %5986 = vmatmul.mubr.bf16.gmra.mxu0 %v5895
    %v5987 = vpop.f32.mrf.mxu0
    %v5988 = vadd.f32 0.0, %v5987
    %v5989 = vpop.f32.mrf.mxu0
    %v5990 = vpop.f32.mrf.mxu0
    %v5991 = vadd.f32 0.0, %v5990
    %v5992 = vpop.f32.mrf.mxu0
    %5993 = vdwg.mxu0
    %v5994 = vadd.f32 %v5800, %v5932
    %v5995 = vadd.f32 %v5801, %v5935
    %v5996 = vadd.f32 %v5802, %v5940
    %v5997 = vadd.f32 %v5803, %v5943
    %v5998 = vadd.f32 %v5804, %v5948
    %v5999 = vadd.f32 %v5805, %v5951
    %v6000 = vadd.f32 %v5806, %v5956
    %v6001 = vadd.f32 %v5807, %v5959
    %v6002 = vadd.f32 %v5808, %v5964
    %v6003 = vadd.f32 %v5809, %v5967
    %v6004 = vadd.f32 %v5810, %v5972
    %v6005 = vadd.f32 %v5811, %v5975
    %v6006 = vadd.f32 %v5812, %v5980
    %v6007 = vadd.f32 %v5813, %v5983
    %v6008 = vadd.f32 %v5814, %v5988
    %v6009 = vadd.f32 %v5815, %v5991
    %v6010 = vld [vmem:[%s14] sm:$0x1]
    %v6012 = vlaneseq
    %v6013 = vshrl.u32 %v6012, 7
    %v6014 = vsub.s32 0, %v6013
    %v6015 = vrot.slane %v6010, %v6014
    %v6017 = vadd.f32 %v5994, %v6015
    %v6018 = vadd.f32 %v5995, %v6015
    %v6019 = vadd.f32 %v5996, %v6015
    %v6020 = vadd.f32 %v5997, %v6015
    %v6021 = vadd.f32 %v5998, %v6015
    %v6022 = vadd.f32 %v5999, %v6015
    %v6023 = vadd.f32 %v6000, %v6015
    %v6024 = vadd.f32 %v6001, %v6015
    %v6025 = vadd.f32 %v6002, %v6015
    %v6026 = vadd.f32 %v6003, %v6015
    %v6027 = vadd.f32 %v6004, %v6015
    %v6028 = vadd.f32 %v6005, %v6015
    %v6029 = vadd.f32 %v6006, %v6015
    %v6030 = vadd.f32 %v6007, %v6015
    %v6031 = vadd.f32 %v6008, %v6015
    %v6032 = vadd.f32 %v6009, %v6015
    %v6033 = vmul.f32 %v6017, 1.442695
    %v6034 = vpow.pop %v6033
    %v6035 = vmul.f32 %v6018, 1.442695
    %v6036 = vpow.pop %v6035
    %v6037 = vmul.f32 %v6019, 1.442695
    %v6038 = vpow.pop %v6037
    %v6039 = vmul.f32 %v6020, 1.442695
    %v6040 = vpow.pop %v6039
    %v6041 = vmul.f32 %v6021, 1.442695
    %v6042 = vpow.pop %v6041
    %v6043 = vmul.f32 %v6022, 1.442695
    %v6044 = vpow.pop %v6043
    %v6045 = vmul.f32 %v6023, 1.442695
    %v6046 = vpow.pop %v6045
    %v6047 = vmul.f32 %v6024, 1.442695
    %v6048 = vpow.pop %v6047
    %v6049 = vmul.f32 %v6025, 1.442695
    %v6050 = vpow.pop %v6049
    %v6051 = vmul.f32 %v6026, 1.442695
    %v6052 = vpow.pop %v6051
    %v6053 = vmul.f32 %v6027, 1.442695
    %v6054 = vpow.pop %v6053
    %v6055 = vmul.f32 %v6028, 1.442695
    %v6056 = vpow.pop %v6055
    %v6057 = vmul.f32 %v6029, 1.442695
    %v6058 = vpow.pop %v6057
    %v6059 = vmul.f32 %v6030, 1.442695
    %v6060 = vpow.pop %v6059
    %v6061 = vmul.f32 %v6031, 1.442695
    %v6062 = vpow.pop %v6061
    %v6063 = vmul.f32 %v6032, 1.442695
    %v6064 = vpow.pop %v6063
    %v6065 = vadd.f32 %v6034, 1.0
    %v6066 = vadd.f32 %v6036, 1.0
    %v6067 = vadd.f32 %v6038, 1.0
    %v6068 = vadd.f32 %v6040, 1.0
    %v6069 = vadd.f32 %v6042, 1.0
    %v6070 = vadd.f32 %v6044, 1.0
    %v6071 = vadd.f32 %v6046, 1.0
    %v6072 = vadd.f32 %v6048, 1.0
    %v6073 = vadd.f32 %v6050, 1.0
    %v6074 = vadd.f32 %v6052, 1.0
    %v6075 = vadd.f32 %v6054, 1.0
    %v6076 = vadd.f32 %v6056, 1.0
    %v6077 = vadd.f32 %v6058, 1.0
    %v6078 = vadd.f32 %v6060, 1.0
    %v6079 = vadd.f32 %v6062, 1.0
    %v6080 = vadd.f32 %v6064, 1.0
    %v6081 = vmul.f32 %v6065, %v6065
    %v6082 = vmul.f32 %v6066, %v6066
    %v6083 = vmul.f32 %v6067, %v6067
    %v6084 = vmul.f32 %v6068, %v6068
    %v6085 = vmul.f32 %v6069, %v6069
    %v6086 = vmul.f32 %v6070, %v6070
    %v6087 = vmul.f32 %v6071, %v6071
    %v6088 = vmul.f32 %v6072, %v6072
    %v6089 = vmul.f32 %v6073, %v6073
    %v6090 = vmul.f32 %v6074, %v6074
    %v6091 = vmul.f32 %v6075, %v6075
    %v6092 = vmul.f32 %v6076, %v6076
    %v6093 = vmul.f32 %v6077, %v6077
    %v6094 = vmul.f32 %v6078, %v6078
    %v6095 = vmul.f32 %v6079, %v6079
    %v6096 = vmul.f32 %v6080, %v6080
    %v6097 = vadd.f32 %v6081, 1.0
    %v6098 = vadd.f32 %v6082, 1.0
    %v6099 = vadd.f32 %v6083, 1.0
    %v6100 = vadd.f32 %v6084, 1.0
    %v6101 = vadd.f32 %v6085, 1.0
    %v6102 = vadd.f32 %v6086, 1.0
    %v6103 = vadd.f32 %v6087, 1.0
    %v6104 = vadd.f32 %v6088, 1.0
    %v6105 = vadd.f32 %v6089, 1.0
    %v6106 = vadd.f32 %v6090, 1.0
    %v6107 = vadd.f32 %v6091, 1.0
    %v6108 = vadd.f32 %v6092, 1.0
    %v6109 = vadd.f32 %v6093, 1.0
    %v6110 = vadd.f32 %v6094, 1.0
    %v6111 = vadd.f32 %v6095, 1.0
    %v6112 = vadd.f32 %v6096, 1.0
    %v6113 = vmul.f32 %v6017, 2.0
    %v6114 = vmul.f32 %v6018, 2.0
    %v6115 = vmul.f32 %v6019, 2.0
    %v6116 = vmul.f32 %v6020, 2.0
    %v6117 = vmul.f32 %v6021, 2.0
    %v6118 = vmul.f32 %v6022, 2.0
    %v6119 = vmul.f32 %v6023, 2.0
    %v6120 = vmul.f32 %v6024, 2.0
    %v6121 = vmul.f32 %v6025, 2.0
    %v6122 = vmul.f32 %v6026, 2.0
    %v6123 = vmul.f32 %v6027, 2.0
    %v6124 = vmul.f32 %v6028, 2.0
    %v6125 = vmul.f32 %v6029, 2.0
    %v6126 = vmul.f32 %v6030, 2.0
    %v6127 = vmul.f32 %v6031, 2.0
    %v6128 = vmul.f32 %v6032, 2.0
    %v6129 = vrcp.pop %v6097
    %v6130 = vmul.f32 %v6113, %v6129
    %v6131 = vrcp.pop %v6098
    %v6132 = vmul.f32 %v6114, %v6131
    %v6133 = vrcp.pop %v6099
    %v6134 = vmul.f32 %v6115, %v6133
    %v6135 = vrcp.pop %v6100
    %v6136 = vmul.f32 %v6116, %v6135
    %v6137 = vrcp.pop %v6101
    %v6138 = vmul.f32 %v6117, %v6137
    %v6139 = vrcp.pop %v6102
    %v6140 = vmul.f32 %v6118, %v6139
    %v6141 = vrcp.pop %v6103
    %v6142 = vmul.f32 %v6119, %v6141
    %v6143 = vrcp.pop %v6104
    %v6144 = vmul.f32 %v6120, %v6143
    %v6145 = vrcp.pop %v6105
    %v6146 = vmul.f32 %v6121, %v6145
    %v6147 = vrcp.pop %v6106
    %v6148 = vmul.f32 %v6122, %v6147
    %v6149 = vrcp.pop %v6107
    %v6150 = vmul.f32 %v6123, %v6149
    %v6151 = vrcp.pop %v6108
    %v6152 = vmul.f32 %v6124, %v6151
    %v6153 = vrcp.pop %v6109
    %v6154 = vmul.f32 %v6125, %v6153
    %v6155 = vrcp.pop %v6110
    %v6156 = vmul.f32 %v6126, %v6155
    %v6157 = vrcp.pop %v6111
    %v6158 = vmul.f32 %v6127, %v6157
    %v6159 = vrcp.pop %v6112
    %v6160 = vmul.f32 %v6128, %v6159
    %v6161 = vsub.f32 %v6017, %v6130
    %v6162 = vsub.f32 %v6018, %v6132
    %v6163 = vsub.f32 %v6019, %v6134
    %v6164 = vsub.f32 %v6020, %v6136
    %v6165 = vsub.f32 %v6021, %v6138
    %v6166 = vsub.f32 %v6022, %v6140
    %v6167 = vsub.f32 %v6023, %v6142
    %v6168 = vsub.f32 %v6024, %v6144
    %v6169 = vsub.f32 %v6025, %v6146
    %v6170 = vsub.f32 %v6026, %v6148
    %v6171 = vsub.f32 %v6027, %v6150
    %v6172 = vsub.f32 %v6028, %v6152
    %v6173 = vsub.f32 %v6029, %v6154
    %v6174 = vsub.f32 %v6030, %v6156
    %v6175 = vsub.f32 %v6031, %v6158
    %v6176 = vsub.f32 %v6032, %v6160
    %v6177 = vadd.f32 %v3953, %v6161
    %v6178 = vadd.f32 %v3954, %v6162
    %v6179 = vadd.f32 %v3955, %v6163
    %v6180 = vadd.f32 %v3956, %v6164
    %v6181 = vadd.f32 %v3957, %v6165
    %v6182 = vadd.f32 %v3958, %v6166
    %v6183 = vadd.f32 %v3959, %v6167
    %v6184 = vadd.f32 %v3960, %v6168
    %v6185 = vadd.f32 %v3961, %v6169
    %v6186 = vadd.f32 %v3962, %v6170
    %v6187 = vadd.f32 %v3963, %v6171
    %v6188 = vadd.f32 %v3964, %v6172
    %v6189 = vadd.f32 %v3965, %v6173
    %v6190 = vadd.f32 %v3966, %v6174
    %v6191 = vadd.f32 %v3967, %v6175
    %v6192 = vadd.f32 %v3968, %v6176
    %v6193 = vpack.c.bf16 %v6178, %v6177
    %v6194 = vpack.c.bf16 %v6180, %v6179
    %v6195 = vpack.c.bf16 %v6182, %v6181
    %v6196 = vpack.c.bf16 %v6184, %v6183
    %v6197 = vpack.c.bf16 %v6186, %v6185
    %v6198 = vpack.c.bf16 %v6188, %v6187
    %v6199 = vpack.c.bf16 %v6190, %v6189
    %v6200 = vpack.c.bf16 %v6192, %v6191
    %v6201 = vld [vmem:[%s15] sm:$0xf]
    %v6202 = vld [vmem:[%s15 + $0x4] sm:$0xf]
    %v6203 = vld [vmem:[%s15 + $0x8] sm:$0xf]
    %v6204 = vld [vmem:[%s15 + $0xc] sm:$0xf]
    %v6205 = vld [vmem:[%s15 + $0x10] sm:$0xf]
    %v6206 = vld [vmem:[%s15 + $0x14] sm:$0xf]
    %v6207 = vld [vmem:[%s15 + $0x18] sm:$0xf]
    %v6208 = vld [vmem:[%s15 + $0x1c] sm:$0xf]
    %v6209 = vld [vmem:[%s16] sm:$0x1]
    %v6211 = vlaneseq
    %v6212 = vshrl.u32 %v6211, 7
    %v6213 = vsub.s32 0, %v6212
    %v6214 = vrot.slane %v6209, %v6213
    %v6224 = vunpack.c.l.b16 %v6201
    %v6225 = vunpack.c.l.b16 %v6202
    %v6226 = vunpack.c.l.b16 %v6203
    %v6227 = vunpack.c.l.b16 %v6204
    %v6228 = vunpack.c.l.b16 %v6205
    %v6229 = vunpack.c.l.b16 %v6206
    %v6230 = vunpack.c.l.b16 %v6207
    %v6231 = vunpack.c.l.b16 %v6208
    %v6232 = vpack.c.b16 %v6225, %v6224
    %v6233 = vpack.c.b16 %v6227, %v6226
    %v6234 = vpack.c.b16 %v6229, %v6228
    %v6235 = vpack.c.b16 %v6231, %v6230
    %v6241 = vsel %vm67, %v6193, 0
    %v6244 = vsel %vm67, %v6194, 0
    %v6247 = vsel %vm67, %v6195, 0
    %v6250 = vsel %vm67, %v6196, 0
    %v6253 = vsel %vm67, %v6197, 0
    %v6256 = vsel %vm67, %v6198, 0
    %v6259 = vsel %vm67, %v6199, 0
    %v6262 = vsel %vm67, %v6200, 0
    %6264 = vmatprep.subr.bf16.mxu0 0
    %6265 = vmatpush1.bf16.msra.mxu0 0
    %6266 = vmatprep.subr.bf16.mxu0 0
    %6267 = vmatpush1.bf16.msra.mxu0 0
    %6268 = vmatprep.subr.bf16.mxu0 0
    %6269 = vmatpush1.bf16.msra.mxu0 0
    %6270 = vmatprep.subr.bf16.mxu0 0
    %6271 = vmatpush1.bf16.msra.mxu0 0
    %6272 = vmatprep.subr.bf16.mxu0 0
    %6273 = vmatpush1.bf16.msra.mxu0 %v6235
    %6274 = vmatprep.subr.bf16.mxu0 0
    %6275 = vmatpush1.bf16.msra.mxu0 %v6234
    %6276 = vmatprep.subr.bf16.mxu0 0
    %6277 = vmatpush1.bf16.msra.mxu0 %v6233
    %6278 = vmatprep.subr.bf16.mxu0 0
    %6279 = vmatpush1.bf16.msra.mxu0 %v6232
    %6280 = vmatprep.subr.bf16.mxu0 0
    %6281 = vmatpush2.bf16.msra.mxu0 0
    %6282 = vmatprep.subr.bf16.mxu0 0
    %6283 = vmatpush2.bf16.msra.mxu0 0
    %6284 = vmatprep.subr.bf16.mxu0 0
    %6285 = vmatpush2.bf16.msra.mxu0 0
    %6286 = vmatprep.subr.bf16.mxu0 0
    %6287 = vmatpush2.bf16.msra.mxu0 0
    %6288 = vmatprep.subr.bf16.mxu0 0
    %6289 = vmatpush2.bf16.msra.mxu0 0
    %6290 = vmatprep.subr.bf16.mxu0 0
    %6291 = vmatpush2.bf16.msra.mxu0 0
    %6292 = vmatprep.subr.bf16.mxu0 0
    %6293 = vmatpush2.bf16.msra.mxu0 0
    %6294 = vmatprep.subr.bf16.mxu0 0
    %6295 = vmatpush2.bf16.msra.mxu0 0
    %6296 = vmatprep.mubr.bf16.mxu0 0
    %6297 = vmatmul.mubr.bf16.gmra.mxu0 %v6241
    %v6298 = vpop.f32.mrf.mxu0
    %v6299 = vadd.f32 %v6214, %v6298
    %v6300 = vpop.f32.mrf.mxu0
    %v6301 = vpop.f32.mrf.mxu0
    %v6302 = vadd.f32 %v6214, %v6301
    %v6303 = vpop.f32.mrf.mxu0
    %6304 = vmatprep.mubr.bf16.mxu0 0
    %6305 = vmatmul.mubr.bf16.gmra.mxu0 %v6244
    %v6306 = vpop.f32.mrf.mxu0
    %v6307 = vadd.f32 %v6214, %v6306
    %v6308 = vpop.f32.mrf.mxu0
    %v6309 = vpop.f32.mrf.mxu0
    %v6310 = vadd.f32 %v6214, %v6309
    %v6311 = vpop.f32.mrf.mxu0
    %6312 = vmatprep.mubr.bf16.mxu0 0
    %6313 = vmatmul.mubr.bf16.gmra.mxu0 %v6247
    %v6314 = vpop.f32.mrf.mxu0
    %v6315 = vadd.f32 %v6214, %v6314
    %v6316 = vpop.f32.mrf.mxu0
    %v6317 = vpop.f32.mrf.mxu0
    %v6318 = vadd.f32 %v6214, %v6317
    %v6319 = vpop.f32.mrf.mxu0
    %6320 = vmatprep.mubr.bf16.mxu0 0
    %6321 = vmatmul.mubr.bf16.gmra.mxu0 %v6250
    %v6322 = vpop.f32.mrf.mxu0
    %v6323 = vadd.f32 %v6214, %v6322
    %v6324 = vpop.f32.mrf.mxu0
    %v6325 = vpop.f32.mrf.mxu0
    %v6326 = vadd.f32 %v6214, %v6325
    %v6327 = vpop.f32.mrf.mxu0
    %6328 = vmatprep.mubr.bf16.mxu0 0
    %6329 = vmatmul.mubr.bf16.gmra.mxu0 %v6253
    %v6330 = vpop.f32.mrf.mxu0
    %v6331 = vadd.f32 %v6214, %v6330
    %v6332 = vpop.f32.mrf.mxu0
    %v6333 = vpop.f32.mrf.mxu0
    %v6334 = vadd.f32 %v6214, %v6333
    %v6335 = vpop.f32.mrf.mxu0
    %6336 = vmatprep.mubr.bf16.mxu0 0
    %6337 = vmatmul.mubr.bf16.gmra.mxu0 %v6256
    %v6338 = vpop.f32.mrf.mxu0
    %v6339 = vadd.f32 %v6214, %v6338
    %v6340 = vpop.f32.mrf.mxu0
    %v6341 = vpop.f32.mrf.mxu0
    %v6342 = vadd.f32 %v6214, %v6341
    %v6343 = vpop.f32.mrf.mxu0
    %6344 = vmatprep.mubr.bf16.mxu0 0
    %6345 = vmatmul.mubr.bf16.gmra.mxu0 %v6259
    %v6346 = vpop.f32.mrf.mxu0
    %v6347 = vadd.f32 %v6214, %v6346
    %v6348 = vpop.f32.mrf.mxu0
    %v6349 = vpop.f32.mrf.mxu0
    %v6350 = vadd.f32 %v6214, %v6349
    %v6351 = vpop.f32.mrf.mxu0
    %6352 = vmatprep.mubr.bf16.mxu0 0
    %6353 = vmatmul.mubr.bf16.gmra.mxu0 %v6262
    %v6354 = vpop.f32.mrf.mxu0
    %v6355 = vadd.f32 %v6214, %v6354
    %v6356 = vpop.f32.mrf.mxu0
    %v6357 = vpop.f32.mrf.mxu0
    %v6358 = vadd.f32 %v6214, %v6357
    %v6359 = vpop.f32.mrf.mxu0
    %6360 = vdwg.mxu0
    %v6361 = vmul.f32 %v6299, 1.442695
    %v6362 = vpow.pop %v6361
    %v6363 = vmul.f32 %v6302, 1.442695
    %v6364 = vpow.pop %v6363
    %v6365 = vmul.f32 %v6307, 1.442695
    %v6366 = vpow.pop %v6365
    %v6367 = vmul.f32 %v6310, 1.442695
    %v6368 = vpow.pop %v6367
    %v6369 = vmul.f32 %v6315, 1.442695
    %v6370 = vpow.pop %v6369
    %v6371 = vmul.f32 %v6318, 1.442695
    %v6372 = vpow.pop %v6371
    %v6373 = vmul.f32 %v6323, 1.442695
    %v6374 = vpow.pop %v6373
    %v6375 = vmul.f32 %v6326, 1.442695
    %v6376 = vpow.pop %v6375
    %v6377 = vmul.f32 %v6331, 1.442695
    %v6378 = vpow.pop %v6377
    %v6379 = vmul.f32 %v6334, 1.442695
    %v6380 = vpow.pop %v6379
    %v6381 = vmul.f32 %v6339, 1.442695
    %v6382 = vpow.pop %v6381
    %v6383 = vmul.f32 %v6342, 1.442695
    %v6384 = vpow.pop %v6383
    %v6385 = vmul.f32 %v6347, 1.442695
    %v6386 = vpow.pop %v6385
    %v6387 = vmul.f32 %v6350, 1.442695
    %v6388 = vpow.pop %v6387
    %v6389 = vmul.f32 %v6355, 1.442695
    %v6390 = vpow.pop %v6389
    %v6391 = vmul.f32 %v6358, 1.442695
    %v6392 = vpow.pop %v6391
    %v6393 = vadd.f32 %v6362, 1.0
    %v6394 = vadd.f32 %v6364, 1.0
    %v6395 = vadd.f32 %v6366, 1.0
    %v6396 = vadd.f32 %v6368, 1.0
    %v6397 = vadd.f32 %v6370, 1.0
    %v6398 = vadd.f32 %v6372, 1.0
    %v6399 = vadd.f32 %v6374, 1.0
    %v6400 = vadd.f32 %v6376, 1.0
    %v6401 = vadd.f32 %v6378, 1.0
    %v6402 = vadd.f32 %v6380, 1.0
    %v6403 = vadd.f32 %v6382, 1.0
    %v6404 = vadd.f32 %v6384, 1.0
    %v6405 = vadd.f32 %v6386, 1.0
    %v6406 = vadd.f32 %v6388, 1.0
    %v6407 = vadd.f32 %v6390, 1.0
    %v6408 = vadd.f32 %v6392, 1.0
    %v6409 = vmul.f32 %v6393, %v6393
    %v6410 = vmul.f32 %v6394, %v6394
    %v6411 = vmul.f32 %v6395, %v6395
    %v6412 = vmul.f32 %v6396, %v6396
    %v6413 = vmul.f32 %v6397, %v6397
    %v6414 = vmul.f32 %v6398, %v6398
    %v6415 = vmul.f32 %v6399, %v6399
    %v6416 = vmul.f32 %v6400, %v6400
    %v6417 = vmul.f32 %v6401, %v6401
    %v6418 = vmul.f32 %v6402, %v6402
    %v6419 = vmul.f32 %v6403, %v6403
    %v6420 = vmul.f32 %v6404, %v6404
    %v6421 = vmul.f32 %v6405, %v6405
    %v6422 = vmul.f32 %v6406, %v6406
    %v6423 = vmul.f32 %v6407, %v6407
    %v6424 = vmul.f32 %v6408, %v6408
    %v6425 = vadd.f32 %v6409, 1.0
    %v6426 = vadd.f32 %v6410, 1.0
    %v6427 = vadd.f32 %v6411, 1.0
    %v6428 = vadd.f32 %v6412, 1.0
    %v6429 = vadd.f32 %v6413, 1.0
    %v6430 = vadd.f32 %v6414, 1.0
    %v6431 = vadd.f32 %v6415, 1.0
    %v6432 = vadd.f32 %v6416, 1.0
    %v6433 = vadd.f32 %v6417, 1.0
    %v6434 = vadd.f32 %v6418, 1.0
    %v6435 = vadd.f32 %v6419, 1.0
    %v6436 = vadd.f32 %v6420, 1.0
    %v6437 = vadd.f32 %v6421, 1.0
    %v6438 = vadd.f32 %v6422, 1.0
    %v6439 = vadd.f32 %v6423, 1.0
    %v6440 = vadd.f32 %v6424, 1.0
    %v6441 = vmul.f32 %v6299, 2.0
    %v6442 = vmul.f32 %v6302, 2.0
    %v6443 = vmul.f32 %v6307, 2.0
    %v6444 = vmul.f32 %v6310, 2.0
    %v6445 = vmul.f32 %v6315, 2.0
    %v6446 = vmul.f32 %v6318, 2.0
    %v6447 = vmul.f32 %v6323, 2.0
    %v6448 = vmul.f32 %v6326, 2.0
    %v6449 = vmul.f32 %v6331, 2.0
    %v6450 = vmul.f32 %v6334, 2.0
    %v6451 = vmul.f32 %v6339, 2.0
    %v6452 = vmul.f32 %v6342, 2.0
    %v6453 = vmul.f32 %v6347, 2.0
    %v6454 = vmul.f32 %v6350, 2.0
    %v6455 = vmul.f32 %v6355, 2.0
    %v6456 = vmul.f32 %v6358, 2.0
    %v6457 = vrcp.pop %v6425
    %v6458 = vmul.f32 %v6441, %v6457
    %v6459 = vrcp.pop %v6426
    %v6460 = vmul.f32 %v6442, %v6459
    %v6461 = vrcp.pop %v6427
    %v6462 = vmul.f32 %v6443, %v6461
    %v6463 = vrcp.pop %v6428
    %v6464 = vmul.f32 %v6444, %v6463
    %v6465 = vrcp.pop %v6429
    %v6466 = vmul.f32 %v6445, %v6465
    %v6467 = vrcp.pop %v6430
    %v6468 = vmul.f32 %v6446, %v6467
    %v6469 = vrcp.pop %v6431
    %v6470 = vmul.f32 %v6447, %v6469
    %v6471 = vrcp.pop %v6432
    %v6472 = vmul.f32 %v6448, %v6471
    %v6473 = vrcp.pop %v6433
    %v6474 = vmul.f32 %v6449, %v6473
    %v6475 = vrcp.pop %v6434
    %v6476 = vmul.f32 %v6450, %v6475
    %v6477 = vrcp.pop %v6435
    %v6478 = vmul.f32 %v6451, %v6477
    %v6479 = vrcp.pop %v6436
    %v6480 = vmul.f32 %v6452, %v6479
    %v6481 = vrcp.pop %v6437
    %v6482 = vmul.f32 %v6453, %v6481
    %v6483 = vrcp.pop %v6438
    %v6484 = vmul.f32 %v6454, %v6483
    %v6485 = vrcp.pop %v6439
    %v6486 = vmul.f32 %v6455, %v6485
    %v6487 = vrcp.pop %v6440
    %v6488 = vmul.f32 %v6456, %v6487
    %v6489 = vsub.f32 %v6299, %v6458
    %v6490 = vsub.f32 %v6302, %v6460
    %v6491 = vsub.f32 %v6307, %v6462
    %v6492 = vsub.f32 %v6310, %v6464
    %v6493 = vsub.f32 %v6315, %v6466
    %v6494 = vsub.f32 %v6318, %v6468
    %v6495 = vsub.f32 %v6323, %v6470
    %v6496 = vsub.f32 %v6326, %v6472
    %v6497 = vsub.f32 %v6331, %v6474
    %v6498 = vsub.f32 %v6334, %v6476
    %v6499 = vsub.f32 %v6339, %v6478
    %v6500 = vsub.f32 %v6342, %v6480
    %v6501 = vsub.f32 %v6347, %v6482
    %v6502 = vsub.f32 %v6350, %v6484
    %v6503 = vsub.f32 %v6355, %v6486
    %v6504 = vsub.f32 %v6358, %v6488
    %v6505 = vpack.c.bf16 %v6490, %v6489
    %v6506 = vpack.c.bf16 %v6492, %v6491
    %v6507 = vpack.c.bf16 %v6494, %v6493
    %v6508 = vpack.c.bf16 %v6496, %v6495
    %v6509 = vpack.c.bf16 %v6498, %v6497
    %v6510 = vpack.c.bf16 %v6500, %v6499
    %v6511 = vpack.c.bf16 %v6502, %v6501
    %v6512 = vpack.c.bf16 %v6504, %v6503
    %v6513 = vld [vmem:[%s17] sm:$0xf]
    %v6514 = vld [vmem:[%s17 + $0x4] sm:$0xf]
    %v6515 = vld [vmem:[%s17 + $0x8] sm:$0xf]
    %v6516 = vld [vmem:[%s17 + $0xc] sm:$0xf]
    %v6517 = vld [vmem:[%s17 + $0x10] sm:$0xf]
    %v6518 = vld [vmem:[%s17 + $0x14] sm:$0xf]
    %v6519 = vld [vmem:[%s17 + $0x18] sm:$0xf]
    %v6520 = vld [vmem:[%s17 + $0x1c] sm:$0xf]
    %v6521 = vpack.c.bf16 %v1416, %v1415
    %v6522 = vpack.c.bf16 %v1418, %v1417
    %v6523 = vpack.c.bf16 %v1420, %v1419
    %v6524 = vpack.c.bf16 %v1422, %v1421
    %v6525 = vpack.c.bf16 %v1424, %v1423
    %v6526 = vpack.c.bf16 %v1426, %v1425
    %v6527 = vpack.c.bf16 %v1428, %v1427
    %v6528 = vpack.c.bf16 %v1430, %v1429
    %v6529 = vld [vmem:[%s18] sm:$0xf]
    %v6530 = vld [vmem:[%s18 + $0x4] sm:$0xf]
    %v6531 = vld [vmem:[%s18 + $0x8] sm:$0xf]
    %v6532 = vld [vmem:[%s18 + $0xc] sm:$0xf]
    %v6533 = vld [vmem:[%s18 + $0x10] sm:$0xf]
    %v6534 = vld [vmem:[%s18 + $0x14] sm:$0xf]
    %v6535 = vld [vmem:[%s18 + $0x18] sm:$0xf]
    %v6536 = vld [vmem:[%s18 + $0x1c] sm:$0xf]
    %v6545 = vunpack.c.l.b16 %v6529
    %v6546 = vunpack.c.l.b16 %v6530
    %v6547 = vunpack.c.l.b16 %v6531
    %v6548 = vunpack.c.l.b16 %v6532
    %v6549 = vunpack.c.l.b16 %v6533
    %v6550 = vunpack.c.l.b16 %v6534
    %v6551 = vunpack.c.l.b16 %v6535
    %v6552 = vunpack.c.l.b16 %v6536
    %v6553 = vpack.c.b16 %v6546, %v6545
    %v6554 = vpack.c.b16 %v6548, %v6547
    %v6555 = vpack.c.b16 %v6550, %v6549
    %v6556 = vpack.c.b16 %v6552, %v6551
    %v6562 = vsel %vm67, %v6521, 0
    %v6565 = vsel %vm67, %v6522, 0
    %v6568 = vsel %vm67, %v6523, 0
    %v6571 = vsel %vm67, %v6524, 0
    %v6574 = vsel %vm67, %v6525, 0
    %v6577 = vsel %vm67, %v6526, 0
    %v6580 = vsel %vm67, %v6527, 0
    %v6583 = vsel %vm67, %v6528, 0
    %6585 = vmatprep.subr.bf16.mxu0 0
    %6586 = vmatpush1.bf16.msra.mxu0 0
    %6587 = vmatprep.subr.bf16.mxu0 0
    %6588 = vmatpush1.bf16.msra.mxu0 0
    %6589 = vmatprep.subr.bf16.mxu0 0
    %6590 = vmatpush1.bf16.msra.mxu0 0
    %6591 = vmatprep.subr.bf16.mxu0 0
    %6592 = vmatpush1.bf16.msra.mxu0 0
    %6593 = vmatprep.subr.bf16.mxu0 0
    %6594 = vmatpush1.bf16.msra.mxu0 %v6556
    %6595 = vmatprep.subr.bf16.mxu0 0
    %6596 = vmatpush1.bf16.msra.mxu0 %v6555
    %6597 = vmatprep.subr.bf16.mxu0 0
    %6598 = vmatpush1.bf16.msra.mxu0 %v6554
    %6599 = vmatprep.subr.bf16.mxu0 0
    %6600 = vmatpush1.bf16.msra.mxu0 %v6553
    %6601 = vmatprep.subr.bf16.mxu0 0
    %6602 = vmatpush2.bf16.msra.mxu0 0
    %6603 = vmatprep.subr.bf16.mxu0 0
    %6604 = vmatpush2.bf16.msra.mxu0 0
    %6605 = vmatprep.subr.bf16.mxu0 0
    %6606 = vmatpush2.bf16.msra.mxu0 0
    %6607 = vmatprep.subr.bf16.mxu0 0
    %6608 = vmatpush2.bf16.msra.mxu0 0
    %6609 = vmatprep.subr.bf16.mxu0 0
    %6610 = vmatpush2.bf16.msra.mxu0 0
    %6611 = vmatprep.subr.bf16.mxu0 0
    %6612 = vmatpush2.bf16.msra.mxu0 0
    %6613 = vmatprep.subr.bf16.mxu0 0
    %6614 = vmatpush2.bf16.msra.mxu0 0
    %6615 = vmatprep.subr.bf16.mxu0 0
    %6616 = vmatpush2.bf16.msra.mxu0 0
    %6617 = vmatprep.mubr.bf16.mxu0 0
    %6618 = vmatmul.mubr.bf16.gmra.mxu0 %v6562
    %v6619 = vpop.f32.mrf.mxu0
    %v6620 = vadd.f32 0.0, %v6619
    %v6621 = vpop.f32.mrf.mxu0
    %v6622 = vpop.f32.mrf.mxu0
    %v6623 = vadd.f32 0.0, %v6622
    %v6624 = vpop.f32.mrf.mxu0
    %6625 = vmatprep.mubr.bf16.mxu0 0
    %6626 = vmatmul.mubr.bf16.gmra.mxu0 %v6565
    %v6627 = vpop.f32.mrf.mxu0
    %v6628 = vadd.f32 0.0, %v6627
    %v6629 = vpop.f32.mrf.mxu0
    %v6630 = vpop.f32.mrf.mxu0
    %v6631 = vadd.f32 0.0, %v6630
    %v6632 = vpop.f32.mrf.mxu0
    %6633 = vmatprep.mubr.bf16.mxu0 0
    %6634 = vmatmul.mubr.bf16.gmra.mxu0 %v6568
    %v6635 = vpop.f32.mrf.mxu0
    %v6636 = vadd.f32 0.0, %v6635
    %v6637 = vpop.f32.mrf.mxu0
    %v6638 = vpop.f32.mrf.mxu0
    %v6639 = vadd.f32 0.0, %v6638
    %v6640 = vpop.f32.mrf.mxu0
    %6641 = vmatprep.mubr.bf16.mxu0 0
    %6642 = vmatmul.mubr.bf16.gmra.mxu0 %v6571
    %v6643 = vpop.f32.mrf.mxu0
    %v6644 = vadd.f32 0.0, %v6643
    %v6645 = vpop.f32.mrf.mxu0
    %v6646 = vpop.f32.mrf.mxu0
    %v6647 = vadd.f32 0.0, %v6646
    %v6648 = vpop.f32.mrf.mxu0
    %6649 = vmatprep.mubr.bf16.mxu0 0
    %6650 = vmatmul.mubr.bf16.gmra.mxu0 %v6574
    %v6651 = vpop.f32.mrf.mxu0
    %v6652 = vadd.f32 0.0, %v6651
    %v6653 = vpop.f32.mrf.mxu0
    %v6654 = vpop.f32.mrf.mxu0
    %v6655 = vadd.f32 0.0, %v6654
    %v6656 = vpop.f32.mrf.mxu0
    %6657 = vmatprep.mubr.bf16.mxu0 0
    %6658 = vmatmul.mubr.bf16.gmra.mxu0 %v6577
    %v6659 = vpop.f32.mrf.mxu0
    %v6660 = vadd.f32 0.0, %v6659
    %v6661 = vpop.f32.mrf.mxu0
    %v6662 = vpop.f32.mrf.mxu0
    %v6663 = vadd.f32 0.0, %v6662
    %v6664 = vpop.f32.mrf.mxu0
    %6665 = vmatprep.mubr.bf16.mxu0 0
    %6666 = vmatmul.mubr.bf16.gmra.mxu0 %v6580
    %v6667 = vpop.f32.mrf.mxu0
    %v6668 = vadd.f32 0.0, %v6667
    %v6669 = vpop.f32.mrf.mxu0
    %v6670 = vpop.f32.mrf.mxu0
    %v6671 = vadd.f32 0.0, %v6670
    %v6672 = vpop.f32.mrf.mxu0
    %6673 = vmatprep.mubr.bf16.mxu0 0
    %6674 = vmatmul.mubr.bf16.gmra.mxu0 %v6583
    %v6675 = vpop.f32.mrf.mxu0
    %v6676 = vadd.f32 0.0, %v6675
    %v6677 = vpop.f32.mrf.mxu0
    %v6678 = vpop.f32.mrf.mxu0
    %v6679 = vadd.f32 0.0, %v6678
    %v6680 = vpop.f32.mrf.mxu0
    %6681 = vdwg.mxu0
    %v6690 = vunpack.c.l.b16 %v6513
    %v6691 = vunpack.c.l.b16 %v6514
    %v6692 = vunpack.c.l.b16 %v6515
    %v6693 = vunpack.c.l.b16 %v6516
    %v6694 = vunpack.c.l.b16 %v6517
    %v6695 = vunpack.c.l.b16 %v6518
    %v6696 = vunpack.c.l.b16 %v6519
    %v6697 = vunpack.c.l.b16 %v6520
    %v6698 = vpack.c.b16 %v6691, %v6690
    %v6699 = vpack.c.b16 %v6693, %v6692
    %v6700 = vpack.c.b16 %v6695, %v6694
    %v6701 = vpack.c.b16 %v6697, %v6696
    %v6707 = vsel %vm67, %v6505, 0
    %v6710 = vsel %vm67, %v6506, 0
    %v6713 = vsel %vm67, %v6507, 0
    %v6716 = vsel %vm67, %v6508, 0
    %v6719 = vsel %vm67, %v6509, 0
    %v6722 = vsel %vm67, %v6510, 0
    %v6725 = vsel %vm67, %v6511, 0
    %v6728 = vsel %vm67, %v6512, 0
    %6730 = vmatprep.subr.bf16.mxu0 0
    %6731 = vmatpush1.bf16.msra.mxu0 0
    %6732 = vmatprep.subr.bf16.mxu0 0
    %6733 = vmatpush1.bf16.msra.mxu0 0
    %6734 = vmatprep.subr.bf16.mxu0 0
    %6735 = vmatpush1.bf16.msra.mxu0 0
    %6736 = vmatprep.subr.bf16.mxu0 0
    %6737 = vmatpush1.bf16.msra.mxu0 0
    %6738 = vmatprep.subr.bf16.mxu0 0
    %6739 = vmatpush1.bf16.msra.mxu0 %v6701
    %6740 = vmatprep.subr.bf16.mxu0 0
    %6741 = vmatpush1.bf16.msra.mxu0 %v6700
    %6742 = vmatprep.subr.bf16.mxu0 0
    %6743 = vmatpush1.bf16.msra.mxu0 %v6699
    %6744 = vmatprep.subr.bf16.mxu0 0
    %6745 = vmatpush1.bf16.msra.mxu0 %v6698
    %6746 = vmatprep.subr.bf16.mxu0 0
    %6747 = vmatpush2.bf16.msra.mxu0 0
    %6748 = vmatprep.subr.bf16.mxu0 0
    %6749 = vmatpush2.bf16.msra.mxu0 0
    %6750 = vmatprep.subr.bf16.mxu0 0
    %6751 = vmatpush2.bf16.msra.mxu0 0
    %6752 = vmatprep.subr.bf16.mxu0 0
    %6753 = vmatpush2.bf16.msra.mxu0 0
    %6754 = vmatprep.subr.bf16.mxu0 0
    %6755 = vmatpush2.bf16.msra.mxu0 0
    %6756 = vmatprep.subr.bf16.mxu0 0
    %6757 = vmatpush2.bf16.msra.mxu0 0
    %6758 = vmatprep.subr.bf16.mxu0 0
    %6759 = vmatpush2.bf16.msra.mxu0 0
    %6760 = vmatprep.subr.bf16.mxu0 0
    %6761 = vmatpush2.bf16.msra.mxu0 0
    %6762 = vmatprep.mubr.bf16.mxu0 0
    %6763 = vmatmul.mubr.bf16.gmra.mxu0 %v6707
    %v6764 = vpop.f32.mrf.mxu0
    %v6765 = vadd.f32 %v6620, %v6764
    %v6766 = vpop.f32.mrf.mxu0
    %v6767 = vpop.f32.mrf.mxu0
    %v6768 = vadd.f32 %v6623, %v6767
    %v6769 = vpop.f32.mrf.mxu0
    %6770 = vmatprep.mubr.bf16.mxu0 0
    %6771 = vmatmul.mubr.bf16.gmra.mxu0 %v6710
    %v6772 = vpop.f32.mrf.mxu0
    %v6773 = vadd.f32 %v6628, %v6772
    %v6774 = vpop.f32.mrf.mxu0
    %v6775 = vpop.f32.mrf.mxu0
    %v6776 = vadd.f32 %v6631, %v6775
    %v6777 = vpop.f32.mrf.mxu0
    %6778 = vmatprep.mubr.bf16.mxu0 0
    %6779 = vmatmul.mubr.bf16.gmra.mxu0 %v6713
    %v6780 = vpop.f32.mrf.mxu0
    %v6781 = vadd.f32 %v6636, %v6780
    %v6782 = vpop.f32.mrf.mxu0
    %v6783 = vpop.f32.mrf.mxu0
    %v6784 = vadd.f32 %v6639, %v6783
    %v6785 = vpop.f32.mrf.mxu0
    %6786 = vmatprep.mubr.bf16.mxu0 0
    %6787 = vmatmul.mubr.bf16.gmra.mxu0 %v6716
    %v6788 = vpop.f32.mrf.mxu0
    %v6789 = vadd.f32 %v6644, %v6788
    %v6790 = vpop.f32.mrf.mxu0
    %v6791 = vpop.f32.mrf.mxu0
    %v6792 = vadd.f32 %v6647, %v6791
    %v6793 = vpop.f32.mrf.mxu0
    %6794 = vmatprep.mubr.bf16.mxu0 0
    %6795 = vmatmul.mubr.bf16.gmra.mxu0 %v6719
    %v6796 = vpop.f32.mrf.mxu0
    %v6797 = vadd.f32 %v6652, %v6796
    %v6798 = vpop.f32.mrf.mxu0
    %v6799 = vpop.f32.mrf.mxu0
    %v6800 = vadd.f32 %v6655, %v6799
    %v6801 = vpop.f32.mrf.mxu0
    %6802 = vmatprep.mubr.bf16.mxu0 0
    %6803 = vmatmul.mubr.bf16.gmra.mxu0 %v6722
    %v6804 = vpop.f32.mrf.mxu0
    %v6805 = vadd.f32 %v6660, %v6804
    %v6806 = vpop.f32.mrf.mxu0
    %v6807 = vpop.f32.mrf.mxu0
    %v6808 = vadd.f32 %v6663, %v6807
    %v6809 = vpop.f32.mrf.mxu0
    %6810 = vmatprep.mubr.bf16.mxu0 0
    %6811 = vmatmul.mubr.bf16.gmra.mxu0 %v6725
    %v6812 = vpop.f32.mrf.mxu0
    %v6813 = vadd.f32 %v6668, %v6812
    %v6814 = vpop.f32.mrf.mxu0
    %v6815 = vpop.f32.mrf.mxu0
    %v6816 = vadd.f32 %v6671, %v6815
    %v6817 = vpop.f32.mrf.mxu0
    %6818 = vmatprep.mubr.bf16.mxu0 0
    %6819 = vmatmul.mubr.bf16.gmra.mxu0 %v6728
    %v6820 = vpop.f32.mrf.mxu0
    %v6821 = vadd.f32 %v6676, %v6820
    %v6822 = vpop.f32.mrf.mxu0
    %v6823 = vpop.f32.mrf.mxu0
    %v6824 = vadd.f32 %v6679, %v6823
    %v6825 = vpop.f32.mrf.mxu0
    %6826 = vdwg.mxu0
    %v6827 = vld [vmem:[%s19] sm:$0x1]
    %v6829 = vlaneseq
    %v6830 = vshrl.u32 %v6829, 7
    %v6831 = vsub.s32 0, %v6830
    %v6832 = vrot.slane %v6827, %v6831
    %v6834 = vadd.f32 %v6765, %v6832
    %v6835 = vadd.f32 %v6768, %v6832
    %v6836 = vadd.f32 %v6773, %v6832
    %v6837 = vadd.f32 %v6776, %v6832
    %v6838 = vadd.f32 %v6781, %v6832
    %v6839 = vadd.f32 %v6784, %v6832
    %v6840 = vadd.f32 %v6789, %v6832
    %v6841 = vadd.f32 %v6792, %v6832
    %v6842 = vadd.f32 %v6797, %v6832
    %v6843 = vadd.f32 %v6800, %v6832
    %v6844 = vadd.f32 %v6805, %v6832
    %v6845 = vadd.f32 %v6808, %v6832
    %v6846 = vadd.f32 %v6813, %v6832
    %v6847 = vadd.f32 %v6816, %v6832
    %v6848 = vadd.f32 %v6821, %v6832
    %v6849 = vadd.f32 %v6824, %v6832
    %v6850 = vmul.f32 %v6834, 1.442695
    %v6851 = vpow.pop %v6850
    %v6852 = vmul.f32 %v6835, 1.442695
    %v6853 = vpow.pop %v6852
    %v6854 = vmul.f32 %v6836, 1.442695
    %v6855 = vpow.pop %v6854
    %v6856 = vmul.f32 %v6837, 1.442695
    %v6857 = vpow.pop %v6856
    %v6858 = vmul.f32 %v6838, 1.442695
    %v6859 = vpow.pop %v6858
    %v6860 = vmul.f32 %v6839, 1.442695
    %v6861 = vpow.pop %v6860
    %v6862 = vmul.f32 %v6840, 1.442695
    %v6863 = vpow.pop %v6862
    %v6864 = vmul.f32 %v6841, 1.442695
    %v6865 = vpow.pop %v6864
    %v6866 = vmul.f32 %v6842, 1.442695
    %v6867 = vpow.pop %v6866
    %v6868 = vmul.f32 %v6843, 1.442695
    %v6869 = vpow.pop %v6868
    %v6870 = vmul.f32 %v6844, 1.442695
    %v6871 = vpow.pop %v6870
    %v6872 = vmul.f32 %v6845, 1.442695
    %v6873 = vpow.pop %v6872
    %v6874 = vmul.f32 %v6846, 1.442695
    %v6875 = vpow.pop %v6874
    %v6876 = vmul.f32 %v6847, 1.442695
    %v6877 = vpow.pop %v6876
    %v6878 = vmul.f32 %v6848, 1.442695
    %v6879 = vpow.pop %v6878
    %v6880 = vmul.f32 %v6849, 1.442695
    %v6881 = vpow.pop %v6880
    %v6882 = vadd.f32 %v6851, 1.0
    %v6883 = vadd.f32 %v6853, 1.0
    %v6884 = vadd.f32 %v6855, 1.0
    %v6885 = vadd.f32 %v6857, 1.0
    %v6886 = vadd.f32 %v6859, 1.0
    %v6887 = vadd.f32 %v6861, 1.0
    %v6888 = vadd.f32 %v6863, 1.0
    %v6889 = vadd.f32 %v6865, 1.0
    %v6890 = vadd.f32 %v6867, 1.0
    %v6891 = vadd.f32 %v6869, 1.0
    %v6892 = vadd.f32 %v6871, 1.0
    %v6893 = vadd.f32 %v6873, 1.0
    %v6894 = vadd.f32 %v6875, 1.0
    %v6895 = vadd.f32 %v6877, 1.0
    %v6896 = vadd.f32 %v6879, 1.0
    %v6897 = vadd.f32 %v6881, 1.0
    %v6898 = vmul.f32 %v6882, %v6882
    %v6899 = vmul.f32 %v6883, %v6883
    %v6900 = vmul.f32 %v6884, %v6884
    %v6901 = vmul.f32 %v6885, %v6885
    %v6902 = vmul.f32 %v6886, %v6886
    %v6903 = vmul.f32 %v6887, %v6887
    %v6904 = vmul.f32 %v6888, %v6888
    %v6905 = vmul.f32 %v6889, %v6889
    %v6906 = vmul.f32 %v6890, %v6890
    %v6907 = vmul.f32 %v6891, %v6891
    %v6908 = vmul.f32 %v6892, %v6892
    %v6909 = vmul.f32 %v6893, %v6893
    %v6910 = vmul.f32 %v6894, %v6894
    %v6911 = vmul.f32 %v6895, %v6895
    %v6912 = vmul.f32 %v6896, %v6896
    %v6913 = vmul.f32 %v6897, %v6897
    %v6914 = vadd.f32 %v6898, 1.0
    %v6915 = vadd.f32 %v6899, 1.0
    %v6916 = vadd.f32 %v6900, 1.0
    %v6917 = vadd.f32 %v6901, 1.0
    %v6918 = vadd.f32 %v6902, 1.0
    %v6919 = vadd.f32 %v6903, 1.0
    %v6920 = vadd.f32 %v6904, 1.0
    %v6921 = vadd.f32 %v6905, 1.0
    %v6922 = vadd.f32 %v6906, 1.0
    %v6923 = vadd.f32 %v6907, 1.0
    %v6924 = vadd.f32 %v6908, 1.0
    %v6925 = vadd.f32 %v6909, 1.0
    %v6926 = vadd.f32 %v6910, 1.0
    %v6927 = vadd.f32 %v6911, 1.0
    %v6928 = vadd.f32 %v6912, 1.0
    %v6929 = vadd.f32 %v6913, 1.0
    %v6930 = vmul.f32 %v6834, 2.0
    %v6931 = vmul.f32 %v6835, 2.0
    %v6932 = vmul.f32 %v6836, 2.0
    %v6933 = vmul.f32 %v6837, 2.0
    %v6934 = vmul.f32 %v6838, 2.0
    %v6935 = vmul.f32 %v6839, 2.0
    %v6936 = vmul.f32 %v6840, 2.0
    %v6937 = vmul.f32 %v6841, 2.0
    %v6938 = vmul.f32 %v6842, 2.0
    %v6939 = vmul.f32 %v6843, 2.0
    %v6940 = vmul.f32 %v6844, 2.0
    %v6941 = vmul.f32 %v6845, 2.0
    %v6942 = vmul.f32 %v6846, 2.0
    %v6943 = vmul.f32 %v6847, 2.0
    %v6944 = vmul.f32 %v6848, 2.0
    %v6945 = vmul.f32 %v6849, 2.0
    %v6946 = vrcp.pop %v6914
    %v6947 = vmul.f32 %v6930, %v6946
    %v6948 = vrcp.pop %v6915
    %v6949 = vmul.f32 %v6931, %v6948
    %v6950 = vrcp.pop %v6916
    %v6951 = vmul.f32 %v6932, %v6950
    %v6952 = vrcp.pop %v6917
    %v6953 = vmul.f32 %v6933, %v6952
    %v6954 = vrcp.pop %v6918
    %v6955 = vmul.f32 %v6934, %v6954
    %v6956 = vrcp.pop %v6919
    %v6957 = vmul.f32 %v6935, %v6956
    %v6958 = vrcp.pop %v6920
    %v6959 = vmul.f32 %v6936, %v6958
    %v6960 = vrcp.pop %v6921
    %v6961 = vmul.f32 %v6937, %v6960
    %v6962 = vrcp.pop %v6922
    %v6963 = vmul.f32 %v6938, %v6962
    %v6964 = vrcp.pop %v6923
    %v6965 = vmul.f32 %v6939, %v6964
    %v6966 = vrcp.pop %v6924
    %v6967 = vmul.f32 %v6940, %v6966
    %v6968 = vrcp.pop %v6925
    %v6969 = vmul.f32 %v6941, %v6968
    %v6970 = vrcp.pop %v6926
    %v6971 = vmul.f32 %v6942, %v6970
    %v6972 = vrcp.pop %v6927
    %v6973 = vmul.f32 %v6943, %v6972
    %v6974 = vrcp.pop %v6928
    %v6975 = vmul.f32 %v6944, %v6974
    %v6976 = vrcp.pop %v6929
    %v6977 = vmul.f32 %v6945, %v6976
    %v6978 = vsub.f32 %v6834, %v6947
    %v6979 = vsub.f32 %v6835, %v6949
    %v6980 = vsub.f32 %v6836, %v6951
    %v6981 = vsub.f32 %v6837, %v6953
    %v6982 = vsub.f32 %v6838, %v6955
    %v6983 = vsub.f32 %v6839, %v6957
    %v6984 = vsub.f32 %v6840, %v6959
    %v6985 = vsub.f32 %v6841, %v6961
    %v6986 = vsub.f32 %v6842, %v6963
    %v6987 = vsub.f32 %v6843, %v6965
    %v6988 = vsub.f32 %v6844, %v6967
    %v6989 = vsub.f32 %v6845, %v6969
    %v6990 = vsub.f32 %v6846, %v6971
    %v6991 = vsub.f32 %v6847, %v6973
    %v6992 = vsub.f32 %v6848, %v6975
    %v6993 = vsub.f32 %v6849, %v6977
    %6994 = vst [vmem:[#allocation3] sm:$0xff] %v6978
    %6995 = vst [vmem:[#allocation3 + $0x8] sm:$0xff] %v6979
    %6996 = vst [vmem:[#allocation3 + $0x10] sm:$0xff] %v6980
    %6997 = vst [vmem:[#allocation3 + $0x18] sm:$0xff] %v6981
    %6998 = vst [vmem:[#allocation3 + $0x20] sm:$0xff] %v6982
    %6999 = vst [vmem:[#allocation3 + $0x28] sm:$0xff] %v6983
    %7000 = vst [vmem:[#allocation3 + $0x30] sm:$0xff] %v6984
    %7001 = vst [vmem:[#allocation3 + $0x38] sm:$0xff] %v6985
    %7002 = vst [vmem:[#allocation3 + $0x40] sm:$0xff] %v6986
    %7003 = vst [vmem:[#allocation3 + $0x48] sm:$0xff] %v6987
    %7004 = vst [vmem:[#allocation3 + $0x50] sm:$0xff] %v6988
    %7005 = vst [vmem:[#allocation3 + $0x58] sm:$0xff] %v6989
    %7006 = vst [vmem:[#allocation3 + $0x60] sm:$0xff] %v6990
    %7007 = vst [vmem:[#allocation3 + $0x68] sm:$0xff] %v6991
    %7008 = vst [vmem:[#allocation3 + $0x70] sm:$0xff] %v6992
    %7009 = vst [vmem:[#allocation3 + $0x78] sm:$0xff] %v6993
    // Predicated region
    $region82: #{downsample2_forward.1} parent=1 // pred_check
      _
    $region83: #{downsample2_forward.1} parent=1 // pred_check_branch
      %7011 = sbr.rel (0) target = $region85
    $region84: #{downsample2_forward.1} parent=1 // pred_region
      %s7013 = ssub.s32 2048, 2048
      %7014 = vsyncadd [#allocation4], %s7013
      %s7015 = sshll.u32 [#allocation3], 4
      %s7016 = int_to_ptr.vmem [resolvable:$true] %s7015
      %7021 = dma.vmem_to_hbm [thread:$0]  %s7016, 2048, %s20, [#allocation4], 128, 128, 8
    $region85: #{downsample2_forward.1} parent=1 // pred_fallthru
      _
    // Predicated region
    $region86: #{downsample2_forward.1} parent=1 // pred_check
      _
    $region87: #{downsample2_forward.1} parent=1 // pred_check_branch
      %7023 = sbr.rel (0) target = $region89
    $region88: #{downsample2_forward.1} parent=1 // pred_region
      %7024 = dma.done [#allocation4], 2048
    $region89: #{downsample2_forward.1} parent=1 // pred_fallthru
      _
    %7025 = vsyncpa [#allocation4], 1

</llo_original>
